<compile_context>
chip_gen: v5e
topology: v5e:2x2
jax: 0.10.0
libtpu: 0.0.40
codegen_flags: <defaults>
</compile_context>

<pallas_src>
import jax
import jax.numpy as jnp
from jax.experimental import pallas as pl
from jax.experimental.pallas import tpu as pltpu


# ---------------------------------------------------------------------------
# Fused forward kernel (single invocation, everything stays in VMEM)
# ---------------------------------------------------------------------------

def _fused_forward_kernel(x_ref, w1_ref, b1_ref, w2_ref, b2_ref,
                          w1e_ref, b1f_ref, w2f_ref, b2f_ref,
                          out_ref,
                          pad1_ref, pad2_ref, stage1_ref, stage2_ref, fcin_ref):
    N, H, W, Cin = x_ref.shape          # (2, 16, 16, 4)
    Co1 = w1_ref.shape[2]               # 8
    Co2 = w2_ref.shape[2]               # 16
    F1 = w1e_ref.shape[2]               # 32
    H2, W2 = H // 2, W // 2             # 8, 8
    H4, W4 = H // 4, W // 4             # 4, 4

    def conv3x3_relu(pad_ref, w_ref, b_ref, n, h, w, cin, cout):
        """3x3 / stride 1 / pad 1 conv (+bias +ReLU): 9 shifted GEMM taps on the
        zero-padded VMEM-resident activation, accumulated in f32."""
        acc = jnp.zeros((n * h * w, cout), jnp.float32)
        for kh in range(3):
            for kw in range(3):
                xs = pad_ref[:, kh:kh + h, kw:kw + w, :]        # (n, h, w, cin)
                xs2 = xs.reshape(n * h * w, cin)
                acc = acc + jnp.dot(xs2, w_ref[kh * 3 + kw],
                                    preferred_element_type=jnp.float32)
        return jnp.maximum(acc + b_ref[...], 0.0)               # (n*h*w, cout)

    def maxpool2x2(y2d, n, h, w, c, stage_ref):
        """2x2 / stride 2 max pool of a (n*h*w, c) map whose rows are (n, h, w).
        H-halving via leading-dim reshape + max, W-halving via sublane-strided
        reads from a VMEM staging ref."""
        y5 = y2d.reshape(n, h // 2, 2, w, c)
        hp = jnp.maximum(y5[:, :, 0, :, :], y5[:, :, 1, :, :])  # (n, h/2, w, c)
        stage_ref[...] = hp.reshape(n * (h // 2) * w, c)
        half = n * (h // 2) * (w // 2)
        even = stage_ref[pl.ds(0, half, stride=2), :]
        odd = stage_ref[pl.ds(1, half, stride=2), :]
        return jnp.maximum(even, odd)                           # rows = (n, h/2, w/2)

    # ---- conv1 + ReLU + maxpool ------------------------------------------
    pad1_ref[...] = jnp.zeros_like(pad1_ref)
    pad1_ref[:, 1:H + 1, 1:W + 1, :] = x_ref[...]
    y1 = conv3x3_relu(pad1_ref, w1_ref, b1_ref, N, H, W, Cin, Co1)
    p1 = maxpool2x2(y1, N, H, W, Co1, stage1_ref)               # (N*H2*W2, Co1)

    # ---- conv2 + ReLU + maxpool ------------------------------------------
    pad2_ref[...] = jnp.zeros_like(pad2_ref)
    pad2_ref[:, 1:H2 + 1, 1:W2 + 1, :] = p1.reshape(N, H2, W2, Co1)
    y2 = conv3x3_relu(pad2_ref, w2_ref, b2_ref, N, H2, W2, Co1, Co2)
    p2 = maxpool2x2(y2, N, H2, W2, Co2, stage2_ref)             # (N*H4*W4, Co2)

    # ---- avgpool(2,2) + flatten + fc1 + ReLU ------------------------------
    # AdaptiveAvgPool2d((2,2)) and torch's NCHW flatten order are pre-folded
    # into w1e (see wrapper), so fc1 is a sum of per-spatial-position GEMMs on
    # the VMEM-resident 4x4 feature map.
    fcin_ref[...] = p2                                          # rows = (n, h, w)
    acc1 = jnp.zeros((N, F1), jnp.float32)
    for hw in range(H4 * W4):
        xrow = fcin_ref[pl.ds(hw, N, stride=H4 * W4), :]        # (N, Co2)
        acc1 = acc1 + jnp.dot(xrow, w1e_ref[hw],
                              preferred_element_type=jnp.float32)
    h_fc = jnp.maximum(acc1 + b1f_ref[...], 0.0)
    # Dropout (classifier[2]) is identity in eval/inference mode.

    # ---- fc2 ---------------------------------------------------------------
    out = jnp.dot(h_fc, w2f_ref[...],
                  preferred_element_type=jnp.float32) + b2f_ref[...]
    out_ref[...] = out.astype(out_ref.dtype)


# ---------------------------------------------------------------------------
# Wrapper: weight re-layout (tiny, XLA) + the single pallas_call
# ---------------------------------------------------------------------------

def feature_extractor_forward(x_nchw, params):
    """Forward pass matching the torch FeatureExtractor (eval mode)."""
    x = jnp.transpose(x_nchw, (0, 2, 3, 1)).astype(jnp.float32)       # NHWC
    N, H, W, Cin = x.shape
    Co1 = params["conv1_w"].shape[0]
    Co2 = params["conv2_w"].shape[0]
    F1 = params["fc1_w"].shape[1]
    F2 = params["fc2_w"].shape[1]
    H2, W2, H4, W4 = H // 2, W // 2, H // 4, W // 4

    # torch conv weight (Cout, Cin, kh, kw) -> (kh*3+kw, Cin, Cout)
    w1 = jnp.transpose(params["conv1_w"], (2, 3, 1, 0)).reshape(9, Cin, Co1)
    w2 = jnp.transpose(params["conv2_w"], (2, 3, 1, 0)).reshape(9, Co1, Co2)
    b1 = params["conv1_b"].reshape(1, Co1)
    b2 = params["conv2_b"].reshape(1, Co2)

    # Fold AdaptiveAvgPool2d((2,2)) (H4xW4 -> 2x2 mean) and torch's NCHW flatten
    # order into fc1:  w1e[h*W4 + w, c, :] = 0.25 * fc1_w[c*4 + (h//2)*2 + (w//2), :]
    f1 = params["fc1_w"].reshape(Co2, 2, 2, F1)                       # (c, h2, w2, out)
    f1 = jnp.repeat(jnp.repeat(f1, H4 // 2, axis=1), W4 // 2, axis=2)
    f1 = f1 / float((H4 // 2) * (W4 // 2))
    w1e = jnp.transpose(f1, (1, 2, 0, 3)).reshape(H4 * W4, Co2, F1)   # (hw, c, out)
    b1f = params["fc1_b"].reshape(1, F1)
    w2f = params["fc2_w"]
    b2f = params["fc2_b"].reshape(1, F2)

    return pl.pallas_call(
        _fused_forward_kernel,
        out_shape=jax.ShapeDtypeStruct((N, F2), jnp.float32),
        scratch_shapes=[
            pltpu.VMEM((N, H + 2, W + 2, Cin), jnp.float32),    # padded conv1 input
            pltpu.VMEM((N, H2 + 2, W2 + 2, Co1), jnp.float32),  # padded conv2 input
            pltpu.VMEM((N * H2 * W, Co1), jnp.float32),         # pool1 W-staging
            pltpu.VMEM((N * H4 * W2, Co2), jnp.float32),        # pool2 W-staging
            pltpu.VMEM((N * H4 * W4, Co2), jnp.float32),        # fc spatial map
        ],
    )(x, w1, b1, w2, b2, w1e, b1f, w2f, b2f)


# ---------------------------------------------------------------------------
# Pure-JAX reference (XLA) used to validate the fused kernel
# ---------------------------------------------------------------------------

def _reference_forward(x_nchw, params):
    hi = jax.lax.Precision.HIGHEST
    x = x_nchw.astype(jnp.float32)

    def conv_relu(x, w, b):
        y = jax.lax.conv_general_dilated(
            x, w, window_strides=(1, 1), padding=((1, 1), (1, 1)),
            dimension_numbers=("NCHW", "OIHW", "NCHW"), precision=hi)
        return jax.nn.relu(y + b[None, :, None, None])

    def maxpool2(x):
        return jax.lax.reduce_window(x, -jnp.inf, jax.lax.max,
                                     (1, 1, 2, 2), (1, 1, 2, 2), "VALID")

    x = maxpool2(conv_relu(x, params["conv1_w"], params["conv1_b"]))
    x = maxpool2(conv_relu(x, params["conv2_w"], params["conv2_b"]))
    x = jax.lax.reduce_window(x, 0.0, jax.lax.add,
                              (1, 1, 2, 2), (1, 1, 2, 2), "VALID") * 0.25
    x = x.reshape(x.shape[0], -1)                                     # NCHW flatten
    x = jax.nn.relu(jnp.dot(x, params["fc1_w"], precision=hi) + params["fc1_b"])
    x = jnp.dot(x, params["fc2_w"], precision=hi) + params["fc2_b"]
    return x


# ---------------------------------------------------------------------------
# Deterministic synthetic parameters (torch-style shapes)
# ---------------------------------------------------------------------------

def init_params(key):
    ks = jax.random.split(key, 8)
    s = 0.1
    return {
        # conv weights in torch layout (Cout, Cin, kh, kw)
        "conv1_w": jax.random.normal(ks[0], (8, 4, 3, 3), jnp.float32) * s,
        "conv1_b": jax.random.normal(ks[1], (8,), jnp.float32) * s,
        "conv2_w": jax.random.normal(ks[2], (16, 8, 3, 3), jnp.float32) * s,
        "conv2_b": jax.random.normal(ks[3], (16,), jnp.float32) * s,
        # fc weights stored already transposed to (in, out); "in" is torch's
        # NCHW-flatten index order.
        "fc1_w": jax.random.normal(ks[4], (16 * 2 * 2, 32), jnp.float32) * s,
        "fc1_b": jax.random.normal(ks[5], (32,), jnp.float32) * s,
        "fc2_w": jax.random.normal(ks[6], (32, 32), jnp.float32) * s,
        "fc2_b": jax.random.normal(ks[7], (32,), jnp.float32) * s,
    }


if __name__ == "__main__":
    key = jax.random.PRNGKey(0)
    k_x, k_p = jax.random.split(key)
    x = jax.random.normal(k_x, (2, 4, 16, 16), jnp.float32)  # NCHW, like torch
    params = init_params(k_p)

    fwd = jax.jit(feature_extractor_forward)
    out = jax.block_until_ready(fwd(x, params))

    assert out.shape == (2, 32)
    assert out.dtype == jnp.float32

    ref = jax.block_until_ready(jax.jit(_reference_forward)(x, params))
    assert jnp.allclose(out, ref, rtol=5e-2, atol=5e-3), (
        "max abs err = %g" % float(jnp.max(jnp.abs(out - ref))))

    print("KERNEL_OK")
</pallas_src>

<mosaic_0001>
module attributes {stable_mosaic.version = 11 : i64} {
  func.func @_fused_forward_kernel(%arg0: memref<2x16x16x4xf32, #tpu.memory_space<vmem>>, %arg1: memref<9x4x8xf32, #tpu.memory_space<vmem>>, %arg2: memref<1x8xf32, #tpu.memory_space<vmem>>, %arg3: memref<9x8x16xf32, #tpu.memory_space<vmem>>, %arg4: memref<1x16xf32, #tpu.memory_space<vmem>>, %arg5: memref<16x16x32xf32, #tpu.memory_space<vmem>>, %arg6: memref<1x32xf32, #tpu.memory_space<vmem>>, %arg7: memref<32x32xf32, #tpu.memory_space<vmem>>, %arg8: memref<1x32xf32, #tpu.memory_space<vmem>>, %arg9: memref<2x32xf32, #tpu.memory_space<vmem>>, %arg10: memref<2x18x18x4xf32, #tpu.memory_space<vmem>>, %arg11: memref<2x10x10x8xf32, #tpu.memory_space<vmem>>, %arg12: memref<256x8xf32, #tpu.memory_space<vmem>>, %arg13: memref<64x16xf32, #tpu.memory_space<vmem>>, %arg14: memref<32x16xf32, #tpu.memory_space<vmem>>) attributes {dimension_semantics = [], scalar_prefetch = 0 : i64, scratch_operands = 5 : i64, tpu.core_type = #tpu.core_type<tc>} {
    %cst = arith.constant 0.000000e+00 : f32
    %0 = vector.broadcast %cst : f32 to vector<2x18x18x4xf32>
    %c0 = arith.constant 0 : index
    %c0_0 = arith.constant 0 : index
    %c0_1 = arith.constant 0 : index
    %c0_2 = arith.constant 0 : index
    %1 = vector.load %arg10[%c0, %c0_0, %c0_1, %c0_2] : memref<2x18x18x4xf32, #tpu.memory_space<vmem>>, vector<2x18x18x4xf32>
    tpu.vector_store %arg10[%c0, %c0_0, %c0_1, %c0_2], %0 {strides = array<i32>} : memref<2x18x18x4xf32, #tpu.memory_space<vmem>>, vector<2x18x18x4xf32>,
    %c0_3 = arith.constant 0 : index
    %c0_4 = arith.constant 0 : index
    %c0_5 = arith.constant 0 : index
    %c0_6 = arith.constant 0 : index
    %2 = vector.load %arg0[%c0_3, %c0_4, %c0_5, %c0_6] : memref<2x16x16x4xf32, #tpu.memory_space<vmem>>, vector<2x16x16x4xf32>
    %c0_7 = arith.constant 0 : index
    %c1 = arith.constant 1 : index
    %c1_8 = arith.constant 1 : index
    %c0_9 = arith.constant 0 : index
    %3 = vector.load %arg10[%c0_7, %c1, %c1_8, %c0_9] : memref<2x18x18x4xf32, #tpu.memory_space<vmem>>, vector<2x16x16x4xf32>
    tpu.vector_store %arg10[%c0_7, %c1, %c1_8, %c0_9], %2 {strides = array<i32>} : memref<2x18x18x4xf32, #tpu.memory_space<vmem>>, vector<2x16x16x4xf32>,
    %cst_10 = arith.constant 0.000000e+00 : f32
    %4 = vector.broadcast %cst_10 : f32 to vector<512x8xf32>
    %c0_11 = arith.constant 0 : index
    %c0_12 = arith.constant 0 : index
    %c0_13 = arith.constant 0 : index
    %c0_14 = arith.constant 0 : index
    %5 = vector.load %arg10[%c0_11, %c0_12, %c0_13, %c0_14] : memref<2x18x18x4xf32, #tpu.memory_space<vmem>>, vector<2x16x16x4xf32>
    %6 = vector.shape_cast %5 : vector<2x16x16x4xf32> to vector<512x4xf32>
    %c0_15 = arith.constant 0 : index
    %c0_16 = arith.constant 0 : index
    %c0_17 = arith.constant 0 : index
    %7 = vector.load %arg1[%c0_15, %c0_16, %c0_17] : memref<9x4x8xf32, #tpu.memory_space<vmem>>, vector<1x4x8xf32>
    %8 = vector.shape_cast %7 : vector<1x4x8xf32> to vector<4x8xf32>
    %cst_18 = arith.constant dense<0.000000e+00> : vector<512x8xf32>
    %9 = tpu.matmul %6, %8, %cst_18 {dimension_numbers = #tpu.dot_dimension_numbers<[1], [0], [0], [1], [0, 0, 1, 1], [], []>} : vector<512x4xf32>, vector<4x8xf32>, vector<512x8xf32> -> vector<512x8xf32>
    %10 = arith.addf %4, %9 : vector<512x8xf32>
    %c0_19 = arith.constant 0 : index
    %c0_20 = arith.constant 0 : index
    %c1_21 = arith.constant 1 : index
    %c0_22 = arith.constant 0 : index
    %11 = vector.load %arg10[%c0_19, %c0_20, %c1_21, %c0_22] : memref<2x18x18x4xf32, #tpu.memory_space<vmem>>, vector<2x16x16x4xf32>
    %12 = vector.shape_cast %11 : vector<2x16x16x4xf32> to vector<512x4xf32>
    %c1_23 = arith.constant 1 : index
    %c0_24 = arith.constant 0 : index
    %c0_25 = arith.constant 0 : index
    %13 = vector.load %arg1[%c1_23, %c0_24, %c0_25] : memref<9x4x8xf32, #tpu.memory_space<vmem>>, vector<1x4x8xf32>
    %14 = vector.shape_cast %13 : vector<1x4x8xf32> to vector<4x8xf32>
    %cst_26 = arith.constant dense<0.000000e+00> : vector<512x8xf32>
    %15 = tpu.matmul %12, %14, %cst_26 {dimension_numbers = #tpu.dot_dimension_numbers<[1], [0], [0], [1], [0, 0, 1, 1], [], []>} : vector<512x4xf32>, vector<4x8xf32>, vector<512x8xf32> -> vector<512x8xf32>
    %16 = arith.addf %10, %15 : vector<512x8xf32>
    %c0_27 = arith.constant 0 : index
    %c0_28 = arith.constant 0 : index
    %c2 = arith.constant 2 : index
    %c0_29 = arith.constant 0 : index
    %17 = vector.load %arg10[%c0_27, %c0_28, %c2, %c0_29] : memref<2x18x18x4xf32, #tpu.memory_space<vmem>>, vector<2x16x16x4xf32>
    %18 = vector.shape_cast %17 : vector<2x16x16x4xf32> to vector<512x4xf32>
    %c2_30 = arith.constant 2 : index
    %c0_31 = arith.constant 0 : index
    %c0_32 = arith.constant 0 : index
    %19 = vector.load %arg1[%c2_30, %c0_31, %c0_32] : memref<9x4x8xf32, #tpu.memory_space<vmem>>, vector<1x4x8xf32>
    %20 = vector.shape_cast %19 : vector<1x4x8xf32> to vector<4x8xf32>
    %cst_33 = arith.constant dense<0.000000e+00> : vector<512x8xf32>
    %21 = tpu.matmul %18, %20, %cst_33 {dimension_numbers = #tpu.dot_dimension_numbers<[1], [0], [0], [1], [0, 0, 1, 1], [], []>} : vector<512x4xf32>, vector<4x8xf32>, vector<512x8xf32> -> vector<512x8xf32>
    %22 = arith.addf %16, %21 : vector<512x8xf32>
    %c0_34 = arith.constant 0 : index
    %c1_35 = arith.constant 1 : index
    %c0_36 = arith.constant 0 : index
    %c0_37 = arith.constant 0 : index
    %23 = vector.load %arg10[%c0_34, %c1_35, %c0_36, %c0_37] : memref<2x18x18x4xf32, #tpu.memory_space<vmem>>, vector<2x16x16x4xf32>
    %24 = vector.shape_cast %23 : vector<2x16x16x4xf32> to vector<512x4xf32>
    %c3 = arith.constant 3 : index
    %c0_38 = arith.constant 0 : index
    %c0_39 = arith.constant 0 : index
    %25 = vector.load %arg1[%c3, %c0_38, %c0_39] : memref<9x4x8xf32, #tpu.memory_space<vmem>>, vector<1x4x8xf32>
    %26 = vector.shape_cast %25 : vector<1x4x8xf32> to vector<4x8xf32>
    %cst_40 = arith.constant dense<0.000000e+00> : vector<512x8xf32>
    %27 = tpu.matmul %24, %26, %cst_40 {dimension_numbers = #tpu.dot_dimension_numbers<[1], [0], [0], [1], [0, 0, 1, 1], [], []>} : vector<512x4xf32>, vector<4x8xf32>, vector<512x8xf32> -> vector<512x8xf32>
    %28 = arith.addf %22, %27 : vector<512x8xf32>
    %c0_41 = arith.constant 0 : index
    %c1_42 = arith.constant 1 : index
    %c1_43 = arith.constant 1 : index
    %c0_44 = arith.constant 0 : index
    %29 = vector.load %arg10[%c0_41, %c1_42, %c1_43, %c0_44] : memref<2x18x18x4xf32, #tpu.memory_space<vmem>>, vector<2x16x16x4xf32>
    %30 = vector.shape_cast %29 : vector<2x16x16x4xf32> to vector<512x4xf32>
    %c4 = arith.constant 4 : index
    %c0_45 = arith.constant 0 : index
    %c0_46 = arith.constant 0 : index
    %31 = vector.load %arg1[%c4, %c0_45, %c0_46] : memref<9x4x8xf32, #tpu.memory_space<vmem>>, vector<1x4x8xf32>
    %32 = vector.shape_cast %31 : vector<1x4x8xf32> to vector<4x8xf32>
    %cst_47 = arith.constant dense<0.000000e+00> : vector<512x8xf32>
    %33 = tpu.matmul %30, %32, %cst_47 {dimension_numbers = #tpu.dot_dimension_numbers<[1], [0], [0], [1], [0, 0, 1, 1], [], []>} : vector<512x4xf32>, vector<4x8xf32>, vector<512x8xf32> -> vector<512x8xf32>
    %34 = arith.addf %28, %33 : vector<512x8xf32>
    %c0_48 = arith.constant 0 : index
    %c1_49 = arith.constant 1 : index
    %c2_50 = arith.constant 2 : index
    %c0_51 = arith.constant 0 : index
    %35 = vector.load %arg10[%c0_48, %c1_49, %c2_50, %c0_51] : memref<2x18x18x4xf32, #tpu.memory_space<vmem>>, vector<2x16x16x4xf32>
    %36 = vector.shape_cast %35 : vector<2x16x16x4xf32> to vector<512x4xf32>
    %c5 = arith.constant 5 : index
    %c0_52 = arith.constant 0 : index
    %c0_53 = arith.constant 0 : index
    %37 = vector.load %arg1[%c5, %c0_52, %c0_53] : memref<9x4x8xf32, #tpu.memory_space<vmem>>, vector<1x4x8xf32>
    %38 = vector.shape_cast %37 : vector<1x4x8xf32> to vector<4x8xf32>
    %cst_54 = arith.constant dense<0.000000e+00> : vector<512x8xf32>
    %39 = tpu.matmul %36, %38, %cst_54 {dimension_numbers = #tpu.dot_dimension_numbers<[1], [0], [0], [1], [0, 0, 1, 1], [], []>} : vector<512x4xf32>, vector<4x8xf32>, vector<512x8xf32> -> vector<512x8xf32>
    %40 = arith.addf %34, %39 : vector<512x8xf32>
    %c0_55 = arith.constant 0 : index
    %c2_56 = arith.constant 2 : index
    %c0_57 = arith.constant 0 : index
    %c0_58 = arith.constant 0 : index
    %41 = vector.load %arg10[%c0_55, %c2_56, %c0_57, %c0_58] : memref<2x18x18x4xf32, #tpu.memory_space<vmem>>, vector<2x16x16x4xf32>
    %42 = vector.shape_cast %41 : vector<2x16x16x4xf32> to vector<512x4xf32>
    %c6 = arith.constant 6 : index
    %c0_59 = arith.constant 0 : index
    %c0_60 = arith.constant 0 : index
    %43 = vector.load %arg1[%c6, %c0_59, %c0_60] : memref<9x4x8xf32, #tpu.memory_space<vmem>>, vector<1x4x8xf32>
    %44 = vector.shape_cast %43 : vector<1x4x8xf32> to vector<4x8xf32>
    %cst_61 = arith.constant dense<0.000000e+00> : vector<512x8xf32>
    %45 = tpu.matmul %42, %44, %cst_61 {dimension_numbers = #tpu.dot_dimension_numbers<[1], [0], [0], [1], [0, 0, 1, 1], [], []>} : vector<512x4xf32>, vector<4x8xf32>, vector<512x8xf32> -> vector<512x8xf32>
    %46 = arith.addf %40, %45 : vector<512x8xf32>
    %c0_62 = arith.constant 0 : index
    %c2_63 = arith.constant 2 : index
    %c1_64 = arith.constant 1 : index
    %c0_65 = arith.constant 0 : index
    %47 = vector.load %arg10[%c0_62, %c2_63, %c1_64, %c0_65] : memref<2x18x18x4xf32, #tpu.memory_space<vmem>>, vector<2x16x16x4xf32>
    %48 = vector.shape_cast %47 : vector<2x16x16x4xf32> to vector<512x4xf32>
    %c7 = arith.constant 7 : index
    %c0_66 = arith.constant 0 : index
    %c0_67 = arith.constant 0 : index
    %49 = vector.load %arg1[%c7, %c0_66, %c0_67] : memref<9x4x8xf32, #tpu.memory_space<vmem>>, vector<1x4x8xf32>
    %50 = vector.shape_cast %49 : vector<1x4x8xf32> to vector<4x8xf32>
    %cst_68 = arith.constant dense<0.000000e+00> : vector<512x8xf32>
    %51 = tpu.matmul %48, %50, %cst_68 {dimension_numbers = #tpu.dot_dimension_numbers<[1], [0], [0], [1], [0, 0, 1, 1], [], []>} : vector<512x4xf32>, vector<4x8xf32>, vector<512x8xf32> -> vector<512x8xf32>
    %52 = arith.addf %46, %51 : vector<512x8xf32>
    %c0_69 = arith.constant 0 : index
    %c2_70 = arith.constant 2 : index
    %c2_71 = arith.constant 2 : index
    %c0_72 = arith.constant 0 : index
    %53 = vector.load %arg10[%c0_69, %c2_70, %c2_71, %c0_72] : memref<2x18x18x4xf32, #tpu.memory_space<vmem>>, vector<2x16x16x4xf32>
    %54 = vector.shape_cast %53 : vector<2x16x16x4xf32> to vector<512x4xf32>
    %c8 = arith.constant 8 : index
    %c0_73 = arith.constant 0 : index
    %c0_74 = arith.constant 0 : index
    %55 = vector.load %arg1[%c8, %c0_73, %c0_74] : memref<9x4x8xf32, #tpu.memory_space<vmem>>, vector<1x4x8xf32>
    %56 = vector.shape_cast %55 : vector<1x4x8xf32> to vector<4x8xf32>
    %cst_75 = arith.constant dense<0.000000e+00> : vector<512x8xf32>
    %57 = tpu.matmul %54, %56, %cst_75 {dimension_numbers = #tpu.dot_dimension_numbers<[1], [0], [0], [1], [0, 0, 1, 1], [], []>} : vector<512x4xf32>, vector<4x8xf32>, vector<512x8xf32> -> vector<512x8xf32>
    %58 = arith.addf %52, %57 : vector<512x8xf32>
    %c0_76 = arith.constant 0 : index
    %c0_77 = arith.constant 0 : index
    %59 = vector.load %arg2[%c0_76, %c0_77] : memref<1x8xf32, #tpu.memory_space<vmem>>, vector<1x8xf32>
    %60 = vector.broadcast %59 : vector<1x8xf32> to vector<512x8xf32>
    %61 = arith.addf %58, %60 : vector<512x8xf32>
    %cst_78 = arith.constant 0.000000e+00 : f32
    %62 = vector.broadcast %cst_78 : f32 to vector<512x8xf32>
    %63 = arith.maximumf %61, %62 : vector<512x8xf32>
    %64 = vector.shape_cast %63 : vector<512x8xf32> to vector<2x8x2x16x8xf32>
    %65 = vector.extract_strided_slice %64 {offsets = [0, 0, 0, 0, 0], sizes = [2, 8, 1, 16, 8], strides = [1, 1, 1, 1, 1]} : vector<2x8x2x16x8xf32> to vector<2x8x1x16x8xf32>
    %66 = vector.shape_cast %65 : vector<2x8x1x16x8xf32> to vector<2x8x16x8xf32>
    %67 = vector.extract_strided_slice %64 {offsets = [0, 0, 1, 0, 0], sizes = [2, 8, 1, 16, 8], strides = [1, 1, 1, 1, 1]} : vector<2x8x2x16x8xf32> to vector<2x8x1x16x8xf32>
    %68 = vector.shape_cast %67 : vector<2x8x1x16x8xf32> to vector<2x8x16x8xf32>
    %69 = arith.maximumf %66, %68 : vector<2x8x16x8xf32>
    %70 = vector.shape_cast %69 : vector<2x8x16x8xf32> to vector<256x8xf32>
    %c0_79 = arith.constant 0 : index
    %c0_80 = arith.constant 0 : index
    %71 = vector.load %arg12[%c0_79, %c0_80] : memref<256x8xf32, #tpu.memory_space<vmem>>, vector<256x8xf32>
    tpu.vector_store %arg12[%c0_79, %c0_80], %70 {strides = array<i32>} : memref<256x8xf32, #tpu.memory_space<vmem>>, vector<256x8xf32>,
    %c0_81 = arith.constant 0 : index
    %c0_82 = arith.constant 0 : index
    %72 = tpu.strided_load %arg12[%c0_81, %c0_82] {strides = array<i32: 2, 1>} : memref<256x8xf32, #tpu.memory_space<vmem>>, vector<128x8xf32>
    %c1_83 = arith.constant 1 : index
    %c0_84 = arith.constant 0 : index
    %73 = tpu.strided_load %arg12[%c1_83, %c0_84] {strides = array<i32: 2, 1>} : memref<256x8xf32, #tpu.memory_space<vmem>>, vector<128x8xf32>
    %74 = arith.maximumf %72, %73 : vector<128x8xf32>
    %cst_85 = arith.constant 0.000000e+00 : f32
    %75 = vector.broadcast %cst_85 : f32 to vector<2x10x10x8xf32>
    %c0_86 = arith.constant 0 : index
    %c0_87 = arith.constant 0 : index
    %c0_88 = arith.constant 0 : index
    %c0_89 = arith.constant 0 : index
    %76 = vector.load %arg11[%c0_86, %c0_87, %c0_88, %c0_89] : memref<2x10x10x8xf32, #tpu.memory_space<vmem>>, vector<2x10x10x8xf32>
    tpu.vector_store %arg11[%c0_86, %c0_87, %c0_88, %c0_89], %75 {strides = array<i32>} : memref<2x10x10x8xf32, #tpu.memory_space<vmem>>, vector<2x10x10x8xf32>,
    %77 = vector.shape_cast %74 : vector<128x8xf32> to vector<2x8x8x8xf32>
    %c0_90 = arith.constant 0 : index
    %c1_91 = arith.constant 1 : index
    %c1_92 = arith.constant 1 : index
    %c0_93 = arith.constant 0 : index
    %78 = vector.load %arg11[%c0_90, %c1_91, %c1_92, %c0_93] : memref<2x10x10x8xf32, #tpu.memory_space<vmem>>, vector<2x8x8x8xf32>
    tpu.vector_store %arg11[%c0_90, %c1_91, %c1_92, %c0_93], %77 {strides = array<i32>} : memref<2x10x10x8xf32, #tpu.memory_space<vmem>>, vector<2x8x8x8xf32>,
    %cst_94 = arith.constant 0.000000e+00 : f32
    %79 = vector.broadcast %cst_94 : f32 to vector<128x16xf32>
    %c0_95 = arith.constant 0 : index
    %c0_96 = arith.constant 0 : index
    %c0_97 = arith.constant 0 : index
    %c0_98 = arith.constant 0 : index
    %80 = vector.load %arg11[%c0_95, %c0_96, %c0_97, %c0_98] : memref<2x10x10x8xf32, #tpu.memory_space<vmem>>, vector<2x8x8x8xf32>
    %81 = vector.shape_cast %80 : vector<2x8x8x8xf32> to vector<128x8xf32>
    %c0_99 = arith.constant 0 : index
    %c0_100 = arith.constant 0 : index
    %c0_101 = arith.constant 0 : index
    %82 = vector.load %arg3[%c0_99, %c0_100, %c0_101] : memref<9x8x16xf32, #tpu.memory_space<vmem>>, vector<1x8x16xf32>
    %83 = vector.shape_cast %82 : vector<1x8x16xf32> to vector<8x16xf32>
    %cst_102 = arith.constant dense<0.000000e+00> : vector<128x16xf32>
    %84 = tpu.matmul %81, %83, %cst_102 {dimension_numbers = #tpu.dot_dimension_numbers<[1], [0], [0], [1], [0, 0, 1, 1], [], []>} : vector<128x8xf32>, vector<8x16xf32>, vector<128x16xf32> -> vector<128x16xf32>
    %85 = arith.addf %79, %84 : vector<128x16xf32>
    %c0_103 = arith.constant 0 : index
    %c0_104 = arith.constant 0 : index
    %c1_105 = arith.constant 1 : index
    %c0_106 = arith.constant 0 : index
    %86 = vector.load %arg11[%c0_103, %c0_104, %c1_105, %c0_106] : memref<2x10x10x8xf32, #tpu.memory_space<vmem>>, vector<2x8x8x8xf32>
    %87 = vector.shape_cast %86 : vector<2x8x8x8xf32> to vector<128x8xf32>
    %c1_107 = arith.constant 1 : index
    %c0_108 = arith.constant 0 : index
    %c0_109 = arith.constant 0 : index
    %88 = vector.load %arg3[%c1_107, %c0_108, %c0_109] : memref<9x8x16xf32, #tpu.memory_space<vmem>>, vector<1x8x16xf32>
    %89 = vector.shape_cast %88 : vector<1x8x16xf32> to vector<8x16xf32>
    %cst_110 = arith.constant dense<0.000000e+00> : vector<128x16xf32>
    %90 = tpu.matmul %87, %89, %cst_110 {dimension_numbers = #tpu.dot_dimension_numbers<[1], [0], [0], [1], [0, 0, 1, 1], [], []>} : vector<128x8xf32>, vector<8x16xf32>, vector<128x16xf32> -> vector<128x16xf32>
    %91 = arith.addf %85, %90 : vector<128x16xf32>
    %c0_111 = arith.constant 0 : index
    %c0_112 = arith.constant 0 : index
    %c2_113 = arith.constant 2 : index
    %c0_114 = arith.constant 0 : index
    %92 = vector.load %arg11[%c0_111, %c0_112, %c2_113, %c0_114] : memref<2x10x10x8xf32, #tpu.memory_space<vmem>>, vector<2x8x8x8xf32>
    %93 = vector.shape_cast %92 : vector<2x8x8x8xf32> to vector<128x8xf32>
    %c2_115 = arith.constant 2 : index
    %c0_116 = arith.constant 0 : index
    %c0_117 = arith.constant 0 : index
    %94 = vector.load %arg3[%c2_115, %c0_116, %c0_117] : memref<9x8x16xf32, #tpu.memory_space<vmem>>, vector<1x8x16xf32>
    %95 = vector.shape_cast %94 : vector<1x8x16xf32> to vector<8x16xf32>
    %cst_118 = arith.constant dense<0.000000e+00> : vector<128x16xf32>
    %96 = tpu.matmul %93, %95, %cst_118 {dimension_numbers = #tpu.dot_dimension_numbers<[1], [0], [0], [1], [0, 0, 1, 1], [], []>} : vector<128x8xf32>, vector<8x16xf32>, vector<128x16xf32> -> vector<128x16xf32>
    %97 = arith.addf %91, %96 : vector<128x16xf32>
    %c0_119 = arith.constant 0 : index
    %c1_120 = arith.constant 1 : index
    %c0_121 = arith.constant 0 : index
    %c0_122 = arith.constant 0 : index
    %98 = vector.load %arg11[%c0_119, %c1_120, %c0_121, %c0_122] : memref<2x10x10x8xf32, #tpu.memory_space<vmem>>, vector<2x8x8x8xf32>
    %99 = vector.shape_cast %98 : vector<2x8x8x8xf32> to vector<128x8xf32>
    %c3_123 = arith.constant 3 : index
    %c0_124 = arith.constant 0 : index
    %c0_125 = arith.constant 0 : index
    %100 = vector.load %arg3[%c3_123, %c0_124, %c0_125] : memref<9x8x16xf32, #tpu.memory_space<vmem>>, vector<1x8x16xf32>
    %101 = vector.shape_cast %100 : vector<1x8x16xf32> to vector<8x16xf32>
    %cst_126 = arith.constant dense<0.000000e+00> : vector<128x16xf32>
    %102 = tpu.matmul %99, %101, %cst_126 {dimension_numbers = #tpu.dot_dimension_numbers<[1], [0], [0], [1], [0, 0, 1, 1], [], []>} : vector<128x8xf32>, vector<8x16xf32>, vector<128x16xf32> -> vector<128x16xf32>
    %103 = arith.addf %97, %102 : vector<128x16xf32>
    %c0_127 = arith.constant 0 : index
    %c1_128 = arith.constant 1 : index
    %c1_129 = arith.constant 1 : index
    %c0_130 = arith.constant 0 : index
    %104 = vector.load %arg11[%c0_127, %c1_128, %c1_129, %c0_130] : memref<2x10x10x8xf32, #tpu.memory_space<vmem>>, vector<2x8x8x8xf32>
    %105 = vector.shape_cast %104 : vector<2x8x8x8xf32> to vector<128x8xf32>
    %c4_131 = arith.constant 4 : index
    %c0_132 = arith.constant 0 : index
    %c0_133 = arith.constant 0 : index
    %106 = vector.load %arg3[%c4_131, %c0_132, %c0_133] : memref<9x8x16xf32, #tpu.memory_space<vmem>>, vector<1x8x16xf32>
    %107 = vector.shape_cast %106 : vector<1x8x16xf32> to vector<8x16xf32>
    %cst_134 = arith.constant dense<0.000000e+00> : vector<128x16xf32>
    %108 = tpu.matmul %105, %107, %cst_134 {dimension_numbers = #tpu.dot_dimension_numbers<[1], [0], [0], [1], [0, 0, 1, 1], [], []>} : vector<128x8xf32>, vector<8x16xf32>, vector<128x16xf32> -> vector<128x16xf32>
    %109 = arith.addf %103, %108 : vector<128x16xf32>
    %c0_135 = arith.constant 0 : index
    %c1_136 = arith.constant 1 : index
    %c2_137 = arith.constant 2 : index
    %c0_138 = arith.constant 0 : index
    %110 = vector.load %arg11[%c0_135, %c1_136, %c2_137, %c0_138] : memref<2x10x10x8xf32, #tpu.memory_space<vmem>>, vector<2x8x8x8xf32>
    %111 = vector.shape_cast %110 : vector<2x8x8x8xf32> to vector<128x8xf32>
    %c5_139 = arith.constant 5 : index
    %c0_140 = arith.constant 0 : index
    %c0_141 = arith.constant 0 : index
    %112 = vector.load %arg3[%c5_139, %c0_140, %c0_141] : memref<9x8x16xf32, #tpu.memory_space<vmem>>, vector<1x8x16xf32>
    %113 = vector.shape_cast %112 : vector<1x8x16xf32> to vector<8x16xf32>
    %cst_142 = arith.constant dense<0.000000e+00> : vector<128x16xf32>
    %114 = tpu.matmul %111, %113, %cst_142 {dimension_numbers = #tpu.dot_dimension_numbers<[1], [0], [0], [1], [0, 0, 1, 1], [], []>} : vector<128x8xf32>, vector<8x16xf32>, vector<128x16xf32> -> vector<128x16xf32>
    %115 = arith.addf %109, %114 : vector<128x16xf32>
    %c0_143 = arith.constant 0 : index
    %c2_144 = arith.constant 2 : index
    %c0_145 = arith.constant 0 : index
    %c0_146 = arith.constant 0 : index
    %116 = vector.load %arg11[%c0_143, %c2_144, %c0_145, %c0_146] : memref<2x10x10x8xf32, #tpu.memory_space<vmem>>, vector<2x8x8x8xf32>
    %117 = vector.shape_cast %116 : vector<2x8x8x8xf32> to vector<128x8xf32>
    %c6_147 = arith.constant 6 : index
    %c0_148 = arith.constant 0 : index
    %c0_149 = arith.constant 0 : index
    %118 = vector.load %arg3[%c6_147, %c0_148, %c0_149] : memref<9x8x16xf32, #tpu.memory_space<vmem>>, vector<1x8x16xf32>
    %119 = vector.shape_cast %118 : vector<1x8x16xf32> to vector<8x16xf32>
    %cst_150 = arith.constant dense<0.000000e+00> : vector<128x16xf32>
    %120 = tpu.matmul %117, %119, %cst_150 {dimension_numbers = #tpu.dot_dimension_numbers<[1], [0], [0], [1], [0, 0, 1, 1], [], []>} : vector<128x8xf32>, vector<8x16xf32>, vector<128x16xf32> -> vector<128x16xf32>
    %121 = arith.addf %115, %120 : vector<128x16xf32>
    %c0_151 = arith.constant 0 : index
    %c2_152 = arith.constant 2 : index
    %c1_153 = arith.constant 1 : index
    %c0_154 = arith.constant 0 : index
    %122 = vector.load %arg11[%c0_151, %c2_152, %c1_153, %c0_154] : memref<2x10x10x8xf32, #tpu.memory_space<vmem>>, vector<2x8x8x8xf32>
    %123 = vector.shape_cast %122 : vector<2x8x8x8xf32> to vector<128x8xf32>
    %c7_155 = arith.constant 7 : index
    %c0_156 = arith.constant 0 : index
    %c0_157 = arith.constant 0 : index
    %124 = vector.load %arg3[%c7_155, %c0_156, %c0_157] : memref<9x8x16xf32, #tpu.memory_space<vmem>>, vector<1x8x16xf32>
    %125 = vector.shape_cast %124 : vector<1x8x16xf32> to vector<8x16xf32>
    %cst_158 = arith.constant dense<0.000000e+00> : vector<128x16xf32>
    %126 = tpu.matmul %123, %125, %cst_158 {dimension_numbers = #tpu.dot_dimension_numbers<[1], [0], [0], [1], [0, 0, 1, 1], [], []>} : vector<128x8xf32>, vector<8x16xf32>, vector<128x16xf32> -> vector<128x16xf32>
    %127 = arith.addf %121, %126 : vector<128x16xf32>
    %c0_159 = arith.constant 0 : index
    %c2_160 = arith.constant 2 : index
    %c2_161 = arith.constant 2 : index
    %c0_162 = arith.constant 0 : index
    %128 = vector.load %arg11[%c0_159, %c2_160, %c2_161, %c0_162] : memref<2x10x10x8xf32, #tpu.memory_space<vmem>>, vector<2x8x8x8xf32>
    %129 = vector.shape_cast %128 : vector<2x8x8x8xf32> to vector<128x8xf32>
    %c8_163 = arith.constant 8 : index
    %c0_164 = arith.constant 0 : index
    %c0_165 = arith.constant 0 : index
    %130 = vector.load %arg3[%c8_163, %c0_164, %c0_165] : memref<9x8x16xf32, #tpu.memory_space<vmem>>, vector<1x8x16xf32>
    %131 = vector.shape_cast %130 : vector<1x8x16xf32> to vector<8x16xf32>
    %cst_166 = arith.constant dense<0.000000e+00> : vector<128x16xf32>
    %132 = tpu.matmul %129, %131, %cst_166 {dimension_numbers = #tpu.dot_dimension_numbers<[1], [0], [0], [1], [0, 0, 1, 1], [], []>} : vector<128x8xf32>, vector<8x16xf32>, vector<128x16xf32> -> vector<128x16xf32>
    %133 = arith.addf %127, %132 : vector<128x16xf32>
    %c0_167 = arith.constant 0 : index
    %c0_168 = arith.constant 0 : index
    %134 = vector.load %arg4[%c0_167, %c0_168] : memref<1x16xf32, #tpu.memory_space<vmem>>, vector<1x16xf32>
    %135 = vector.broadcast %134 : vector<1x16xf32> to vector<128x16xf32>
    %136 = arith.addf %133, %135 : vector<128x16xf32>
    %cst_169 = arith.constant 0.000000e+00 : f32
    %137 = vector.broadcast %cst_169 : f32 to vector<128x16xf32>
    %138 = arith.maximumf %136, %137 : vector<128x16xf32>
    %139 = vector.shape_cast %138 : vector<128x16xf32> to vector<2x4x2x8x16xf32>
    %140 = vector.extract_strided_slice %139 {offsets = [0, 0, 0, 0, 0], sizes = [2, 4, 1, 8, 16], strides = [1, 1, 1, 1, 1]} : vector<2x4x2x8x16xf32> to vector<2x4x1x8x16xf32>
    %141 = vector.shape_cast %140 : vector<2x4x1x8x16xf32> to vector<2x4x8x16xf32>
    %142 = vector.extract_strided_slice %139 {offsets = [0, 0, 1, 0, 0], sizes = [2, 4, 1, 8, 16], strides = [1, 1, 1, 1, 1]} : vector<2x4x2x8x16xf32> to vector<2x4x1x8x16xf32>
    %143 = vector.shape_cast %142 : vector<2x4x1x8x16xf32> to vector<2x4x8x16xf32>
    %144 = arith.maximumf %141, %143 : vector<2x4x8x16xf32>
    %145 = vector.shape_cast %144 : vector<2x4x8x16xf32> to vector<64x16xf32>
    %c0_170 = arith.constant 0 : index
    %c0_171 = arith.constant 0 : index
    %146 = vector.load %arg13[%c0_170, %c0_171] : memref<64x16xf32, #tpu.memory_space<vmem>>, vector<64x16xf32>
    tpu.vector_store %arg13[%c0_170, %c0_171], %145 {strides = array<i32>} : memref<64x16xf32, #tpu.memory_space<vmem>>, vector<64x16xf32>,
    %c0_172 = arith.constant 0 : index
    %c0_173 = arith.constant 0 : index
    %147 = tpu.strided_load %arg13[%c0_172, %c0_173] {strides = array<i32: 2, 1>} : memref<64x16xf32, #tpu.memory_space<vmem>>, vector<32x16xf32>
    %c1_174 = arith.constant 1 : index
    %c0_175 = arith.constant 0 : index
    %148 = tpu.strided_load %arg13[%c1_174, %c0_175] {strides = array<i32: 2, 1>} : memref<64x16xf32, #tpu.memory_space<vmem>>, vector<32x16xf32>
    %149 = arith.maximumf %147, %148 : vector<32x16xf32>
    %c0_176 = arith.constant 0 : index
    %c0_177 = arith.constant 0 : index
    %150 = vector.load %arg14[%c0_176, %c0_177] : memref<32x16xf32, #tpu.memory_space<vmem>>, vector<32x16xf32>
    tpu.vector_store %arg14[%c0_176, %c0_177], %149 {strides = array<i32>} : memref<32x16xf32, #tpu.memory_space<vmem>>, vector<32x16xf32>,
    %cst_178 = arith.constant 0.000000e+00 : f32
    %151 = vector.broadcast %cst_178 : f32 to vector<2x32xf32>
    %c0_179 = arith.constant 0 : index
    %c0_180 = arith.constant 0 : index
    %152 = tpu.strided_load %arg14[%c0_179, %c0_180] {strides = array<i32: 16, 1>} : memref<32x16xf32, #tpu.memory_space<vmem>>, vector<2x16xf32>
    %c0_181 = arith.constant 0 : index
    %c0_182 = arith.constant 0 : index
    %c0_183 = arith.constant 0 : index
    %153 = vector.load %arg5[%c0_181, %c0_182, %c0_183] : memref<16x16x32xf32, #tpu.memory_space<vmem>>, vector<1x16x32xf32>
    %154 = vector.shape_cast %153 : vector<1x16x32xf32> to vector<16x32xf32>
    %cst_184 = arith.constant dense<0.000000e+00> : vector<2x32xf32>
    %155 = tpu.matmul %152, %154, %cst_184 {dimension_numbers = #tpu.dot_dimension_numbers<[1], [0], [0], [1], [0, 0, 1, 1], [], []>} : vector<2x16xf32>, vector<16x32xf32>, vector<2x32xf32> -> vector<2x32xf32>
    %156 = arith.addf %151, %155 : vector<2x32xf32>
    %c1_185 = arith.constant 1 : index
    %c0_186 = arith.constant 0 : index
    %157 = tpu.strided_load %arg14[%c1_185, %c0_186] {strides = array<i32: 16, 1>} : memref<32x16xf32, #tpu.memory_space<vmem>>, vector<2x16xf32>
    %c1_187 = arith.constant 1 : index
    %c0_188 = arith.constant 0 : index
    %c0_189 = arith.constant 0 : index
    %158 = vector.load %arg5[%c1_187, %c0_188, %c0_189] : memref<16x16x32xf32, #tpu.memory_space<vmem>>, vector<1x16x32xf32>
    %159 = vector.shape_cast %158 : vector<1x16x32xf32> to vector<16x32xf32>
    %cst_190 = arith.constant dense<0.000000e+00> : vector<2x32xf32>
    %160 = tpu.matmul %157, %159, %cst_190 {dimension_numbers = #tpu.dot_dimension_numbers<[1], [0], [0], [1], [0, 0, 1, 1], [], []>} : vector<2x16xf32>, vector<16x32xf32>, vector<2x32xf32> -> vector<2x32xf32>
    %161 = arith.addf %156, %160 : vector<2x32xf32>
    %c2_191 = arith.constant 2 : index
    %c0_192 = arith.constant 0 : index
    %162 = tpu.strided_load %arg14[%c2_191, %c0_192] {strides = array<i32: 16, 1>} : memref<32x16xf32, #tpu.memory_space<vmem>>, vector<2x16xf32>
    %c2_193 = arith.constant 2 : index
    %c0_194 = arith.constant 0 : index
    %c0_195 = arith.constant 0 : index
    %163 = vector.load %arg5[%c2_193, %c0_194, %c0_195] : memref<16x16x32xf32, #tpu.memory_space<vmem>>, vector<1x16x32xf32>
    %164 = vector.shape_cast %163 : vector<1x16x32xf32> to vector<16x32xf32>
    %cst_196 = arith.constant dense<0.000000e+00> : vector<2x32xf32>
    %165 = tpu.matmul %162, %164, %cst_196 {dimension_numbers = #tpu.dot_dimension_numbers<[1], [0], [0], [1], [0, 0, 1, 1], [], []>} : vector<2x16xf32>, vector<16x32xf32>, vector<2x32xf32> -> vector<2x32xf32>
    %166 = arith.addf %161, %165 : vector<2x32xf32>
    %c3_197 = arith.constant 3 : index
    %c0_198 = arith.constant 0 : index
    %167 = tpu.strided_load %arg14[%c3_197, %c0_198] {strides = array<i32: 16, 1>} : memref<32x16xf32, #tpu.memory_space<vmem>>, vector<2x16xf32>
    %c3_199 = arith.constant 3 : index
    %c0_200 = arith.constant 0 : index
    %c0_201 = arith.constant 0 : index
    %168 = vector.load %arg5[%c3_199, %c0_200, %c0_201] : memref<16x16x32xf32, #tpu.memory_space<vmem>>, vector<1x16x32xf32>
    %169 = vector.shape_cast %168 : vector<1x16x32xf32> to vector<16x32xf32>
    %cst_202 = arith.constant dense<0.000000e+00> : vector<2x32xf32>
    %170 = tpu.matmul %167, %169, %cst_202 {dimension_numbers = #tpu.dot_dimension_numbers<[1], [0], [0], [1], [0, 0, 1, 1], [], []>} : vector<2x16xf32>, vector<16x32xf32>, vector<2x32xf32> -> vector<2x32xf32>
    %171 = arith.addf %166, %170 : vector<2x32xf32>
    %c4_203 = arith.constant 4 : index
    %c0_204 = arith.constant 0 : index
    %172 = tpu.strided_load %arg14[%c4_203, %c0_204] {strides = array<i32: 16, 1>} : memref<32x16xf32, #tpu.memory_space<vmem>>, vector<2x16xf32>
    %c4_205 = arith.constant 4 : index
    %c0_206 = arith.constant 0 : index
    %c0_207 = arith.constant 0 : index
    %173 = vector.load %arg5[%c4_205, %c0_206, %c0_207] : memref<16x16x32xf32, #tpu.memory_space<vmem>>, vector<1x16x32xf32>
    %174 = vector.shape_cast %173 : vector<1x16x32xf32> to vector<16x32xf32>
    %cst_208 = arith.constant dense<0.000000e+00> : vector<2x32xf32>
    %175 = tpu.matmul %172, %174, %cst_208 {dimension_numbers = #tpu.dot_dimension_numbers<[1], [0], [0], [1], [0, 0, 1, 1], [], []>} : vector<2x16xf32>, vector<16x32xf32>, vector<2x32xf32> -> vector<2x32xf32>
    %176 = arith.addf %171, %175 : vector<2x32xf32>
    %c5_209 = arith.constant 5 : index
    %c0_210 = arith.constant 0 : index
    %177 = tpu.strided_load %arg14[%c5_209, %c0_210] {strides = array<i32: 16, 1>} : memref<32x16xf32, #tpu.memory_space<vmem>>, vector<2x16xf32>
    %c5_211 = arith.constant 5 : index
    %c0_212 = arith.constant 0 : index
    %c0_213 = arith.constant 0 : index
    %178 = vector.load %arg5[%c5_211, %c0_212, %c0_213] : memref<16x16x32xf32, #tpu.memory_space<vmem>>, vector<1x16x32xf32>
    %179 = vector.shape_cast %178 : vector<1x16x32xf32> to vector<16x32xf32>
    %cst_214 = arith.constant dense<0.000000e+00> : vector<2x32xf32>
    %180 = tpu.matmul %177, %179, %cst_214 {dimension_numbers = #tpu.dot_dimension_numbers<[1], [0], [0], [1], [0, 0, 1, 1], [], []>} : vector<2x16xf32>, vector<16x32xf32>, vector<2x32xf32> -> vector<2x32xf32>
    %181 = arith.addf %176, %180 : vector<2x32xf32>
    %c6_215 = arith.constant 6 : index
    %c0_216 = arith.constant 0 : index
    %182 = tpu.strided_load %arg14[%c6_215, %c0_216] {strides = array<i32: 16, 1>} : memref<32x16xf32, #tpu.memory_space<vmem>>, vector<2x16xf32>
    %c6_217 = arith.constant 6 : index
    %c0_218 = arith.constant 0 : index
    %c0_219 = arith.constant 0 : index
    %183 = vector.load %arg5[%c6_217, %c0_218, %c0_219] : memref<16x16x32xf32, #tpu.memory_space<vmem>>, vector<1x16x32xf32>
    %184 = vector.shape_cast %183 : vector<1x16x32xf32> to vector<16x32xf32>
    %cst_220 = arith.constant dense<0.000000e+00> : vector<2x32xf32>
    %185 = tpu.matmul %182, %184, %cst_220 {dimension_numbers = #tpu.dot_dimension_numbers<[1], [0], [0], [1], [0, 0, 1, 1], [], []>} : vector<2x16xf32>, vector<16x32xf32>, vector<2x32xf32> -> vector<2x32xf32>
    %186 = arith.addf %181, %185 : vector<2x32xf32>
    %c7_221 = arith.constant 7 : index
    %c0_222 = arith.constant 0 : index
    %187 = tpu.strided_load %arg14[%c7_221, %c0_222] {strides = array<i32: 16, 1>} : memref<32x16xf32, #tpu.memory_space<vmem>>, vector<2x16xf32>
    %c7_223 = arith.constant 7 : index
    %c0_224 = arith.constant 0 : index
    %c0_225 = arith.constant 0 : index
    %188 = vector.load %arg5[%c7_223, %c0_224, %c0_225] : memref<16x16x32xf32, #tpu.memory_space<vmem>>, vector<1x16x32xf32>
    %189 = vector.shape_cast %188 : vector<1x16x32xf32> to vector<16x32xf32>
    %cst_226 = arith.constant dense<0.000000e+00> : vector<2x32xf32>
    %190 = tpu.matmul %187, %189, %cst_226 {dimension_numbers = #tpu.dot_dimension_numbers<[1], [0], [0], [1], [0, 0, 1, 1], [], []>} : vector<2x16xf32>, vector<16x32xf32>, vector<2x32xf32> -> vector<2x32xf32>
    %191 = arith.addf %186, %190 : vector<2x32xf32>
    %c8_227 = arith.constant 8 : index
    %c0_228 = arith.constant 0 : index
    %192 = tpu.strided_load %arg14[%c8_227, %c0_228] {strides = array<i32: 16, 1>} : memref<32x16xf32, #tpu.memory_space<vmem>>, vector<2x16xf32>
    %c8_229 = arith.constant 8 : index
    %c0_230 = arith.constant 0 : index
    %c0_231 = arith.constant 0 : index
    %193 = vector.load %arg5[%c8_229, %c0_230, %c0_231] : memref<16x16x32xf32, #tpu.memory_space<vmem>>, vector<1x16x32xf32>
    %194 = vector.shape_cast %193 : vector<1x16x32xf32> to vector<16x32xf32>
    %cst_232 = arith.constant dense<0.000000e+00> : vector<2x32xf32>
    %195 = tpu.matmul %192, %194, %cst_232 {dimension_numbers = #tpu.dot_dimension_numbers<[1], [0], [0], [1], [0, 0, 1, 1], [], []>} : vector<2x16xf32>, vector<16x32xf32>, vector<2x32xf32> -> vector<2x32xf32>
    %196 = arith.addf %191, %195 : vector<2x32xf32>
    %c9 = arith.constant 9 : index
    %c0_233 = arith.constant 0 : index
    %197 = tpu.strided_load %arg14[%c9, %c0_233] {strides = array<i32: 16, 1>} : memref<32x16xf32, #tpu.memory_space<vmem>>, vector<2x16xf32>
    %c9_234 = arith.constant 9 : index
    %c0_235 = arith.constant 0 : index
    %c0_236 = arith.constant 0 : index
    %198 = vector.load %arg5[%c9_234, %c0_235, %c0_236] : memref<16x16x32xf32, #tpu.memory_space<vmem>>, vector<1x16x32xf32>
    %199 = vector.shape_cast %198 : vector<1x16x32xf32> to vector<16x32xf32>
    %cst_237 = arith.constant dense<0.000000e+00> : vector<2x32xf32>
    %200 = tpu.matmul %197, %199, %cst_237 {dimension_numbers = #tpu.dot_dimension_numbers<[1], [0], [0], [1], [0, 0, 1, 1], [], []>} : vector<2x16xf32>, vector<16x32xf32>, vector<2x32xf32> -> vector<2x32xf32>
    %201 = arith.addf %196, %200 : vector<2x32xf32>
    %c10 = arith.constant 10 : index
    %c0_238 = arith.constant 0 : index
    %202 = tpu.strided_load %arg14[%c10, %c0_238] {strides = array<i32: 16, 1>} : memref<32x16xf32, #tpu.memory_space<vmem>>, vector<2x16xf32>
    %c10_239 = arith.constant 10 : index
    %c0_240 = arith.constant 0 : index
    %c0_241 = arith.constant 0 : index
    %203 = vector.load %arg5[%c10_239, %c0_240, %c0_241] : memref<16x16x32xf32, #tpu.memory_space<vmem>>, vector<1x16x32xf32>
    %204 = vector.shape_cast %203 : vector<1x16x32xf32> to vector<16x32xf32>
    %cst_242 = arith.constant dense<0.000000e+00> : vector<2x32xf32>
    %205 = tpu.matmul %202, %204, %cst_242 {dimension_numbers = #tpu.dot_dimension_numbers<[1], [0], [0], [1], [0, 0, 1, 1], [], []>} : vector<2x16xf32>, vector<16x32xf32>, vector<2x32xf32> -> vector<2x32xf32>
    %206 = arith.addf %201, %205 : vector<2x32xf32>
    %c11 = arith.constant 11 : index
    %c0_243 = arith.constant 0 : index
    %207 = tpu.strided_load %arg14[%c11, %c0_243] {strides = array<i32: 16, 1>} : memref<32x16xf32, #tpu.memory_space<vmem>>, vector<2x16xf32>
    %c11_244 = arith.constant 11 : index
    %c0_245 = arith.constant 0 : index
    %c0_246 = arith.constant 0 : index
    %208 = vector.load %arg5[%c11_244, %c0_245, %c0_246] : memref<16x16x32xf32, #tpu.memory_space<vmem>>, vector<1x16x32xf32>
    %209 = vector.shape_cast %208 : vector<1x16x32xf32> to vector<16x32xf32>
    %cst_247 = arith.constant dense<0.000000e+00> : vector<2x32xf32>
    %210 = tpu.matmul %207, %209, %cst_247 {dimension_numbers = #tpu.dot_dimension_numbers<[1], [0], [0], [1], [0, 0, 1, 1], [], []>} : vector<2x16xf32>, vector<16x32xf32>, vector<2x32xf32> -> vector<2x32xf32>
    %211 = arith.addf %206, %210 : vector<2x32xf32>
    %c12 = arith.constant 12 : index
    %c0_248 = arith.constant 0 : index
    %212 = tpu.strided_load %arg14[%c12, %c0_248] {strides = array<i32: 16, 1>} : memref<32x16xf32, #tpu.memory_space<vmem>>, vector<2x16xf32>
    %c12_249 = arith.constant 12 : index
    %c0_250 = arith.constant 0 : index
    %c0_251 = arith.constant 0 : index
    %213 = vector.load %arg5[%c12_249, %c0_250, %c0_251] : memref<16x16x32xf32, #tpu.memory_space<vmem>>, vector<1x16x32xf32>
    %214 = vector.shape_cast %213 : vector<1x16x32xf32> to vector<16x32xf32>
    %cst_252 = arith.constant dense<0.000000e+00> : vector<2x32xf32>
    %215 = tpu.matmul %212, %214, %cst_252 {dimension_numbers = #tpu.dot_dimension_numbers<[1], [0], [0], [1], [0, 0, 1, 1], [], []>} : vector<2x16xf32>, vector<16x32xf32>, vector<2x32xf32> -> vector<2x32xf32>
    %216 = arith.addf %211, %215 : vector<2x32xf32>
    %c13 = arith.constant 13 : index
    %c0_253 = arith.constant 0 : index
    %217 = tpu.strided_load %arg14[%c13, %c0_253] {strides = array<i32: 16, 1>} : memref<32x16xf32, #tpu.memory_space<vmem>>, vector<2x16xf32>
    %c13_254 = arith.constant 13 : index
    %c0_255 = arith.constant 0 : index
    %c0_256 = arith.constant 0 : index
    %218 = vector.load %arg5[%c13_254, %c0_255, %c0_256] : memref<16x16x32xf32, #tpu.memory_space<vmem>>, vector<1x16x32xf32>
    %219 = vector.shape_cast %218 : vector<1x16x32xf32> to vector<16x32xf32>
    %cst_257 = arith.constant dense<0.000000e+00> : vector<2x32xf32>
    %220 = tpu.matmul %217, %219, %cst_257 {dimension_numbers = #tpu.dot_dimension_numbers<[1], [0], [0], [1], [0, 0, 1, 1], [], []>} : vector<2x16xf32>, vector<16x32xf32>, vector<2x32xf32> -> vector<2x32xf32>
    %221 = arith.addf %216, %220 : vector<2x32xf32>
    %c14 = arith.constant 14 : index
    %c0_258 = arith.constant 0 : index
    %222 = tpu.strided_load %arg14[%c14, %c0_258] {strides = array<i32: 16, 1>} : memref<32x16xf32, #tpu.memory_space<vmem>>, vector<2x16xf32>
    %c14_259 = arith.constant 14 : index
    %c0_260 = arith.constant 0 : index
    %c0_261 = arith.constant 0 : index
    %223 = vector.load %arg5[%c14_259, %c0_260, %c0_261] : memref<16x16x32xf32, #tpu.memory_space<vmem>>, vector<1x16x32xf32>
    %224 = vector.shape_cast %223 : vector<1x16x32xf32> to vector<16x32xf32>
    %cst_262 = arith.constant dense<0.000000e+00> : vector<2x32xf32>
    %225 = tpu.matmul %222, %224, %cst_262 {dimension_numbers = #tpu.dot_dimension_numbers<[1], [0], [0], [1], [0, 0, 1, 1], [], []>} : vector<2x16xf32>, vector<16x32xf32>, vector<2x32xf32> -> vector<2x32xf32>
    %226 = arith.addf %221, %225 : vector<2x32xf32>
    %c15 = arith.constant 15 : index
    %c0_263 = arith.constant 0 : index
    %227 = tpu.strided_load %arg14[%c15, %c0_263] {strides = array<i32: 16, 1>} : memref<32x16xf32, #tpu.memory_space<vmem>>, vector<2x16xf32>
    %c15_264 = arith.constant 15 : index
    %c0_265 = arith.constant 0 : index
    %c0_266 = arith.constant 0 : index
    %228 = vector.load %arg5[%c15_264, %c0_265, %c0_266] : memref<16x16x32xf32, #tpu.memory_space<vmem>>, vector<1x16x32xf32>
    %229 = vector.shape_cast %228 : vector<1x16x32xf32> to vector<16x32xf32>
    %cst_267 = arith.constant dense<0.000000e+00> : vector<2x32xf32>
    %230 = tpu.matmul %227, %229, %cst_267 {dimension_numbers = #tpu.dot_dimension_numbers<[1], [0], [0], [1], [0, 0, 1, 1], [], []>} : vector<2x16xf32>, vector<16x32xf32>, vector<2x32xf32> -> vector<2x32xf32>
    %231 = arith.addf %226, %230 : vector<2x32xf32>
    %c0_268 = arith.constant 0 : index
    %c0_269 = arith.constant 0 : index
    %232 = vector.load %arg6[%c0_268, %c0_269] : memref<1x32xf32, #tpu.memory_space<vmem>>, vector<1x32xf32>
    %233 = vector.broadcast %232 : vector<1x32xf32> to vector<2x32xf32>
    %234 = arith.addf %231, %233 : vector<2x32xf32>
    %cst_270 = arith.constant 0.000000e+00 : f32
    %235 = vector.broadcast %cst_270 : f32 to vector<2x32xf32>
    %236 = arith.maximumf %234, %235 : vector<2x32xf32>
    %c0_271 = arith.constant 0 : index
    %c0_272 = arith.constant 0 : index
    %237 = vector.load %arg7[%c0_271, %c0_272] : memref<32x32xf32, #tpu.memory_space<vmem>>, vector<32x32xf32>
    %cst_273 = arith.constant dense<0.000000e+00> : vector<2x32xf32>
    %238 = tpu.matmul %236, %237, %cst_273 {dimension_numbers = #tpu.dot_dimension_numbers<[1], [0], [0], [1], [0, 0, 1, 1], [], []>} : vector<2x32xf32>, vector<32x32xf32>, vector<2x32xf32> -> vector<2x32xf32>
    %c0_274 = arith.constant 0 : index
    %c0_275 = arith.constant 0 : index
    %239 = vector.load %arg8[%c0_274, %c0_275] : memref<1x32xf32, #tpu.memory_space<vmem>>, vector<1x32xf32>
    %240 = vector.broadcast %239 : vector<1x32xf32> to vector<2x32xf32>
    %241 = arith.addf %238, %240 : vector<2x32xf32>
    %c0_276 = arith.constant 0 : index
    %c0_277 = arith.constant 0 : index
    %242 = vector.load %arg9[%c0_276, %c0_277] : memref<2x32xf32, #tpu.memory_space<vmem>>, vector<2x32xf32>
    tpu.vector_store %arg9[%c0_276, %c0_277], %241 {strides = array<i32>} : memref<2x32xf32, #tpu.memory_space<vmem>>, vector<2x32xf32>,
    return
  }
}

</mosaic_0001>

<llo_original>
// kernel: feature_extractor_forward.1
$region0: #{feature_extractor_forward.1}
  #allocation0 [shape = 'u32[]', space=smem, size = 0x4, offset = 0x4, fixed_abs, tag = 'smem constant byte address 0x4 - core index']
  #allocation1 [shape = 'u32[72,128]{1,0:T(1,128)}', space=vmem, size = 0x9000, scoped, tag = 'internal scratch']
  #allocation2 [shape = 'f32[2,18,18,4]{3,2,1,0:T(8,128)}', space=vmem, size = 0x6c000, scoped, tag = 'scratch operand']
  #allocation3 [shape = 'f32[2,10,10,8]{3,2,1,0:T(8,128)}', space=vmem, size = 0x28000, scoped, tag = 'scratch operand']
  #allocation4 [shape = 'f32[256,8]{1,0:T(8,128)}', space=vmem, size = 0x20000, scoped, tag = 'scratch operand']
  #allocation5 [shape = 'f32[64,16]{1,0:T(8,128)}', space=vmem, size = 0x8000, scoped, tag = 'scratch operand']
  #allocation6 [shape = 'f32[32,16]{1,0:T(8,128)}', space=vmem, size = 0x4000, scoped, tag = 'scratch operand']
  %s0 = inlined_call_operand.vmem [shape: f32[2,16,16,4], index: 0, kind: input, shape index: {}]
  %s1 = inlined_call_operand.vmem [shape: f32[9,4,8], index: 1, kind: input, shape index: {}]
  %s2 = inlined_call_operand.vmem [shape: f32[1,8], index: 2, kind: input, shape index: {}]
  %s3 = inlined_call_operand.vmem [shape: f32[9,8,16], index: 3, kind: input, shape index: {}]
  %s4 = inlined_call_operand.vmem [shape: f32[1,16], index: 4, kind: input, shape index: {}]
  %s5 = inlined_call_operand.vmem [shape: f32[16,16,32], index: 5, kind: input, shape index: {}]
  %s6 = inlined_call_operand.vmem [shape: f32[1,32], index: 6, kind: input, shape index: {}]
  %s7 = inlined_call_operand.vmem [shape: f32[32,32], index: 7, kind: input, shape index: {}]
  %s8 = inlined_call_operand.vmem [shape: f32[1,32], index: 8, kind: input, shape index: {}]
  %s9 = inlined_call_operand.hbm [shape: f32[2,32], index: 9, kind: output, shape index: {}]
  %s10 = sld [smem:[#allocation0]]
  $region46: #{feature_extractor_forward.1} parent=0
    _
  %s12 = ssub.s32 1, %s10
  %s13 = scalar_select 0, %s12, %s10
  $region1: #{feature_extractor_forward.1} parent=0
    #allocation7 [shape = 'u8[1024]{0}', space=vmem, size = 0x400, scoped, tag = 'output window, operand 0, single buffered']
    #allocation8 [shape = 's32[1]{0}', space=sflag, size = 0x4, scoped, tag = 'scoped memory for feature_extractor_forward.1']
    %14 = vsyncpa [#allocation8], 0
    // Predicated region
    $region2: #{feature_extractor_forward.1} parent=1 // pred_check
      _
    $region3: #{feature_extractor_forward.1} parent=1 // pred_check_branch
      %16 = sbr.rel (0) target = $region5
    $region4: #{feature_extractor_forward.1} parent=1 // pred_region
      _
    $region5: #{feature_extractor_forward.1} parent=1 // pred_fallthru
      _
    // Predicated region
    $region6: #{feature_extractor_forward.1} parent=1 // pred_check
      _
    $region7: #{feature_extractor_forward.1} parent=1 // pred_check_branch
      %18 = sbr.rel (0) target = $region9
    $region8: #{feature_extractor_forward.1} parent=1 // pred_region
      _
    $region9: #{feature_extractor_forward.1} parent=1 // pred_fallthru
      _
    // Predicated region
    $region10: #{feature_extractor_forward.1} parent=1 // pred_check
      _
    $region11: #{feature_extractor_forward.1} parent=1 // pred_check_branch
      %20 = sbr.rel (0) target = $region13
    $region12: #{feature_extractor_forward.1} parent=1 // pred_region
      _
    $region13: #{feature_extractor_forward.1} parent=1 // pred_fallthru
      _
    // Predicated region
    $region14: #{feature_extractor_forward.1} parent=1 // pred_check
      _
    $region15: #{feature_extractor_forward.1} parent=1 // pred_check_branch
      %22 = sbr.rel (0) target = $region17
    $region16: #{feature_extractor_forward.1} parent=1 // pred_region
      _
    $region17: #{feature_extractor_forward.1} parent=1 // pred_fallthru
      _
    // Predicated region
    $region18: #{feature_extractor_forward.1} parent=1 // pred_check
      _
    $region19: #{feature_extractor_forward.1} parent=1 // pred_check_branch
      %24 = sbr.rel (0) target = $region21
    $region20: #{feature_extractor_forward.1} parent=1 // pred_region
      _
    $region21: #{feature_extractor_forward.1} parent=1 // pred_fallthru
      _
    // Predicated region
    $region22: #{feature_extractor_forward.1} parent=1 // pred_check
      _
    $region23: #{feature_extractor_forward.1} parent=1 // pred_check_branch
      %26 = sbr.rel (0) target = $region25
    $region24: #{feature_extractor_forward.1} parent=1 // pred_region
      _
    $region25: #{feature_extractor_forward.1} parent=1 // pred_fallthru
      _
    // Predicated region
    $region26: #{feature_extractor_forward.1} parent=1 // pred_check
      _
    $region27: #{feature_extractor_forward.1} parent=1 // pred_check_branch
      %28 = sbr.rel (0) target = $region29
    $region28: #{feature_extractor_forward.1} parent=1 // pred_region
      _
    $region29: #{feature_extractor_forward.1} parent=1 // pred_fallthru
      _
    // Predicated region
    $region30: #{feature_extractor_forward.1} parent=1 // pred_check
      _
    $region31: #{feature_extractor_forward.1} parent=1 // pred_check_branch
      %30 = sbr.rel (0) target = $region33
    $region32: #{feature_extractor_forward.1} parent=1 // pred_region
      _
    $region33: #{feature_extractor_forward.1} parent=1 // pred_fallthru
      _
    // Predicated region
    $region34: #{feature_extractor_forward.1} parent=1 // pred_check
      _
    $region35: #{feature_extractor_forward.1} parent=1 // pred_check_branch
      %32 = sbr.rel (0) target = $region37
    $region36: #{feature_extractor_forward.1} parent=1 // pred_region
      _
    $region37: #{feature_extractor_forward.1} parent=1 // pred_fallthru
      _
    %vm33 = vcmask 31744
    %34 = vst.msk [vmem:[#allocation2] sm:$0xff] %vm33, 0.0
    %35 = vst.msk [vmem:[#allocation2 + $0x8] sm:$0xff] %vm33, 0.0
    %vm36 = vcmask 25600
    %37 = vst.msk [vmem:[#allocation2 + $0x10] sm:$0x3] %vm36, 0.0
    %38 = vst.msk [vmem:[#allocation2 + $0x18] sm:$0xff] %vm33, 0.0
    %39 = vst.msk [vmem:[#allocation2 + $0x20] sm:$0xff] %vm33, 0.0
    %40 = vst.msk [vmem:[#allocation2 + $0x28] sm:$0x3] %vm36, 0.0
    %41 = vst.msk [vmem:[#allocation2 + $0x30] sm:$0xff] %vm33, 0.0
    %42 = vst.msk [vmem:[#allocation2 + $0x38] sm:$0xff] %vm33, 0.0
    %43 = vst.msk [vmem:[#allocation2 + $0x40] sm:$0x3] %vm36, 0.0
    %44 = vst.msk [vmem:[#allocation2 + $0x48] sm:$0xff] %vm33, 0.0
    %45 = vst.msk [vmem:[#allocation2 + $0x50] sm:$0xff] %vm33, 0.0
    %46 = vst.msk [vmem:[#allocation2 + $0x58] sm:$0x3] %vm36, 0.0
    %47 = vst.msk [vmem:[#allocation2 + $0x60] sm:$0xff] %vm33, 0.0
    %48 = vst.msk [vmem:[#allocation2 + $0x68] sm:$0xff] %vm33, 0.0
    %49 = vst.msk [vmem:[#allocation2 + $0x70] sm:$0x3] %vm36, 0.0
    %50 = vst.msk [vmem:[#allocation2 + $0x78] sm:$0xff] %vm33, 0.0
    %51 = vst.msk [vmem:[#allocation2 + $0x80] sm:$0xff] %vm33, 0.0
    %52 = vst.msk [vmem:[#allocation2 + $0x88] sm:$0x3] %vm36, 0.0
    %53 = vst.msk [vmem:[#allocation2 + $0x90] sm:$0xff] %vm33, 0.0
    %54 = vst.msk [vmem:[#allocation2 + $0x98] sm:$0xff] %vm33, 0.0
    %55 = vst.msk [vmem:[#allocation2 + $0xa0] sm:$0x3] %vm36, 0.0
    %56 = vst.msk [vmem:[#allocation2 + $0xa8] sm:$0xff] %vm33, 0.0
    %57 = vst.msk [vmem:[#allocation2 + $0xb0] sm:$0xff] %vm33, 0.0
    %58 = vst.msk [vmem:[#allocation2 + $0xb8] sm:$0x3] %vm36, 0.0
    %59 = vst.msk [vmem:[#allocation2 + $0xc0] sm:$0xff] %vm33, 0.0
    %60 = vst.msk [vmem:[#allocation2 + $0xc8] sm:$0xff] %vm33, 0.0
    %61 = vst.msk [vmem:[#allocation2 + $0xd0] sm:$0x3] %vm36, 0.0
    %62 = vst.msk [vmem:[#allocation2 + $0xd8] sm:$0xff] %vm33, 0.0
    %63 = vst.msk [vmem:[#allocation2 + $0xe0] sm:$0xff] %vm33, 0.0
    %64 = vst.msk [vmem:[#allocation2 + $0xe8] sm:$0x3] %vm36, 0.0
    %65 = vst.msk [vmem:[#allocation2 + $0xf0] sm:$0xff] %vm33, 0.0
    %66 = vst.msk [vmem:[#allocation2 + $0xf8] sm:$0xff] %vm33, 0.0
    %67 = vst.msk [vmem:[#allocation2 + $0x100] sm:$0x3] %vm36, 0.0
    %68 = vst.msk [vmem:[#allocation2 + $0x108] sm:$0xff] %vm33, 0.0
    %69 = vst.msk [vmem:[#allocation2 + $0x110] sm:$0xff] %vm33, 0.0
    %70 = vst.msk [vmem:[#allocation2 + $0x118] sm:$0x3] %vm36, 0.0
    %71 = vst.msk [vmem:[#allocation2 + $0x120] sm:$0xff] %vm33, 0.0
    %72 = vst.msk [vmem:[#allocation2 + $0x128] sm:$0xff] %vm33, 0.0
    %73 = vst.msk [vmem:[#allocation2 + $0x130] sm:$0x3] %vm36, 0.0
    %74 = vst.msk [vmem:[#allocation2 + $0x138] sm:$0xff] %vm33, 0.0
    %75 = vst.msk [vmem:[#allocation2 + $0x140] sm:$0xff] %vm33, 0.0
    %76 = vst.msk [vmem:[#allocation2 + $0x148] sm:$0x3] %vm36, 0.0
    %77 = vst.msk [vmem:[#allocation2 + $0x150] sm:$0xff] %vm33, 0.0
    %78 = vst.msk [vmem:[#allocation2 + $0x158] sm:$0xff] %vm33, 0.0
    %79 = vst.msk [vmem:[#allocation2 + $0x160] sm:$0x3] %vm36, 0.0
    %80 = vst.msk [vmem:[#allocation2 + $0x168] sm:$0xff] %vm33, 0.0
    %81 = vst.msk [vmem:[#allocation2 + $0x170] sm:$0xff] %vm33, 0.0
    %82 = vst.msk [vmem:[#allocation2 + $0x178] sm:$0x3] %vm36, 0.0
    %83 = vst.msk [vmem:[#allocation2 + $0x180] sm:$0xff] %vm33, 0.0
    %84 = vst.msk [vmem:[#allocation2 + $0x188] sm:$0xff] %vm33, 0.0
    %85 = vst.msk [vmem:[#allocation2 + $0x190] sm:$0x3] %vm36, 0.0
    %86 = vst.msk [vmem:[#allocation2 + $0x198] sm:$0xff] %vm33, 0.0
    %87 = vst.msk [vmem:[#allocation2 + $0x1a0] sm:$0xff] %vm33, 0.0
    %88 = vst.msk [vmem:[#allocation2 + $0x1a8] sm:$0x3] %vm36, 0.0
    %89 = vst.msk [vmem:[#allocation2 + $0x1b0] sm:$0xff] %vm33, 0.0
    %90 = vst.msk [vmem:[#allocation2 + $0x1b8] sm:$0xff] %vm33, 0.0
    %91 = vst.msk [vmem:[#allocation2 + $0x1c0] sm:$0x3] %vm36, 0.0
    %92 = vst.msk [vmem:[#allocation2 + $0x1c8] sm:$0xff] %vm33, 0.0
    %93 = vst.msk [vmem:[#allocation2 + $0x1d0] sm:$0xff] %vm33, 0.0
    %94 = vst.msk [vmem:[#allocation2 + $0x1d8] sm:$0x3] %vm36, 0.0
    %95 = vst.msk [vmem:[#allocation2 + $0x1e0] sm:$0xff] %vm33, 0.0
    %96 = vst.msk [vmem:[#allocation2 + $0x1e8] sm:$0xff] %vm33, 0.0
    %97 = vst.msk [vmem:[#allocation2 + $0x1f0] sm:$0x3] %vm36, 0.0
    %98 = vst.msk [vmem:[#allocation2 + $0x1f8] sm:$0xff] %vm33, 0.0
    %99 = vst.msk [vmem:[#allocation2 + $0x200] sm:$0xff] %vm33, 0.0
    %100 = vst.msk [vmem:[#allocation2 + $0x208] sm:$0x3] %vm36, 0.0
    %101 = vst.msk [vmem:[#allocation2 + $0x210] sm:$0xff] %vm33, 0.0
    %102 = vst.msk [vmem:[#allocation2 + $0x218] sm:$0xff] %vm33, 0.0
    %103 = vst.msk [vmem:[#allocation2 + $0x220] sm:$0x3] %vm36, 0.0
    %104 = vst.msk [vmem:[#allocation2 + $0x228] sm:$0xff] %vm33, 0.0
    %105 = vst.msk [vmem:[#allocation2 + $0x230] sm:$0xff] %vm33, 0.0
    %106 = vst.msk [vmem:[#allocation2 + $0x238] sm:$0x3] %vm36, 0.0
    %107 = vst.msk [vmem:[#allocation2 + $0x240] sm:$0xff] %vm33, 0.0
    %108 = vst.msk [vmem:[#allocation2 + $0x248] sm:$0xff] %vm33, 0.0
    %109 = vst.msk [vmem:[#allocation2 + $0x250] sm:$0x3] %vm36, 0.0
    %110 = vst.msk [vmem:[#allocation2 + $0x258] sm:$0xff] %vm33, 0.0
    %111 = vst.msk [vmem:[#allocation2 + $0x260] sm:$0xff] %vm33, 0.0
    %112 = vst.msk [vmem:[#allocation2 + $0x268] sm:$0x3] %vm36, 0.0
    %113 = vst.msk [vmem:[#allocation2 + $0x270] sm:$0xff] %vm33, 0.0
    %114 = vst.msk [vmem:[#allocation2 + $0x278] sm:$0xff] %vm33, 0.0
    %115 = vst.msk [vmem:[#allocation2 + $0x280] sm:$0x3] %vm36, 0.0
    %116 = vst.msk [vmem:[#allocation2 + $0x288] sm:$0xff] %vm33, 0.0
    %117 = vst.msk [vmem:[#allocation2 + $0x290] sm:$0xff] %vm33, 0.0
    %118 = vst.msk [vmem:[#allocation2 + $0x298] sm:$0x3] %vm36, 0.0
    %119 = vst.msk [vmem:[#allocation2 + $0x2a0] sm:$0xff] %vm33, 0.0
    %120 = vst.msk [vmem:[#allocation2 + $0x2a8] sm:$0xff] %vm33, 0.0
    %121 = vst.msk [vmem:[#allocation2 + $0x2b0] sm:$0x3] %vm36, 0.0
    %122 = vst.msk [vmem:[#allocation2 + $0x2b8] sm:$0xff] %vm33, 0.0
    %123 = vst.msk [vmem:[#allocation2 + $0x2c0] sm:$0xff] %vm33, 0.0
    %124 = vst.msk [vmem:[#allocation2 + $0x2c8] sm:$0x3] %vm36, 0.0
    %125 = vst.msk [vmem:[#allocation2 + $0x2d0] sm:$0xff] %vm33, 0.0
    %126 = vst.msk [vmem:[#allocation2 + $0x2d8] sm:$0xff] %vm33, 0.0
    %127 = vst.msk [vmem:[#allocation2 + $0x2e0] sm:$0x3] %vm36, 0.0
    %128 = vst.msk [vmem:[#allocation2 + $0x2e8] sm:$0xff] %vm33, 0.0
    %129 = vst.msk [vmem:[#allocation2 + $0x2f0] sm:$0xff] %vm33, 0.0
    %130 = vst.msk [vmem:[#allocation2 + $0x2f8] sm:$0x3] %vm36, 0.0
    %131 = vst.msk [vmem:[#allocation2 + $0x300] sm:$0xff] %vm33, 0.0
    %132 = vst.msk [vmem:[#allocation2 + $0x308] sm:$0xff] %vm33, 0.0
    %133 = vst.msk [vmem:[#allocation2 + $0x310] sm:$0x3] %vm36, 0.0
    %134 = vst.msk [vmem:[#allocation2 + $0x318] sm:$0xff] %vm33, 0.0
    %135 = vst.msk [vmem:[#allocation2 + $0x320] sm:$0xff] %vm33, 0.0
    %136 = vst.msk [vmem:[#allocation2 + $0x328] sm:$0x3] %vm36, 0.0
    %137 = vst.msk [vmem:[#allocation2 + $0x330] sm:$0xff] %vm33, 0.0
    %138 = vst.msk [vmem:[#allocation2 + $0x338] sm:$0xff] %vm33, 0.0
    %139 = vst.msk [vmem:[#allocation2 + $0x340] sm:$0x3] %vm36, 0.0
    %140 = vst.msk [vmem:[#allocation2 + $0x348] sm:$0xff] %vm33, 0.0
    %141 = vst.msk [vmem:[#allocation2 + $0x350] sm:$0xff] %vm33, 0.0
    %142 = vst.msk [vmem:[#allocation2 + $0x358] sm:$0x3] %vm36, 0.0
    %v143 = vld [vmem:[%s0] sm:$0xff]
    %v144 = vld [vmem:[%s0 + $0x8] sm:$0xff]
    %v145 = vld [vmem:[%s0 + $0x10] sm:$0xff]
    %v146 = vld [vmem:[%s0 + $0x18] sm:$0xff]
    %v147 = vld [vmem:[%s0 + $0x20] sm:$0xff]
    %v148 = vld [vmem:[%s0 + $0x28] sm:$0xff]
    %v149 = vld [vmem:[%s0 + $0x30] sm:$0xff]
    %v150 = vld [vmem:[%s0 + $0x38] sm:$0xff]
    %v151 = vld [vmem:[%s0 + $0x40] sm:$0xff]
    %v152 = vld [vmem:[%s0 + $0x48] sm:$0xff]
    %v153 = vld [vmem:[%s0 + $0x50] sm:$0xff]
    %v154 = vld [vmem:[%s0 + $0x58] sm:$0xff]
    %v155 = vld [vmem:[%s0 + $0x60] sm:$0xff]
    %v156 = vld [vmem:[%s0 + $0x68] sm:$0xff]
    %v157 = vld [vmem:[%s0 + $0x70] sm:$0xff]
    %v158 = vld [vmem:[%s0 + $0x78] sm:$0xff]
    %v159 = vld [vmem:[%s0 + $0x80] sm:$0xff]
    %v160 = vld [vmem:[%s0 + $0x88] sm:$0xff]
    %v161 = vld [vmem:[%s0 + $0x90] sm:$0xff]
    %v162 = vld [vmem:[%s0 + $0x98] sm:$0xff]
    %v163 = vld [vmem:[%s0 + $0xa0] sm:$0xff]
    %v164 = vld [vmem:[%s0 + $0xa8] sm:$0xff]
    %v165 = vld [vmem:[%s0 + $0xb0] sm:$0xff]
    %v166 = vld [vmem:[%s0 + $0xb8] sm:$0xff]
    %v167 = vld [vmem:[%s0 + $0xc0] sm:$0xff]
    %v168 = vld [vmem:[%s0 + $0xc8] sm:$0xff]
    %v169 = vld [vmem:[%s0 + $0xd0] sm:$0xff]
    %v170 = vld [vmem:[%s0 + $0xd8] sm:$0xff]
    %v171 = vld [vmem:[%s0 + $0xe0] sm:$0xff]
    %v172 = vld [vmem:[%s0 + $0xe8] sm:$0xff]
    %v173 = vld [vmem:[%s0 + $0xf0] sm:$0xff]
    %v174 = vld [vmem:[%s0 + $0xf8] sm:$0xff]
    %v175 = vld [vmem:[%s0 + $0x100] sm:$0xff]
    %v176 = vld [vmem:[%s0 + $0x108] sm:$0xff]
    %v177 = vld [vmem:[%s0 + $0x110] sm:$0xff]
    %v178 = vld [vmem:[%s0 + $0x118] sm:$0xff]
    %v179 = vld [vmem:[%s0 + $0x120] sm:$0xff]
    %v180 = vld [vmem:[%s0 + $0x128] sm:$0xff]
    %v181 = vld [vmem:[%s0 + $0x130] sm:$0xff]
    %v182 = vld [vmem:[%s0 + $0x138] sm:$0xff]
    %v183 = vld [vmem:[%s0 + $0x140] sm:$0xff]
    %v184 = vld [vmem:[%s0 + $0x148] sm:$0xff]
    %v185 = vld [vmem:[%s0 + $0x150] sm:$0xff]
    %v186 = vld [vmem:[%s0 + $0x158] sm:$0xff]
    %v187 = vld [vmem:[%s0 + $0x160] sm:$0xff]
    %v188 = vld [vmem:[%s0 + $0x168] sm:$0xff]
    %v189 = vld [vmem:[%s0 + $0x170] sm:$0xff]
    %v190 = vld [vmem:[%s0 + $0x178] sm:$0xff]
    %v191 = vld [vmem:[%s0 + $0x180] sm:$0xff]
    %v192 = vld [vmem:[%s0 + $0x188] sm:$0xff]
    %v193 = vld [vmem:[%s0 + $0x190] sm:$0xff]
    %v194 = vld [vmem:[%s0 + $0x198] sm:$0xff]
    %v195 = vld [vmem:[%s0 + $0x1a0] sm:$0xff]
    %v196 = vld [vmem:[%s0 + $0x1a8] sm:$0xff]
    %v197 = vld [vmem:[%s0 + $0x1b0] sm:$0xff]
    %v198 = vld [vmem:[%s0 + $0x1b8] sm:$0xff]
    %v199 = vld [vmem:[%s0 + $0x1c0] sm:$0xff]
    %v200 = vld [vmem:[%s0 + $0x1c8] sm:$0xff]
    %v201 = vld [vmem:[%s0 + $0x1d0] sm:$0xff]
    %v202 = vld [vmem:[%s0 + $0x1d8] sm:$0xff]
    %v203 = vld [vmem:[%s0 + $0x1e0] sm:$0xff]
    %v204 = vld [vmem:[%s0 + $0x1e8] sm:$0xff]
    %v205 = vld [vmem:[%s0 + $0x1f0] sm:$0xff]
    %v206 = vld [vmem:[%s0 + $0x1f8] sm:$0xff]
    %s207 = scalar_lea.vmem [#allocation2], 24
    %208 = vst.msk [vmem:[%s207 + $0x1] sm:$0xff] %vm33, %v143
    %209 = vst.msk [vmem:[%s207 + $0x9] sm:$0xff] %vm33, %v144
    %210 = vst.msk [vmem:[%s207 + $0x19] sm:$0xff] %vm33, %v145
    %211 = vst.msk [vmem:[%s207 + $0x21] sm:$0xff] %vm33, %v146
    %212 = vst.msk [vmem:[%s207 + $0x31] sm:$0xff] %vm33, %v147
    %213 = vst.msk [vmem:[%s207 + $0x39] sm:$0xff] %vm33, %v148
    %214 = vst.msk [vmem:[%s207 + $0x49] sm:$0xff] %vm33, %v149
    %215 = vst.msk [vmem:[%s207 + $0x51] sm:$0xff] %vm33, %v150
    %216 = vst.msk [vmem:[%s207 + $0x61] sm:$0xff] %vm33, %v151
    %217 = vst.msk [vmem:[%s207 + $0x69] sm:$0xff] %vm33, %v152
    %218 = vst.msk [vmem:[%s207 + $0x79] sm:$0xff] %vm33, %v153
    %219 = vst.msk [vmem:[%s207 + $0x81] sm:$0xff] %vm33, %v154
    %220 = vst.msk [vmem:[%s207 + $0x91] sm:$0xff] %vm33, %v155
    %221 = vst.msk [vmem:[%s207 + $0x99] sm:$0xff] %vm33, %v156
    %222 = vst.msk [vmem:[%s207 + $0xa9] sm:$0xff] %vm33, %v157
    %223 = vst.msk [vmem:[%s207 + $0xb1] sm:$0xff] %vm33, %v158
    %224 = vst.msk [vmem:[%s207 + $0xc1] sm:$0xff] %vm33, %v159
    %225 = vst.msk [vmem:[%s207 + $0xc9] sm:$0xff] %vm33, %v160
    %226 = vst.msk [vmem:[%s207 + $0xd9] sm:$0xff] %vm33, %v161
    %227 = vst.msk [vmem:[%s207 + $0xe1] sm:$0xff] %vm33, %v162
    %228 = vst.msk [vmem:[%s207 + $0xf1] sm:$0xff] %vm33, %v163
    %229 = vst.msk [vmem:[%s207 + $0xf9] sm:$0xff] %vm33, %v164
    %230 = vst.msk [vmem:[%s207 + $0x109] sm:$0xff] %vm33, %v165
    %231 = vst.msk [vmem:[%s207 + $0x111] sm:$0xff] %vm33, %v166
    %232 = vst.msk [vmem:[%s207 + $0x121] sm:$0xff] %vm33, %v167
    %233 = vst.msk [vmem:[%s207 + $0x129] sm:$0xff] %vm33, %v168
    %234 = vst.msk [vmem:[%s207 + $0x139] sm:$0xff] %vm33, %v169
    %235 = vst.msk [vmem:[%s207 + $0x141] sm:$0xff] %vm33, %v170
    %236 = vst.msk [vmem:[%s207 + $0x151] sm:$0xff] %vm33, %v171
    %237 = vst.msk [vmem:[%s207 + $0x159] sm:$0xff] %vm33, %v172
    %238 = vst.msk [vmem:[%s207 + $0x169] sm:$0xff] %vm33, %v173
    %239 = vst.msk [vmem:[%s207 + $0x171] sm:$0xff] %vm33, %v174
    %240 = vst.msk [vmem:[%s207 + $0x1b1] sm:$0xff] %vm33, %v175
    %241 = vst.msk [vmem:[%s207 + $0x1b9] sm:$0xff] %vm33, %v176
    %242 = vst.msk [vmem:[%s207 + $0x1c9] sm:$0xff] %vm33, %v177
    %243 = vst.msk [vmem:[%s207 + $0x1d1] sm:$0xff] %vm33, %v178
    %244 = vst.msk [vmem:[%s207 + $0x1e1] sm:$0xff] %vm33, %v179
    %245 = vst.msk [vmem:[%s207 + $0x1e9] sm:$0xff] %vm33, %v180
    %246 = vst.msk [vmem:[%s207 + $0x1f9] sm:$0xff] %vm33, %v181
    %247 = vst.msk [vmem:[%s207 + $0x201] sm:$0xff] %vm33, %v182
    %248 = vst.msk [vmem:[%s207 + $0x211] sm:$0xff] %vm33, %v183
    %249 = vst.msk [vmem:[%s207 + $0x219] sm:$0xff] %vm33, %v184
    %250 = vst.msk [vmem:[%s207 + $0x229] sm:$0xff] %vm33, %v185
    %251 = vst.msk [vmem:[%s207 + $0x231] sm:$0xff] %vm33, %v186
    %252 = vst.msk [vmem:[%s207 + $0x241] sm:$0xff] %vm33, %v187
    %253 = vst.msk [vmem:[%s207 + $0x249] sm:$0xff] %vm33, %v188
    %254 = vst.msk [vmem:[%s207 + $0x259] sm:$0xff] %vm33, %v189
    %255 = vst.msk [vmem:[%s207 + $0x261] sm:$0xff] %vm33, %v190
    %256 = vst.msk [vmem:[%s207 + $0x271] sm:$0xff] %vm33, %v191
    %257 = vst.msk [vmem:[%s207 + $0x279] sm:$0xff] %vm33, %v192
    %258 = vst.msk [vmem:[%s207 + $0x289] sm:$0xff] %vm33, %v193
    %259 = vst.msk [vmem:[%s207 + $0x291] sm:$0xff] %vm33, %v194
    %260 = vst.msk [vmem:[%s207 + $0x2a1] sm:$0xff] %vm33, %v195
    %261 = vst.msk [vmem:[%s207 + $0x2a9] sm:$0xff] %vm33, %v196
    %262 = vst.msk [vmem:[%s207 + $0x2b9] sm:$0xff] %vm33, %v197
    %263 = vst.msk [vmem:[%s207 + $0x2c1] sm:$0xff] %vm33, %v198
    %264 = vst.msk [vmem:[%s207 + $0x2d1] sm:$0xff] %vm33, %v199
    %265 = vst.msk [vmem:[%s207 + $0x2d9] sm:$0xff] %vm33, %v200
    %266 = vst.msk [vmem:[%s207 + $0x2e9] sm:$0xff] %vm33, %v201
    %267 = vst.msk [vmem:[%s207 + $0x2f1] sm:$0xff] %vm33, %v202
    %268 = vst.msk [vmem:[%s207 + $0x301] sm:$0xff] %vm33, %v203
    %269 = vst.msk [vmem:[%s207 + $0x309] sm:$0xff] %vm33, %v204
    %270 = vst.msk [vmem:[%s207 + $0x319] sm:$0xff] %vm33, %v205
    %271 = vst.msk [vmem:[%s207 + $0x321] sm:$0xff] %vm33, %v206
    %v272 = vld [vmem:[#allocation2] sm:$0xff]
    %v273 = vld [vmem:[#allocation2 + $0x8] sm:$0xff]
    %v274 = vld [vmem:[#allocation2 + $0x18] sm:$0xff]
    %v275 = vld [vmem:[#allocation2 + $0x20] sm:$0xff]
    %v276 = vld [vmem:[#allocation2 + $0x30] sm:$0xff]
    %v277 = vld [vmem:[#allocation2 + $0x38] sm:$0xff]
    %v278 = vld [vmem:[#allocation2 + $0x48] sm:$0xff]
    %v279 = vld [vmem:[#allocation2 + $0x50] sm:$0xff]
    %v280 = vld [vmem:[#allocation2 + $0x60] sm:$0xff]
    %v281 = vld [vmem:[#allocation2 + $0x68] sm:$0xff]
    %v282 = vld [vmem:[#allocation2 + $0x78] sm:$0xff]
    %v283 = vld [vmem:[#allocation2 + $0x80] sm:$0xff]
    %v284 = vld [vmem:[#allocation2 + $0x90] sm:$0xff]
    %v285 = vld [vmem:[#allocation2 + $0x98] sm:$0xff]
    %v286 = vld [vmem:[#allocation2 + $0xa8] sm:$0xff]
    %v287 = vld [vmem:[#allocation2 + $0xb0] sm:$0xff]
    %v288 = vld [vmem:[#allocation2 + $0xc0] sm:$0xff]
    %v289 = vld [vmem:[#allocation2 + $0xc8] sm:$0xff]
    %v290 = vld [vmem:[#allocation2 + $0xd8] sm:$0xff]
    %v291 = vld [vmem:[#allocation2 + $0xe0] sm:$0xff]
    %v292 = vld [vmem:[#allocation2 + $0xf0] sm:$0xff]
    %v293 = vld [vmem:[#allocation2 + $0xf8] sm:$0xff]
    %v294 = vld [vmem:[#allocation2 + $0x108] sm:$0xff]
    %v295 = vld [vmem:[#allocation2 + $0x110] sm:$0xff]
    %v296 = vld [vmem:[#allocation2 + $0x120] sm:$0xff]
    %v297 = vld [vmem:[#allocation2 + $0x128] sm:$0xff]
    %v298 = vld [vmem:[#allocation2 + $0x138] sm:$0xff]
    %v299 = vld [vmem:[#allocation2 + $0x140] sm:$0xff]
    %v300 = vld [vmem:[#allocation2 + $0x150] sm:$0xff]
    %v301 = vld [vmem:[#allocation2 + $0x158] sm:$0xff]
    %v302 = vld [vmem:[#allocation2 + $0x168] sm:$0xff]
    %v303 = vld [vmem:[#allocation2 + $0x170] sm:$0xff]
    %v304 = vld [vmem:[#allocation2 + $0x1b0] sm:$0xff]
    %v305 = vld [vmem:[#allocation2 + $0x1b8] sm:$0xff]
    %v306 = vld [vmem:[#allocation2 + $0x1c8] sm:$0xff]
    %v307 = vld [vmem:[#allocation2 + $0x1d0] sm:$0xff]
    %v308 = vld [vmem:[#allocation2 + $0x1e0] sm:$0xff]
    %v309 = vld [vmem:[#allocation2 + $0x1e8] sm:$0xff]
    %v310 = vld [vmem:[#allocation2 + $0x1f8] sm:$0xff]
    %v311 = vld [vmem:[#allocation2 + $0x200] sm:$0xff]
    %v312 = vld [vmem:[#allocation2 + $0x210] sm:$0xff]
    %v313 = vld [vmem:[#allocation2 + $0x218] sm:$0xff]
    %v314 = vld [vmem:[#allocation2 + $0x228] sm:$0xff]
    %v315 = vld [vmem:[#allocation2 + $0x230] sm:$0xff]
    %v316 = vld [vmem:[#allocation2 + $0x240] sm:$0xff]
    %v317 = vld [vmem:[#allocation2 + $0x248] sm:$0xff]
    %v318 = vld [vmem:[#allocation2 + $0x258] sm:$0xff]
    %v319 = vld [vmem:[#allocation2 + $0x260] sm:$0xff]
    %v320 = vld [vmem:[#allocation2 + $0x270] sm:$0xff]
    %v321 = vld [vmem:[#allocation2 + $0x278] sm:$0xff]
    %v322 = vld [vmem:[#allocation2 + $0x288] sm:$0xff]
    %v323 = vld [vmem:[#allocation2 + $0x290] sm:$0xff]
    %v324 = vld [vmem:[#allocation2 + $0x2a0] sm:$0xff]
    %v325 = vld [vmem:[#allocation2 + $0x2a8] sm:$0xff]
    %v326 = vld [vmem:[#allocation2 + $0x2b8] sm:$0xff]
    %v327 = vld [vmem:[#allocation2 + $0x2c0] sm:$0xff]
    %v328 = vld [vmem:[#allocation2 + $0x2d0] sm:$0xff]
    %v329 = vld [vmem:[#allocation2 + $0x2d8] sm:$0xff]
    %v330 = vld [vmem:[#allocation2 + $0x2e8] sm:$0xff]
    %v331 = vld [vmem:[#allocation2 + $0x2f0] sm:$0xff]
    %v332 = vld [vmem:[#allocation2 + $0x300] sm:$0xff]
    %v333 = vld [vmem:[#allocation2 + $0x308] sm:$0xff]
    %v334 = vld [vmem:[#allocation2 + $0x318] sm:$0xff]
    %v335 = vld [vmem:[#allocation2 + $0x320] sm:$0xff]
    %v336 = vld [vmem:[%s1] sm:$0xf]
    %v337 = vld [vmem:[#allocation2 + $0x1] sm:$0xff]
    %v338 = vld [vmem:[#allocation2 + $0x9] sm:$0xff]
    %v339 = vld [vmem:[#allocation2 + $0x19] sm:$0xff]
    %v340 = vld [vmem:[#allocation2 + $0x21] sm:$0xff]
    %v341 = vld [vmem:[#allocation2 + $0x31] sm:$0xff]
    %v342 = vld [vmem:[#allocation2 + $0x39] sm:$0xff]
    %v343 = vld [vmem:[#allocation2 + $0x49] sm:$0xff]
    %v344 = vld [vmem:[#allocation2 + $0x51] sm:$0xff]
    %v345 = vld [vmem:[#allocation2 + $0x61] sm:$0xff]
    %v346 = vld [vmem:[#allocation2 + $0x69] sm:$0xff]
    %v347 = vld [vmem:[#allocation2 + $0x79] sm:$0xff]
    %v348 = vld [vmem:[#allocation2 + $0x81] sm:$0xff]
    %v349 = vld [vmem:[#allocation2 + $0x91] sm:$0xff]
    %v350 = vld [vmem:[#allocation2 + $0x99] sm:$0xff]
    %v351 = vld [vmem:[#allocation2 + $0xa9] sm:$0xff]
    %v352 = vld [vmem:[#allocation2 + $0xb1] sm:$0xff]
    %v353 = vld [vmem:[#allocation2 + $0xc1] sm:$0xff]
    %v354 = vld [vmem:[#allocation2 + $0xc9] sm:$0xff]
    %v355 = vld [vmem:[#allocation2 + $0xd9] sm:$0xff]
    %v356 = vld [vmem:[#allocation2 + $0xe1] sm:$0xff]
    %v357 = vld [vmem:[#allocation2 + $0xf1] sm:$0xff]
    %v358 = vld [vmem:[#allocation2 + $0xf9] sm:$0xff]
    %v359 = vld [vmem:[#allocation2 + $0x109] sm:$0xff]
    %v360 = vld [vmem:[#allocation2 + $0x111] sm:$0xff]
    %v361 = vld [vmem:[#allocation2 + $0x121] sm:$0xff]
    %v362 = vld [vmem:[#allocation2 + $0x129] sm:$0xff]
    %v363 = vld [vmem:[#allocation2 + $0x139] sm:$0xff]
    %v364 = vld [vmem:[#allocation2 + $0x141] sm:$0xff]
    %v365 = vld [vmem:[#allocation2 + $0x151] sm:$0xff]
    %v366 = vld [vmem:[#allocation2 + $0x159] sm:$0xff]
    %v367 = vld [vmem:[#allocation2 + $0x169] sm:$0xff]
    %v368 = vld [vmem:[#allocation2 + $0x171] sm:$0xff]
    %v369 = vld [vmem:[#allocation2 + $0x1b1] sm:$0xff]
    %v370 = vld [vmem:[#allocation2 + $0x1b9] sm:$0xff]
    %v371 = vld [vmem:[#allocation2 + $0x1c9] sm:$0xff]
    %v372 = vld [vmem:[#allocation2 + $0x1d1] sm:$0xff]
    %v373 = vld [vmem:[#allocation2 + $0x1e1] sm:$0xff]
    %v374 = vld [vmem:[#allocation2 + $0x1e9] sm:$0xff]
    %v375 = vld [vmem:[#allocation2 + $0x1f9] sm:$0xff]
    %v376 = vld [vmem:[#allocation2 + $0x201] sm:$0xff]
    %v377 = vld [vmem:[#allocation2 + $0x211] sm:$0xff]
    %v378 = vld [vmem:[#allocation2 + $0x219] sm:$0xff]
    %v379 = vld [vmem:[#allocation2 + $0x229] sm:$0xff]
    %v380 = vld [vmem:[#allocation2 + $0x231] sm:$0xff]
    %v381 = vld [vmem:[#allocation2 + $0x241] sm:$0xff]
    %v382 = vld [vmem:[#allocation2 + $0x249] sm:$0xff]
    %v383 = vld [vmem:[#allocation2 + $0x259] sm:$0xff]
    %v384 = vld [vmem:[#allocation2 + $0x261] sm:$0xff]
    %v385 = vld [vmem:[#allocation2 + $0x271] sm:$0xff]
    %v386 = vld [vmem:[#allocation2 + $0x279] sm:$0xff]
    %v387 = vld [vmem:[#allocation2 + $0x289] sm:$0xff]
    %v388 = vld [vmem:[#allocation2 + $0x291] sm:$0xff]
    %v389 = vld [vmem:[#allocation2 + $0x2a1] sm:$0xff]
    %v390 = vld [vmem:[#allocation2 + $0x2a9] sm:$0xff]
    %v391 = vld [vmem:[#allocation2 + $0x2b9] sm:$0xff]
    %v392 = vld [vmem:[#allocation2 + $0x2c1] sm:$0xff]
    %v393 = vld [vmem:[#allocation2 + $0x2d1] sm:$0xff]
    %v394 = vld [vmem:[#allocation2 + $0x2d9] sm:$0xff]
    %v395 = vld [vmem:[#allocation2 + $0x2e9] sm:$0xff]
    %v396 = vld [vmem:[#allocation2 + $0x2f1] sm:$0xff]
    %v397 = vld [vmem:[#allocation2 + $0x301] sm:$0xff]
    %v398 = vld [vmem:[#allocation2 + $0x309] sm:$0xff]
    %v399 = vld [vmem:[#allocation2 + $0x319] sm:$0xff]
    %v400 = vld [vmem:[#allocation2 + $0x321] sm:$0xff]
    %s401 = scalar_lea.vmem %s1, 4
    %v402 = vld [vmem:[%s401] sm:$0xf]
    %v404 = vsel %vm33, %v337, 0
    %v407 = vsel %vm33, %v338, 0
    %v410 = vsel %vm33, %v339, 0
    %v413 = vsel %vm33, %v340, 0
    %v416 = vsel %vm33, %v341, 0
    %v419 = vsel %vm33, %v342, 0
    %v422 = vsel %vm33, %v343, 0
    %v425 = vsel %vm33, %v344, 0
    %v428 = vsel %vm33, %v345, 0
    %v431 = vsel %vm33, %v346, 0
    %v434 = vsel %vm33, %v347, 0
    %v437 = vsel %vm33, %v348, 0
    %v440 = vsel %vm33, %v349, 0
    %v443 = vsel %vm33, %v350, 0
    %v446 = vsel %vm33, %v351, 0
    %v449 = vsel %vm33, %v352, 0
    %v452 = vsel %vm33, %v353, 0
    %v455 = vsel %vm33, %v354, 0
    %v458 = vsel %vm33, %v355, 0
    %v461 = vsel %vm33, %v356, 0
    %v464 = vsel %vm33, %v357, 0
    %v467 = vsel %vm33, %v358, 0
    %v470 = vsel %vm33, %v359, 0
    %v473 = vsel %vm33, %v360, 0
    %v476 = vsel %vm33, %v361, 0
    %v479 = vsel %vm33, %v362, 0
    %v482 = vsel %vm33, %v363, 0
    %v485 = vsel %vm33, %v364, 0
    %v488 = vsel %vm33, %v365, 0
    %v491 = vsel %vm33, %v366, 0
    %v494 = vsel %vm33, %v367, 0
    %v497 = vsel %vm33, %v368, 0
    %v500 = vsel %vm33, %v369, 0
    %v503 = vsel %vm33, %v370, 0
    %v506 = vsel %vm33, %v371, 0
    %v509 = vsel %vm33, %v372, 0
    %v512 = vsel %vm33, %v373, 0
    %v515 = vsel %vm33, %v374, 0
    %v518 = vsel %vm33, %v375, 0
    %v521 = vsel %vm33, %v376, 0
    %v524 = vsel %vm33, %v377, 0
    %v527 = vsel %vm33, %v378, 0
    %v530 = vsel %vm33, %v379, 0
    %v533 = vsel %vm33, %v380, 0
    %v536 = vsel %vm33, %v381, 0
    %v539 = vsel %vm33, %v382, 0
    %v542 = vsel %vm33, %v383, 0
    %v545 = vsel %vm33, %v384, 0
    %v548 = vsel %vm33, %v385, 0
    %v551 = vsel %vm33, %v386, 0
    %v554 = vsel %vm33, %v387, 0
    %v557 = vsel %vm33, %v388, 0
    %v560 = vsel %vm33, %v389, 0
    %v563 = vsel %vm33, %v390, 0
    %v566 = vsel %vm33, %v391, 0
    %v569 = vsel %vm33, %v392, 0
    %v572 = vsel %vm33, %v393, 0
    %v575 = vsel %vm33, %v394, 0
    %v578 = vsel %vm33, %v395, 0
    %v581 = vsel %vm33, %v396, 0
    %v584 = vsel %vm33, %v397, 0
    %v587 = vsel %vm33, %v398, 0
    %v590 = vsel %vm33, %v399, 0
    %v593 = vsel %vm33, %v400, 0
    %vm595 = vcmask 1043456
    %v597 = vsel %vm595, %v402, 0
    %599 = vmatpush.msra.mxu0 0.0
    %600 = vmatpush.msra.mxu0 0.0
    %601 = vmatpush.msra.mxu0 0.0
    %602 = vmatpush.msra.mxu0 0.0
    %603 = vmatpush.msra.mxu0 0.0
    %604 = vmatpush.msra.mxu0 0.0
    %605 = vmatpush.msra.mxu0 0.0
    %606 = vmatpush.msra.mxu0 0.0
    %607 = vmatpush.msra.mxu0 0.0
    %608 = vmatpush.msra.mxu0 0.0
    %609 = vmatpush.msra.mxu0 0.0
    %610 = vmatpush.msra.mxu0 0.0
    %611 = vmatpush.msra.mxu0 0.0
    %612 = vmatpush.msra.mxu0 0.0
    %613 = vmatpush.msra.mxu0 0.0
    %614 = vmatpush.msra.mxu0 %v597
    %615 = vmatmul.f32.gmra.mxu0 %v404
    %v616 = vpop.f32.mrf.mxu0
    %v617 = vadd.f32 0.0, %v616
    %618 = vmatmul.f32.gmra.mxu0 %v407
    %v619 = vpop.f32.mrf.mxu0
    %v620 = vadd.f32 0.0, %v619
    %621 = vmatmul.f32.gmra.mxu0 %v410
    %v622 = vpop.f32.mrf.mxu0
    %v623 = vadd.f32 0.0, %v622
    %624 = vmatmul.f32.gmra.mxu0 %v413
    %v625 = vpop.f32.mrf.mxu0
    %v626 = vadd.f32 0.0, %v625
    %627 = vmatmul.f32.gmra.mxu0 %v416
    %v628 = vpop.f32.mrf.mxu0
    %v629 = vadd.f32 0.0, %v628
    %630 = vmatmul.f32.gmra.mxu0 %v419
    %v631 = vpop.f32.mrf.mxu0
    %v632 = vadd.f32 0.0, %v631
    %633 = vmatmul.f32.gmra.mxu0 %v422
    %v634 = vpop.f32.mrf.mxu0
    %v635 = vadd.f32 0.0, %v634
    %636 = vmatmul.f32.gmra.mxu0 %v425
    %v637 = vpop.f32.mrf.mxu0
    %v638 = vadd.f32 0.0, %v637
    %639 = vmatmul.f32.gmra.mxu0 %v428
    %v640 = vpop.f32.mrf.mxu0
    %v641 = vadd.f32 0.0, %v640
    %642 = vmatmul.f32.gmra.mxu0 %v431
    %v643 = vpop.f32.mrf.mxu0
    %v644 = vadd.f32 0.0, %v643
    %645 = vmatmul.f32.gmra.mxu0 %v434
    %v646 = vpop.f32.mrf.mxu0
    %v647 = vadd.f32 0.0, %v646
    %648 = vmatmul.f32.gmra.mxu0 %v437
    %v649 = vpop.f32.mrf.mxu0
    %v650 = vadd.f32 0.0, %v649
    %651 = vmatmul.f32.gmra.mxu0 %v440
    %v652 = vpop.f32.mrf.mxu0
    %v653 = vadd.f32 0.0, %v652
    %654 = vmatmul.f32.gmra.mxu0 %v443
    %v655 = vpop.f32.mrf.mxu0
    %v656 = vadd.f32 0.0, %v655
    %657 = vmatmul.f32.gmra.mxu0 %v446
    %v658 = vpop.f32.mrf.mxu0
    %v659 = vadd.f32 0.0, %v658
    %660 = vmatmul.f32.gmra.mxu0 %v449
    %v661 = vpop.f32.mrf.mxu0
    %v662 = vadd.f32 0.0, %v661
    %663 = vmatmul.f32.gmra.mxu0 %v452
    %v664 = vpop.f32.mrf.mxu0
    %v665 = vadd.f32 0.0, %v664
    %666 = vmatmul.f32.gmra.mxu0 %v455
    %v667 = vpop.f32.mrf.mxu0
    %v668 = vadd.f32 0.0, %v667
    %669 = vmatmul.f32.gmra.mxu0 %v458
    %v670 = vpop.f32.mrf.mxu0
    %v671 = vadd.f32 0.0, %v670
    %672 = vmatmul.f32.gmra.mxu0 %v461
    %v673 = vpop.f32.mrf.mxu0
    %v674 = vadd.f32 0.0, %v673
    %675 = vmatmul.f32.gmra.mxu0 %v464
    %v676 = vpop.f32.mrf.mxu0
    %v677 = vadd.f32 0.0, %v676
    %678 = vmatmul.f32.gmra.mxu0 %v467
    %v679 = vpop.f32.mrf.mxu0
    %v680 = vadd.f32 0.0, %v679
    %681 = vmatmul.f32.gmra.mxu0 %v470
    %v682 = vpop.f32.mrf.mxu0
    %v683 = vadd.f32 0.0, %v682
    %684 = vmatmul.f32.gmra.mxu0 %v473
    %v685 = vpop.f32.mrf.mxu0
    %v686 = vadd.f32 0.0, %v685
    %687 = vmatmul.f32.gmra.mxu0 %v476
    %v688 = vpop.f32.mrf.mxu0
    %v689 = vadd.f32 0.0, %v688
    %690 = vmatmul.f32.gmra.mxu0 %v479
    %v691 = vpop.f32.mrf.mxu0
    %v692 = vadd.f32 0.0, %v691
    %693 = vmatmul.f32.gmra.mxu0 %v482
    %v694 = vpop.f32.mrf.mxu0
    %v695 = vadd.f32 0.0, %v694
    %696 = vmatmul.f32.gmra.mxu0 %v485
    %v697 = vpop.f32.mrf.mxu0
    %v698 = vadd.f32 0.0, %v697
    %699 = vmatmul.f32.gmra.mxu0 %v488
    %v700 = vpop.f32.mrf.mxu0
    %v701 = vadd.f32 0.0, %v700
    %702 = vmatmul.f32.gmra.mxu0 %v491
    %v703 = vpop.f32.mrf.mxu0
    %v704 = vadd.f32 0.0, %v703
    %705 = vmatmul.f32.gmra.mxu0 %v494
    %v706 = vpop.f32.mrf.mxu0
    %v707 = vadd.f32 0.0, %v706
    %708 = vmatmul.f32.gmra.mxu0 %v497
    %v709 = vpop.f32.mrf.mxu0
    %v710 = vadd.f32 0.0, %v709
    %711 = vmatmul.f32.gmra.mxu0 %v500
    %v712 = vpop.f32.mrf.mxu0
    %v713 = vadd.f32 0.0, %v712
    %714 = vmatmul.f32.gmra.mxu0 %v503
    %v715 = vpop.f32.mrf.mxu0
    %v716 = vadd.f32 0.0, %v715
    %717 = vmatmul.f32.gmra.mxu0 %v506
    %v718 = vpop.f32.mrf.mxu0
    %v719 = vadd.f32 0.0, %v718
    %720 = vmatmul.f32.gmra.mxu0 %v509
    %v721 = vpop.f32.mrf.mxu0
    %v722 = vadd.f32 0.0, %v721
    %723 = vmatmul.f32.gmra.mxu0 %v512
    %v724 = vpop.f32.mrf.mxu0
    %v725 = vadd.f32 0.0, %v724
    %726 = vmatmul.f32.gmra.mxu0 %v515
    %v727 = vpop.f32.mrf.mxu0
    %v728 = vadd.f32 0.0, %v727
    %729 = vmatmul.f32.gmra.mxu0 %v518
    %v730 = vpop.f32.mrf.mxu0
    %v731 = vadd.f32 0.0, %v730
    %732 = vmatmul.f32.gmra.mxu0 %v521
    %v733 = vpop.f32.mrf.mxu0
    %v734 = vadd.f32 0.0, %v733
    %735 = vmatmul.f32.gmra.mxu0 %v524
    %v736 = vpop.f32.mrf.mxu0
    %v737 = vadd.f32 0.0, %v736
    %738 = vmatmul.f32.gmra.mxu0 %v527
    %v739 = vpop.f32.mrf.mxu0
    %v740 = vadd.f32 0.0, %v739
    %741 = vmatmul.f32.gmra.mxu0 %v530
    %v742 = vpop.f32.mrf.mxu0
    %v743 = vadd.f32 0.0, %v742
    %744 = vmatmul.f32.gmra.mxu0 %v533
    %v745 = vpop.f32.mrf.mxu0
    %v746 = vadd.f32 0.0, %v745
    %747 = vmatmul.f32.gmra.mxu0 %v536
    %v748 = vpop.f32.mrf.mxu0
    %v749 = vadd.f32 0.0, %v748
    %750 = vmatmul.f32.gmra.mxu0 %v539
    %v751 = vpop.f32.mrf.mxu0
    %v752 = vadd.f32 0.0, %v751
    %753 = vmatmul.f32.gmra.mxu0 %v542
    %v754 = vpop.f32.mrf.mxu0
    %v755 = vadd.f32 0.0, %v754
    %756 = vmatmul.f32.gmra.mxu0 %v545
    %v757 = vpop.f32.mrf.mxu0
    %v758 = vadd.f32 0.0, %v757
    %759 = vmatmul.f32.gmra.mxu0 %v548
    %v760 = vpop.f32.mrf.mxu0
    %v761 = vadd.f32 0.0, %v760
    %762 = vmatmul.f32.gmra.mxu0 %v551
    %v763 = vpop.f32.mrf.mxu0
    %v764 = vadd.f32 0.0, %v763
    %765 = vmatmul.f32.gmra.mxu0 %v554
    %v766 = vpop.f32.mrf.mxu0
    %v767 = vadd.f32 0.0, %v766
    %768 = vmatmul.f32.gmra.mxu0 %v557
    %v769 = vpop.f32.mrf.mxu0
    %v770 = vadd.f32 0.0, %v769
    %771 = vmatmul.f32.gmra.mxu0 %v560
    %v772 = vpop.f32.mrf.mxu0
    %v773 = vadd.f32 0.0, %v772
    %774 = vmatmul.f32.gmra.mxu0 %v563
    %v775 = vpop.f32.mrf.mxu0
    %v776 = vadd.f32 0.0, %v775
    %777 = vmatmul.f32.gmra.mxu0 %v566
    %v778 = vpop.f32.mrf.mxu0
    %v779 = vadd.f32 0.0, %v778
    %780 = vmatmul.f32.gmra.mxu0 %v569
    %v781 = vpop.f32.mrf.mxu0
    %v782 = vadd.f32 0.0, %v781
    %783 = vmatmul.f32.gmra.mxu0 %v572
    %v784 = vpop.f32.mrf.mxu0
    %v785 = vadd.f32 0.0, %v784
    %786 = vmatmul.f32.gmra.mxu0 %v575
    %v787 = vpop.f32.mrf.mxu0
    %v788 = vadd.f32 0.0, %v787
    %789 = vmatmul.f32.gmra.mxu0 %v578
    %v790 = vpop.f32.mrf.mxu0
    %v791 = vadd.f32 0.0, %v790
    %792 = vmatmul.f32.gmra.mxu0 %v581
    %v793 = vpop.f32.mrf.mxu0
    %v794 = vadd.f32 0.0, %v793
    %795 = vmatmul.f32.gmra.mxu0 %v584
    %v796 = vpop.f32.mrf.mxu0
    %v797 = vadd.f32 0.0, %v796
    %798 = vmatmul.f32.gmra.mxu0 %v587
    %v799 = vpop.f32.mrf.mxu0
    %v800 = vadd.f32 0.0, %v799
    %801 = vmatmul.f32.gmra.mxu0 %v590
    %v802 = vpop.f32.mrf.mxu0
    %v803 = vadd.f32 0.0, %v802
    %804 = vmatmul.f32.gmra.mxu0 %v593
    %v805 = vpop.f32.mrf.mxu0
    %v806 = vadd.f32 0.0, %v805
    %807 = vdwg.mxu0
    %v809 = vsel %vm33, %v272, 0
    %v812 = vsel %vm33, %v273, 0
    %v815 = vsel %vm33, %v274, 0
    %v818 = vsel %vm33, %v275, 0
    %v821 = vsel %vm33, %v276, 0
    %v824 = vsel %vm33, %v277, 0
    %v827 = vsel %vm33, %v278, 0
    %v830 = vsel %vm33, %v279, 0
    %v833 = vsel %vm33, %v280, 0
    %v836 = vsel %vm33, %v281, 0
    %v839 = vsel %vm33, %v282, 0
    %v842 = vsel %vm33, %v283, 0
    %v845 = vsel %vm33, %v284, 0
    %v848 = vsel %vm33, %v285, 0
    %v851 = vsel %vm33, %v286, 0
    %v854 = vsel %vm33, %v287, 0
    %v857 = vsel %vm33, %v288, 0
    %v860 = vsel %vm33, %v289, 0
    %v863 = vsel %vm33, %v290, 0
    %v866 = vsel %vm33, %v291, 0
    %v869 = vsel %vm33, %v292, 0
    %v872 = vsel %vm33, %v293, 0
    %v875 = vsel %vm33, %v294, 0
    %v878 = vsel %vm33, %v295, 0
    %v881 = vsel %vm33, %v296, 0
    %v884 = vsel %vm33, %v297, 0
    %v887 = vsel %vm33, %v298, 0
    %v890 = vsel %vm33, %v299, 0
    %v893 = vsel %vm33, %v300, 0
    %v896 = vsel %vm33, %v301, 0
    %v899 = vsel %vm33, %v302, 0
    %v902 = vsel %vm33, %v303, 0
    %v905 = vsel %vm33, %v304, 0
    %v908 = vsel %vm33, %v305, 0
    %v911 = vsel %vm33, %v306, 0
    %v914 = vsel %vm33, %v307, 0
    %v917 = vsel %vm33, %v308, 0
    %v920 = vsel %vm33, %v309, 0
    %v923 = vsel %vm33, %v310, 0
    %v926 = vsel %vm33, %v311, 0
    %v929 = vsel %vm33, %v312, 0
    %v932 = vsel %vm33, %v313, 0
    %v935 = vsel %vm33, %v314, 0
    %v938 = vsel %vm33, %v315, 0
    %v941 = vsel %vm33, %v316, 0
    %v944 = vsel %vm33, %v317, 0
    %v947 = vsel %vm33, %v318, 0
    %v950 = vsel %vm33, %v319, 0
    %v953 = vsel %vm33, %v320, 0
    %v956 = vsel %vm33, %v321, 0
    %v959 = vsel %vm33, %v322, 0
    %v962 = vsel %vm33, %v323, 0
    %v965 = vsel %vm33, %v324, 0
    %v968 = vsel %vm33, %v325, 0
    %v971 = vsel %vm33, %v326, 0
    %v974 = vsel %vm33, %v327, 0
    %v977 = vsel %vm33, %v328, 0
    %v980 = vsel %vm33, %v329, 0
    %v983 = vsel %vm33, %v330, 0
    %v986 = vsel %vm33, %v331, 0
    %v989 = vsel %vm33, %v332, 0
    %v992 = vsel %vm33, %v333, 0
    %v995 = vsel %vm33, %v334, 0
    %v998 = vsel %vm33, %v335, 0
    %v1001 = vsel %vm595, %v336, 0
    %1003 = vmatpush.msra.mxu0 0.0
    %1004 = vmatpush.msra.mxu0 0.0
    %1005 = vmatpush.msra.mxu0 0.0
    %1006 = vmatpush.msra.mxu0 0.0
    %1007 = vmatpush.msra.mxu0 0.0
    %1008 = vmatpush.msra.mxu0 0.0
    %1009 = vmatpush.msra.mxu0 0.0
    %1010 = vmatpush.msra.mxu0 0.0
    %1011 = vmatpush.msra.mxu0 0.0
    %1012 = vmatpush.msra.mxu0 0.0
    %1013 = vmatpush.msra.mxu0 0.0
    %1014 = vmatpush.msra.mxu0 0.0
    %1015 = vmatpush.msra.mxu0 0.0
    %1016 = vmatpush.msra.mxu0 0.0
    %1017 = vmatpush.msra.mxu0 0.0
    %1018 = vmatpush.msra.mxu0 %v1001
    %1019 = vmatmul.f32.gmra.mxu0 %v809
    %v1020 = vpop.f32.mrf.mxu0
    %v1021 = vadd.f32 %v617, %v1020
    %1022 = vmatmul.f32.gmra.mxu0 %v812
    %v1023 = vpop.f32.mrf.mxu0
    %v1024 = vadd.f32 %v620, %v1023
    %1025 = vmatmul.f32.gmra.mxu0 %v815
    %v1026 = vpop.f32.mrf.mxu0
    %v1027 = vadd.f32 %v623, %v1026
    %1028 = vmatmul.f32.gmra.mxu0 %v818
    %v1029 = vpop.f32.mrf.mxu0
    %v1030 = vadd.f32 %v626, %v1029
    %1031 = vmatmul.f32.gmra.mxu0 %v821
    %v1032 = vpop.f32.mrf.mxu0
    %v1033 = vadd.f32 %v629, %v1032
    %1034 = vmatmul.f32.gmra.mxu0 %v824
    %v1035 = vpop.f32.mrf.mxu0
    %v1036 = vadd.f32 %v632, %v1035
    %1037 = vmatmul.f32.gmra.mxu0 %v827
    %v1038 = vpop.f32.mrf.mxu0
    %v1039 = vadd.f32 %v635, %v1038
    %1040 = vmatmul.f32.gmra.mxu0 %v830
    %v1041 = vpop.f32.mrf.mxu0
    %v1042 = vadd.f32 %v638, %v1041
    %1043 = vmatmul.f32.gmra.mxu0 %v833
    %v1044 = vpop.f32.mrf.mxu0
    %v1045 = vadd.f32 %v641, %v1044
    %1046 = vmatmul.f32.gmra.mxu0 %v836
    %v1047 = vpop.f32.mrf.mxu0
    %v1048 = vadd.f32 %v644, %v1047
    %1049 = vmatmul.f32.gmra.mxu0 %v839
    %v1050 = vpop.f32.mrf.mxu0
    %v1051 = vadd.f32 %v647, %v1050
    %1052 = vmatmul.f32.gmra.mxu0 %v842
    %v1053 = vpop.f32.mrf.mxu0
    %v1054 = vadd.f32 %v650, %v1053
    %1055 = vmatmul.f32.gmra.mxu0 %v845
    %v1056 = vpop.f32.mrf.mxu0
    %v1057 = vadd.f32 %v653, %v1056
    %1058 = vmatmul.f32.gmra.mxu0 %v848
    %v1059 = vpop.f32.mrf.mxu0
    %v1060 = vadd.f32 %v656, %v1059
    %1061 = vmatmul.f32.gmra.mxu0 %v851
    %v1062 = vpop.f32.mrf.mxu0
    %v1063 = vadd.f32 %v659, %v1062
    %1064 = vmatmul.f32.gmra.mxu0 %v854
    %v1065 = vpop.f32.mrf.mxu0
    %v1066 = vadd.f32 %v662, %v1065
    %1067 = vmatmul.f32.gmra.mxu0 %v857
    %v1068 = vpop.f32.mrf.mxu0
    %v1069 = vadd.f32 %v665, %v1068
    %1070 = vmatmul.f32.gmra.mxu0 %v860
    %v1071 = vpop.f32.mrf.mxu0
    %v1072 = vadd.f32 %v668, %v1071
    %1073 = vmatmul.f32.gmra.mxu0 %v863
    %v1074 = vpop.f32.mrf.mxu0
    %v1075 = vadd.f32 %v671, %v1074
    %1076 = vmatmul.f32.gmra.mxu0 %v866
    %v1077 = vpop.f32.mrf.mxu0
    %v1078 = vadd.f32 %v674, %v1077
    %1079 = vmatmul.f32.gmra.mxu0 %v869
    %v1080 = vpop.f32.mrf.mxu0
    %v1081 = vadd.f32 %v677, %v1080
    %1082 = vmatmul.f32.gmra.mxu0 %v872
    %v1083 = vpop.f32.mrf.mxu0
    %v1084 = vadd.f32 %v680, %v1083
    %1085 = vmatmul.f32.gmra.mxu0 %v875
    %v1086 = vpop.f32.mrf.mxu0
    %v1087 = vadd.f32 %v683, %v1086
    %1088 = vmatmul.f32.gmra.mxu0 %v878
    %v1089 = vpop.f32.mrf.mxu0
    %v1090 = vadd.f32 %v686, %v1089
    %1091 = vmatmul.f32.gmra.mxu0 %v881
    %v1092 = vpop.f32.mrf.mxu0
    %v1093 = vadd.f32 %v689, %v1092
    %1094 = vmatmul.f32.gmra.mxu0 %v884
    %v1095 = vpop.f32.mrf.mxu0
    %v1096 = vadd.f32 %v692, %v1095
    %1097 = vmatmul.f32.gmra.mxu0 %v887
    %v1098 = vpop.f32.mrf.mxu0
    %v1099 = vadd.f32 %v695, %v1098
    %1100 = vmatmul.f32.gmra.mxu0 %v890
    %v1101 = vpop.f32.mrf.mxu0
    %v1102 = vadd.f32 %v698, %v1101
    %1103 = vmatmul.f32.gmra.mxu0 %v893
    %v1104 = vpop.f32.mrf.mxu0
    %v1105 = vadd.f32 %v701, %v1104
    %1106 = vmatmul.f32.gmra.mxu0 %v896
    %v1107 = vpop.f32.mrf.mxu0
    %v1108 = vadd.f32 %v704, %v1107
    %1109 = vmatmul.f32.gmra.mxu0 %v899
    %v1110 = vpop.f32.mrf.mxu0
    %v1111 = vadd.f32 %v707, %v1110
    %1112 = vmatmul.f32.gmra.mxu0 %v902
    %v1113 = vpop.f32.mrf.mxu0
    %v1114 = vadd.f32 %v710, %v1113
    %1115 = vmatmul.f32.gmra.mxu0 %v905
    %v1116 = vpop.f32.mrf.mxu0
    %v1117 = vadd.f32 %v713, %v1116
    %1118 = vmatmul.f32.gmra.mxu0 %v908
    %v1119 = vpop.f32.mrf.mxu0
    %v1120 = vadd.f32 %v716, %v1119
    %1121 = vmatmul.f32.gmra.mxu0 %v911
    %v1122 = vpop.f32.mrf.mxu0
    %v1123 = vadd.f32 %v719, %v1122
    %1124 = vmatmul.f32.gmra.mxu0 %v914
    %v1125 = vpop.f32.mrf.mxu0
    %v1126 = vadd.f32 %v722, %v1125
    %1127 = vmatmul.f32.gmra.mxu0 %v917
    %v1128 = vpop.f32.mrf.mxu0
    %v1129 = vadd.f32 %v725, %v1128
    %1130 = vmatmul.f32.gmra.mxu0 %v920
    %v1131 = vpop.f32.mrf.mxu0
    %v1132 = vadd.f32 %v728, %v1131
    %1133 = vmatmul.f32.gmra.mxu0 %v923
    %v1134 = vpop.f32.mrf.mxu0
    %v1135 = vadd.f32 %v731, %v1134
    %1136 = vmatmul.f32.gmra.mxu0 %v926
    %v1137 = vpop.f32.mrf.mxu0
    %v1138 = vadd.f32 %v734, %v1137
    %1139 = vmatmul.f32.gmra.mxu0 %v929
    %v1140 = vpop.f32.mrf.mxu0
    %v1141 = vadd.f32 %v737, %v1140
    %1142 = vmatmul.f32.gmra.mxu0 %v932
    %v1143 = vpop.f32.mrf.mxu0
    %v1144 = vadd.f32 %v740, %v1143
    %1145 = vmatmul.f32.gmra.mxu0 %v935
    %v1146 = vpop.f32.mrf.mxu0
    %v1147 = vadd.f32 %v743, %v1146
    %1148 = vmatmul.f32.gmra.mxu0 %v938
    %v1149 = vpop.f32.mrf.mxu0
    %v1150 = vadd.f32 %v746, %v1149
    %1151 = vmatmul.f32.gmra.mxu0 %v941
    %v1152 = vpop.f32.mrf.mxu0
    %v1153 = vadd.f32 %v749, %v1152
    %1154 = vmatmul.f32.gmra.mxu0 %v944
    %v1155 = vpop.f32.mrf.mxu0
    %v1156 = vadd.f32 %v752, %v1155
    %1157 = vmatmul.f32.gmra.mxu0 %v947
    %v1158 = vpop.f32.mrf.mxu0
    %v1159 = vadd.f32 %v755, %v1158
    %1160 = vmatmul.f32.gmra.mxu0 %v950
    %v1161 = vpop.f32.mrf.mxu0
    %v1162 = vadd.f32 %v758, %v1161
    %1163 = vmatmul.f32.gmra.mxu0 %v953
    %v1164 = vpop.f32.mrf.mxu0
    %v1165 = vadd.f32 %v761, %v1164
    %1166 = vmatmul.f32.gmra.mxu0 %v956
    %v1167 = vpop.f32.mrf.mxu0
    %v1168 = vadd.f32 %v764, %v1167
    %1169 = vmatmul.f32.gmra.mxu0 %v959
    %v1170 = vpop.f32.mrf.mxu0
    %v1171 = vadd.f32 %v767, %v1170
    %1172 = vmatmul.f32.gmra.mxu0 %v962
    %v1173 = vpop.f32.mrf.mxu0
    %v1174 = vadd.f32 %v770, %v1173
    %1175 = vmatmul.f32.gmra.mxu0 %v965
    %v1176 = vpop.f32.mrf.mxu0
    %v1177 = vadd.f32 %v773, %v1176
    %1178 = vmatmul.f32.gmra.mxu0 %v968
    %v1179 = vpop.f32.mrf.mxu0
    %v1180 = vadd.f32 %v776, %v1179
    %1181 = vmatmul.f32.gmra.mxu0 %v971
    %v1182 = vpop.f32.mrf.mxu0
    %v1183 = vadd.f32 %v779, %v1182
    %1184 = vmatmul.f32.gmra.mxu0 %v974
    %v1185 = vpop.f32.mrf.mxu0
    %v1186 = vadd.f32 %v782, %v1185
    %1187 = vmatmul.f32.gmra.mxu0 %v977
    %v1188 = vpop.f32.mrf.mxu0
    %v1189 = vadd.f32 %v785, %v1188
    %1190 = vmatmul.f32.gmra.mxu0 %v980
    %v1191 = vpop.f32.mrf.mxu0
    %v1192 = vadd.f32 %v788, %v1191
    %1193 = vmatmul.f32.gmra.mxu0 %v983
    %v1194 = vpop.f32.mrf.mxu0
    %v1195 = vadd.f32 %v791, %v1194
    %1196 = vmatmul.f32.gmra.mxu0 %v986
    %v1197 = vpop.f32.mrf.mxu0
    %v1198 = vadd.f32 %v794, %v1197
    %1199 = vmatmul.f32.gmra.mxu0 %v989
    %v1200 = vpop.f32.mrf.mxu0
    %v1201 = vadd.f32 %v797, %v1200
    %1202 = vmatmul.f32.gmra.mxu0 %v992
    %v1203 = vpop.f32.mrf.mxu0
    %v1204 = vadd.f32 %v800, %v1203
    %1205 = vmatmul.f32.gmra.mxu0 %v995
    %v1206 = vpop.f32.mrf.mxu0
    %v1207 = vadd.f32 %v803, %v1206
    %1208 = vmatmul.f32.gmra.mxu0 %v998
    %v1209 = vpop.f32.mrf.mxu0
    %v1210 = vadd.f32 %v806, %v1209
    %1211 = vdwg.mxu0
    %v1212 = vld [vmem:[#allocation2 + $0x2] sm:$0xff]
    %v1213 = vld [vmem:[#allocation2 + $0xa] sm:$0xff]
    %v1214 = vld [vmem:[#allocation2 + $0x1a] sm:$0xff]
    %v1215 = vld [vmem:[#allocation2 + $0x22] sm:$0xff]
    %v1216 = vld [vmem:[#allocation2 + $0x32] sm:$0xff]
    %v1217 = vld [vmem:[#allocation2 + $0x3a] sm:$0xff]
    %v1218 = vld [vmem:[#allocation2 + $0x4a] sm:$0xff]
    %v1219 = vld [vmem:[#allocation2 + $0x52] sm:$0xff]
    %v1220 = vld [vmem:[#allocation2 + $0x62] sm:$0xff]
    %v1221 = vld [vmem:[#allocation2 + $0x6a] sm:$0xff]
    %v1222 = vld [vmem:[#allocation2 + $0x7a] sm:$0xff]
    %v1223 = vld [vmem:[#allocation2 + $0x82] sm:$0xff]
    %v1224 = vld [vmem:[#allocation2 + $0x92] sm:$0xff]
    %v1225 = vld [vmem:[#allocation2 + $0x9a] sm:$0xff]
    %v1226 = vld [vmem:[#allocation2 + $0xaa] sm:$0xff]
    %v1227 = vld [vmem:[#allocation2 + $0xb2] sm:$0xff]
    %v1228 = vld [vmem:[#allocation2 + $0xc2] sm:$0xff]
    %v1229 = vld [vmem:[#allocation2 + $0xca] sm:$0xff]
    %v1230 = vld [vmem:[#allocation2 + $0xda] sm:$0xff]
    %v1231 = vld [vmem:[#allocation2 + $0xe2] sm:$0xff]
    %v1232 = vld [vmem:[#allocation2 + $0xf2] sm:$0xff]
    %v1233 = vld [vmem:[#allocation2 + $0xfa] sm:$0xff]
    %v1234 = vld [vmem:[#allocation2 + $0x10a] sm:$0xff]
    %v1235 = vld [vmem:[#allocation2 + $0x112] sm:$0xff]
    %v1236 = vld [vmem:[#allocation2 + $0x122] sm:$0xff]
    %v1237 = vld [vmem:[#allocation2 + $0x12a] sm:$0xff]
    %v1238 = vld [vmem:[#allocation2 + $0x13a] sm:$0xff]
    %v1239 = vld [vmem:[#allocation2 + $0x142] sm:$0xff]
    %v1240 = vld [vmem:[#allocation2 + $0x152] sm:$0xff]
    %v1241 = vld [vmem:[#allocation2 + $0x15a] sm:$0xff]
    %v1242 = vld [vmem:[#allocation2 + $0x16a] sm:$0xff]
    %v1243 = vld [vmem:[#allocation2 + $0x172] sm:$0xff]
    %v1244 = vld [vmem:[#allocation2 + $0x1b2] sm:$0xff]
    %v1245 = vld [vmem:[#allocation2 + $0x1ba] sm:$0xff]
    %v1246 = vld [vmem:[#allocation2 + $0x1ca] sm:$0xff]
    %v1247 = vld [vmem:[#allocation2 + $0x1d2] sm:$0xff]
    %v1248 = vld [vmem:[#allocation2 + $0x1e2] sm:$0xff]
    %v1249 = vld [vmem:[#allocation2 + $0x1ea] sm:$0xff]
    %v1250 = vld [vmem:[#allocation2 + $0x1fa] sm:$0xff]
    %v1251 = vld [vmem:[#allocation2 + $0x202] sm:$0xff]
    %v1252 = vld [vmem:[#allocation2 + $0x212] sm:$0xff]
    %v1253 = vld [vmem:[#allocation2 + $0x21a] sm:$0xff]
    %v1254 = vld [vmem:[#allocation2 + $0x22a] sm:$0xff]
    %v1255 = vld [vmem:[#allocation2 + $0x232] sm:$0xff]
    %v1256 = vld [vmem:[#allocation2 + $0x242] sm:$0xff]
    %v1257 = vld [vmem:[#allocation2 + $0x24a] sm:$0xff]
    %v1258 = vld [vmem:[#allocation2 + $0x25a] sm:$0xff]
    %v1259 = vld [vmem:[#allocation2 + $0x262] sm:$0xff]
    %v1260 = vld [vmem:[#allocation2 + $0x272] sm:$0xff]
    %v1261 = vld [vmem:[#allocation2 + $0x27a] sm:$0xff]
    %v1262 = vld [vmem:[#allocation2 + $0x28a] sm:$0xff]
    %v1263 = vld [vmem:[#allocation2 + $0x292] sm:$0xff]
    %v1264 = vld [vmem:[#allocation2 + $0x2a2] sm:$0xff]
    %v1265 = vld [vmem:[#allocation2 + $0x2aa] sm:$0xff]
    %v1266 = vld [vmem:[#allocation2 + $0x2ba] sm:$0xff]
    %v1267 = vld [vmem:[#allocation2 + $0x2c2] sm:$0xff]
    %v1268 = vld [vmem:[#allocation2 + $0x2d2] sm:$0xff]
    %v1269 = vld [vmem:[#allocation2 + $0x2da] sm:$0xff]
    %v1270 = vld [vmem:[#allocation2 + $0x2ea] sm:$0xff]
    %v1271 = vld [vmem:[#allocation2 + $0x2f2] sm:$0xff]
    %v1272 = vld [vmem:[#allocation2 + $0x302] sm:$0xff]
    %v1273 = vld [vmem:[#allocation2 + $0x30a] sm:$0xff]
    %v1274 = vld [vmem:[#allocation2 + $0x31a] sm:$0xff]
    %v1275 = vld [vmem:[#allocation2 + $0x322] sm:$0xff]
    %s1276 = scalar_lea.vmem %s1, 8
    %v1277 = vld [vmem:[%s1276] sm:$0xf]
    %v1279 = vsel %vm33, %v1212, 0
    %v1282 = vsel %vm33, %v1213, 0
    %v1285 = vsel %vm33, %v1214, 0
    %v1288 = vsel %vm33, %v1215, 0
    %v1291 = vsel %vm33, %v1216, 0
    %v1294 = vsel %vm33, %v1217, 0
    %v1297 = vsel %vm33, %v1218, 0
    %v1300 = vsel %vm33, %v1219, 0
    %v1303 = vsel %vm33, %v1220, 0
    %v1306 = vsel %vm33, %v1221, 0
    %v1309 = vsel %vm33, %v1222, 0
    %v1312 = vsel %vm33, %v1223, 0
    %v1315 = vsel %vm33, %v1224, 0
    %v1318 = vsel %vm33, %v1225, 0
    %v1321 = vsel %vm33, %v1226, 0
    %v1324 = vsel %vm33, %v1227, 0
    %v1327 = vsel %vm33, %v1228, 0
    %v1330 = vsel %vm33, %v1229, 0
    %v1333 = vsel %vm33, %v1230, 0
    %v1336 = vsel %vm33, %v1231, 0
    %v1339 = vsel %vm33, %v1232, 0
    %v1342 = vsel %vm33, %v1233, 0
    %v1345 = vsel %vm33, %v1234, 0
    %v1348 = vsel %vm33, %v1235, 0
    %v1351 = vsel %vm33, %v1236, 0
    %v1354 = vsel %vm33, %v1237, 0
    %v1357 = vsel %vm33, %v1238, 0
    %v1360 = vsel %vm33, %v1239, 0
    %v1363 = vsel %vm33, %v1240, 0
    %v1366 = vsel %vm33, %v1241, 0
    %v1369 = vsel %vm33, %v1242, 0
    %v1372 = vsel %vm33, %v1243, 0
    %v1375 = vsel %vm33, %v1244, 0
    %v1378 = vsel %vm33, %v1245, 0
    %v1381 = vsel %vm33, %v1246, 0
    %v1384 = vsel %vm33, %v1247, 0
    %v1387 = vsel %vm33, %v1248, 0
    %v1390 = vsel %vm33, %v1249, 0
    %v1393 = vsel %vm33, %v1250, 0
    %v1396 = vsel %vm33, %v1251, 0
    %v1399 = vsel %vm33, %v1252, 0
    %v1402 = vsel %vm33, %v1253, 0
    %v1405 = vsel %vm33, %v1254, 0
    %v1408 = vsel %vm33, %v1255, 0
    %v1411 = vsel %vm33, %v1256, 0
    %v1414 = vsel %vm33, %v1257, 0
    %v1417 = vsel %vm33, %v1258, 0
    %v1420 = vsel %vm33, %v1259, 0
    %v1423 = vsel %vm33, %v1260, 0
    %v1426 = vsel %vm33, %v1261, 0
    %v1429 = vsel %vm33, %v1262, 0
    %v1432 = vsel %vm33, %v1263, 0
    %v1435 = vsel %vm33, %v1264, 0
    %v1438 = vsel %vm33, %v1265, 0
    %v1441 = vsel %vm33, %v1266, 0
    %v1444 = vsel %vm33, %v1267, 0
    %v1447 = vsel %vm33, %v1268, 0
    %v1450 = vsel %vm33, %v1269, 0
    %v1453 = vsel %vm33, %v1270, 0
    %v1456 = vsel %vm33, %v1271, 0
    %v1459 = vsel %vm33, %v1272, 0
    %v1462 = vsel %vm33, %v1273, 0
    %v1465 = vsel %vm33, %v1274, 0
    %v1468 = vsel %vm33, %v1275, 0
    %v1471 = vsel %vm595, %v1277, 0
    %1473 = vmatpush.msra.mxu0 0.0
    %1474 = vmatpush.msra.mxu0 0.0
    %1475 = vmatpush.msra.mxu0 0.0
    %1476 = vmatpush.msra.mxu0 0.0
    %1477 = vmatpush.msra.mxu0 0.0
    %1478 = vmatpush.msra.mxu0 0.0
    %1479 = vmatpush.msra.mxu0 0.0
    %1480 = vmatpush.msra.mxu0 0.0
    %1481 = vmatpush.msra.mxu0 0.0
    %1482 = vmatpush.msra.mxu0 0.0
    %1483 = vmatpush.msra.mxu0 0.0
    %1484 = vmatpush.msra.mxu0 0.0
    %1485 = vmatpush.msra.mxu0 0.0
    %1486 = vmatpush.msra.mxu0 0.0
    %1487 = vmatpush.msra.mxu0 0.0
    %1488 = vmatpush.msra.mxu0 %v1471
    %1489 = vmatmul.f32.gmra.mxu0 %v1279
    %v1490 = vpop.f32.mrf.mxu0
    %v1491 = vadd.f32 0.0, %v1490
    %1492 = vmatmul.f32.gmra.mxu0 %v1282
    %v1493 = vpop.f32.mrf.mxu0
    %v1494 = vadd.f32 0.0, %v1493
    %1495 = vmatmul.f32.gmra.mxu0 %v1285
    %v1496 = vpop.f32.mrf.mxu0
    %v1497 = vadd.f32 0.0, %v1496
    %1498 = vmatmul.f32.gmra.mxu0 %v1288
    %v1499 = vpop.f32.mrf.mxu0
    %v1500 = vadd.f32 0.0, %v1499
    %1501 = vmatmul.f32.gmra.mxu0 %v1291
    %v1502 = vpop.f32.mrf.mxu0
    %v1503 = vadd.f32 0.0, %v1502
    %1504 = vmatmul.f32.gmra.mxu0 %v1294
    %v1505 = vpop.f32.mrf.mxu0
    %v1506 = vadd.f32 0.0, %v1505
    %1507 = vmatmul.f32.gmra.mxu0 %v1297
    %v1508 = vpop.f32.mrf.mxu0
    %v1509 = vadd.f32 0.0, %v1508
    %1510 = vmatmul.f32.gmra.mxu0 %v1300
    %v1511 = vpop.f32.mrf.mxu0
    %v1512 = vadd.f32 0.0, %v1511
    %1513 = vmatmul.f32.gmra.mxu0 %v1303
    %v1514 = vpop.f32.mrf.mxu0
    %v1515 = vadd.f32 0.0, %v1514
    %1516 = vmatmul.f32.gmra.mxu0 %v1306
    %v1517 = vpop.f32.mrf.mxu0
    %v1518 = vadd.f32 0.0, %v1517
    %1519 = vmatmul.f32.gmra.mxu0 %v1309
    %v1520 = vpop.f32.mrf.mxu0
    %v1521 = vadd.f32 0.0, %v1520
    %1522 = vmatmul.f32.gmra.mxu0 %v1312
    %v1523 = vpop.f32.mrf.mxu0
    %v1524 = vadd.f32 0.0, %v1523
    %1525 = vmatmul.f32.gmra.mxu0 %v1315
    %v1526 = vpop.f32.mrf.mxu0
    %v1527 = vadd.f32 0.0, %v1526
    %1528 = vmatmul.f32.gmra.mxu0 %v1318
    %v1529 = vpop.f32.mrf.mxu0
    %v1530 = vadd.f32 0.0, %v1529
    %1531 = vmatmul.f32.gmra.mxu0 %v1321
    %v1532 = vpop.f32.mrf.mxu0
    %v1533 = vadd.f32 0.0, %v1532
    %1534 = vmatmul.f32.gmra.mxu0 %v1324
    %v1535 = vpop.f32.mrf.mxu0
    %v1536 = vadd.f32 0.0, %v1535
    %1537 = vmatmul.f32.gmra.mxu0 %v1327
    %v1538 = vpop.f32.mrf.mxu0
    %v1539 = vadd.f32 0.0, %v1538
    %1540 = vmatmul.f32.gmra.mxu0 %v1330
    %v1541 = vpop.f32.mrf.mxu0
    %v1542 = vadd.f32 0.0, %v1541
    %1543 = vmatmul.f32.gmra.mxu0 %v1333
    %v1544 = vpop.f32.mrf.mxu0
    %v1545 = vadd.f32 0.0, %v1544
    %1546 = vmatmul.f32.gmra.mxu0 %v1336
    %v1547 = vpop.f32.mrf.mxu0
    %v1548 = vadd.f32 0.0, %v1547
    %1549 = vmatmul.f32.gmra.mxu0 %v1339
    %v1550 = vpop.f32.mrf.mxu0
    %v1551 = vadd.f32 0.0, %v1550
    %1552 = vmatmul.f32.gmra.mxu0 %v1342
    %v1553 = vpop.f32.mrf.mxu0
    %v1554 = vadd.f32 0.0, %v1553
    %1555 = vmatmul.f32.gmra.mxu0 %v1345
    %v1556 = vpop.f32.mrf.mxu0
    %v1557 = vadd.f32 0.0, %v1556
    %1558 = vmatmul.f32.gmra.mxu0 %v1348
    %v1559 = vpop.f32.mrf.mxu0
    %v1560 = vadd.f32 0.0, %v1559
    %1561 = vmatmul.f32.gmra.mxu0 %v1351
    %v1562 = vpop.f32.mrf.mxu0
    %v1563 = vadd.f32 0.0, %v1562
    %1564 = vmatmul.f32.gmra.mxu0 %v1354
    %v1565 = vpop.f32.mrf.mxu0
    %v1566 = vadd.f32 0.0, %v1565
    %1567 = vmatmul.f32.gmra.mxu0 %v1357
    %v1568 = vpop.f32.mrf.mxu0
    %v1569 = vadd.f32 0.0, %v1568
    %1570 = vmatmul.f32.gmra.mxu0 %v1360
    %v1571 = vpop.f32.mrf.mxu0
    %v1572 = vadd.f32 0.0, %v1571
    %1573 = vmatmul.f32.gmra.mxu0 %v1363
    %v1574 = vpop.f32.mrf.mxu0
    %v1575 = vadd.f32 0.0, %v1574
    %1576 = vmatmul.f32.gmra.mxu0 %v1366
    %v1577 = vpop.f32.mrf.mxu0
    %v1578 = vadd.f32 0.0, %v1577
    %1579 = vmatmul.f32.gmra.mxu0 %v1369
    %v1580 = vpop.f32.mrf.mxu0
    %v1581 = vadd.f32 0.0, %v1580
    %1582 = vmatmul.f32.gmra.mxu0 %v1372
    %v1583 = vpop.f32.mrf.mxu0
    %v1584 = vadd.f32 0.0, %v1583
    %1585 = vmatmul.f32.gmra.mxu0 %v1375
    %v1586 = vpop.f32.mrf.mxu0
    %v1587 = vadd.f32 0.0, %v1586
    %1588 = vmatmul.f32.gmra.mxu0 %v1378
    %v1589 = vpop.f32.mrf.mxu0
    %v1590 = vadd.f32 0.0, %v1589
    %1591 = vmatmul.f32.gmra.mxu0 %v1381
    %v1592 = vpop.f32.mrf.mxu0
    %v1593 = vadd.f32 0.0, %v1592
    %1594 = vmatmul.f32.gmra.mxu0 %v1384
    %v1595 = vpop.f32.mrf.mxu0
    %v1596 = vadd.f32 0.0, %v1595
    %1597 = vmatmul.f32.gmra.mxu0 %v1387
    %v1598 = vpop.f32.mrf.mxu0
    %v1599 = vadd.f32 0.0, %v1598
    %1600 = vmatmul.f32.gmra.mxu0 %v1390
    %v1601 = vpop.f32.mrf.mxu0
    %v1602 = vadd.f32 0.0, %v1601
    %1603 = vmatmul.f32.gmra.mxu0 %v1393
    %v1604 = vpop.f32.mrf.mxu0
    %v1605 = vadd.f32 0.0, %v1604
    %1606 = vmatmul.f32.gmra.mxu0 %v1396
    %v1607 = vpop.f32.mrf.mxu0
    %v1608 = vadd.f32 0.0, %v1607
    %1609 = vmatmul.f32.gmra.mxu0 %v1399
    %v1610 = vpop.f32.mrf.mxu0
    %v1611 = vadd.f32 0.0, %v1610
    %1612 = vmatmul.f32.gmra.mxu0 %v1402
    %v1613 = vpop.f32.mrf.mxu0
    %v1614 = vadd.f32 0.0, %v1613
    %1615 = vmatmul.f32.gmra.mxu0 %v1405
    %v1616 = vpop.f32.mrf.mxu0
    %v1617 = vadd.f32 0.0, %v1616
    %1618 = vmatmul.f32.gmra.mxu0 %v1408
    %v1619 = vpop.f32.mrf.mxu0
    %v1620 = vadd.f32 0.0, %v1619
    %1621 = vmatmul.f32.gmra.mxu0 %v1411
    %v1622 = vpop.f32.mrf.mxu0
    %v1623 = vadd.f32 0.0, %v1622
    %1624 = vmatmul.f32.gmra.mxu0 %v1414
    %v1625 = vpop.f32.mrf.mxu0
    %v1626 = vadd.f32 0.0, %v1625
    %1627 = vmatmul.f32.gmra.mxu0 %v1417
    %v1628 = vpop.f32.mrf.mxu0
    %v1629 = vadd.f32 0.0, %v1628
    %1630 = vmatmul.f32.gmra.mxu0 %v1420
    %v1631 = vpop.f32.mrf.mxu0
    %v1632 = vadd.f32 0.0, %v1631
    %1633 = vmatmul.f32.gmra.mxu0 %v1423
    %v1634 = vpop.f32.mrf.mxu0
    %v1635 = vadd.f32 0.0, %v1634
    %1636 = vmatmul.f32.gmra.mxu0 %v1426
    %v1637 = vpop.f32.mrf.mxu0
    %v1638 = vadd.f32 0.0, %v1637
    %1639 = vmatmul.f32.gmra.mxu0 %v1429
    %v1640 = vpop.f32.mrf.mxu0
    %v1641 = vadd.f32 0.0, %v1640
    %1642 = vmatmul.f32.gmra.mxu0 %v1432
    %v1643 = vpop.f32.mrf.mxu0
    %v1644 = vadd.f32 0.0, %v1643
    %1645 = vmatmul.f32.gmra.mxu0 %v1435
    %v1646 = vpop.f32.mrf.mxu0
    %v1647 = vadd.f32 0.0, %v1646
    %1648 = vmatmul.f32.gmra.mxu0 %v1438
    %v1649 = vpop.f32.mrf.mxu0
    %v1650 = vadd.f32 0.0, %v1649
    %1651 = vmatmul.f32.gmra.mxu0 %v1441
    %v1652 = vpop.f32.mrf.mxu0
    %v1653 = vadd.f32 0.0, %v1652
    %1654 = vmatmul.f32.gmra.mxu0 %v1444
    %v1655 = vpop.f32.mrf.mxu0
    %v1656 = vadd.f32 0.0, %v1655
    %1657 = vmatmul.f32.gmra.mxu0 %v1447
    %v1658 = vpop.f32.mrf.mxu0
    %v1659 = vadd.f32 0.0, %v1658
    %1660 = vmatmul.f32.gmra.mxu0 %v1450
    %v1661 = vpop.f32.mrf.mxu0
    %v1662 = vadd.f32 0.0, %v1661
    %1663 = vmatmul.f32.gmra.mxu0 %v1453
    %v1664 = vpop.f32.mrf.mxu0
    %v1665 = vadd.f32 0.0, %v1664
    %1666 = vmatmul.f32.gmra.mxu0 %v1456
    %v1667 = vpop.f32.mrf.mxu0
    %v1668 = vadd.f32 0.0, %v1667
    %1669 = vmatmul.f32.gmra.mxu0 %v1459
    %v1670 = vpop.f32.mrf.mxu0
    %v1671 = vadd.f32 0.0, %v1670
    %1672 = vmatmul.f32.gmra.mxu0 %v1462
    %v1673 = vpop.f32.mrf.mxu0
    %v1674 = vadd.f32 0.0, %v1673
    %1675 = vmatmul.f32.gmra.mxu0 %v1465
    %v1676 = vpop.f32.mrf.mxu0
    %v1677 = vadd.f32 0.0, %v1676
    %1678 = vmatmul.f32.gmra.mxu0 %v1468
    %v1679 = vpop.f32.mrf.mxu0
    %v1680 = vadd.f32 0.0, %v1679
    %1681 = vdwg.mxu0
    %v1682 = vadd.f32 %v1021, %v1491
    %v1683 = vadd.f32 %v1024, %v1494
    %v1684 = vadd.f32 %v1027, %v1497
    %v1685 = vadd.f32 %v1030, %v1500
    %v1686 = vadd.f32 %v1033, %v1503
    %v1687 = vadd.f32 %v1036, %v1506
    %v1688 = vadd.f32 %v1039, %v1509
    %v1689 = vadd.f32 %v1042, %v1512
    %v1690 = vadd.f32 %v1045, %v1515
    %v1691 = vadd.f32 %v1048, %v1518
    %v1692 = vadd.f32 %v1051, %v1521
    %v1693 = vadd.f32 %v1054, %v1524
    %v1694 = vadd.f32 %v1057, %v1527
    %v1695 = vadd.f32 %v1060, %v1530
    %v1696 = vadd.f32 %v1063, %v1533
    %v1697 = vadd.f32 %v1066, %v1536
    %v1698 = vadd.f32 %v1069, %v1539
    %v1699 = vadd.f32 %v1072, %v1542
    %v1700 = vadd.f32 %v1075, %v1545
    %v1701 = vadd.f32 %v1078, %v1548
    %v1702 = vadd.f32 %v1081, %v1551
    %v1703 = vadd.f32 %v1084, %v1554
    %v1704 = vadd.f32 %v1087, %v1557
    %v1705 = vadd.f32 %v1090, %v1560
    %v1706 = vadd.f32 %v1093, %v1563
    %v1707 = vadd.f32 %v1096, %v1566
    %v1708 = vadd.f32 %v1099, %v1569
    %v1709 = vadd.f32 %v1102, %v1572
    %v1710 = vadd.f32 %v1105, %v1575
    %v1711 = vadd.f32 %v1108, %v1578
    %v1712 = vadd.f32 %v1111, %v1581
    %v1713 = vadd.f32 %v1114, %v1584
    %v1714 = vadd.f32 %v1117, %v1587
    %v1715 = vadd.f32 %v1120, %v1590
    %v1716 = vadd.f32 %v1123, %v1593
    %v1717 = vadd.f32 %v1126, %v1596
    %v1718 = vadd.f32 %v1129, %v1599
    %v1719 = vadd.f32 %v1132, %v1602
    %v1720 = vadd.f32 %v1135, %v1605
    %v1721 = vadd.f32 %v1138, %v1608
    %v1722 = vadd.f32 %v1141, %v1611
    %v1723 = vadd.f32 %v1144, %v1614
    %v1724 = vadd.f32 %v1147, %v1617
    %v1725 = vadd.f32 %v1150, %v1620
    %v1726 = vadd.f32 %v1153, %v1623
    %v1727 = vadd.f32 %v1156, %v1626
    %v1728 = vadd.f32 %v1159, %v1629
    %v1729 = vadd.f32 %v1162, %v1632
    %v1730 = vadd.f32 %v1165, %v1635
    %v1731 = vadd.f32 %v1168, %v1638
    %v1732 = vadd.f32 %v1171, %v1641
    %v1733 = vadd.f32 %v1174, %v1644
    %v1734 = vadd.f32 %v1177, %v1647
    %v1735 = vadd.f32 %v1180, %v1650
    %v1736 = vadd.f32 %v1183, %v1653
    %v1737 = vadd.f32 %v1186, %v1656
    %v1738 = vadd.f32 %v1189, %v1659
    %v1739 = vadd.f32 %v1192, %v1662
    %v1740 = vadd.f32 %v1195, %v1665
    %v1741 = vadd.f32 %v1198, %v1668
    %v1742 = vadd.f32 %v1201, %v1671
    %v1743 = vadd.f32 %v1204, %v1674
    %v1744 = vadd.f32 %v1207, %v1677
    %v1745 = vadd.f32 %v1210, %v1680
    %v1746 = vld [vmem:[%s207] sm:$0xff]
    %v1747 = vld [vmem:[%s207 + $0x8] sm:$0xff]
    %v1748 = vld [vmem:[%s207 + $0x18] sm:$0xff]
    %v1749 = vld [vmem:[%s207 + $0x20] sm:$0xff]
    %v1750 = vld [vmem:[%s207 + $0x30] sm:$0xff]
    %v1751 = vld [vmem:[%s207 + $0x38] sm:$0xff]
    %v1752 = vld [vmem:[%s207 + $0x48] sm:$0xff]
    %v1753 = vld [vmem:[%s207 + $0x50] sm:$0xff]
    %v1754 = vld [vmem:[%s207 + $0x60] sm:$0xff]
    %v1755 = vld [vmem:[%s207 + $0x68] sm:$0xff]
    %v1756 = vld [vmem:[%s207 + $0x78] sm:$0xff]
    %v1757 = vld [vmem:[%s207 + $0x80] sm:$0xff]
    %v1758 = vld [vmem:[%s207 + $0x90] sm:$0xff]
    %v1759 = vld [vmem:[%s207 + $0x98] sm:$0xff]
    %v1760 = vld [vmem:[%s207 + $0xa8] sm:$0xff]
    %v1761 = vld [vmem:[%s207 + $0xb0] sm:$0xff]
    %v1762 = vld [vmem:[%s207 + $0xc0] sm:$0xff]
    %v1763 = vld [vmem:[%s207 + $0xc8] sm:$0xff]
    %v1764 = vld [vmem:[%s207 + $0xd8] sm:$0xff]
    %v1765 = vld [vmem:[%s207 + $0xe0] sm:$0xff]
    %v1766 = vld [vmem:[%s207 + $0xf0] sm:$0xff]
    %v1767 = vld [vmem:[%s207 + $0xf8] sm:$0xff]
    %v1768 = vld [vmem:[%s207 + $0x108] sm:$0xff]
    %v1769 = vld [vmem:[%s207 + $0x110] sm:$0xff]
    %v1770 = vld [vmem:[%s207 + $0x120] sm:$0xff]
    %v1771 = vld [vmem:[%s207 + $0x128] sm:$0xff]
    %v1772 = vld [vmem:[%s207 + $0x138] sm:$0xff]
    %v1773 = vld [vmem:[%s207 + $0x140] sm:$0xff]
    %v1774 = vld [vmem:[%s207 + $0x150] sm:$0xff]
    %v1775 = vld [vmem:[%s207 + $0x158] sm:$0xff]
    %v1776 = vld [vmem:[%s207 + $0x168] sm:$0xff]
    %v1777 = vld [vmem:[%s207 + $0x170] sm:$0xff]
    %v1778 = vld [vmem:[%s207 + $0x1b0] sm:$0xff]
    %v1779 = vld [vmem:[%s207 + $0x1b8] sm:$0xff]
    %v1780 = vld [vmem:[%s207 + $0x1c8] sm:$0xff]
    %v1781 = vld [vmem:[%s207 + $0x1d0] sm:$0xff]
    %v1782 = vld [vmem:[%s207 + $0x1e0] sm:$0xff]
    %v1783 = vld [vmem:[%s207 + $0x1e8] sm:$0xff]
    %v1784 = vld [vmem:[%s207 + $0x1f8] sm:$0xff]
    %v1785 = vld [vmem:[%s207 + $0x200] sm:$0xff]
    %v1786 = vld [vmem:[%s207 + $0x210] sm:$0xff]
    %v1787 = vld [vmem:[%s207 + $0x218] sm:$0xff]
    %v1788 = vld [vmem:[%s207 + $0x228] sm:$0xff]
    %v1789 = vld [vmem:[%s207 + $0x230] sm:$0xff]
    %v1790 = vld [vmem:[%s207 + $0x240] sm:$0xff]
    %v1791 = vld [vmem:[%s207 + $0x248] sm:$0xff]
    %v1792 = vld [vmem:[%s207 + $0x258] sm:$0xff]
    %v1793 = vld [vmem:[%s207 + $0x260] sm:$0xff]
    %v1794 = vld [vmem:[%s207 + $0x270] sm:$0xff]
    %v1795 = vld [vmem:[%s207 + $0x278] sm:$0xff]
    %v1796 = vld [vmem:[%s207 + $0x288] sm:$0xff]
    %v1797 = vld [vmem:[%s207 + $0x290] sm:$0xff]
    %v1798 = vld [vmem:[%s207 + $0x2a0] sm:$0xff]
    %v1799 = vld [vmem:[%s207 + $0x2a8] sm:$0xff]
    %v1800 = vld [vmem:[%s207 + $0x2b8] sm:$0xff]
    %v1801 = vld [vmem:[%s207 + $0x2c0] sm:$0xff]
    %v1802 = vld [vmem:[%s207 + $0x2d0] sm:$0xff]
    %v1803 = vld [vmem:[%s207 + $0x2d8] sm:$0xff]
    %v1804 = vld [vmem:[%s207 + $0x2e8] sm:$0xff]
    %v1805 = vld [vmem:[%s207 + $0x2f0] sm:$0xff]
    %v1806 = vld [vmem:[%s207 + $0x300] sm:$0xff]
    %v1807 = vld [vmem:[%s207 + $0x308] sm:$0xff]
    %v1808 = vld [vmem:[%s207 + $0x318] sm:$0xff]
    %v1809 = vld [vmem:[%s207 + $0x320] sm:$0xff]
    %s1810 = scalar_lea.vmem %s1, 12
    %v1811 = vld [vmem:[%s1810] sm:$0xf]
    %v1813 = vsel %vm33, %v1746, 0
    %v1816 = vsel %vm33, %v1747, 0
    %v1819 = vsel %vm33, %v1748, 0
    %v1822 = vsel %vm33, %v1749, 0
    %v1825 = vsel %vm33, %v1750, 0
    %v1828 = vsel %vm33, %v1751, 0
    %v1831 = vsel %vm33, %v1752, 0
    %v1834 = vsel %vm33, %v1753, 0
    %v1837 = vsel %vm33, %v1754, 0
    %v1840 = vsel %vm33, %v1755, 0
    %v1843 = vsel %vm33, %v1756, 0
    %v1846 = vsel %vm33, %v1757, 0
    %v1849 = vsel %vm33, %v1758, 0
    %v1852 = vsel %vm33, %v1759, 0
    %v1855 = vsel %vm33, %v1760, 0
    %v1858 = vsel %vm33, %v1761, 0
    %v1861 = vsel %vm33, %v1762, 0
    %v1864 = vsel %vm33, %v1763, 0
    %v1867 = vsel %vm33, %v1764, 0
    %v1870 = vsel %vm33, %v1765, 0
    %v1873 = vsel %vm33, %v1766, 0
    %v1876 = vsel %vm33, %v1767, 0
    %v1879 = vsel %vm33, %v1768, 0
    %v1882 = vsel %vm33, %v1769, 0
    %v1885 = vsel %vm33, %v1770, 0
    %v1888 = vsel %vm33, %v1771, 0
    %v1891 = vsel %vm33, %v1772, 0
    %v1894 = vsel %vm33, %v1773, 0
    %v1897 = vsel %vm33, %v1774, 0
    %v1900 = vsel %vm33, %v1775, 0
    %v1903 = vsel %vm33, %v1776, 0
    %v1906 = vsel %vm33, %v1777, 0
    %v1909 = vsel %vm33, %v1778, 0
    %v1912 = vsel %vm33, %v1779, 0
    %v1915 = vsel %vm33, %v1780, 0
    %v1918 = vsel %vm33, %v1781, 0
    %v1921 = vsel %vm33, %v1782, 0
    %v1924 = vsel %vm33, %v1783, 0
    %v1927 = vsel %vm33, %v1784, 0
    %v1930 = vsel %vm33, %v1785, 0
    %v1933 = vsel %vm33, %v1786, 0
    %v1936 = vsel %vm33, %v1787, 0
    %v1939 = vsel %vm33, %v1788, 0
    %v1942 = vsel %vm33, %v1789, 0
    %v1945 = vsel %vm33, %v1790, 0
    %v1948 = vsel %vm33, %v1791, 0
    %v1951 = vsel %vm33, %v1792, 0
    %v1954 = vsel %vm33, %v1793, 0
    %v1957 = vsel %vm33, %v1794, 0
    %v1960 = vsel %vm33, %v1795, 0
    %v1963 = vsel %vm33, %v1796, 0
    %v1966 = vsel %vm33, %v1797, 0
    %v1969 = vsel %vm33, %v1798, 0
    %v1972 = vsel %vm33, %v1799, 0
    %v1975 = vsel %vm33, %v1800, 0
    %v1978 = vsel %vm33, %v1801, 0
    %v1981 = vsel %vm33, %v1802, 0
    %v1984 = vsel %vm33, %v1803, 0
    %v1987 = vsel %vm33, %v1804, 0
    %v1990 = vsel %vm33, %v1805, 0
    %v1993 = vsel %vm33, %v1806, 0
    %v1996 = vsel %vm33, %v1807, 0
    %v1999 = vsel %vm33, %v1808, 0
    %v2002 = vsel %vm33, %v1809, 0
    %v2005 = vsel %vm595, %v1811, 0
    %2007 = vmatpush.msra.mxu0 0.0
    %2008 = vmatpush.msra.mxu0 0.0
    %2009 = vmatpush.msra.mxu0 0.0
    %2010 = vmatpush.msra.mxu0 0.0
    %2011 = vmatpush.msra.mxu0 0.0
    %2012 = vmatpush.msra.mxu0 0.0
    %2013 = vmatpush.msra.mxu0 0.0
    %2014 = vmatpush.msra.mxu0 0.0
    %2015 = vmatpush.msra.mxu0 0.0
    %2016 = vmatpush.msra.mxu0 0.0
    %2017 = vmatpush.msra.mxu0 0.0
    %2018 = vmatpush.msra.mxu0 0.0
    %2019 = vmatpush.msra.mxu0 0.0
    %2020 = vmatpush.msra.mxu0 0.0
    %2021 = vmatpush.msra.mxu0 0.0
    %2022 = vmatpush.msra.mxu0 %v2005
    %2023 = vmatmul.f32.gmra.mxu0 %v1813
    %v2024 = vpop.f32.mrf.mxu0
    %v2025 = vadd.f32 0.0, %v2024
    %2026 = vmatmul.f32.gmra.mxu0 %v1816
    %v2027 = vpop.f32.mrf.mxu0
    %v2028 = vadd.f32 0.0, %v2027
    %2029 = vmatmul.f32.gmra.mxu0 %v1819
    %v2030 = vpop.f32.mrf.mxu0
    %v2031 = vadd.f32 0.0, %v2030
    %2032 = vmatmul.f32.gmra.mxu0 %v1822
    %v2033 = vpop.f32.mrf.mxu0
    %v2034 = vadd.f32 0.0, %v2033
    %2035 = vmatmul.f32.gmra.mxu0 %v1825
    %v2036 = vpop.f32.mrf.mxu0
    %v2037 = vadd.f32 0.0, %v2036
    %2038 = vmatmul.f32.gmra.mxu0 %v1828
    %v2039 = vpop.f32.mrf.mxu0
    %v2040 = vadd.f32 0.0, %v2039
    %2041 = vmatmul.f32.gmra.mxu0 %v1831
    %v2042 = vpop.f32.mrf.mxu0
    %v2043 = vadd.f32 0.0, %v2042
    %2044 = vmatmul.f32.gmra.mxu0 %v1834
    %v2045 = vpop.f32.mrf.mxu0
    %v2046 = vadd.f32 0.0, %v2045
    %2047 = vmatmul.f32.gmra.mxu0 %v1837
    %v2048 = vpop.f32.mrf.mxu0
    %v2049 = vadd.f32 0.0, %v2048
    %2050 = vmatmul.f32.gmra.mxu0 %v1840
    %v2051 = vpop.f32.mrf.mxu0
    %v2052 = vadd.f32 0.0, %v2051
    %2053 = vmatmul.f32.gmra.mxu0 %v1843
    %v2054 = vpop.f32.mrf.mxu0
    %v2055 = vadd.f32 0.0, %v2054
    %2056 = vmatmul.f32.gmra.mxu0 %v1846
    %v2057 = vpop.f32.mrf.mxu0
    %v2058 = vadd.f32 0.0, %v2057
    %2059 = vmatmul.f32.gmra.mxu0 %v1849
    %v2060 = vpop.f32.mrf.mxu0
    %v2061 = vadd.f32 0.0, %v2060
    %2062 = vmatmul.f32.gmra.mxu0 %v1852
    %v2063 = vpop.f32.mrf.mxu0
    %v2064 = vadd.f32 0.0, %v2063
    %2065 = vmatmul.f32.gmra.mxu0 %v1855
    %v2066 = vpop.f32.mrf.mxu0
    %v2067 = vadd.f32 0.0, %v2066
    %2068 = vmatmul.f32.gmra.mxu0 %v1858
    %v2069 = vpop.f32.mrf.mxu0
    %v2070 = vadd.f32 0.0, %v2069
    %2071 = vmatmul.f32.gmra.mxu0 %v1861
    %v2072 = vpop.f32.mrf.mxu0
    %v2073 = vadd.f32 0.0, %v2072
    %2074 = vmatmul.f32.gmra.mxu0 %v1864
    %v2075 = vpop.f32.mrf.mxu0
    %v2076 = vadd.f32 0.0, %v2075
    %2077 = vmatmul.f32.gmra.mxu0 %v1867
    %v2078 = vpop.f32.mrf.mxu0
    %v2079 = vadd.f32 0.0, %v2078
    %2080 = vmatmul.f32.gmra.mxu0 %v1870
    %v2081 = vpop.f32.mrf.mxu0
    %v2082 = vadd.f32 0.0, %v2081
    %2083 = vmatmul.f32.gmra.mxu0 %v1873
    %v2084 = vpop.f32.mrf.mxu0
    %v2085 = vadd.f32 0.0, %v2084
    %2086 = vmatmul.f32.gmra.mxu0 %v1876
    %v2087 = vpop.f32.mrf.mxu0
    %v2088 = vadd.f32 0.0, %v2087
    %2089 = vmatmul.f32.gmra.mxu0 %v1879
    %v2090 = vpop.f32.mrf.mxu0
    %v2091 = vadd.f32 0.0, %v2090
    %2092 = vmatmul.f32.gmra.mxu0 %v1882
    %v2093 = vpop.f32.mrf.mxu0
    %v2094 = vadd.f32 0.0, %v2093
    %2095 = vmatmul.f32.gmra.mxu0 %v1885
    %v2096 = vpop.f32.mrf.mxu0
    %v2097 = vadd.f32 0.0, %v2096
    %2098 = vmatmul.f32.gmra.mxu0 %v1888
    %v2099 = vpop.f32.mrf.mxu0
    %v2100 = vadd.f32 0.0, %v2099
    %2101 = vmatmul.f32.gmra.mxu0 %v1891
    %v2102 = vpop.f32.mrf.mxu0
    %v2103 = vadd.f32 0.0, %v2102
    %2104 = vmatmul.f32.gmra.mxu0 %v1894
    %v2105 = vpop.f32.mrf.mxu0
    %v2106 = vadd.f32 0.0, %v2105
    %2107 = vmatmul.f32.gmra.mxu0 %v1897
    %v2108 = vpop.f32.mrf.mxu0
    %v2109 = vadd.f32 0.0, %v2108
    %2110 = vmatmul.f32.gmra.mxu0 %v1900
    %v2111 = vpop.f32.mrf.mxu0
    %v2112 = vadd.f32 0.0, %v2111
    %2113 = vmatmul.f32.gmra.mxu0 %v1903
    %v2114 = vpop.f32.mrf.mxu0
    %v2115 = vadd.f32 0.0, %v2114
    %2116 = vmatmul.f32.gmra.mxu0 %v1906
    %v2117 = vpop.f32.mrf.mxu0
    %v2118 = vadd.f32 0.0, %v2117
    %2119 = vmatmul.f32.gmra.mxu0 %v1909
    %v2120 = vpop.f32.mrf.mxu0
    %v2121 = vadd.f32 0.0, %v2120
    %2122 = vmatmul.f32.gmra.mxu0 %v1912
    %v2123 = vpop.f32.mrf.mxu0
    %v2124 = vadd.f32 0.0, %v2123
    %2125 = vmatmul.f32.gmra.mxu0 %v1915
    %v2126 = vpop.f32.mrf.mxu0
    %v2127 = vadd.f32 0.0, %v2126
    %2128 = vmatmul.f32.gmra.mxu0 %v1918
    %v2129 = vpop.f32.mrf.mxu0
    %v2130 = vadd.f32 0.0, %v2129
    %2131 = vmatmul.f32.gmra.mxu0 %v1921
    %v2132 = vpop.f32.mrf.mxu0
    %v2133 = vadd.f32 0.0, %v2132
    %2134 = vmatmul.f32.gmra.mxu0 %v1924
    %v2135 = vpop.f32.mrf.mxu0
    %v2136 = vadd.f32 0.0, %v2135
    %2137 = vmatmul.f32.gmra.mxu0 %v1927
    %v2138 = vpop.f32.mrf.mxu0
    %v2139 = vadd.f32 0.0, %v2138
    %2140 = vmatmul.f32.gmra.mxu0 %v1930
    %v2141 = vpop.f32.mrf.mxu0
    %v2142 = vadd.f32 0.0, %v2141
    %2143 = vmatmul.f32.gmra.mxu0 %v1933
    %v2144 = vpop.f32.mrf.mxu0
    %v2145 = vadd.f32 0.0, %v2144
    %2146 = vmatmul.f32.gmra.mxu0 %v1936
    %v2147 = vpop.f32.mrf.mxu0
    %v2148 = vadd.f32 0.0, %v2147
    %2149 = vmatmul.f32.gmra.mxu0 %v1939
    %v2150 = vpop.f32.mrf.mxu0
    %v2151 = vadd.f32 0.0, %v2150
    %2152 = vmatmul.f32.gmra.mxu0 %v1942
    %v2153 = vpop.f32.mrf.mxu0
    %v2154 = vadd.f32 0.0, %v2153
    %2155 = vmatmul.f32.gmra.mxu0 %v1945
    %v2156 = vpop.f32.mrf.mxu0
    %v2157 = vadd.f32 0.0, %v2156
    %2158 = vmatmul.f32.gmra.mxu0 %v1948
    %v2159 = vpop.f32.mrf.mxu0
    %v2160 = vadd.f32 0.0, %v2159
    %2161 = vmatmul.f32.gmra.mxu0 %v1951
    %v2162 = vpop.f32.mrf.mxu0
    %v2163 = vadd.f32 0.0, %v2162
    %2164 = vmatmul.f32.gmra.mxu0 %v1954
    %v2165 = vpop.f32.mrf.mxu0
    %v2166 = vadd.f32 0.0, %v2165
    %2167 = vmatmul.f32.gmra.mxu0 %v1957
    %v2168 = vpop.f32.mrf.mxu0
    %v2169 = vadd.f32 0.0, %v2168
    %2170 = vmatmul.f32.gmra.mxu0 %v1960
    %v2171 = vpop.f32.mrf.mxu0
    %v2172 = vadd.f32 0.0, %v2171
    %2173 = vmatmul.f32.gmra.mxu0 %v1963
    %v2174 = vpop.f32.mrf.mxu0
    %v2175 = vadd.f32 0.0, %v2174
    %2176 = vmatmul.f32.gmra.mxu0 %v1966
    %v2177 = vpop.f32.mrf.mxu0
    %v2178 = vadd.f32 0.0, %v2177
    %2179 = vmatmul.f32.gmra.mxu0 %v1969
    %v2180 = vpop.f32.mrf.mxu0
    %v2181 = vadd.f32 0.0, %v2180
    %2182 = vmatmul.f32.gmra.mxu0 %v1972
    %v2183 = vpop.f32.mrf.mxu0
    %v2184 = vadd.f32 0.0, %v2183
    %2185 = vmatmul.f32.gmra.mxu0 %v1975
    %v2186 = vpop.f32.mrf.mxu0
    %v2187 = vadd.f32 0.0, %v2186
    %2188 = vmatmul.f32.gmra.mxu0 %v1978
    %v2189 = vpop.f32.mrf.mxu0
    %v2190 = vadd.f32 0.0, %v2189
    %2191 = vmatmul.f32.gmra.mxu0 %v1981
    %v2192 = vpop.f32.mrf.mxu0
    %v2193 = vadd.f32 0.0, %v2192
    %2194 = vmatmul.f32.gmra.mxu0 %v1984
    %v2195 = vpop.f32.mrf.mxu0
    %v2196 = vadd.f32 0.0, %v2195
    %2197 = vmatmul.f32.gmra.mxu0 %v1987
    %v2198 = vpop.f32.mrf.mxu0
    %v2199 = vadd.f32 0.0, %v2198
    %2200 = vmatmul.f32.gmra.mxu0 %v1990
    %v2201 = vpop.f32.mrf.mxu0
    %v2202 = vadd.f32 0.0, %v2201
    %2203 = vmatmul.f32.gmra.mxu0 %v1993
    %v2204 = vpop.f32.mrf.mxu0
    %v2205 = vadd.f32 0.0, %v2204
    %2206 = vmatmul.f32.gmra.mxu0 %v1996
    %v2207 = vpop.f32.mrf.mxu0
    %v2208 = vadd.f32 0.0, %v2207
    %2209 = vmatmul.f32.gmra.mxu0 %v1999
    %v2210 = vpop.f32.mrf.mxu0
    %v2211 = vadd.f32 0.0, %v2210
    %2212 = vmatmul.f32.gmra.mxu0 %v2002
    %v2213 = vpop.f32.mrf.mxu0
    %v2214 = vadd.f32 0.0, %v2213
    %2215 = vdwg.mxu0
    %v2216 = vadd.f32 %v1682, %v2025
    %v2217 = vadd.f32 %v1683, %v2028
    %v2218 = vadd.f32 %v1684, %v2031
    %v2219 = vadd.f32 %v1685, %v2034
    %v2220 = vadd.f32 %v1686, %v2037
    %v2221 = vadd.f32 %v1687, %v2040
    %v2222 = vadd.f32 %v1688, %v2043
    %v2223 = vadd.f32 %v1689, %v2046
    %v2224 = vadd.f32 %v1690, %v2049
    %v2225 = vadd.f32 %v1691, %v2052
    %v2226 = vadd.f32 %v1692, %v2055
    %v2227 = vadd.f32 %v1693, %v2058
    %v2228 = vadd.f32 %v1694, %v2061
    %v2229 = vadd.f32 %v1695, %v2064
    %v2230 = vadd.f32 %v1696, %v2067
    %v2231 = vadd.f32 %v1697, %v2070
    %v2232 = vadd.f32 %v1698, %v2073
    %v2233 = vadd.f32 %v1699, %v2076
    %v2234 = vadd.f32 %v1700, %v2079
    %v2235 = vadd.f32 %v1701, %v2082
    %v2236 = vadd.f32 %v1702, %v2085
    %v2237 = vadd.f32 %v1703, %v2088
    %v2238 = vadd.f32 %v1704, %v2091
    %v2239 = vadd.f32 %v1705, %v2094
    %v2240 = vadd.f32 %v1706, %v2097
    %v2241 = vadd.f32 %v1707, %v2100
    %v2242 = vadd.f32 %v1708, %v2103
    %v2243 = vadd.f32 %v1709, %v2106
    %v2244 = vadd.f32 %v1710, %v2109
    %v2245 = vadd.f32 %v1711, %v2112
    %v2246 = vadd.f32 %v1712, %v2115
    %v2247 = vadd.f32 %v1713, %v2118
    %v2248 = vadd.f32 %v1714, %v2121
    %v2249 = vadd.f32 %v1715, %v2124
    %v2250 = vadd.f32 %v1716, %v2127
    %v2251 = vadd.f32 %v1717, %v2130
    %v2252 = vadd.f32 %v1718, %v2133
    %v2253 = vadd.f32 %v1719, %v2136
    %v2254 = vadd.f32 %v1720, %v2139
    %v2255 = vadd.f32 %v1721, %v2142
    %v2256 = vadd.f32 %v1722, %v2145
    %v2257 = vadd.f32 %v1723, %v2148
    %v2258 = vadd.f32 %v1724, %v2151
    %v2259 = vadd.f32 %v1725, %v2154
    %v2260 = vadd.f32 %v1726, %v2157
    %v2261 = vadd.f32 %v1727, %v2160
    %v2262 = vadd.f32 %v1728, %v2163
    %v2263 = vadd.f32 %v1729, %v2166
    %v2264 = vadd.f32 %v1730, %v2169
    %v2265 = vadd.f32 %v1731, %v2172
    %v2266 = vadd.f32 %v1732, %v2175
    %v2267 = vadd.f32 %v1733, %v2178
    %v2268 = vadd.f32 %v1734, %v2181
    %v2269 = vadd.f32 %v1735, %v2184
    %v2270 = vadd.f32 %v1736, %v2187
    %v2271 = vadd.f32 %v1737, %v2190
    %v2272 = vadd.f32 %v1738, %v2193
    %v2273 = vadd.f32 %v1739, %v2196
    %v2274 = vadd.f32 %v1740, %v2199
    %v2275 = vadd.f32 %v1741, %v2202
    %v2276 = vadd.f32 %v1742, %v2205
    %v2277 = vadd.f32 %v1743, %v2208
    %v2278 = vadd.f32 %v1744, %v2211
    %v2279 = vadd.f32 %v1745, %v2214
    %v2280 = vld [vmem:[%s207 + $0x1] sm:$0xff]
    %v2281 = vld [vmem:[%s207 + $0x9] sm:$0xff]
    %v2282 = vld [vmem:[%s207 + $0x19] sm:$0xff]
    %v2283 = vld [vmem:[%s207 + $0x21] sm:$0xff]
    %v2284 = vld [vmem:[%s207 + $0x31] sm:$0xff]
    %v2285 = vld [vmem:[%s207 + $0x39] sm:$0xff]
    %v2286 = vld [vmem:[%s207 + $0x49] sm:$0xff]
    %v2287 = vld [vmem:[%s207 + $0x51] sm:$0xff]
    %v2288 = vld [vmem:[%s207 + $0x61] sm:$0xff]
    %v2289 = vld [vmem:[%s207 + $0x69] sm:$0xff]
    %v2290 = vld [vmem:[%s207 + $0x79] sm:$0xff]
    %v2291 = vld [vmem:[%s207 + $0x81] sm:$0xff]
    %v2292 = vld [vmem:[%s207 + $0x91] sm:$0xff]
    %v2293 = vld [vmem:[%s207 + $0x99] sm:$0xff]
    %v2294 = vld [vmem:[%s207 + $0xa9] sm:$0xff]
    %v2295 = vld [vmem:[%s207 + $0xb1] sm:$0xff]
    %v2296 = vld [vmem:[%s207 + $0xc1] sm:$0xff]
    %v2297 = vld [vmem:[%s207 + $0xc9] sm:$0xff]
    %v2298 = vld [vmem:[%s207 + $0xd9] sm:$0xff]
    %v2299 = vld [vmem:[%s207 + $0xe1] sm:$0xff]
    %v2300 = vld [vmem:[%s207 + $0xf1] sm:$0xff]
    %v2301 = vld [vmem:[%s207 + $0xf9] sm:$0xff]
    %v2302 = vld [vmem:[%s207 + $0x109] sm:$0xff]
    %v2303 = vld [vmem:[%s207 + $0x111] sm:$0xff]
    %v2304 = vld [vmem:[%s207 + $0x121] sm:$0xff]
    %v2305 = vld [vmem:[%s207 + $0x129] sm:$0xff]
    %v2306 = vld [vmem:[%s207 + $0x139] sm:$0xff]
    %v2307 = vld [vmem:[%s207 + $0x141] sm:$0xff]
    %v2308 = vld [vmem:[%s207 + $0x151] sm:$0xff]
    %v2309 = vld [vmem:[%s207 + $0x159] sm:$0xff]
    %v2310 = vld [vmem:[%s207 + $0x169] sm:$0xff]
    %v2311 = vld [vmem:[%s207 + $0x171] sm:$0xff]
    %v2312 = vld [vmem:[%s207 + $0x1b1] sm:$0xff]
    %v2313 = vld [vmem:[%s207 + $0x1b9] sm:$0xff]
    %v2314 = vld [vmem:[%s207 + $0x1c9] sm:$0xff]
    %v2315 = vld [vmem:[%s207 + $0x1d1] sm:$0xff]
    %v2316 = vld [vmem:[%s207 + $0x1e1] sm:$0xff]
    %v2317 = vld [vmem:[%s207 + $0x1e9] sm:$0xff]
    %v2318 = vld [vmem:[%s207 + $0x1f9] sm:$0xff]
    %v2319 = vld [vmem:[%s207 + $0x201] sm:$0xff]
    %v2320 = vld [vmem:[%s207 + $0x211] sm:$0xff]
    %v2321 = vld [vmem:[%s207 + $0x219] sm:$0xff]
    %v2322 = vld [vmem:[%s207 + $0x229] sm:$0xff]
    %v2323 = vld [vmem:[%s207 + $0x231] sm:$0xff]
    %v2324 = vld [vmem:[%s207 + $0x241] sm:$0xff]
    %v2325 = vld [vmem:[%s207 + $0x249] sm:$0xff]
    %v2326 = vld [vmem:[%s207 + $0x259] sm:$0xff]
    %v2327 = vld [vmem:[%s207 + $0x261] sm:$0xff]
    %v2328 = vld [vmem:[%s207 + $0x271] sm:$0xff]
    %v2329 = vld [vmem:[%s207 + $0x279] sm:$0xff]
    %v2330 = vld [vmem:[%s207 + $0x289] sm:$0xff]
    %v2331 = vld [vmem:[%s207 + $0x291] sm:$0xff]
    %v2332 = vld [vmem:[%s207 + $0x2a1] sm:$0xff]
    %v2333 = vld [vmem:[%s207 + $0x2a9] sm:$0xff]
    %v2334 = vld [vmem:[%s207 + $0x2b9] sm:$0xff]
    %v2335 = vld [vmem:[%s207 + $0x2c1] sm:$0xff]
    %v2336 = vld [vmem:[%s207 + $0x2d1] sm:$0xff]
    %v2337 = vld [vmem:[%s207 + $0x2d9] sm:$0xff]
    %v2338 = vld [vmem:[%s207 + $0x2e9] sm:$0xff]
    %v2339 = vld [vmem:[%s207 + $0x2f1] sm:$0xff]
    %v2340 = vld [vmem:[%s207 + $0x301] sm:$0xff]
    %v2341 = vld [vmem:[%s207 + $0x309] sm:$0xff]
    %v2342 = vld [vmem:[%s207 + $0x319] sm:$0xff]
    %v2343 = vld [vmem:[%s207 + $0x321] sm:$0xff]
    %s2344 = scalar_lea.vmem %s1, 16
    %v2345 = vld [vmem:[%s2344] sm:$0xf]
    %v2347 = vsel %vm33, %v2280, 0
    %v2350 = vsel %vm33, %v2281, 0
    %v2353 = vsel %vm33, %v2282, 0
    %v2356 = vsel %vm33, %v2283, 0
    %v2359 = vsel %vm33, %v2284, 0
    %v2362 = vsel %vm33, %v2285, 0
    %v2365 = vsel %vm33, %v2286, 0
    %v2368 = vsel %vm33, %v2287, 0
    %v2371 = vsel %vm33, %v2288, 0
    %v2374 = vsel %vm33, %v2289, 0
    %v2377 = vsel %vm33, %v2290, 0
    %v2380 = vsel %vm33, %v2291, 0
    %v2383 = vsel %vm33, %v2292, 0
    %v2386 = vsel %vm33, %v2293, 0
    %v2389 = vsel %vm33, %v2294, 0
    %v2392 = vsel %vm33, %v2295, 0
    %v2395 = vsel %vm33, %v2296, 0
    %v2398 = vsel %vm33, %v2297, 0
    %v2401 = vsel %vm33, %v2298, 0
    %v2404 = vsel %vm33, %v2299, 0
    %v2407 = vsel %vm33, %v2300, 0
    %v2410 = vsel %vm33, %v2301, 0
    %v2413 = vsel %vm33, %v2302, 0
    %v2416 = vsel %vm33, %v2303, 0
    %v2419 = vsel %vm33, %v2304, 0
    %v2422 = vsel %vm33, %v2305, 0
    %v2425 = vsel %vm33, %v2306, 0
    %v2428 = vsel %vm33, %v2307, 0
    %v2431 = vsel %vm33, %v2308, 0
    %v2434 = vsel %vm33, %v2309, 0
    %v2437 = vsel %vm33, %v2310, 0
    %v2440 = vsel %vm33, %v2311, 0
    %v2443 = vsel %vm33, %v2312, 0
    %v2446 = vsel %vm33, %v2313, 0
    %v2449 = vsel %vm33, %v2314, 0
    %v2452 = vsel %vm33, %v2315, 0
    %v2455 = vsel %vm33, %v2316, 0
    %v2458 = vsel %vm33, %v2317, 0
    %v2461 = vsel %vm33, %v2318, 0
    %v2464 = vsel %vm33, %v2319, 0
    %v2467 = vsel %vm33, %v2320, 0
    %v2470 = vsel %vm33, %v2321, 0
    %v2473 = vsel %vm33, %v2322, 0
    %v2476 = vsel %vm33, %v2323, 0
    %v2479 = vsel %vm33, %v2324, 0
    %v2482 = vsel %vm33, %v2325, 0
    %v2485 = vsel %vm33, %v2326, 0
    %v2488 = vsel %vm33, %v2327, 0
    %v2491 = vsel %vm33, %v2328, 0
    %v2494 = vsel %vm33, %v2329, 0
    %v2497 = vsel %vm33, %v2330, 0
    %v2500 = vsel %vm33, %v2331, 0
    %v2503 = vsel %vm33, %v2332, 0
    %v2506 = vsel %vm33, %v2333, 0
    %v2509 = vsel %vm33, %v2334, 0
    %v2512 = vsel %vm33, %v2335, 0
    %v2515 = vsel %vm33, %v2336, 0
    %v2518 = vsel %vm33, %v2337, 0
    %v2521 = vsel %vm33, %v2338, 0
    %v2524 = vsel %vm33, %v2339, 0
    %v2527 = vsel %vm33, %v2340, 0
    %v2530 = vsel %vm33, %v2341, 0
    %v2533 = vsel %vm33, %v2342, 0
    %v2536 = vsel %vm33, %v2343, 0
    %v2539 = vsel %vm595, %v2345, 0
    %2541 = vmatpush.msra.mxu0 0.0
    %2542 = vmatpush.msra.mxu0 0.0
    %2543 = vmatpush.msra.mxu0 0.0
    %2544 = vmatpush.msra.mxu0 0.0
    %2545 = vmatpush.msra.mxu0 0.0
    %2546 = vmatpush.msra.mxu0 0.0
    %2547 = vmatpush.msra.mxu0 0.0
    %2548 = vmatpush.msra.mxu0 0.0
    %2549 = vmatpush.msra.mxu0 0.0
    %2550 = vmatpush.msra.mxu0 0.0
    %2551 = vmatpush.msra.mxu0 0.0
    %2552 = vmatpush.msra.mxu0 0.0
    %2553 = vmatpush.msra.mxu0 0.0
    %2554 = vmatpush.msra.mxu0 0.0
    %2555 = vmatpush.msra.mxu0 0.0
    %2556 = vmatpush.msra.mxu0 %v2539
    %2557 = vmatmul.f32.gmra.mxu0 %v2347
    %v2558 = vpop.f32.mrf.mxu0
    %v2559 = vadd.f32 0.0, %v2558
    %2560 = vmatmul.f32.gmra.mxu0 %v2350
    %v2561 = vpop.f32.mrf.mxu0
    %v2562 = vadd.f32 0.0, %v2561
    %2563 = vmatmul.f32.gmra.mxu0 %v2353
    %v2564 = vpop.f32.mrf.mxu0
    %v2565 = vadd.f32 0.0, %v2564
    %2566 = vmatmul.f32.gmra.mxu0 %v2356
    %v2567 = vpop.f32.mrf.mxu0
    %v2568 = vadd.f32 0.0, %v2567
    %2569 = vmatmul.f32.gmra.mxu0 %v2359
    %v2570 = vpop.f32.mrf.mxu0
    %v2571 = vadd.f32 0.0, %v2570
    %2572 = vmatmul.f32.gmra.mxu0 %v2362
    %v2573 = vpop.f32.mrf.mxu0
    %v2574 = vadd.f32 0.0, %v2573
    %2575 = vmatmul.f32.gmra.mxu0 %v2365
    %v2576 = vpop.f32.mrf.mxu0
    %v2577 = vadd.f32 0.0, %v2576
    %2578 = vmatmul.f32.gmra.mxu0 %v2368
    %v2579 = vpop.f32.mrf.mxu0
    %v2580 = vadd.f32 0.0, %v2579
    %2581 = vmatmul.f32.gmra.mxu0 %v2371
    %v2582 = vpop.f32.mrf.mxu0
    %v2583 = vadd.f32 0.0, %v2582
    %2584 = vmatmul.f32.gmra.mxu0 %v2374
    %v2585 = vpop.f32.mrf.mxu0
    %v2586 = vadd.f32 0.0, %v2585
    %2587 = vmatmul.f32.gmra.mxu0 %v2377
    %v2588 = vpop.f32.mrf.mxu0
    %v2589 = vadd.f32 0.0, %v2588
    %2590 = vmatmul.f32.gmra.mxu0 %v2380
    %v2591 = vpop.f32.mrf.mxu0
    %v2592 = vadd.f32 0.0, %v2591
    %2593 = vmatmul.f32.gmra.mxu0 %v2383
    %v2594 = vpop.f32.mrf.mxu0
    %v2595 = vadd.f32 0.0, %v2594
    %2596 = vmatmul.f32.gmra.mxu0 %v2386
    %v2597 = vpop.f32.mrf.mxu0
    %v2598 = vadd.f32 0.0, %v2597
    %2599 = vmatmul.f32.gmra.mxu0 %v2389
    %v2600 = vpop.f32.mrf.mxu0
    %v2601 = vadd.f32 0.0, %v2600
    %2602 = vmatmul.f32.gmra.mxu0 %v2392
    %v2603 = vpop.f32.mrf.mxu0
    %v2604 = vadd.f32 0.0, %v2603
    %2605 = vmatmul.f32.gmra.mxu0 %v2395
    %v2606 = vpop.f32.mrf.mxu0
    %v2607 = vadd.f32 0.0, %v2606
    %2608 = vmatmul.f32.gmra.mxu0 %v2398
    %v2609 = vpop.f32.mrf.mxu0
    %v2610 = vadd.f32 0.0, %v2609
    %2611 = vmatmul.f32.gmra.mxu0 %v2401
    %v2612 = vpop.f32.mrf.mxu0
    %v2613 = vadd.f32 0.0, %v2612
    %2614 = vmatmul.f32.gmra.mxu0 %v2404
    %v2615 = vpop.f32.mrf.mxu0
    %v2616 = vadd.f32 0.0, %v2615
    %2617 = vmatmul.f32.gmra.mxu0 %v2407
    %v2618 = vpop.f32.mrf.mxu0
    %v2619 = vadd.f32 0.0, %v2618
    %2620 = vmatmul.f32.gmra.mxu0 %v2410
    %v2621 = vpop.f32.mrf.mxu0
    %v2622 = vadd.f32 0.0, %v2621
    %2623 = vmatmul.f32.gmra.mxu0 %v2413
    %v2624 = vpop.f32.mrf.mxu0
    %v2625 = vadd.f32 0.0, %v2624
    %2626 = vmatmul.f32.gmra.mxu0 %v2416
    %v2627 = vpop.f32.mrf.mxu0
    %v2628 = vadd.f32 0.0, %v2627
    %2629 = vmatmul.f32.gmra.mxu0 %v2419
    %v2630 = vpop.f32.mrf.mxu0
    %v2631 = vadd.f32 0.0, %v2630
    %2632 = vmatmul.f32.gmra.mxu0 %v2422
    %v2633 = vpop.f32.mrf.mxu0
    %v2634 = vadd.f32 0.0, %v2633
    %2635 = vmatmul.f32.gmra.mxu0 %v2425
    %v2636 = vpop.f32.mrf.mxu0
    %v2637 = vadd.f32 0.0, %v2636
    %2638 = vmatmul.f32.gmra.mxu0 %v2428
    %v2639 = vpop.f32.mrf.mxu0
    %v2640 = vadd.f32 0.0, %v2639
    %2641 = vmatmul.f32.gmra.mxu0 %v2431
    %v2642 = vpop.f32.mrf.mxu0
    %v2643 = vadd.f32 0.0, %v2642
    %2644 = vmatmul.f32.gmra.mxu0 %v2434
    %v2645 = vpop.f32.mrf.mxu0
    %v2646 = vadd.f32 0.0, %v2645
    %2647 = vmatmul.f32.gmra.mxu0 %v2437
    %v2648 = vpop.f32.mrf.mxu0
    %v2649 = vadd.f32 0.0, %v2648
    %2650 = vmatmul.f32.gmra.mxu0 %v2440
    %v2651 = vpop.f32.mrf.mxu0
    %v2652 = vadd.f32 0.0, %v2651
    %2653 = vmatmul.f32.gmra.mxu0 %v2443
    %v2654 = vpop.f32.mrf.mxu0
    %v2655 = vadd.f32 0.0, %v2654
    %2656 = vmatmul.f32.gmra.mxu0 %v2446
    %v2657 = vpop.f32.mrf.mxu0
    %v2658 = vadd.f32 0.0, %v2657
    %2659 = vmatmul.f32.gmra.mxu0 %v2449
    %v2660 = vpop.f32.mrf.mxu0
    %v2661 = vadd.f32 0.0, %v2660
    %2662 = vmatmul.f32.gmra.mxu0 %v2452
    %v2663 = vpop.f32.mrf.mxu0
    %v2664 = vadd.f32 0.0, %v2663
    %2665 = vmatmul.f32.gmra.mxu0 %v2455
    %v2666 = vpop.f32.mrf.mxu0
    %v2667 = vadd.f32 0.0, %v2666
    %2668 = vmatmul.f32.gmra.mxu0 %v2458
    %v2669 = vpop.f32.mrf.mxu0
    %v2670 = vadd.f32 0.0, %v2669
    %2671 = vmatmul.f32.gmra.mxu0 %v2461
    %v2672 = vpop.f32.mrf.mxu0
    %v2673 = vadd.f32 0.0, %v2672
    %2674 = vmatmul.f32.gmra.mxu0 %v2464
    %v2675 = vpop.f32.mrf.mxu0
    %v2676 = vadd.f32 0.0, %v2675
    %2677 = vmatmul.f32.gmra.mxu0 %v2467
    %v2678 = vpop.f32.mrf.mxu0
    %v2679 = vadd.f32 0.0, %v2678
    %2680 = vmatmul.f32.gmra.mxu0 %v2470
    %v2681 = vpop.f32.mrf.mxu0
    %v2682 = vadd.f32 0.0, %v2681
    %2683 = vmatmul.f32.gmra.mxu0 %v2473
    %v2684 = vpop.f32.mrf.mxu0
    %v2685 = vadd.f32 0.0, %v2684
    %2686 = vmatmul.f32.gmra.mxu0 %v2476
    %v2687 = vpop.f32.mrf.mxu0
    %v2688 = vadd.f32 0.0, %v2687
    %2689 = vmatmul.f32.gmra.mxu0 %v2479
    %v2690 = vpop.f32.mrf.mxu0
    %v2691 = vadd.f32 0.0, %v2690
    %2692 = vmatmul.f32.gmra.mxu0 %v2482
    %v2693 = vpop.f32.mrf.mxu0
    %v2694 = vadd.f32 0.0, %v2693
    %2695 = vmatmul.f32.gmra.mxu0 %v2485
    %v2696 = vpop.f32.mrf.mxu0
    %v2697 = vadd.f32 0.0, %v2696
    %2698 = vmatmul.f32.gmra.mxu0 %v2488
    %v2699 = vpop.f32.mrf.mxu0
    %v2700 = vadd.f32 0.0, %v2699
    %2701 = vmatmul.f32.gmra.mxu0 %v2491
    %v2702 = vpop.f32.mrf.mxu0
    %v2703 = vadd.f32 0.0, %v2702
    %2704 = vmatmul.f32.gmra.mxu0 %v2494
    %v2705 = vpop.f32.mrf.mxu0
    %v2706 = vadd.f32 0.0, %v2705
    %2707 = vmatmul.f32.gmra.mxu0 %v2497
    %v2708 = vpop.f32.mrf.mxu0
    %v2709 = vadd.f32 0.0, %v2708
    %2710 = vmatmul.f32.gmra.mxu0 %v2500
    %v2711 = vpop.f32.mrf.mxu0
    %v2712 = vadd.f32 0.0, %v2711
    %2713 = vmatmul.f32.gmra.mxu0 %v2503
    %v2714 = vpop.f32.mrf.mxu0
    %v2715 = vadd.f32 0.0, %v2714
    %2716 = vmatmul.f32.gmra.mxu0 %v2506
    %v2717 = vpop.f32.mrf.mxu0
    %v2718 = vadd.f32 0.0, %v2717
    %2719 = vmatmul.f32.gmra.mxu0 %v2509
    %v2720 = vpop.f32.mrf.mxu0
    %v2721 = vadd.f32 0.0, %v2720
    %2722 = vmatmul.f32.gmra.mxu0 %v2512
    %v2723 = vpop.f32.mrf.mxu0
    %v2724 = vadd.f32 0.0, %v2723
    %2725 = vmatmul.f32.gmra.mxu0 %v2515
    %v2726 = vpop.f32.mrf.mxu0
    %v2727 = vadd.f32 0.0, %v2726
    %2728 = vmatmul.f32.gmra.mxu0 %v2518
    %v2729 = vpop.f32.mrf.mxu0
    %v2730 = vadd.f32 0.0, %v2729
    %2731 = vmatmul.f32.gmra.mxu0 %v2521
    %v2732 = vpop.f32.mrf.mxu0
    %v2733 = vadd.f32 0.0, %v2732
    %2734 = vmatmul.f32.gmra.mxu0 %v2524
    %v2735 = vpop.f32.mrf.mxu0
    %v2736 = vadd.f32 0.0, %v2735
    %2737 = vmatmul.f32.gmra.mxu0 %v2527
    %v2738 = vpop.f32.mrf.mxu0
    %v2739 = vadd.f32 0.0, %v2738
    %2740 = vmatmul.f32.gmra.mxu0 %v2530
    %v2741 = vpop.f32.mrf.mxu0
    %v2742 = vadd.f32 0.0, %v2741
    %2743 = vmatmul.f32.gmra.mxu0 %v2533
    %v2744 = vpop.f32.mrf.mxu0
    %v2745 = vadd.f32 0.0, %v2744
    %2746 = vmatmul.f32.gmra.mxu0 %v2536
    %v2747 = vpop.f32.mrf.mxu0
    %v2748 = vadd.f32 0.0, %v2747
    %2749 = vdwg.mxu0
    %v2750 = vadd.f32 %v2216, %v2559
    %v2751 = vadd.f32 %v2217, %v2562
    %v2752 = vadd.f32 %v2218, %v2565
    %v2753 = vadd.f32 %v2219, %v2568
    %v2754 = vadd.f32 %v2220, %v2571
    %v2755 = vadd.f32 %v2221, %v2574
    %v2756 = vadd.f32 %v2222, %v2577
    %v2757 = vadd.f32 %v2223, %v2580
    %v2758 = vadd.f32 %v2224, %v2583
    %v2759 = vadd.f32 %v2225, %v2586
    %v2760 = vadd.f32 %v2226, %v2589
    %v2761 = vadd.f32 %v2227, %v2592
    %v2762 = vadd.f32 %v2228, %v2595
    %v2763 = vadd.f32 %v2229, %v2598
    %v2764 = vadd.f32 %v2230, %v2601
    %v2765 = vadd.f32 %v2231, %v2604
    %v2766 = vadd.f32 %v2232, %v2607
    %v2767 = vadd.f32 %v2233, %v2610
    %v2768 = vadd.f32 %v2234, %v2613
    %v2769 = vadd.f32 %v2235, %v2616
    %v2770 = vadd.f32 %v2236, %v2619
    %v2771 = vadd.f32 %v2237, %v2622
    %v2772 = vadd.f32 %v2238, %v2625
    %v2773 = vadd.f32 %v2239, %v2628
    %v2774 = vadd.f32 %v2240, %v2631
    %v2775 = vadd.f32 %v2241, %v2634
    %v2776 = vadd.f32 %v2242, %v2637
    %v2777 = vadd.f32 %v2243, %v2640
    %v2778 = vadd.f32 %v2244, %v2643
    %v2779 = vadd.f32 %v2245, %v2646
    %v2780 = vadd.f32 %v2246, %v2649
    %v2781 = vadd.f32 %v2247, %v2652
    %v2782 = vadd.f32 %v2248, %v2655
    %v2783 = vadd.f32 %v2249, %v2658
    %v2784 = vadd.f32 %v2250, %v2661
    %v2785 = vadd.f32 %v2251, %v2664
    %v2786 = vadd.f32 %v2252, %v2667
    %v2787 = vadd.f32 %v2253, %v2670
    %v2788 = vadd.f32 %v2254, %v2673
    %v2789 = vadd.f32 %v2255, %v2676
    %v2790 = vadd.f32 %v2256, %v2679
    %v2791 = vadd.f32 %v2257, %v2682
    %v2792 = vadd.f32 %v2258, %v2685
    %v2793 = vadd.f32 %v2259, %v2688
    %v2794 = vadd.f32 %v2260, %v2691
    %v2795 = vadd.f32 %v2261, %v2694
    %v2796 = vadd.f32 %v2262, %v2697
    %v2797 = vadd.f32 %v2263, %v2700
    %v2798 = vadd.f32 %v2264, %v2703
    %v2799 = vadd.f32 %v2265, %v2706
    %v2800 = vadd.f32 %v2266, %v2709
    %v2801 = vadd.f32 %v2267, %v2712
    %v2802 = vadd.f32 %v2268, %v2715
    %v2803 = vadd.f32 %v2269, %v2718
    %v2804 = vadd.f32 %v2270, %v2721
    %v2805 = vadd.f32 %v2271, %v2724
    %v2806 = vadd.f32 %v2272, %v2727
    %v2807 = vadd.f32 %v2273, %v2730
    %v2808 = vadd.f32 %v2274, %v2733
    %v2809 = vadd.f32 %v2275, %v2736
    %v2810 = vadd.f32 %v2276, %v2739
    %v2811 = vadd.f32 %v2277, %v2742
    %v2812 = vadd.f32 %v2278, %v2745
    %v2813 = vadd.f32 %v2279, %v2748
    %v2814 = vld [vmem:[%s207 + $0x2] sm:$0xff]
    %v2815 = vld [vmem:[%s207 + $0xa] sm:$0xff]
    %v2816 = vld [vmem:[%s207 + $0x1a] sm:$0xff]
    %v2817 = vld [vmem:[%s207 + $0x22] sm:$0xff]
    %v2818 = vld [vmem:[%s207 + $0x32] sm:$0xff]
    %v2819 = vld [vmem:[%s207 + $0x3a] sm:$0xff]
    %v2820 = vld [vmem:[%s207 + $0x4a] sm:$0xff]
    %v2821 = vld [vmem:[%s207 + $0x52] sm:$0xff]
    %v2822 = vld [vmem:[%s207 + $0x62] sm:$0xff]
    %v2823 = vld [vmem:[%s207 + $0x6a] sm:$0xff]
    %v2824 = vld [vmem:[%s207 + $0x7a] sm:$0xff]
    %v2825 = vld [vmem:[%s207 + $0x82] sm:$0xff]
    %v2826 = vld [vmem:[%s207 + $0x92] sm:$0xff]
    %v2827 = vld [vmem:[%s207 + $0x9a] sm:$0xff]
    %v2828 = vld [vmem:[%s207 + $0xaa] sm:$0xff]
    %v2829 = vld [vmem:[%s207 + $0xb2] sm:$0xff]
    %v2830 = vld [vmem:[%s207 + $0xc2] sm:$0xff]
    %v2831 = vld [vmem:[%s207 + $0xca] sm:$0xff]
    %v2832 = vld [vmem:[%s207 + $0xda] sm:$0xff]
    %v2833 = vld [vmem:[%s207 + $0xe2] sm:$0xff]
    %v2834 = vld [vmem:[%s207 + $0xf2] sm:$0xff]
    %v2835 = vld [vmem:[%s207 + $0xfa] sm:$0xff]
    %v2836 = vld [vmem:[%s207 + $0x10a] sm:$0xff]
    %v2837 = vld [vmem:[%s207 + $0x112] sm:$0xff]
    %v2838 = vld [vmem:[%s207 + $0x122] sm:$0xff]
    %v2839 = vld [vmem:[%s207 + $0x12a] sm:$0xff]
    %v2840 = vld [vmem:[%s207 + $0x13a] sm:$0xff]
    %v2841 = vld [vmem:[%s207 + $0x142] sm:$0xff]
    %v2842 = vld [vmem:[%s207 + $0x152] sm:$0xff]
    %v2843 = vld [vmem:[%s207 + $0x15a] sm:$0xff]
    %v2844 = vld [vmem:[%s207 + $0x16a] sm:$0xff]
    %v2845 = vld [vmem:[%s207 + $0x172] sm:$0xff]
    %v2846 = vld [vmem:[%s207 + $0x1b2] sm:$0xff]
    %v2847 = vld [vmem:[%s207 + $0x1ba] sm:$0xff]
    %v2848 = vld [vmem:[%s207 + $0x1ca] sm:$0xff]
    %v2849 = vld [vmem:[%s207 + $0x1d2] sm:$0xff]
    %v2850 = vld [vmem:[%s207 + $0x1e2] sm:$0xff]
    %v2851 = vld [vmem:[%s207 + $0x1ea] sm:$0xff]
    %v2852 = vld [vmem:[%s207 + $0x1fa] sm:$0xff]
    %v2853 = vld [vmem:[%s207 + $0x202] sm:$0xff]
    %v2854 = vld [vmem:[%s207 + $0x212] sm:$0xff]
    %v2855 = vld [vmem:[%s207 + $0x21a] sm:$0xff]
    %v2856 = vld [vmem:[%s207 + $0x22a] sm:$0xff]
    %v2857 = vld [vmem:[%s207 + $0x232] sm:$0xff]
    %v2858 = vld [vmem:[%s207 + $0x242] sm:$0xff]
    %v2859 = vld [vmem:[%s207 + $0x24a] sm:$0xff]
    %v2860 = vld [vmem:[%s207 + $0x25a] sm:$0xff]
    %v2861 = vld [vmem:[%s207 + $0x262] sm:$0xff]
    %v2862 = vld [vmem:[%s207 + $0x272] sm:$0xff]
    %v2863 = vld [vmem:[%s207 + $0x27a] sm:$0xff]
    %v2864 = vld [vmem:[%s207 + $0x28a] sm:$0xff]
    %v2865 = vld [vmem:[%s207 + $0x292] sm:$0xff]
    %v2866 = vld [vmem:[%s207 + $0x2a2] sm:$0xff]
    %v2867 = vld [vmem:[%s207 + $0x2aa] sm:$0xff]
    %v2868 = vld [vmem:[%s207 + $0x2ba] sm:$0xff]
    %v2869 = vld [vmem:[%s207 + $0x2c2] sm:$0xff]
    %v2870 = vld [vmem:[%s207 + $0x2d2] sm:$0xff]
    %v2871 = vld [vmem:[%s207 + $0x2da] sm:$0xff]
    %v2872 = vld [vmem:[%s207 + $0x2ea] sm:$0xff]
    %v2873 = vld [vmem:[%s207 + $0x2f2] sm:$0xff]
    %v2874 = vld [vmem:[%s207 + $0x302] sm:$0xff]
    %v2875 = vld [vmem:[%s207 + $0x30a] sm:$0xff]
    %v2876 = vld [vmem:[%s207 + $0x31a] sm:$0xff]
    %v2877 = vld [vmem:[%s207 + $0x322] sm:$0xff]
    %s2878 = scalar_lea.vmem %s1, 20
    %v2879 = vld [vmem:[%s2878] sm:$0xf]
    %v2881 = vsel %vm33, %v2814, 0
    %v2884 = vsel %vm33, %v2815, 0
    %v2887 = vsel %vm33, %v2816, 0
    %v2890 = vsel %vm33, %v2817, 0
    %v2893 = vsel %vm33, %v2818, 0
    %v2896 = vsel %vm33, %v2819, 0
    %v2899 = vsel %vm33, %v2820, 0
    %v2902 = vsel %vm33, %v2821, 0
    %v2905 = vsel %vm33, %v2822, 0
    %v2908 = vsel %vm33, %v2823, 0
    %v2911 = vsel %vm33, %v2824, 0
    %v2914 = vsel %vm33, %v2825, 0
    %v2917 = vsel %vm33, %v2826, 0
    %v2920 = vsel %vm33, %v2827, 0
    %v2923 = vsel %vm33, %v2828, 0
    %v2926 = vsel %vm33, %v2829, 0
    %v2929 = vsel %vm33, %v2830, 0
    %v2932 = vsel %vm33, %v2831, 0
    %v2935 = vsel %vm33, %v2832, 0
    %v2938 = vsel %vm33, %v2833, 0
    %v2941 = vsel %vm33, %v2834, 0
    %v2944 = vsel %vm33, %v2835, 0
    %v2947 = vsel %vm33, %v2836, 0
    %v2950 = vsel %vm33, %v2837, 0
    %v2953 = vsel %vm33, %v2838, 0
    %v2956 = vsel %vm33, %v2839, 0
    %v2959 = vsel %vm33, %v2840, 0
    %v2962 = vsel %vm33, %v2841, 0
    %v2965 = vsel %vm33, %v2842, 0
    %v2968 = vsel %vm33, %v2843, 0
    %v2971 = vsel %vm33, %v2844, 0
    %v2974 = vsel %vm33, %v2845, 0
    %v2977 = vsel %vm33, %v2846, 0
    %v2980 = vsel %vm33, %v2847, 0
    %v2983 = vsel %vm33, %v2848, 0
    %v2986 = vsel %vm33, %v2849, 0
    %v2989 = vsel %vm33, %v2850, 0
    %v2992 = vsel %vm33, %v2851, 0
    %v2995 = vsel %vm33, %v2852, 0
    %v2998 = vsel %vm33, %v2853, 0
    %v3001 = vsel %vm33, %v2854, 0
    %v3004 = vsel %vm33, %v2855, 0
    %v3007 = vsel %vm33, %v2856, 0
    %v3010 = vsel %vm33, %v2857, 0
    %v3013 = vsel %vm33, %v2858, 0
    %v3016 = vsel %vm33, %v2859, 0
    %v3019 = vsel %vm33, %v2860, 0
    %v3022 = vsel %vm33, %v2861, 0
    %v3025 = vsel %vm33, %v2862, 0
    %v3028 = vsel %vm33, %v2863, 0
    %v3031 = vsel %vm33, %v2864, 0
    %v3034 = vsel %vm33, %v2865, 0
    %v3037 = vsel %vm33, %v2866, 0
    %v3040 = vsel %vm33, %v2867, 0
    %v3043 = vsel %vm33, %v2868, 0
    %v3046 = vsel %vm33, %v2869, 0
    %v3049 = vsel %vm33, %v2870, 0
    %v3052 = vsel %vm33, %v2871, 0
    %v3055 = vsel %vm33, %v2872, 0
    %v3058 = vsel %vm33, %v2873, 0
    %v3061 = vsel %vm33, %v2874, 0
    %v3064 = vsel %vm33, %v2875, 0
    %v3067 = vsel %vm33, %v2876, 0
    %v3070 = vsel %vm33, %v2877, 0
    %v3073 = vsel %vm595, %v2879, 0
    %3075 = vmatpush.msra.mxu0 0.0
    %3076 = vmatpush.msra.mxu0 0.0
    %3077 = vmatpush.msra.mxu0 0.0
    %3078 = vmatpush.msra.mxu0 0.0
    %3079 = vmatpush.msra.mxu0 0.0
    %3080 = vmatpush.msra.mxu0 0.0
    %3081 = vmatpush.msra.mxu0 0.0
    %3082 = vmatpush.msra.mxu0 0.0
    %3083 = vmatpush.msra.mxu0 0.0
    %3084 = vmatpush.msra.mxu0 0.0
    %3085 = vmatpush.msra.mxu0 0.0
    %3086 = vmatpush.msra.mxu0 0.0
    %3087 = vmatpush.msra.mxu0 0.0
    %3088 = vmatpush.msra.mxu0 0.0
    %3089 = vmatpush.msra.mxu0 0.0
    %3090 = vmatpush.msra.mxu0 %v3073
    %3091 = vmatmul.f32.gmra.mxu0 %v2881
    %v3092 = vpop.f32.mrf.mxu0
    %v3093 = vadd.f32 0.0, %v3092
    %3094 = vmatmul.f32.gmra.mxu0 %v2884
    %v3095 = vpop.f32.mrf.mxu0
    %v3096 = vadd.f32 0.0, %v3095
    %3097 = vmatmul.f32.gmra.mxu0 %v2887
    %v3098 = vpop.f32.mrf.mxu0
    %v3099 = vadd.f32 0.0, %v3098
    %3100 = vmatmul.f32.gmra.mxu0 %v2890
    %v3101 = vpop.f32.mrf.mxu0
    %v3102 = vadd.f32 0.0, %v3101
    %3103 = vmatmul.f32.gmra.mxu0 %v2893
    %v3104 = vpop.f32.mrf.mxu0
    %v3105 = vadd.f32 0.0, %v3104
    %3106 = vmatmul.f32.gmra.mxu0 %v2896
    %v3107 = vpop.f32.mrf.mxu0
    %v3108 = vadd.f32 0.0, %v3107
    %3109 = vmatmul.f32.gmra.mxu0 %v2899
    %v3110 = vpop.f32.mrf.mxu0
    %v3111 = vadd.f32 0.0, %v3110
    %3112 = vmatmul.f32.gmra.mxu0 %v2902
    %v3113 = vpop.f32.mrf.mxu0
    %v3114 = vadd.f32 0.0, %v3113
    %3115 = vmatmul.f32.gmra.mxu0 %v2905
    %v3116 = vpop.f32.mrf.mxu0
    %v3117 = vadd.f32 0.0, %v3116
    %3118 = vmatmul.f32.gmra.mxu0 %v2908
    %v3119 = vpop.f32.mrf.mxu0
    %v3120 = vadd.f32 0.0, %v3119
    %3121 = vmatmul.f32.gmra.mxu0 %v2911
    %v3122 = vpop.f32.mrf.mxu0
    %v3123 = vadd.f32 0.0, %v3122
    %3124 = vmatmul.f32.gmra.mxu0 %v2914
    %v3125 = vpop.f32.mrf.mxu0
    %v3126 = vadd.f32 0.0, %v3125
    %3127 = vmatmul.f32.gmra.mxu0 %v2917
    %v3128 = vpop.f32.mrf.mxu0
    %v3129 = vadd.f32 0.0, %v3128
    %3130 = vmatmul.f32.gmra.mxu0 %v2920
    %v3131 = vpop.f32.mrf.mxu0
    %v3132 = vadd.f32 0.0, %v3131
    %3133 = vmatmul.f32.gmra.mxu0 %v2923
    %v3134 = vpop.f32.mrf.mxu0
    %v3135 = vadd.f32 0.0, %v3134
    %3136 = vmatmul.f32.gmra.mxu0 %v2926
    %v3137 = vpop.f32.mrf.mxu0
    %v3138 = vadd.f32 0.0, %v3137
    %3139 = vmatmul.f32.gmra.mxu0 %v2929
    %v3140 = vpop.f32.mrf.mxu0
    %v3141 = vadd.f32 0.0, %v3140
    %3142 = vmatmul.f32.gmra.mxu0 %v2932
    %v3143 = vpop.f32.mrf.mxu0
    %v3144 = vadd.f32 0.0, %v3143
    %3145 = vmatmul.f32.gmra.mxu0 %v2935
    %v3146 = vpop.f32.mrf.mxu0
    %v3147 = vadd.f32 0.0, %v3146
    %3148 = vmatmul.f32.gmra.mxu0 %v2938
    %v3149 = vpop.f32.mrf.mxu0
    %v3150 = vadd.f32 0.0, %v3149
    %3151 = vmatmul.f32.gmra.mxu0 %v2941
    %v3152 = vpop.f32.mrf.mxu0
    %v3153 = vadd.f32 0.0, %v3152
    %3154 = vmatmul.f32.gmra.mxu0 %v2944
    %v3155 = vpop.f32.mrf.mxu0
    %v3156 = vadd.f32 0.0, %v3155
    %3157 = vmatmul.f32.gmra.mxu0 %v2947
    %v3158 = vpop.f32.mrf.mxu0
    %v3159 = vadd.f32 0.0, %v3158
    %3160 = vmatmul.f32.gmra.mxu0 %v2950
    %v3161 = vpop.f32.mrf.mxu0
    %v3162 = vadd.f32 0.0, %v3161
    %3163 = vmatmul.f32.gmra.mxu0 %v2953
    %v3164 = vpop.f32.mrf.mxu0
    %v3165 = vadd.f32 0.0, %v3164
    %3166 = vmatmul.f32.gmra.mxu0 %v2956
    %v3167 = vpop.f32.mrf.mxu0
    %v3168 = vadd.f32 0.0, %v3167
    %3169 = vmatmul.f32.gmra.mxu0 %v2959
    %v3170 = vpop.f32.mrf.mxu0
    %v3171 = vadd.f32 0.0, %v3170
    %3172 = vmatmul.f32.gmra.mxu0 %v2962
    %v3173 = vpop.f32.mrf.mxu0
    %v3174 = vadd.f32 0.0, %v3173
    %3175 = vmatmul.f32.gmra.mxu0 %v2965
    %v3176 = vpop.f32.mrf.mxu0
    %v3177 = vadd.f32 0.0, %v3176
    %3178 = vmatmul.f32.gmra.mxu0 %v2968
    %v3179 = vpop.f32.mrf.mxu0
    %v3180 = vadd.f32 0.0, %v3179
    %3181 = vmatmul.f32.gmra.mxu0 %v2971
    %v3182 = vpop.f32.mrf.mxu0
    %v3183 = vadd.f32 0.0, %v3182
    %3184 = vmatmul.f32.gmra.mxu0 %v2974
    %v3185 = vpop.f32.mrf.mxu0
    %v3186 = vadd.f32 0.0, %v3185
    %3187 = vmatmul.f32.gmra.mxu0 %v2977
    %v3188 = vpop.f32.mrf.mxu0
    %v3189 = vadd.f32 0.0, %v3188
    %3190 = vmatmul.f32.gmra.mxu0 %v2980
    %v3191 = vpop.f32.mrf.mxu0
    %v3192 = vadd.f32 0.0, %v3191
    %3193 = vmatmul.f32.gmra.mxu0 %v2983
    %v3194 = vpop.f32.mrf.mxu0
    %v3195 = vadd.f32 0.0, %v3194
    %3196 = vmatmul.f32.gmra.mxu0 %v2986
    %v3197 = vpop.f32.mrf.mxu0
    %v3198 = vadd.f32 0.0, %v3197
    %3199 = vmatmul.f32.gmra.mxu0 %v2989
    %v3200 = vpop.f32.mrf.mxu0
    %v3201 = vadd.f32 0.0, %v3200
    %3202 = vmatmul.f32.gmra.mxu0 %v2992
    %v3203 = vpop.f32.mrf.mxu0
    %v3204 = vadd.f32 0.0, %v3203
    %3205 = vmatmul.f32.gmra.mxu0 %v2995
    %v3206 = vpop.f32.mrf.mxu0
    %v3207 = vadd.f32 0.0, %v3206
    %3208 = vmatmul.f32.gmra.mxu0 %v2998
    %v3209 = vpop.f32.mrf.mxu0
    %v3210 = vadd.f32 0.0, %v3209
    %3211 = vmatmul.f32.gmra.mxu0 %v3001
    %v3212 = vpop.f32.mrf.mxu0
    %v3213 = vadd.f32 0.0, %v3212
    %3214 = vmatmul.f32.gmra.mxu0 %v3004
    %v3215 = vpop.f32.mrf.mxu0
    %v3216 = vadd.f32 0.0, %v3215
    %3217 = vmatmul.f32.gmra.mxu0 %v3007
    %v3218 = vpop.f32.mrf.mxu0
    %v3219 = vadd.f32 0.0, %v3218
    %3220 = vmatmul.f32.gmra.mxu0 %v3010
    %v3221 = vpop.f32.mrf.mxu0
    %v3222 = vadd.f32 0.0, %v3221
    %3223 = vmatmul.f32.gmra.mxu0 %v3013
    %v3224 = vpop.f32.mrf.mxu0
    %v3225 = vadd.f32 0.0, %v3224
    %3226 = vmatmul.f32.gmra.mxu0 %v3016
    %v3227 = vpop.f32.mrf.mxu0
    %v3228 = vadd.f32 0.0, %v3227
    %3229 = vmatmul.f32.gmra.mxu0 %v3019
    %v3230 = vpop.f32.mrf.mxu0
    %v3231 = vadd.f32 0.0, %v3230
    %3232 = vmatmul.f32.gmra.mxu0 %v3022
    %v3233 = vpop.f32.mrf.mxu0
    %v3234 = vadd.f32 0.0, %v3233
    %3235 = vmatmul.f32.gmra.mxu0 %v3025
    %v3236 = vpop.f32.mrf.mxu0
    %v3237 = vadd.f32 0.0, %v3236
    %3238 = vmatmul.f32.gmra.mxu0 %v3028
    %v3239 = vpop.f32.mrf.mxu0
    %v3240 = vadd.f32 0.0, %v3239
    %3241 = vmatmul.f32.gmra.mxu0 %v3031
    %v3242 = vpop.f32.mrf.mxu0
    %v3243 = vadd.f32 0.0, %v3242
    %3244 = vmatmul.f32.gmra.mxu0 %v3034
    %v3245 = vpop.f32.mrf.mxu0
    %v3246 = vadd.f32 0.0, %v3245
    %3247 = vmatmul.f32.gmra.mxu0 %v3037
    %v3248 = vpop.f32.mrf.mxu0
    %v3249 = vadd.f32 0.0, %v3248
    %3250 = vmatmul.f32.gmra.mxu0 %v3040
    %v3251 = vpop.f32.mrf.mxu0
    %v3252 = vadd.f32 0.0, %v3251
    %3253 = vmatmul.f32.gmra.mxu0 %v3043
    %v3254 = vpop.f32.mrf.mxu0
    %v3255 = vadd.f32 0.0, %v3254
    %3256 = vmatmul.f32.gmra.mxu0 %v3046
    %v3257 = vpop.f32.mrf.mxu0
    %v3258 = vadd.f32 0.0, %v3257
    %3259 = vmatmul.f32.gmra.mxu0 %v3049
    %v3260 = vpop.f32.mrf.mxu0
    %v3261 = vadd.f32 0.0, %v3260
    %3262 = vmatmul.f32.gmra.mxu0 %v3052
    %v3263 = vpop.f32.mrf.mxu0
    %v3264 = vadd.f32 0.0, %v3263
    %3265 = vmatmul.f32.gmra.mxu0 %v3055
    %v3266 = vpop.f32.mrf.mxu0
    %v3267 = vadd.f32 0.0, %v3266
    %3268 = vmatmul.f32.gmra.mxu0 %v3058
    %v3269 = vpop.f32.mrf.mxu0
    %v3270 = vadd.f32 0.0, %v3269
    %3271 = vmatmul.f32.gmra.mxu0 %v3061
    %v3272 = vpop.f32.mrf.mxu0
    %v3273 = vadd.f32 0.0, %v3272
    %3274 = vmatmul.f32.gmra.mxu0 %v3064
    %v3275 = vpop.f32.mrf.mxu0
    %v3276 = vadd.f32 0.0, %v3275
    %3277 = vmatmul.f32.gmra.mxu0 %v3067
    %v3278 = vpop.f32.mrf.mxu0
    %v3279 = vadd.f32 0.0, %v3278
    %3280 = vmatmul.f32.gmra.mxu0 %v3070
    %v3281 = vpop.f32.mrf.mxu0
    %v3282 = vadd.f32 0.0, %v3281
    %3283 = vdwg.mxu0
    %v3284 = vadd.f32 %v2750, %v3093
    %v3285 = vadd.f32 %v2751, %v3096
    %v3286 = vadd.f32 %v2752, %v3099
    %v3287 = vadd.f32 %v2753, %v3102
    %v3288 = vadd.f32 %v2754, %v3105
    %v3289 = vadd.f32 %v2755, %v3108
    %v3290 = vadd.f32 %v2756, %v3111
    %v3291 = vadd.f32 %v2757, %v3114
    %v3292 = vadd.f32 %v2758, %v3117
    %v3293 = vadd.f32 %v2759, %v3120
    %v3294 = vadd.f32 %v2760, %v3123
    %v3295 = vadd.f32 %v2761, %v3126
    %v3296 = vadd.f32 %v2762, %v3129
    %v3297 = vadd.f32 %v2763, %v3132
    %v3298 = vadd.f32 %v2764, %v3135
    %v3299 = vadd.f32 %v2765, %v3138
    %v3300 = vadd.f32 %v2766, %v3141
    %v3301 = vadd.f32 %v2767, %v3144
    %v3302 = vadd.f32 %v2768, %v3147
    %v3303 = vadd.f32 %v2769, %v3150
    %v3304 = vadd.f32 %v2770, %v3153
    %v3305 = vadd.f32 %v2771, %v3156
    %v3306 = vadd.f32 %v2772, %v3159
    %v3307 = vadd.f32 %v2773, %v3162
    %v3308 = vadd.f32 %v2774, %v3165
    %v3309 = vadd.f32 %v2775, %v3168
    %v3310 = vadd.f32 %v2776, %v3171
    %v3311 = vadd.f32 %v2777, %v3174
    %v3312 = vadd.f32 %v2778, %v3177
    %v3313 = vadd.f32 %v2779, %v3180
    %v3314 = vadd.f32 %v2780, %v3183
    %v3315 = vadd.f32 %v2781, %v3186
    %v3316 = vadd.f32 %v2782, %v3189
    %v3317 = vadd.f32 %v2783, %v3192
    %v3318 = vadd.f32 %v2784, %v3195
    %v3319 = vadd.f32 %v2785, %v3198
    %v3320 = vadd.f32 %v2786, %v3201
    %v3321 = vadd.f32 %v2787, %v3204
    %v3322 = vadd.f32 %v2788, %v3207
    %v3323 = vadd.f32 %v2789, %v3210
    %v3324 = vadd.f32 %v2790, %v3213
    %v3325 = vadd.f32 %v2791, %v3216
    %v3326 = vadd.f32 %v2792, %v3219
    %v3327 = vadd.f32 %v2793, %v3222
    %v3328 = vadd.f32 %v2794, %v3225
    %v3329 = vadd.f32 %v2795, %v3228
    %v3330 = vadd.f32 %v2796, %v3231
    %v3331 = vadd.f32 %v2797, %v3234
    %v3332 = vadd.f32 %v2798, %v3237
    %v3333 = vadd.f32 %v2799, %v3240
    %v3334 = vadd.f32 %v2800, %v3243
    %v3335 = vadd.f32 %v2801, %v3246
    %v3336 = vadd.f32 %v2802, %v3249
    %v3337 = vadd.f32 %v2803, %v3252
    %v3338 = vadd.f32 %v2804, %v3255
    %v3339 = vadd.f32 %v2805, %v3258
    %v3340 = vadd.f32 %v2806, %v3261
    %v3341 = vadd.f32 %v2807, %v3264
    %v3342 = vadd.f32 %v2808, %v3267
    %v3343 = vadd.f32 %v2809, %v3270
    %v3344 = vadd.f32 %v2810, %v3273
    %v3345 = vadd.f32 %v2811, %v3276
    %v3346 = vadd.f32 %v2812, %v3279
    %v3347 = vadd.f32 %v2813, %v3282
    %s3348 = scalar_lea.vmem [#allocation2], 48
    %v3349 = vld [vmem:[%s3348] sm:$0xff]
    %v3350 = vld [vmem:[%s3348 + $0x8] sm:$0xff]
    %v3351 = vld [vmem:[%s3348 + $0x18] sm:$0xff]
    %v3352 = vld [vmem:[%s3348 + $0x20] sm:$0xff]
    %v3353 = vld [vmem:[%s3348 + $0x30] sm:$0xff]
    %v3354 = vld [vmem:[%s3348 + $0x38] sm:$0xff]
    %v3355 = vld [vmem:[%s3348 + $0x48] sm:$0xff]
    %v3356 = vld [vmem:[%s3348 + $0x50] sm:$0xff]
    %v3357 = vld [vmem:[%s3348 + $0x60] sm:$0xff]
    %v3358 = vld [vmem:[%s3348 + $0x68] sm:$0xff]
    %v3359 = vld [vmem:[%s3348 + $0x78] sm:$0xff]
    %v3360 = vld [vmem:[%s3348 + $0x80] sm:$0xff]
    %v3361 = vld [vmem:[%s3348 + $0x90] sm:$0xff]
    %v3362 = vld [vmem:[%s3348 + $0x98] sm:$0xff]
    %v3363 = vld [vmem:[%s3348 + $0xa8] sm:$0xff]
    %v3364 = vld [vmem:[%s3348 + $0xb0] sm:$0xff]
    %v3365 = vld [vmem:[%s3348 + $0xc0] sm:$0xff]
    %v3366 = vld [vmem:[%s3348 + $0xc8] sm:$0xff]
    %v3367 = vld [vmem:[%s3348 + $0xd8] sm:$0xff]
    %v3368 = vld [vmem:[%s3348 + $0xe0] sm:$0xff]
    %v3369 = vld [vmem:[%s3348 + $0xf0] sm:$0xff]
    %v3370 = vld [vmem:[%s3348 + $0xf8] sm:$0xff]
    %v3371 = vld [vmem:[%s3348 + $0x108] sm:$0xff]
    %v3372 = vld [vmem:[%s3348 + $0x110] sm:$0xff]
    %v3373 = vld [vmem:[%s3348 + $0x120] sm:$0xff]
    %v3374 = vld [vmem:[%s3348 + $0x128] sm:$0xff]
    %v3375 = vld [vmem:[%s3348 + $0x138] sm:$0xff]
    %v3376 = vld [vmem:[%s3348 + $0x140] sm:$0xff]
    %v3377 = vld [vmem:[%s3348 + $0x150] sm:$0xff]
    %v3378 = vld [vmem:[%s3348 + $0x158] sm:$0xff]
    %v3379 = vld [vmem:[%s3348 + $0x168] sm:$0xff]
    %v3380 = vld [vmem:[%s3348 + $0x170] sm:$0xff]
    %v3381 = vld [vmem:[%s3348 + $0x1b0] sm:$0xff]
    %v3382 = vld [vmem:[%s3348 + $0x1b8] sm:$0xff]
    %v3383 = vld [vmem:[%s3348 + $0x1c8] sm:$0xff]
    %v3384 = vld [vmem:[%s3348 + $0x1d0] sm:$0xff]
    %v3385 = vld [vmem:[%s3348 + $0x1e0] sm:$0xff]
    %v3386 = vld [vmem:[%s3348 + $0x1e8] sm:$0xff]
    %v3387 = vld [vmem:[%s3348 + $0x1f8] sm:$0xff]
    %v3388 = vld [vmem:[%s3348 + $0x200] sm:$0xff]
    %v3389 = vld [vmem:[%s3348 + $0x210] sm:$0xff]
    %v3390 = vld [vmem:[%s3348 + $0x218] sm:$0xff]
    %v3391 = vld [vmem:[%s3348 + $0x228] sm:$0xff]
    %v3392 = vld [vmem:[%s3348 + $0x230] sm:$0xff]
    %v3393 = vld [vmem:[%s3348 + $0x240] sm:$0xff]
    %v3394 = vld [vmem:[%s3348 + $0x248] sm:$0xff]
    %v3395 = vld [vmem:[%s3348 + $0x258] sm:$0xff]
    %v3396 = vld [vmem:[%s3348 + $0x260] sm:$0xff]
    %v3397 = vld [vmem:[%s3348 + $0x270] sm:$0xff]
    %v3398 = vld [vmem:[%s3348 + $0x278] sm:$0xff]
    %v3399 = vld [vmem:[%s3348 + $0x288] sm:$0xff]
    %v3400 = vld [vmem:[%s3348 + $0x290] sm:$0xff]
    %v3401 = vld [vmem:[%s3348 + $0x2a0] sm:$0xff]
    %v3402 = vld [vmem:[%s3348 + $0x2a8] sm:$0xff]
    %v3403 = vld [vmem:[%s3348 + $0x2b8] sm:$0xff]
    %v3404 = vld [vmem:[%s3348 + $0x2c0] sm:$0xff]
    %v3405 = vld [vmem:[%s3348 + $0x2d0] sm:$0xff]
    %v3406 = vld [vmem:[%s3348 + $0x2d8] sm:$0xff]
    %v3407 = vld [vmem:[%s3348 + $0x2e8] sm:$0xff]
    %v3408 = vld [vmem:[%s3348 + $0x2f0] sm:$0xff]
    %v3409 = vld [vmem:[%s3348 + $0x300] sm:$0xff]
    %v3410 = vld [vmem:[%s3348 + $0x308] sm:$0xff]
    %v3411 = vld [vmem:[%s3348 + $0x318] sm:$0xff]
    %v3412 = vld [vmem:[%s3348 + $0x320] sm:$0xff]
    %s3413 = scalar_lea.vmem %s1, 24
    %v3414 = vld [vmem:[%s3413] sm:$0xf]
    %v3416 = vsel %vm33, %v3349, 0
    %v3419 = vsel %vm33, %v3350, 0
    %v3422 = vsel %vm33, %v3351, 0
    %v3425 = vsel %vm33, %v3352, 0
    %v3428 = vsel %vm33, %v3353, 0
    %v3431 = vsel %vm33, %v3354, 0
    %v3434 = vsel %vm33, %v3355, 0
    %v3437 = vsel %vm33, %v3356, 0
    %v3440 = vsel %vm33, %v3357, 0
    %v3443 = vsel %vm33, %v3358, 0
    %v3446 = vsel %vm33, %v3359, 0
    %v3449 = vsel %vm33, %v3360, 0
    %v3452 = vsel %vm33, %v3361, 0
    %v3455 = vsel %vm33, %v3362, 0
    %v3458 = vsel %vm33, %v3363, 0
    %v3461 = vsel %vm33, %v3364, 0
    %v3464 = vsel %vm33, %v3365, 0
    %v3467 = vsel %vm33, %v3366, 0
    %v3470 = vsel %vm33, %v3367, 0
    %v3473 = vsel %vm33, %v3368, 0
    %v3476 = vsel %vm33, %v3369, 0
    %v3479 = vsel %vm33, %v3370, 0
    %v3482 = vsel %vm33, %v3371, 0
    %v3485 = vsel %vm33, %v3372, 0
    %v3488 = vsel %vm33, %v3373, 0
    %v3491 = vsel %vm33, %v3374, 0
    %v3494 = vsel %vm33, %v3375, 0
    %v3497 = vsel %vm33, %v3376, 0
    %v3500 = vsel %vm33, %v3377, 0
    %v3503 = vsel %vm33, %v3378, 0
    %v3506 = vsel %vm33, %v3379, 0
    %v3509 = vsel %vm33, %v3380, 0
    %v3512 = vsel %vm33, %v3381, 0
    %v3515 = vsel %vm33, %v3382, 0
    %v3518 = vsel %vm33, %v3383, 0
    %v3521 = vsel %vm33, %v3384, 0
    %v3524 = vsel %vm33, %v3385, 0
    %v3527 = vsel %vm33, %v3386, 0
    %v3530 = vsel %vm33, %v3387, 0
    %v3533 = vsel %vm33, %v3388, 0
    %v3536 = vsel %vm33, %v3389, 0
    %v3539 = vsel %vm33, %v3390, 0
    %v3542 = vsel %vm33, %v3391, 0
    %v3545 = vsel %vm33, %v3392, 0
    %v3548 = vsel %vm33, %v3393, 0
    %v3551 = vsel %vm33, %v3394, 0
    %v3554 = vsel %vm33, %v3395, 0
    %v3557 = vsel %vm33, %v3396, 0
    %v3560 = vsel %vm33, %v3397, 0
    %v3563 = vsel %vm33, %v3398, 0
    %v3566 = vsel %vm33, %v3399, 0
    %v3569 = vsel %vm33, %v3400, 0
    %v3572 = vsel %vm33, %v3401, 0
    %v3575 = vsel %vm33, %v3402, 0
    %v3578 = vsel %vm33, %v3403, 0
    %v3581 = vsel %vm33, %v3404, 0
    %v3584 = vsel %vm33, %v3405, 0
    %v3587 = vsel %vm33, %v3406, 0
    %v3590 = vsel %vm33, %v3407, 0
    %v3593 = vsel %vm33, %v3408, 0
    %v3596 = vsel %vm33, %v3409, 0
    %v3599 = vsel %vm33, %v3410, 0
    %v3602 = vsel %vm33, %v3411, 0
    %v3605 = vsel %vm33, %v3412, 0
    %v3608 = vsel %vm595, %v3414, 0
    %3610 = vmatpush.msra.mxu0 0.0
    %3611 = vmatpush.msra.mxu0 0.0
    %3612 = vmatpush.msra.mxu0 0.0
    %3613 = vmatpush.msra.mxu0 0.0
    %3614 = vmatpush.msra.mxu0 0.0
    %3615 = vmatpush.msra.mxu0 0.0
    %3616 = vmatpush.msra.mxu0 0.0
    %3617 = vmatpush.msra.mxu0 0.0
    %3618 = vmatpush.msra.mxu0 0.0
    %3619 = vmatpush.msra.mxu0 0.0
    %3620 = vmatpush.msra.mxu0 0.0
    %3621 = vmatpush.msra.mxu0 0.0
    %3622 = vmatpush.msra.mxu0 0.0
    %3623 = vmatpush.msra.mxu0 0.0
    %3624 = vmatpush.msra.mxu0 0.0
    %3625 = vmatpush.msra.mxu0 %v3608
    %3626 = vmatmul.f32.gmra.mxu0 %v3416
    %v3627 = vpop.f32.mrf.mxu0
    %v3628 = vadd.f32 0.0, %v3627
    %3629 = vmatmul.f32.gmra.mxu0 %v3419
    %v3630 = vpop.f32.mrf.mxu0
    %v3631 = vadd.f32 0.0, %v3630
    %3632 = vmatmul.f32.gmra.mxu0 %v3422
    %v3633 = vpop.f32.mrf.mxu0
    %v3634 = vadd.f32 0.0, %v3633
    %3635 = vmatmul.f32.gmra.mxu0 %v3425
    %v3636 = vpop.f32.mrf.mxu0
    %v3637 = vadd.f32 0.0, %v3636
    %3638 = vmatmul.f32.gmra.mxu0 %v3428
    %v3639 = vpop.f32.mrf.mxu0
    %v3640 = vadd.f32 0.0, %v3639
    %3641 = vmatmul.f32.gmra.mxu0 %v3431
    %v3642 = vpop.f32.mrf.mxu0
    %v3643 = vadd.f32 0.0, %v3642
    %3644 = vmatmul.f32.gmra.mxu0 %v3434
    %v3645 = vpop.f32.mrf.mxu0
    %v3646 = vadd.f32 0.0, %v3645
    %3647 = vmatmul.f32.gmra.mxu0 %v3437
    %v3648 = vpop.f32.mrf.mxu0
    %v3649 = vadd.f32 0.0, %v3648
    %3650 = vmatmul.f32.gmra.mxu0 %v3440
    %v3651 = vpop.f32.mrf.mxu0
    %v3652 = vadd.f32 0.0, %v3651
    %3653 = vmatmul.f32.gmra.mxu0 %v3443
    %v3654 = vpop.f32.mrf.mxu0
    %v3655 = vadd.f32 0.0, %v3654
    %3656 = vmatmul.f32.gmra.mxu0 %v3446
    %v3657 = vpop.f32.mrf.mxu0
    %v3658 = vadd.f32 0.0, %v3657
    %3659 = vmatmul.f32.gmra.mxu0 %v3449
    %v3660 = vpop.f32.mrf.mxu0
    %v3661 = vadd.f32 0.0, %v3660
    %3662 = vmatmul.f32.gmra.mxu0 %v3452
    %v3663 = vpop.f32.mrf.mxu0
    %v3664 = vadd.f32 0.0, %v3663
    %3665 = vmatmul.f32.gmra.mxu0 %v3455
    %v3666 = vpop.f32.mrf.mxu0
    %v3667 = vadd.f32 0.0, %v3666
    %3668 = vmatmul.f32.gmra.mxu0 %v3458
    %v3669 = vpop.f32.mrf.mxu0
    %v3670 = vadd.f32 0.0, %v3669
    %3671 = vmatmul.f32.gmra.mxu0 %v3461
    %v3672 = vpop.f32.mrf.mxu0
    %v3673 = vadd.f32 0.0, %v3672
    %3674 = vmatmul.f32.gmra.mxu0 %v3464
    %v3675 = vpop.f32.mrf.mxu0
    %v3676 = vadd.f32 0.0, %v3675
    %3677 = vmatmul.f32.gmra.mxu0 %v3467
    %v3678 = vpop.f32.mrf.mxu0
    %v3679 = vadd.f32 0.0, %v3678
    %3680 = vmatmul.f32.gmra.mxu0 %v3470
    %v3681 = vpop.f32.mrf.mxu0
    %v3682 = vadd.f32 0.0, %v3681
    %3683 = vmatmul.f32.gmra.mxu0 %v3473
    %v3684 = vpop.f32.mrf.mxu0
    %v3685 = vadd.f32 0.0, %v3684
    %3686 = vmatmul.f32.gmra.mxu0 %v3476
    %v3687 = vpop.f32.mrf.mxu0
    %v3688 = vadd.f32 0.0, %v3687
    %3689 = vmatmul.f32.gmra.mxu0 %v3479
    %v3690 = vpop.f32.mrf.mxu0
    %v3691 = vadd.f32 0.0, %v3690
    %3692 = vmatmul.f32.gmra.mxu0 %v3482
    %v3693 = vpop.f32.mrf.mxu0
    %v3694 = vadd.f32 0.0, %v3693
    %3695 = vmatmul.f32.gmra.mxu0 %v3485
    %v3696 = vpop.f32.mrf.mxu0
    %v3697 = vadd.f32 0.0, %v3696
    %3698 = vmatmul.f32.gmra.mxu0 %v3488
    %v3699 = vpop.f32.mrf.mxu0
    %v3700 = vadd.f32 0.0, %v3699
    %3701 = vmatmul.f32.gmra.mxu0 %v3491
    %v3702 = vpop.f32.mrf.mxu0
    %v3703 = vadd.f32 0.0, %v3702
    %3704 = vmatmul.f32.gmra.mxu0 %v3494
    %v3705 = vpop.f32.mrf.mxu0
    %v3706 = vadd.f32 0.0, %v3705
    %3707 = vmatmul.f32.gmra.mxu0 %v3497
    %v3708 = vpop.f32.mrf.mxu0
    %v3709 = vadd.f32 0.0, %v3708
    %3710 = vmatmul.f32.gmra.mxu0 %v3500
    %v3711 = vpop.f32.mrf.mxu0
    %v3712 = vadd.f32 0.0, %v3711
    %3713 = vmatmul.f32.gmra.mxu0 %v3503
    %v3714 = vpop.f32.mrf.mxu0
    %v3715 = vadd.f32 0.0, %v3714
    %3716 = vmatmul.f32.gmra.mxu0 %v3506
    %v3717 = vpop.f32.mrf.mxu0
    %v3718 = vadd.f32 0.0, %v3717
    %3719 = vmatmul.f32.gmra.mxu0 %v3509
    %v3720 = vpop.f32.mrf.mxu0
    %v3721 = vadd.f32 0.0, %v3720
    %3722 = vmatmul.f32.gmra.mxu0 %v3512
    %v3723 = vpop.f32.mrf.mxu0
    %v3724 = vadd.f32 0.0, %v3723
    %3725 = vmatmul.f32.gmra.mxu0 %v3515
    %v3726 = vpop.f32.mrf.mxu0
    %v3727 = vadd.f32 0.0, %v3726
    %3728 = vmatmul.f32.gmra.mxu0 %v3518
    %v3729 = vpop.f32.mrf.mxu0
    %v3730 = vadd.f32 0.0, %v3729
    %3731 = vmatmul.f32.gmra.mxu0 %v3521
    %v3732 = vpop.f32.mrf.mxu0
    %v3733 = vadd.f32 0.0, %v3732
    %3734 = vmatmul.f32.gmra.mxu0 %v3524
    %v3735 = vpop.f32.mrf.mxu0
    %v3736 = vadd.f32 0.0, %v3735
    %3737 = vmatmul.f32.gmra.mxu0 %v3527
    %v3738 = vpop.f32.mrf.mxu0
    %v3739 = vadd.f32 0.0, %v3738
    %3740 = vmatmul.f32.gmra.mxu0 %v3530
    %v3741 = vpop.f32.mrf.mxu0
    %v3742 = vadd.f32 0.0, %v3741
    %3743 = vmatmul.f32.gmra.mxu0 %v3533
    %v3744 = vpop.f32.mrf.mxu0
    %v3745 = vadd.f32 0.0, %v3744
    %3746 = vmatmul.f32.gmra.mxu0 %v3536
    %v3747 = vpop.f32.mrf.mxu0
    %v3748 = vadd.f32 0.0, %v3747
    %3749 = vmatmul.f32.gmra.mxu0 %v3539
    %v3750 = vpop.f32.mrf.mxu0
    %v3751 = vadd.f32 0.0, %v3750
    %3752 = vmatmul.f32.gmra.mxu0 %v3542
    %v3753 = vpop.f32.mrf.mxu0
    %v3754 = vadd.f32 0.0, %v3753
    %3755 = vmatmul.f32.gmra.mxu0 %v3545
    %v3756 = vpop.f32.mrf.mxu0
    %v3757 = vadd.f32 0.0, %v3756
    %3758 = vmatmul.f32.gmra.mxu0 %v3548
    %v3759 = vpop.f32.mrf.mxu0
    %v3760 = vadd.f32 0.0, %v3759
    %3761 = vmatmul.f32.gmra.mxu0 %v3551
    %v3762 = vpop.f32.mrf.mxu0
    %v3763 = vadd.f32 0.0, %v3762
    %3764 = vmatmul.f32.gmra.mxu0 %v3554
    %v3765 = vpop.f32.mrf.mxu0
    %v3766 = vadd.f32 0.0, %v3765
    %3767 = vmatmul.f32.gmra.mxu0 %v3557
    %v3768 = vpop.f32.mrf.mxu0
    %v3769 = vadd.f32 0.0, %v3768
    %3770 = vmatmul.f32.gmra.mxu0 %v3560
    %v3771 = vpop.f32.mrf.mxu0
    %v3772 = vadd.f32 0.0, %v3771
    %3773 = vmatmul.f32.gmra.mxu0 %v3563
    %v3774 = vpop.f32.mrf.mxu0
    %v3775 = vadd.f32 0.0, %v3774
    %3776 = vmatmul.f32.gmra.mxu0 %v3566
    %v3777 = vpop.f32.mrf.mxu0
    %v3778 = vadd.f32 0.0, %v3777
    %3779 = vmatmul.f32.gmra.mxu0 %v3569
    %v3780 = vpop.f32.mrf.mxu0
    %v3781 = vadd.f32 0.0, %v3780
    %3782 = vmatmul.f32.gmra.mxu0 %v3572
    %v3783 = vpop.f32.mrf.mxu0
    %v3784 = vadd.f32 0.0, %v3783
    %3785 = vmatmul.f32.gmra.mxu0 %v3575
    %v3786 = vpop.f32.mrf.mxu0
    %v3787 = vadd.f32 0.0, %v3786
    %3788 = vmatmul.f32.gmra.mxu0 %v3578
    %v3789 = vpop.f32.mrf.mxu0
    %v3790 = vadd.f32 0.0, %v3789
    %3791 = vmatmul.f32.gmra.mxu0 %v3581
    %v3792 = vpop.f32.mrf.mxu0
    %v3793 = vadd.f32 0.0, %v3792
    %3794 = vmatmul.f32.gmra.mxu0 %v3584
    %v3795 = vpop.f32.mrf.mxu0
    %v3796 = vadd.f32 0.0, %v3795
    %3797 = vmatmul.f32.gmra.mxu0 %v3587
    %v3798 = vpop.f32.mrf.mxu0
    %v3799 = vadd.f32 0.0, %v3798
    %3800 = vmatmul.f32.gmra.mxu0 %v3590
    %v3801 = vpop.f32.mrf.mxu0
    %v3802 = vadd.f32 0.0, %v3801
    %3803 = vmatmul.f32.gmra.mxu0 %v3593
    %v3804 = vpop.f32.mrf.mxu0
    %v3805 = vadd.f32 0.0, %v3804
    %3806 = vmatmul.f32.gmra.mxu0 %v3596
    %v3807 = vpop.f32.mrf.mxu0
    %v3808 = vadd.f32 0.0, %v3807
    %3809 = vmatmul.f32.gmra.mxu0 %v3599
    %v3810 = vpop.f32.mrf.mxu0
    %v3811 = vadd.f32 0.0, %v3810
    %3812 = vmatmul.f32.gmra.mxu0 %v3602
    %v3813 = vpop.f32.mrf.mxu0
    %v3814 = vadd.f32 0.0, %v3813
    %3815 = vmatmul.f32.gmra.mxu0 %v3605
    %v3816 = vpop.f32.mrf.mxu0
    %v3817 = vadd.f32 0.0, %v3816
    %3818 = vdwg.mxu0
    %v3819 = vadd.f32 %v3284, %v3628
    %v3820 = vadd.f32 %v3285, %v3631
    %v3821 = vadd.f32 %v3286, %v3634
    %v3822 = vadd.f32 %v3287, %v3637
    %v3823 = vadd.f32 %v3288, %v3640
    %v3824 = vadd.f32 %v3289, %v3643
    %v3825 = vadd.f32 %v3290, %v3646
    %v3826 = vadd.f32 %v3291, %v3649
    %v3827 = vadd.f32 %v3292, %v3652
    %v3828 = vadd.f32 %v3293, %v3655
    %v3829 = vadd.f32 %v3294, %v3658
    %v3830 = vadd.f32 %v3295, %v3661
    %v3831 = vadd.f32 %v3296, %v3664
    %v3832 = vadd.f32 %v3297, %v3667
    %v3833 = vadd.f32 %v3298, %v3670
    %v3834 = vadd.f32 %v3299, %v3673
    %v3835 = vadd.f32 %v3300, %v3676
    %v3836 = vadd.f32 %v3301, %v3679
    %v3837 = vadd.f32 %v3302, %v3682
    %v3838 = vadd.f32 %v3303, %v3685
    %v3839 = vadd.f32 %v3304, %v3688
    %v3840 = vadd.f32 %v3305, %v3691
    %v3841 = vadd.f32 %v3306, %v3694
    %v3842 = vadd.f32 %v3307, %v3697
    %v3843 = vadd.f32 %v3308, %v3700
    %v3844 = vadd.f32 %v3309, %v3703
    %v3845 = vadd.f32 %v3310, %v3706
    %v3846 = vadd.f32 %v3311, %v3709
    %v3847 = vadd.f32 %v3312, %v3712
    %v3848 = vadd.f32 %v3313, %v3715
    %v3849 = vadd.f32 %v3314, %v3718
    %v3850 = vadd.f32 %v3315, %v3721
    %v3851 = vadd.f32 %v3316, %v3724
    %v3852 = vadd.f32 %v3317, %v3727
    %v3853 = vadd.f32 %v3318, %v3730
    %v3854 = vadd.f32 %v3319, %v3733
    %v3855 = vadd.f32 %v3320, %v3736
    %v3856 = vadd.f32 %v3321, %v3739
    %v3857 = vadd.f32 %v3322, %v3742
    %v3858 = vadd.f32 %v3323, %v3745
    %v3859 = vadd.f32 %v3324, %v3748
    %v3860 = vadd.f32 %v3325, %v3751
    %v3861 = vadd.f32 %v3326, %v3754
    %v3862 = vadd.f32 %v3327, %v3757
    %v3863 = vadd.f32 %v3328, %v3760
    %v3864 = vadd.f32 %v3329, %v3763
    %v3865 = vadd.f32 %v3330, %v3766
    %v3866 = vadd.f32 %v3331, %v3769
    %v3867 = vadd.f32 %v3332, %v3772
    %v3868 = vadd.f32 %v3333, %v3775
    %v3869 = vadd.f32 %v3334, %v3778
    %v3870 = vadd.f32 %v3335, %v3781
    %v3871 = vadd.f32 %v3336, %v3784
    %v3872 = vadd.f32 %v3337, %v3787
    %v3873 = vadd.f32 %v3338, %v3790
    %v3874 = vadd.f32 %v3339, %v3793
    %v3875 = vadd.f32 %v3340, %v3796
    %v3876 = vadd.f32 %v3341, %v3799
    %v3877 = vadd.f32 %v3342, %v3802
    %v3878 = vadd.f32 %v3343, %v3805
    %v3879 = vadd.f32 %v3344, %v3808
    %v3880 = vadd.f32 %v3345, %v3811
    %v3881 = vadd.f32 %v3346, %v3814
    %v3882 = vadd.f32 %v3347, %v3817
    %v3883 = vld [vmem:[%s3348 + $0x1] sm:$0xff]
    %v3884 = vld [vmem:[%s3348 + $0x9] sm:$0xff]
    %v3885 = vld [vmem:[%s3348 + $0x19] sm:$0xff]
    %v3886 = vld [vmem:[%s3348 + $0x21] sm:$0xff]
    %v3887 = vld [vmem:[%s3348 + $0x31] sm:$0xff]
    %v3888 = vld [vmem:[%s3348 + $0x39] sm:$0xff]
    %v3889 = vld [vmem:[%s3348 + $0x49] sm:$0xff]
    %v3890 = vld [vmem:[%s3348 + $0x51] sm:$0xff]
    %v3891 = vld [vmem:[%s3348 + $0x61] sm:$0xff]
    %v3892 = vld [vmem:[%s3348 + $0x69] sm:$0xff]
    %v3893 = vld [vmem:[%s3348 + $0x79] sm:$0xff]
    %v3894 = vld [vmem:[%s3348 + $0x81] sm:$0xff]
    %v3895 = vld [vmem:[%s3348 + $0x91] sm:$0xff]
    %v3896 = vld [vmem:[%s3348 + $0x99] sm:$0xff]
    %v3897 = vld [vmem:[%s3348 + $0xa9] sm:$0xff]
    %v3898 = vld [vmem:[%s3348 + $0xb1] sm:$0xff]
    %v3899 = vld [vmem:[%s3348 + $0xc1] sm:$0xff]
    %v3900 = vld [vmem:[%s3348 + $0xc9] sm:$0xff]
    %v3901 = vld [vmem:[%s3348 + $0xd9] sm:$0xff]
    %v3902 = vld [vmem:[%s3348 + $0xe1] sm:$0xff]
    %v3903 = vld [vmem:[%s3348 + $0xf1] sm:$0xff]
    %v3904 = vld [vmem:[%s3348 + $0xf9] sm:$0xff]
    %v3905 = vld [vmem:[%s3348 + $0x109] sm:$0xff]
    %v3906 = vld [vmem:[%s3348 + $0x111] sm:$0xff]
    %v3907 = vld [vmem:[%s3348 + $0x121] sm:$0xff]
    %v3908 = vld [vmem:[%s3348 + $0x129] sm:$0xff]
    %v3909 = vld [vmem:[%s3348 + $0x139] sm:$0xff]
    %v3910 = vld [vmem:[%s3348 + $0x141] sm:$0xff]
    %v3911 = vld [vmem:[%s3348 + $0x151] sm:$0xff]
    %v3912 = vld [vmem:[%s3348 + $0x159] sm:$0xff]
    %v3913 = vld [vmem:[%s3348 + $0x169] sm:$0xff]
    %v3914 = vld [vmem:[%s3348 + $0x171] sm:$0xff]
    %v3915 = vld [vmem:[%s3348 + $0x1b1] sm:$0xff]
    %v3916 = vld [vmem:[%s3348 + $0x1b9] sm:$0xff]
    %v3917 = vld [vmem:[%s3348 + $0x1c9] sm:$0xff]
    %v3918 = vld [vmem:[%s3348 + $0x1d1] sm:$0xff]
    %v3919 = vld [vmem:[%s3348 + $0x1e1] sm:$0xff]
    %v3920 = vld [vmem:[%s3348 + $0x1e9] sm:$0xff]
    %v3921 = vld [vmem:[%s3348 + $0x1f9] sm:$0xff]
    %v3922 = vld [vmem:[%s3348 + $0x201] sm:$0xff]
    %v3923 = vld [vmem:[%s3348 + $0x211] sm:$0xff]
    %v3924 = vld [vmem:[%s3348 + $0x219] sm:$0xff]
    %v3925 = vld [vmem:[%s3348 + $0x229] sm:$0xff]
    %v3926 = vld [vmem:[%s3348 + $0x231] sm:$0xff]
    %v3927 = vld [vmem:[%s3348 + $0x241] sm:$0xff]
    %v3928 = vld [vmem:[%s3348 + $0x249] sm:$0xff]
    %v3929 = vld [vmem:[%s3348 + $0x259] sm:$0xff]
    %v3930 = vld [vmem:[%s3348 + $0x261] sm:$0xff]
    %v3931 = vld [vmem:[%s3348 + $0x271] sm:$0xff]
    %v3932 = vld [vmem:[%s3348 + $0x279] sm:$0xff]
    %v3933 = vld [vmem:[%s3348 + $0x289] sm:$0xff]
    %v3934 = vld [vmem:[%s3348 + $0x291] sm:$0xff]
    %v3935 = vld [vmem:[%s3348 + $0x2a1] sm:$0xff]
    %v3936 = vld [vmem:[%s3348 + $0x2a9] sm:$0xff]
    %v3937 = vld [vmem:[%s3348 + $0x2b9] sm:$0xff]
    %v3938 = vld [vmem:[%s3348 + $0x2c1] sm:$0xff]
    %v3939 = vld [vmem:[%s3348 + $0x2d1] sm:$0xff]
    %v3940 = vld [vmem:[%s3348 + $0x2d9] sm:$0xff]
    %v3941 = vld [vmem:[%s3348 + $0x2e9] sm:$0xff]
    %v3942 = vld [vmem:[%s3348 + $0x2f1] sm:$0xff]
    %v3943 = vld [vmem:[%s3348 + $0x301] sm:$0xff]
    %v3944 = vld [vmem:[%s3348 + $0x309] sm:$0xff]
    %v3945 = vld [vmem:[%s3348 + $0x319] sm:$0xff]
    %v3946 = vld [vmem:[%s3348 + $0x321] sm:$0xff]
    %s3947 = scalar_lea.vmem %s1, 28
    %v3948 = vld [vmem:[%s3947] sm:$0xf]
    %v3950 = vsel %vm33, %v3883, 0
    %v3953 = vsel %vm33, %v3884, 0
    %v3956 = vsel %vm33, %v3885, 0
    %v3959 = vsel %vm33, %v3886, 0
    %v3962 = vsel %vm33, %v3887, 0
    %v3965 = vsel %vm33, %v3888, 0
    %v3968 = vsel %vm33, %v3889, 0
    %v3971 = vsel %vm33, %v3890, 0
    %v3974 = vsel %vm33, %v3891, 0
    %v3977 = vsel %vm33, %v3892, 0
    %v3980 = vsel %vm33, %v3893, 0
    %v3983 = vsel %vm33, %v3894, 0
    %v3986 = vsel %vm33, %v3895, 0
    %v3989 = vsel %vm33, %v3896, 0
    %v3992 = vsel %vm33, %v3897, 0
    %v3995 = vsel %vm33, %v3898, 0
    %v3998 = vsel %vm33, %v3899, 0
    %v4001 = vsel %vm33, %v3900, 0
    %v4004 = vsel %vm33, %v3901, 0
    %v4007 = vsel %vm33, %v3902, 0
    %v4010 = vsel %vm33, %v3903, 0
    %v4013 = vsel %vm33, %v3904, 0
    %v4016 = vsel %vm33, %v3905, 0
    %v4019 = vsel %vm33, %v3906, 0
    %v4022 = vsel %vm33, %v3907, 0
    %v4025 = vsel %vm33, %v3908, 0
    %v4028 = vsel %vm33, %v3909, 0
    %v4031 = vsel %vm33, %v3910, 0
    %v4034 = vsel %vm33, %v3911, 0
    %v4037 = vsel %vm33, %v3912, 0
    %v4040 = vsel %vm33, %v3913, 0
    %v4043 = vsel %vm33, %v3914, 0
    %v4046 = vsel %vm33, %v3915, 0
    %v4049 = vsel %vm33, %v3916, 0
    %v4052 = vsel %vm33, %v3917, 0
    %v4055 = vsel %vm33, %v3918, 0
    %v4058 = vsel %vm33, %v3919, 0
    %v4061 = vsel %vm33, %v3920, 0
    %v4064 = vsel %vm33, %v3921, 0
    %v4067 = vsel %vm33, %v3922, 0
    %v4070 = vsel %vm33, %v3923, 0
    %v4073 = vsel %vm33, %v3924, 0
    %v4076 = vsel %vm33, %v3925, 0
    %v4079 = vsel %vm33, %v3926, 0
    %v4082 = vsel %vm33, %v3927, 0
    %v4085 = vsel %vm33, %v3928, 0
    %v4088 = vsel %vm33, %v3929, 0
    %v4091 = vsel %vm33, %v3930, 0
    %v4094 = vsel %vm33, %v3931, 0
    %v4097 = vsel %vm33, %v3932, 0
    %v4100 = vsel %vm33, %v3933, 0
    %v4103 = vsel %vm33, %v3934, 0
    %v4106 = vsel %vm33, %v3935, 0
    %v4109 = vsel %vm33, %v3936, 0
    %v4112 = vsel %vm33, %v3937, 0
    %v4115 = vsel %vm33, %v3938, 0
    %v4118 = vsel %vm33, %v3939, 0
    %v4121 = vsel %vm33, %v3940, 0
    %v4124 = vsel %vm33, %v3941, 0
    %v4127 = vsel %vm33, %v3942, 0
    %v4130 = vsel %vm33, %v3943, 0
    %v4133 = vsel %vm33, %v3944, 0
    %v4136 = vsel %vm33, %v3945, 0
    %v4139 = vsel %vm33, %v3946, 0
    %v4142 = vsel %vm595, %v3948, 0
    %4144 = vmatpush.msra.mxu0 0.0
    %4145 = vmatpush.msra.mxu0 0.0
    %4146 = vmatpush.msra.mxu0 0.0
    %4147 = vmatpush.msra.mxu0 0.0
    %4148 = vmatpush.msra.mxu0 0.0
    %4149 = vmatpush.msra.mxu0 0.0
    %4150 = vmatpush.msra.mxu0 0.0
    %4151 = vmatpush.msra.mxu0 0.0
    %4152 = vmatpush.msra.mxu0 0.0
    %4153 = vmatpush.msra.mxu0 0.0
    %4154 = vmatpush.msra.mxu0 0.0
    %4155 = vmatpush.msra.mxu0 0.0
    %4156 = vmatpush.msra.mxu0 0.0
    %4157 = vmatpush.msra.mxu0 0.0
    %4158 = vmatpush.msra.mxu0 0.0
    %4159 = vmatpush.msra.mxu0 %v4142
    %4160 = vmatmul.f32.gmra.mxu0 %v3950
    %v4161 = vpop.f32.mrf.mxu0
    %v4162 = vadd.f32 0.0, %v4161
    %4163 = vmatmul.f32.gmra.mxu0 %v3953
    %v4164 = vpop.f32.mrf.mxu0
    %v4165 = vadd.f32 0.0, %v4164
    %4166 = vmatmul.f32.gmra.mxu0 %v3956
    %v4167 = vpop.f32.mrf.mxu0
    %v4168 = vadd.f32 0.0, %v4167
    %4169 = vmatmul.f32.gmra.mxu0 %v3959
    %v4170 = vpop.f32.mrf.mxu0
    %v4171 = vadd.f32 0.0, %v4170
    %4172 = vmatmul.f32.gmra.mxu0 %v3962
    %v4173 = vpop.f32.mrf.mxu0
    %v4174 = vadd.f32 0.0, %v4173
    %4175 = vmatmul.f32.gmra.mxu0 %v3965
    %v4176 = vpop.f32.mrf.mxu0
    %v4177 = vadd.f32 0.0, %v4176
    %4178 = vmatmul.f32.gmra.mxu0 %v3968
    %v4179 = vpop.f32.mrf.mxu0
    %v4180 = vadd.f32 0.0, %v4179
    %4181 = vmatmul.f32.gmra.mxu0 %v3971
    %v4182 = vpop.f32.mrf.mxu0
    %v4183 = vadd.f32 0.0, %v4182
    %4184 = vmatmul.f32.gmra.mxu0 %v3974
    %v4185 = vpop.f32.mrf.mxu0
    %v4186 = vadd.f32 0.0, %v4185
    %4187 = vmatmul.f32.gmra.mxu0 %v3977
    %v4188 = vpop.f32.mrf.mxu0
    %v4189 = vadd.f32 0.0, %v4188
    %4190 = vmatmul.f32.gmra.mxu0 %v3980
    %v4191 = vpop.f32.mrf.mxu0
    %v4192 = vadd.f32 0.0, %v4191
    %4193 = vmatmul.f32.gmra.mxu0 %v3983
    %v4194 = vpop.f32.mrf.mxu0
    %v4195 = vadd.f32 0.0, %v4194
    %4196 = vmatmul.f32.gmra.mxu0 %v3986
    %v4197 = vpop.f32.mrf.mxu0
    %v4198 = vadd.f32 0.0, %v4197
    %4199 = vmatmul.f32.gmra.mxu0 %v3989
    %v4200 = vpop.f32.mrf.mxu0
    %v4201 = vadd.f32 0.0, %v4200
    %4202 = vmatmul.f32.gmra.mxu0 %v3992
    %v4203 = vpop.f32.mrf.mxu0
    %v4204 = vadd.f32 0.0, %v4203
    %4205 = vmatmul.f32.gmra.mxu0 %v3995
    %v4206 = vpop.f32.mrf.mxu0
    %v4207 = vadd.f32 0.0, %v4206
    %4208 = vmatmul.f32.gmra.mxu0 %v3998
    %v4209 = vpop.f32.mrf.mxu0
    %v4210 = vadd.f32 0.0, %v4209
    %4211 = vmatmul.f32.gmra.mxu0 %v4001
    %v4212 = vpop.f32.mrf.mxu0
    %v4213 = vadd.f32 0.0, %v4212
    %4214 = vmatmul.f32.gmra.mxu0 %v4004
    %v4215 = vpop.f32.mrf.mxu0
    %v4216 = vadd.f32 0.0, %v4215
    %4217 = vmatmul.f32.gmra.mxu0 %v4007
    %v4218 = vpop.f32.mrf.mxu0
    %v4219 = vadd.f32 0.0, %v4218
    %4220 = vmatmul.f32.gmra.mxu0 %v4010
    %v4221 = vpop.f32.mrf.mxu0
    %v4222 = vadd.f32 0.0, %v4221
    %4223 = vmatmul.f32.gmra.mxu0 %v4013
    %v4224 = vpop.f32.mrf.mxu0
    %v4225 = vadd.f32 0.0, %v4224
    %4226 = vmatmul.f32.gmra.mxu0 %v4016
    %v4227 = vpop.f32.mrf.mxu0
    %v4228 = vadd.f32 0.0, %v4227
    %4229 = vmatmul.f32.gmra.mxu0 %v4019
    %v4230 = vpop.f32.mrf.mxu0
    %v4231 = vadd.f32 0.0, %v4230
    %4232 = vmatmul.f32.gmra.mxu0 %v4022
    %v4233 = vpop.f32.mrf.mxu0
    %v4234 = vadd.f32 0.0, %v4233
    %4235 = vmatmul.f32.gmra.mxu0 %v4025
    %v4236 = vpop.f32.mrf.mxu0
    %v4237 = vadd.f32 0.0, %v4236
    %4238 = vmatmul.f32.gmra.mxu0 %v4028
    %v4239 = vpop.f32.mrf.mxu0
    %v4240 = vadd.f32 0.0, %v4239
    %4241 = vmatmul.f32.gmra.mxu0 %v4031
    %v4242 = vpop.f32.mrf.mxu0
    %v4243 = vadd.f32 0.0, %v4242
    %4244 = vmatmul.f32.gmra.mxu0 %v4034
    %v4245 = vpop.f32.mrf.mxu0
    %v4246 = vadd.f32 0.0, %v4245
    %4247 = vmatmul.f32.gmra.mxu0 %v4037
    %v4248 = vpop.f32.mrf.mxu0
    %v4249 = vadd.f32 0.0, %v4248
    %4250 = vmatmul.f32.gmra.mxu0 %v4040
    %v4251 = vpop.f32.mrf.mxu0
    %v4252 = vadd.f32 0.0, %v4251
    %4253 = vmatmul.f32.gmra.mxu0 %v4043
    %v4254 = vpop.f32.mrf.mxu0
    %v4255 = vadd.f32 0.0, %v4254
    %4256 = vmatmul.f32.gmra.mxu0 %v4046
    %v4257 = vpop.f32.mrf.mxu0
    %v4258 = vadd.f32 0.0, %v4257
    %4259 = vmatmul.f32.gmra.mxu0 %v4049
    %v4260 = vpop.f32.mrf.mxu0
    %v4261 = vadd.f32 0.0, %v4260
    %4262 = vmatmul.f32.gmra.mxu0 %v4052
    %v4263 = vpop.f32.mrf.mxu0
    %v4264 = vadd.f32 0.0, %v4263
    %4265 = vmatmul.f32.gmra.mxu0 %v4055
    %v4266 = vpop.f32.mrf.mxu0
    %v4267 = vadd.f32 0.0, %v4266
    %4268 = vmatmul.f32.gmra.mxu0 %v4058
    %v4269 = vpop.f32.mrf.mxu0
    %v4270 = vadd.f32 0.0, %v4269
    %4271 = vmatmul.f32.gmra.mxu0 %v4061
    %v4272 = vpop.f32.mrf.mxu0
    %v4273 = vadd.f32 0.0, %v4272
    %4274 = vmatmul.f32.gmra.mxu0 %v4064
    %v4275 = vpop.f32.mrf.mxu0
    %v4276 = vadd.f32 0.0, %v4275
    %4277 = vmatmul.f32.gmra.mxu0 %v4067
    %v4278 = vpop.f32.mrf.mxu0
    %v4279 = vadd.f32 0.0, %v4278
    %4280 = vmatmul.f32.gmra.mxu0 %v4070
    %v4281 = vpop.f32.mrf.mxu0
    %v4282 = vadd.f32 0.0, %v4281
    %4283 = vmatmul.f32.gmra.mxu0 %v4073
    %v4284 = vpop.f32.mrf.mxu0
    %v4285 = vadd.f32 0.0, %v4284
    %4286 = vmatmul.f32.gmra.mxu0 %v4076
    %v4287 = vpop.f32.mrf.mxu0
    %v4288 = vadd.f32 0.0, %v4287
    %4289 = vmatmul.f32.gmra.mxu0 %v4079
    %v4290 = vpop.f32.mrf.mxu0
    %v4291 = vadd.f32 0.0, %v4290
    %4292 = vmatmul.f32.gmra.mxu0 %v4082
    %v4293 = vpop.f32.mrf.mxu0
    %v4294 = vadd.f32 0.0, %v4293
    %4295 = vmatmul.f32.gmra.mxu0 %v4085
    %v4296 = vpop.f32.mrf.mxu0
    %v4297 = vadd.f32 0.0, %v4296
    %4298 = vmatmul.f32.gmra.mxu0 %v4088
    %v4299 = vpop.f32.mrf.mxu0
    %v4300 = vadd.f32 0.0, %v4299
    %4301 = vmatmul.f32.gmra.mxu0 %v4091
    %v4302 = vpop.f32.mrf.mxu0
    %v4303 = vadd.f32 0.0, %v4302
    %4304 = vmatmul.f32.gmra.mxu0 %v4094
    %v4305 = vpop.f32.mrf.mxu0
    %v4306 = vadd.f32 0.0, %v4305
    %4307 = vmatmul.f32.gmra.mxu0 %v4097
    %v4308 = vpop.f32.mrf.mxu0
    %v4309 = vadd.f32 0.0, %v4308
    %4310 = vmatmul.f32.gmra.mxu0 %v4100
    %v4311 = vpop.f32.mrf.mxu0
    %v4312 = vadd.f32 0.0, %v4311
    %4313 = vmatmul.f32.gmra.mxu0 %v4103
    %v4314 = vpop.f32.mrf.mxu0
    %v4315 = vadd.f32 0.0, %v4314
    %4316 = vmatmul.f32.gmra.mxu0 %v4106
    %v4317 = vpop.f32.mrf.mxu0
    %v4318 = vadd.f32 0.0, %v4317
    %4319 = vmatmul.f32.gmra.mxu0 %v4109
    %v4320 = vpop.f32.mrf.mxu0
    %v4321 = vadd.f32 0.0, %v4320
    %4322 = vmatmul.f32.gmra.mxu0 %v4112
    %v4323 = vpop.f32.mrf.mxu0
    %v4324 = vadd.f32 0.0, %v4323
    %4325 = vmatmul.f32.gmra.mxu0 %v4115
    %v4326 = vpop.f32.mrf.mxu0
    %v4327 = vadd.f32 0.0, %v4326
    %4328 = vmatmul.f32.gmra.mxu0 %v4118
    %v4329 = vpop.f32.mrf.mxu0
    %v4330 = vadd.f32 0.0, %v4329
    %4331 = vmatmul.f32.gmra.mxu0 %v4121
    %v4332 = vpop.f32.mrf.mxu0
    %v4333 = vadd.f32 0.0, %v4332
    %4334 = vmatmul.f32.gmra.mxu0 %v4124
    %v4335 = vpop.f32.mrf.mxu0
    %v4336 = vadd.f32 0.0, %v4335
    %4337 = vmatmul.f32.gmra.mxu0 %v4127
    %v4338 = vpop.f32.mrf.mxu0
    %v4339 = vadd.f32 0.0, %v4338
    %4340 = vmatmul.f32.gmra.mxu0 %v4130
    %v4341 = vpop.f32.mrf.mxu0
    %v4342 = vadd.f32 0.0, %v4341
    %4343 = vmatmul.f32.gmra.mxu0 %v4133
    %v4344 = vpop.f32.mrf.mxu0
    %v4345 = vadd.f32 0.0, %v4344
    %4346 = vmatmul.f32.gmra.mxu0 %v4136
    %v4347 = vpop.f32.mrf.mxu0
    %v4348 = vadd.f32 0.0, %v4347
    %4349 = vmatmul.f32.gmra.mxu0 %v4139
    %v4350 = vpop.f32.mrf.mxu0
    %v4351 = vadd.f32 0.0, %v4350
    %4352 = vdwg.mxu0
    %v4353 = vadd.f32 %v3819, %v4162
    %v4354 = vadd.f32 %v3820, %v4165
    %v4355 = vadd.f32 %v3821, %v4168
    %v4356 = vadd.f32 %v3822, %v4171
    %v4357 = vadd.f32 %v3823, %v4174
    %v4358 = vadd.f32 %v3824, %v4177
    %v4359 = vadd.f32 %v3825, %v4180
    %v4360 = vadd.f32 %v3826, %v4183
    %v4361 = vadd.f32 %v3827, %v4186
    %v4362 = vadd.f32 %v3828, %v4189
    %v4363 = vadd.f32 %v3829, %v4192
    %v4364 = vadd.f32 %v3830, %v4195
    %v4365 = vadd.f32 %v3831, %v4198
    %v4366 = vadd.f32 %v3832, %v4201
    %v4367 = vadd.f32 %v3833, %v4204
    %v4368 = vadd.f32 %v3834, %v4207
    %v4369 = vadd.f32 %v3835, %v4210
    %v4370 = vadd.f32 %v3836, %v4213
    %v4371 = vadd.f32 %v3837, %v4216
    %v4372 = vadd.f32 %v3838, %v4219
    %v4373 = vadd.f32 %v3839, %v4222
    %v4374 = vadd.f32 %v3840, %v4225
    %v4375 = vadd.f32 %v3841, %v4228
    %v4376 = vadd.f32 %v3842, %v4231
    %v4377 = vadd.f32 %v3843, %v4234
    %v4378 = vadd.f32 %v3844, %v4237
    %v4379 = vadd.f32 %v3845, %v4240
    %v4380 = vadd.f32 %v3846, %v4243
    %v4381 = vadd.f32 %v3847, %v4246
    %v4382 = vadd.f32 %v3848, %v4249
    %v4383 = vadd.f32 %v3849, %v4252
    %v4384 = vadd.f32 %v3850, %v4255
    %v4385 = vadd.f32 %v3851, %v4258
    %v4386 = vadd.f32 %v3852, %v4261
    %v4387 = vadd.f32 %v3853, %v4264
    %v4388 = vadd.f32 %v3854, %v4267
    %v4389 = vadd.f32 %v3855, %v4270
    %v4390 = vadd.f32 %v3856, %v4273
    %v4391 = vadd.f32 %v3857, %v4276
    %v4392 = vadd.f32 %v3858, %v4279
    %v4393 = vadd.f32 %v3859, %v4282
    %v4394 = vadd.f32 %v3860, %v4285
    %v4395 = vadd.f32 %v3861, %v4288
    %v4396 = vadd.f32 %v3862, %v4291
    %v4397 = vadd.f32 %v3863, %v4294
    %v4398 = vadd.f32 %v3864, %v4297
    %v4399 = vadd.f32 %v3865, %v4300
    %v4400 = vadd.f32 %v3866, %v4303
    %v4401 = vadd.f32 %v3867, %v4306
    %v4402 = vadd.f32 %v3868, %v4309
    %v4403 = vadd.f32 %v3869, %v4312
    %v4404 = vadd.f32 %v3870, %v4315
    %v4405 = vadd.f32 %v3871, %v4318
    %v4406 = vadd.f32 %v3872, %v4321
    %v4407 = vadd.f32 %v3873, %v4324
    %v4408 = vadd.f32 %v3874, %v4327
    %v4409 = vadd.f32 %v3875, %v4330
    %v4410 = vadd.f32 %v3876, %v4333
    %v4411 = vadd.f32 %v3877, %v4336
    %v4412 = vadd.f32 %v3878, %v4339
    %v4413 = vadd.f32 %v3879, %v4342
    %v4414 = vadd.f32 %v3880, %v4345
    %v4415 = vadd.f32 %v3881, %v4348
    %v4416 = vadd.f32 %v3882, %v4351
    %v4417 = vld [vmem:[%s3348 + $0x2] sm:$0xff]
    %v4418 = vld [vmem:[%s3348 + $0xa] sm:$0xff]
    %v4419 = vld [vmem:[%s3348 + $0x1a] sm:$0xff]
    %v4420 = vld [vmem:[%s3348 + $0x22] sm:$0xff]
    %v4421 = vld [vmem:[%s3348 + $0x32] sm:$0xff]
    %v4422 = vld [vmem:[%s3348 + $0x3a] sm:$0xff]
    %v4423 = vld [vmem:[%s3348 + $0x4a] sm:$0xff]
    %v4424 = vld [vmem:[%s3348 + $0x52] sm:$0xff]
    %v4425 = vld [vmem:[%s3348 + $0x62] sm:$0xff]
    %v4426 = vld [vmem:[%s3348 + $0x6a] sm:$0xff]
    %v4427 = vld [vmem:[%s3348 + $0x7a] sm:$0xff]
    %v4428 = vld [vmem:[%s3348 + $0x82] sm:$0xff]
    %v4429 = vld [vmem:[%s3348 + $0x92] sm:$0xff]
    %v4430 = vld [vmem:[%s3348 + $0x9a] sm:$0xff]
    %v4431 = vld [vmem:[%s3348 + $0xaa] sm:$0xff]
    %v4432 = vld [vmem:[%s3348 + $0xb2] sm:$0xff]
    %v4433 = vld [vmem:[%s3348 + $0xc2] sm:$0xff]
    %v4434 = vld [vmem:[%s3348 + $0xca] sm:$0xff]
    %v4435 = vld [vmem:[%s3348 + $0xda] sm:$0xff]
    %v4436 = vld [vmem:[%s3348 + $0xe2] sm:$0xff]
    %v4437 = vld [vmem:[%s3348 + $0xf2] sm:$0xff]
    %v4438 = vld [vmem:[%s3348 + $0xfa] sm:$0xff]
    %v4439 = vld [vmem:[%s3348 + $0x10a] sm:$0xff]
    %v4440 = vld [vmem:[%s3348 + $0x112] sm:$0xff]
    %v4441 = vld [vmem:[%s3348 + $0x122] sm:$0xff]
    %v4442 = vld [vmem:[%s3348 + $0x12a] sm:$0xff]
    %v4443 = vld [vmem:[%s3348 + $0x13a] sm:$0xff]
    %v4444 = vld [vmem:[%s3348 + $0x142] sm:$0xff]
    %v4445 = vld [vmem:[%s3348 + $0x152] sm:$0xff]
    %v4446 = vld [vmem:[%s3348 + $0x15a] sm:$0xff]
    %v4447 = vld [vmem:[%s3348 + $0x16a] sm:$0xff]
    %v4448 = vld [vmem:[%s3348 + $0x172] sm:$0xff]
    %v4449 = vld [vmem:[%s3348 + $0x1b2] sm:$0xff]
    %v4450 = vld [vmem:[%s3348 + $0x1ba] sm:$0xff]
    %v4451 = vld [vmem:[%s3348 + $0x1ca] sm:$0xff]
    %v4452 = vld [vmem:[%s3348 + $0x1d2] sm:$0xff]
    %v4453 = vld [vmem:[%s3348 + $0x1e2] sm:$0xff]
    %v4454 = vld [vmem:[%s3348 + $0x1ea] sm:$0xff]
    %v4455 = vld [vmem:[%s3348 + $0x1fa] sm:$0xff]
    %v4456 = vld [vmem:[%s3348 + $0x202] sm:$0xff]
    %v4457 = vld [vmem:[%s3348 + $0x212] sm:$0xff]
    %v4458 = vld [vmem:[%s3348 + $0x21a] sm:$0xff]
    %v4459 = vld [vmem:[%s3348 + $0x22a] sm:$0xff]
    %v4460 = vld [vmem:[%s3348 + $0x232] sm:$0xff]
    %v4461 = vld [vmem:[%s3348 + $0x242] sm:$0xff]
    %v4462 = vld [vmem:[%s3348 + $0x24a] sm:$0xff]
    %v4463 = vld [vmem:[%s3348 + $0x25a] sm:$0xff]
    %v4464 = vld [vmem:[%s3348 + $0x262] sm:$0xff]
    %v4465 = vld [vmem:[%s3348 + $0x272] sm:$0xff]
    %v4466 = vld [vmem:[%s3348 + $0x27a] sm:$0xff]
    %v4467 = vld [vmem:[%s3348 + $0x28a] sm:$0xff]
    %v4468 = vld [vmem:[%s3348 + $0x292] sm:$0xff]
    %v4469 = vld [vmem:[%s3348 + $0x2a2] sm:$0xff]
    %v4470 = vld [vmem:[%s3348 + $0x2aa] sm:$0xff]
    %v4471 = vld [vmem:[%s3348 + $0x2ba] sm:$0xff]
    %v4472 = vld [vmem:[%s3348 + $0x2c2] sm:$0xff]
    %v4473 = vld [vmem:[%s3348 + $0x2d2] sm:$0xff]
    %v4474 = vld [vmem:[%s3348 + $0x2da] sm:$0xff]
    %v4475 = vld [vmem:[%s3348 + $0x2ea] sm:$0xff]
    %v4476 = vld [vmem:[%s3348 + $0x2f2] sm:$0xff]
    %v4477 = vld [vmem:[%s3348 + $0x302] sm:$0xff]
    %v4478 = vld [vmem:[%s3348 + $0x30a] sm:$0xff]
    %v4479 = vld [vmem:[%s3348 + $0x31a] sm:$0xff]
    %v4480 = vld [vmem:[%s3348 + $0x322] sm:$0xff]
    %s4481 = scalar_lea.vmem %s1, 32
    %v4482 = vld [vmem:[%s4481] sm:$0xf]
    %v4484 = vsel %vm33, %v4417, 0
    %v4487 = vsel %vm33, %v4418, 0
    %v4490 = vsel %vm33, %v4419, 0
    %v4493 = vsel %vm33, %v4420, 0
    %v4496 = vsel %vm33, %v4421, 0
    %v4499 = vsel %vm33, %v4422, 0
    %v4502 = vsel %vm33, %v4423, 0
    %v4505 = vsel %vm33, %v4424, 0
    %v4508 = vsel %vm33, %v4425, 0
    %v4511 = vsel %vm33, %v4426, 0
    %v4514 = vsel %vm33, %v4427, 0
    %v4517 = vsel %vm33, %v4428, 0
    %v4520 = vsel %vm33, %v4429, 0
    %v4523 = vsel %vm33, %v4430, 0
    %v4526 = vsel %vm33, %v4431, 0
    %v4529 = vsel %vm33, %v4432, 0
    %v4532 = vsel %vm33, %v4433, 0
    %v4535 = vsel %vm33, %v4434, 0
    %v4538 = vsel %vm33, %v4435, 0
    %v4541 = vsel %vm33, %v4436, 0
    %v4544 = vsel %vm33, %v4437, 0
    %v4547 = vsel %vm33, %v4438, 0
    %v4550 = vsel %vm33, %v4439, 0
    %v4553 = vsel %vm33, %v4440, 0
    %v4556 = vsel %vm33, %v4441, 0
    %v4559 = vsel %vm33, %v4442, 0
    %v4562 = vsel %vm33, %v4443, 0
    %v4565 = vsel %vm33, %v4444, 0
    %v4568 = vsel %vm33, %v4445, 0
    %v4571 = vsel %vm33, %v4446, 0
    %v4574 = vsel %vm33, %v4447, 0
    %v4577 = vsel %vm33, %v4448, 0
    %v4580 = vsel %vm33, %v4449, 0
    %v4583 = vsel %vm33, %v4450, 0
    %v4586 = vsel %vm33, %v4451, 0
    %v4589 = vsel %vm33, %v4452, 0
    %v4592 = vsel %vm33, %v4453, 0
    %v4595 = vsel %vm33, %v4454, 0
    %v4598 = vsel %vm33, %v4455, 0
    %v4601 = vsel %vm33, %v4456, 0
    %v4604 = vsel %vm33, %v4457, 0
    %v4607 = vsel %vm33, %v4458, 0
    %v4610 = vsel %vm33, %v4459, 0
    %v4613 = vsel %vm33, %v4460, 0
    %v4616 = vsel %vm33, %v4461, 0
    %v4619 = vsel %vm33, %v4462, 0
    %v4622 = vsel %vm33, %v4463, 0
    %v4625 = vsel %vm33, %v4464, 0
    %v4628 = vsel %vm33, %v4465, 0
    %v4631 = vsel %vm33, %v4466, 0
    %v4634 = vsel %vm33, %v4467, 0
    %v4637 = vsel %vm33, %v4468, 0
    %v4640 = vsel %vm33, %v4469, 0
    %v4643 = vsel %vm33, %v4470, 0
    %v4646 = vsel %vm33, %v4471, 0
    %v4649 = vsel %vm33, %v4472, 0
    %v4652 = vsel %vm33, %v4473, 0
    %v4655 = vsel %vm33, %v4474, 0
    %v4658 = vsel %vm33, %v4475, 0
    %v4661 = vsel %vm33, %v4476, 0
    %v4664 = vsel %vm33, %v4477, 0
    %v4667 = vsel %vm33, %v4478, 0
    %v4670 = vsel %vm33, %v4479, 0
    %v4673 = vsel %vm33, %v4480, 0
    %v4676 = vsel %vm595, %v4482, 0
    %4678 = vmatpush.msra.mxu0 0.0
    %4679 = vmatpush.msra.mxu0 0.0
    %4680 = vmatpush.msra.mxu0 0.0
    %4681 = vmatpush.msra.mxu0 0.0
    %4682 = vmatpush.msra.mxu0 0.0
    %4683 = vmatpush.msra.mxu0 0.0
    %4684 = vmatpush.msra.mxu0 0.0
    %4685 = vmatpush.msra.mxu0 0.0
    %4686 = vmatpush.msra.mxu0 0.0
    %4687 = vmatpush.msra.mxu0 0.0
    %4688 = vmatpush.msra.mxu0 0.0
    %4689 = vmatpush.msra.mxu0 0.0
    %4690 = vmatpush.msra.mxu0 0.0
    %4691 = vmatpush.msra.mxu0 0.0
    %4692 = vmatpush.msra.mxu0 0.0
    %4693 = vmatpush.msra.mxu0 %v4676
    %4694 = vmatmul.f32.gmra.mxu0 %v4484
    %v4695 = vpop.f32.mrf.mxu0
    %v4696 = vadd.f32 0.0, %v4695
    %4697 = vmatmul.f32.gmra.mxu0 %v4487
    %v4698 = vpop.f32.mrf.mxu0
    %v4699 = vadd.f32 0.0, %v4698
    %4700 = vmatmul.f32.gmra.mxu0 %v4490
    %v4701 = vpop.f32.mrf.mxu0
    %v4702 = vadd.f32 0.0, %v4701
    %4703 = vmatmul.f32.gmra.mxu0 %v4493
    %v4704 = vpop.f32.mrf.mxu0
    %v4705 = vadd.f32 0.0, %v4704
    %4706 = vmatmul.f32.gmra.mxu0 %v4496
    %v4707 = vpop.f32.mrf.mxu0
    %v4708 = vadd.f32 0.0, %v4707
    %4709 = vmatmul.f32.gmra.mxu0 %v4499
    %v4710 = vpop.f32.mrf.mxu0
    %v4711 = vadd.f32 0.0, %v4710
    %4712 = vmatmul.f32.gmra.mxu0 %v4502
    %v4713 = vpop.f32.mrf.mxu0
    %v4714 = vadd.f32 0.0, %v4713
    %4715 = vmatmul.f32.gmra.mxu0 %v4505
    %v4716 = vpop.f32.mrf.mxu0
    %v4717 = vadd.f32 0.0, %v4716
    %4718 = vmatmul.f32.gmra.mxu0 %v4508
    %v4719 = vpop.f32.mrf.mxu0
    %v4720 = vadd.f32 0.0, %v4719
    %4721 = vmatmul.f32.gmra.mxu0 %v4511
    %v4722 = vpop.f32.mrf.mxu0
    %v4723 = vadd.f32 0.0, %v4722
    %4724 = vmatmul.f32.gmra.mxu0 %v4514
    %v4725 = vpop.f32.mrf.mxu0
    %v4726 = vadd.f32 0.0, %v4725
    %4727 = vmatmul.f32.gmra.mxu0 %v4517
    %v4728 = vpop.f32.mrf.mxu0
    %v4729 = vadd.f32 0.0, %v4728
    %4730 = vmatmul.f32.gmra.mxu0 %v4520
    %v4731 = vpop.f32.mrf.mxu0
    %v4732 = vadd.f32 0.0, %v4731
    %4733 = vmatmul.f32.gmra.mxu0 %v4523
    %v4734 = vpop.f32.mrf.mxu0
    %v4735 = vadd.f32 0.0, %v4734
    %4736 = vmatmul.f32.gmra.mxu0 %v4526
    %v4737 = vpop.f32.mrf.mxu0
    %v4738 = vadd.f32 0.0, %v4737
    %4739 = vmatmul.f32.gmra.mxu0 %v4529
    %v4740 = vpop.f32.mrf.mxu0
    %v4741 = vadd.f32 0.0, %v4740
    %4742 = vmatmul.f32.gmra.mxu0 %v4532
    %v4743 = vpop.f32.mrf.mxu0
    %v4744 = vadd.f32 0.0, %v4743
    %4745 = vmatmul.f32.gmra.mxu0 %v4535
    %v4746 = vpop.f32.mrf.mxu0
    %v4747 = vadd.f32 0.0, %v4746
    %4748 = vmatmul.f32.gmra.mxu0 %v4538
    %v4749 = vpop.f32.mrf.mxu0
    %v4750 = vadd.f32 0.0, %v4749
    %4751 = vmatmul.f32.gmra.mxu0 %v4541
    %v4752 = vpop.f32.mrf.mxu0
    %v4753 = vadd.f32 0.0, %v4752
    %4754 = vmatmul.f32.gmra.mxu0 %v4544
    %v4755 = vpop.f32.mrf.mxu0
    %v4756 = vadd.f32 0.0, %v4755
    %4757 = vmatmul.f32.gmra.mxu0 %v4547
    %v4758 = vpop.f32.mrf.mxu0
    %v4759 = vadd.f32 0.0, %v4758
    %4760 = vmatmul.f32.gmra.mxu0 %v4550
    %v4761 = vpop.f32.mrf.mxu0
    %v4762 = vadd.f32 0.0, %v4761
    %4763 = vmatmul.f32.gmra.mxu0 %v4553
    %v4764 = vpop.f32.mrf.mxu0
    %v4765 = vadd.f32 0.0, %v4764
    %4766 = vmatmul.f32.gmra.mxu0 %v4556
    %v4767 = vpop.f32.mrf.mxu0
    %v4768 = vadd.f32 0.0, %v4767
    %4769 = vmatmul.f32.gmra.mxu0 %v4559
    %v4770 = vpop.f32.mrf.mxu0
    %v4771 = vadd.f32 0.0, %v4770
    %4772 = vmatmul.f32.gmra.mxu0 %v4562
    %v4773 = vpop.f32.mrf.mxu0
    %v4774 = vadd.f32 0.0, %v4773
    %4775 = vmatmul.f32.gmra.mxu0 %v4565
    %v4776 = vpop.f32.mrf.mxu0
    %v4777 = vadd.f32 0.0, %v4776
    %4778 = vmatmul.f32.gmra.mxu0 %v4568
    %v4779 = vpop.f32.mrf.mxu0
    %v4780 = vadd.f32 0.0, %v4779
    %4781 = vmatmul.f32.gmra.mxu0 %v4571
    %v4782 = vpop.f32.mrf.mxu0
    %v4783 = vadd.f32 0.0, %v4782
    %4784 = vmatmul.f32.gmra.mxu0 %v4574
    %v4785 = vpop.f32.mrf.mxu0
    %v4786 = vadd.f32 0.0, %v4785
    %4787 = vmatmul.f32.gmra.mxu0 %v4577
    %v4788 = vpop.f32.mrf.mxu0
    %v4789 = vadd.f32 0.0, %v4788
    %4790 = vmatmul.f32.gmra.mxu0 %v4580
    %v4791 = vpop.f32.mrf.mxu0
    %v4792 = vadd.f32 0.0, %v4791
    %4793 = vmatmul.f32.gmra.mxu0 %v4583
    %v4794 = vpop.f32.mrf.mxu0
    %v4795 = vadd.f32 0.0, %v4794
    %4796 = vmatmul.f32.gmra.mxu0 %v4586
    %v4797 = vpop.f32.mrf.mxu0
    %v4798 = vadd.f32 0.0, %v4797
    %4799 = vmatmul.f32.gmra.mxu0 %v4589
    %v4800 = vpop.f32.mrf.mxu0
    %v4801 = vadd.f32 0.0, %v4800
    %4802 = vmatmul.f32.gmra.mxu0 %v4592
    %v4803 = vpop.f32.mrf.mxu0
    %v4804 = vadd.f32 0.0, %v4803
    %4805 = vmatmul.f32.gmra.mxu0 %v4595
    %v4806 = vpop.f32.mrf.mxu0
    %v4807 = vadd.f32 0.0, %v4806
    %4808 = vmatmul.f32.gmra.mxu0 %v4598
    %v4809 = vpop.f32.mrf.mxu0
    %v4810 = vadd.f32 0.0, %v4809
    %4811 = vmatmul.f32.gmra.mxu0 %v4601
    %v4812 = vpop.f32.mrf.mxu0
    %v4813 = vadd.f32 0.0, %v4812
    %4814 = vmatmul.f32.gmra.mxu0 %v4604
    %v4815 = vpop.f32.mrf.mxu0
    %v4816 = vadd.f32 0.0, %v4815
    %4817 = vmatmul.f32.gmra.mxu0 %v4607
    %v4818 = vpop.f32.mrf.mxu0
    %v4819 = vadd.f32 0.0, %v4818
    %4820 = vmatmul.f32.gmra.mxu0 %v4610
    %v4821 = vpop.f32.mrf.mxu0
    %v4822 = vadd.f32 0.0, %v4821
    %4823 = vmatmul.f32.gmra.mxu0 %v4613
    %v4824 = vpop.f32.mrf.mxu0
    %v4825 = vadd.f32 0.0, %v4824
    %4826 = vmatmul.f32.gmra.mxu0 %v4616
    %v4827 = vpop.f32.mrf.mxu0
    %v4828 = vadd.f32 0.0, %v4827
    %4829 = vmatmul.f32.gmra.mxu0 %v4619
    %v4830 = vpop.f32.mrf.mxu0
    %v4831 = vadd.f32 0.0, %v4830
    %4832 = vmatmul.f32.gmra.mxu0 %v4622
    %v4833 = vpop.f32.mrf.mxu0
    %v4834 = vadd.f32 0.0, %v4833
    %4835 = vmatmul.f32.gmra.mxu0 %v4625
    %v4836 = vpop.f32.mrf.mxu0
    %v4837 = vadd.f32 0.0, %v4836
    %4838 = vmatmul.f32.gmra.mxu0 %v4628
    %v4839 = vpop.f32.mrf.mxu0
    %v4840 = vadd.f32 0.0, %v4839
    %4841 = vmatmul.f32.gmra.mxu0 %v4631
    %v4842 = vpop.f32.mrf.mxu0
    %v4843 = vadd.f32 0.0, %v4842
    %4844 = vmatmul.f32.gmra.mxu0 %v4634
    %v4845 = vpop.f32.mrf.mxu0
    %v4846 = vadd.f32 0.0, %v4845
    %4847 = vmatmul.f32.gmra.mxu0 %v4637
    %v4848 = vpop.f32.mrf.mxu0
    %v4849 = vadd.f32 0.0, %v4848
    %4850 = vmatmul.f32.gmra.mxu0 %v4640
    %v4851 = vpop.f32.mrf.mxu0
    %v4852 = vadd.f32 0.0, %v4851
    %4853 = vmatmul.f32.gmra.mxu0 %v4643
    %v4854 = vpop.f32.mrf.mxu0
    %v4855 = vadd.f32 0.0, %v4854
    %4856 = vmatmul.f32.gmra.mxu0 %v4646
    %v4857 = vpop.f32.mrf.mxu0
    %v4858 = vadd.f32 0.0, %v4857
    %4859 = vmatmul.f32.gmra.mxu0 %v4649
    %v4860 = vpop.f32.mrf.mxu0
    %v4861 = vadd.f32 0.0, %v4860
    %4862 = vmatmul.f32.gmra.mxu0 %v4652
    %v4863 = vpop.f32.mrf.mxu0
    %v4864 = vadd.f32 0.0, %v4863
    %4865 = vmatmul.f32.gmra.mxu0 %v4655
    %v4866 = vpop.f32.mrf.mxu0
    %v4867 = vadd.f32 0.0, %v4866
    %4868 = vmatmul.f32.gmra.mxu0 %v4658
    %v4869 = vpop.f32.mrf.mxu0
    %v4870 = vadd.f32 0.0, %v4869
    %4871 = vmatmul.f32.gmra.mxu0 %v4661
    %v4872 = vpop.f32.mrf.mxu0
    %v4873 = vadd.f32 0.0, %v4872
    %4874 = vmatmul.f32.gmra.mxu0 %v4664
    %v4875 = vpop.f32.mrf.mxu0
    %v4876 = vadd.f32 0.0, %v4875
    %4877 = vmatmul.f32.gmra.mxu0 %v4667
    %v4878 = vpop.f32.mrf.mxu0
    %v4879 = vadd.f32 0.0, %v4878
    %4880 = vmatmul.f32.gmra.mxu0 %v4670
    %v4881 = vpop.f32.mrf.mxu0
    %v4882 = vadd.f32 0.0, %v4881
    %4883 = vmatmul.f32.gmra.mxu0 %v4673
    %v4884 = vpop.f32.mrf.mxu0
    %v4885 = vadd.f32 0.0, %v4884
    %4886 = vdwg.mxu0
    %v4887 = vadd.f32 %v4353, %v4696
    %v4888 = vadd.f32 %v4354, %v4699
    %v4889 = vadd.f32 %v4355, %v4702
    %v4890 = vadd.f32 %v4356, %v4705
    %v4891 = vadd.f32 %v4357, %v4708
    %v4892 = vadd.f32 %v4358, %v4711
    %v4893 = vadd.f32 %v4359, %v4714
    %v4894 = vadd.f32 %v4360, %v4717
    %v4895 = vadd.f32 %v4361, %v4720
    %v4896 = vadd.f32 %v4362, %v4723
    %v4897 = vadd.f32 %v4363, %v4726
    %v4898 = vadd.f32 %v4364, %v4729
    %v4899 = vadd.f32 %v4365, %v4732
    %v4900 = vadd.f32 %v4366, %v4735
    %v4901 = vadd.f32 %v4367, %v4738
    %v4902 = vadd.f32 %v4368, %v4741
    %v4903 = vadd.f32 %v4369, %v4744
    %v4904 = vadd.f32 %v4370, %v4747
    %v4905 = vadd.f32 %v4371, %v4750
    %v4906 = vadd.f32 %v4372, %v4753
    %v4907 = vadd.f32 %v4373, %v4756
    %v4908 = vadd.f32 %v4374, %v4759
    %v4909 = vadd.f32 %v4375, %v4762
    %v4910 = vadd.f32 %v4376, %v4765
    %v4911 = vadd.f32 %v4377, %v4768
    %v4912 = vadd.f32 %v4378, %v4771
    %v4913 = vadd.f32 %v4379, %v4774
    %v4914 = vadd.f32 %v4380, %v4777
    %v4915 = vadd.f32 %v4381, %v4780
    %v4916 = vadd.f32 %v4382, %v4783
    %v4917 = vadd.f32 %v4383, %v4786
    %v4918 = vadd.f32 %v4384, %v4789
    %v4919 = vadd.f32 %v4385, %v4792
    %v4920 = vadd.f32 %v4386, %v4795
    %v4921 = vadd.f32 %v4387, %v4798
    %v4922 = vadd.f32 %v4388, %v4801
    %v4923 = vadd.f32 %v4389, %v4804
    %v4924 = vadd.f32 %v4390, %v4807
    %v4925 = vadd.f32 %v4391, %v4810
    %v4926 = vadd.f32 %v4392, %v4813
    %v4927 = vadd.f32 %v4393, %v4816
    %v4928 = vadd.f32 %v4394, %v4819
    %v4929 = vadd.f32 %v4395, %v4822
    %v4930 = vadd.f32 %v4396, %v4825
    %v4931 = vadd.f32 %v4397, %v4828
    %v4932 = vadd.f32 %v4398, %v4831
    %v4933 = vadd.f32 %v4399, %v4834
    %v4934 = vadd.f32 %v4400, %v4837
    %v4935 = vadd.f32 %v4401, %v4840
    %v4936 = vadd.f32 %v4402, %v4843
    %v4937 = vadd.f32 %v4403, %v4846
    %v4938 = vadd.f32 %v4404, %v4849
    %v4939 = vadd.f32 %v4405, %v4852
    %v4940 = vadd.f32 %v4406, %v4855
    %v4941 = vadd.f32 %v4407, %v4858
    %v4942 = vadd.f32 %v4408, %v4861
    %v4943 = vadd.f32 %v4409, %v4864
    %v4944 = vadd.f32 %v4410, %v4867
    %v4945 = vadd.f32 %v4411, %v4870
    %v4946 = vadd.f32 %v4412, %v4873
    %v4947 = vadd.f32 %v4413, %v4876
    %v4948 = vadd.f32 %v4414, %v4879
    %v4949 = vadd.f32 %v4415, %v4882
    %v4950 = vadd.f32 %v4416, %v4885
    %v4951 = vld [vmem:[%s2] sm:$0x1]
    %v4953 = vperm.slane %v4951, 0
    %v4955 = vadd.f32 %v4887, %v4953
    %v4956 = vadd.f32 %v4888, %v4953
    %v4957 = vadd.f32 %v4889, %v4953
    %v4958 = vadd.f32 %v4890, %v4953
    %v4959 = vadd.f32 %v4891, %v4953
    %v4960 = vadd.f32 %v4892, %v4953
    %v4961 = vadd.f32 %v4893, %v4953
    %v4962 = vadd.f32 %v4894, %v4953
    %v4963 = vadd.f32 %v4895, %v4953
    %v4964 = vadd.f32 %v4896, %v4953
    %v4965 = vadd.f32 %v4897, %v4953
    %v4966 = vadd.f32 %v4898, %v4953
    %v4967 = vadd.f32 %v4899, %v4953
    %v4968 = vadd.f32 %v4900, %v4953
    %v4969 = vadd.f32 %v4901, %v4953
    %v4970 = vadd.f32 %v4902, %v4953
    %v4971 = vadd.f32 %v4903, %v4953
    %v4972 = vadd.f32 %v4904, %v4953
    %v4973 = vadd.f32 %v4905, %v4953
    %v4974 = vadd.f32 %v4906, %v4953
    %v4975 = vadd.f32 %v4907, %v4953
    %v4976 = vadd.f32 %v4908, %v4953
    %v4977 = vadd.f32 %v4909, %v4953
    %v4978 = vadd.f32 %v4910, %v4953
    %v4979 = vadd.f32 %v4911, %v4953
    %v4980 = vadd.f32 %v4912, %v4953
    %v4981 = vadd.f32 %v4913, %v4953
    %v4982 = vadd.f32 %v4914, %v4953
    %v4983 = vadd.f32 %v4915, %v4953
    %v4984 = vadd.f32 %v4916, %v4953
    %v4985 = vadd.f32 %v4917, %v4953
    %v4986 = vadd.f32 %v4918, %v4953
    %v4987 = vadd.f32 %v4919, %v4953
    %v4988 = vadd.f32 %v4920, %v4953
    %v4989 = vadd.f32 %v4921, %v4953
    %v4990 = vadd.f32 %v4922, %v4953
    %v4991 = vadd.f32 %v4923, %v4953
    %v4992 = vadd.f32 %v4924, %v4953
    %v4993 = vadd.f32 %v4925, %v4953
    %v4994 = vadd.f32 %v4926, %v4953
    %v4995 = vadd.f32 %v4927, %v4953
    %v4996 = vadd.f32 %v4928, %v4953
    %v4997 = vadd.f32 %v4929, %v4953
    %v4998 = vadd.f32 %v4930, %v4953
    %v4999 = vadd.f32 %v4931, %v4953
    %v5000 = vadd.f32 %v4932, %v4953
    %v5001 = vadd.f32 %v4933, %v4953
    %v5002 = vadd.f32 %v4934, %v4953
    %v5003 = vadd.f32 %v4935, %v4953
    %v5004 = vadd.f32 %v4936, %v4953
    %v5005 = vadd.f32 %v4937, %v4953
    %v5006 = vadd.f32 %v4938, %v4953
    %v5007 = vadd.f32 %v4939, %v4953
    %v5008 = vadd.f32 %v4940, %v4953
    %v5009 = vadd.f32 %v4941, %v4953
    %v5010 = vadd.f32 %v4942, %v4953
    %v5011 = vadd.f32 %v4943, %v4953
    %v5012 = vadd.f32 %v4944, %v4953
    %v5013 = vadd.f32 %v4945, %v4953
    %v5014 = vadd.f32 %v4946, %v4953
    %v5015 = vadd.f32 %v4947, %v4953
    %v5016 = vadd.f32 %v4948, %v4953
    %v5017 = vadd.f32 %v4949, %v4953
    %v5018 = vadd.f32 %v4950, %v4953
    %v5019 = vmax.f32 %v4955, 0.0
    %v5020 = vmax.f32 %v4956, 0.0
    %v5021 = vmax.f32 %v4957, 0.0
    %v5022 = vmax.f32 %v4958, 0.0
    %v5023 = vmax.f32 %v4959, 0.0
    %v5024 = vmax.f32 %v4960, 0.0
    %v5025 = vmax.f32 %v4961, 0.0
    %v5026 = vmax.f32 %v4962, 0.0
    %v5027 = vmax.f32 %v4963, 0.0
    %v5028 = vmax.f32 %v4964, 0.0
    %v5029 = vmax.f32 %v4965, 0.0
    %v5030 = vmax.f32 %v4966, 0.0
    %v5031 = vmax.f32 %v4967, 0.0
    %v5032 = vmax.f32 %v4968, 0.0
    %v5033 = vmax.f32 %v4969, 0.0
    %v5034 = vmax.f32 %v4970, 0.0
    %v5035 = vmax.f32 %v4971, 0.0
    %v5036 = vmax.f32 %v4972, 0.0
    %v5037 = vmax.f32 %v4973, 0.0
    %v5038 = vmax.f32 %v4974, 0.0
    %v5039 = vmax.f32 %v4975, 0.0
    %v5040 = vmax.f32 %v4976, 0.0
    %v5041 = vmax.f32 %v4977, 0.0
    %v5042 = vmax.f32 %v4978, 0.0
    %v5043 = vmax.f32 %v4979, 0.0
    %v5044 = vmax.f32 %v4980, 0.0
    %v5045 = vmax.f32 %v4981, 0.0
    %v5046 = vmax.f32 %v4982, 0.0
    %v5047 = vmax.f32 %v4983, 0.0
    %v5048 = vmax.f32 %v4984, 0.0
    %v5049 = vmax.f32 %v4985, 0.0
    %v5050 = vmax.f32 %v4986, 0.0
    %v5051 = vmax.f32 %v4987, 0.0
    %v5052 = vmax.f32 %v4988, 0.0
    %v5053 = vmax.f32 %v4989, 0.0
    %v5054 = vmax.f32 %v4990, 0.0
    %v5055 = vmax.f32 %v4991, 0.0
    %v5056 = vmax.f32 %v4992, 0.0
    %v5057 = vmax.f32 %v4993, 0.0
    %v5058 = vmax.f32 %v4994, 0.0
    %v5059 = vmax.f32 %v4995, 0.0
    %v5060 = vmax.f32 %v4996, 0.0
    %v5061 = vmax.f32 %v4997, 0.0
    %v5062 = vmax.f32 %v4998, 0.0
    %v5063 = vmax.f32 %v4999, 0.0
    %v5064 = vmax.f32 %v5000, 0.0
    %v5065 = vmax.f32 %v5001, 0.0
    %v5066 = vmax.f32 %v5002, 0.0
    %v5067 = vmax.f32 %v5003, 0.0
    %v5068 = vmax.f32 %v5004, 0.0
    %v5069 = vmax.f32 %v5005, 0.0
    %v5070 = vmax.f32 %v5006, 0.0
    %v5071 = vmax.f32 %v5007, 0.0
    %v5072 = vmax.f32 %v5008, 0.0
    %v5073 = vmax.f32 %v5009, 0.0
    %v5074 = vmax.f32 %v5010, 0.0
    %v5075 = vmax.f32 %v5011, 0.0
    %v5076 = vmax.f32 %v5012, 0.0
    %v5077 = vmax.f32 %v5013, 0.0
    %v5078 = vmax.f32 %v5014, 0.0
    %v5079 = vmax.f32 %v5015, 0.0
    %v5080 = vmax.f32 %v5016, 0.0
    %v5081 = vmax.f32 %v5017, 0.0
    %v5082 = vmax.f32 %v5018, 0.0
    %v5083 = vmax.f32 %v5019, %v5021
    %v5084 = vmax.f32 %v5020, %v5022
    %v5085 = vmax.f32 %v5023, %v5025
    %v5086 = vmax.f32 %v5024, %v5026
    %v5087 = vmax.f32 %v5027, %v5029
    %v5088 = vmax.f32 %v5028, %v5030
    %v5089 = vmax.f32 %v5031, %v5033
    %v5090 = vmax.f32 %v5032, %v5034
    %v5091 = vmax.f32 %v5035, %v5037
    %v5092 = vmax.f32 %v5036, %v5038
    %v5093 = vmax.f32 %v5039, %v5041
    %v5094 = vmax.f32 %v5040, %v5042
    %v5095 = vmax.f32 %v5043, %v5045
    %v5096 = vmax.f32 %v5044, %v5046
    %v5097 = vmax.f32 %v5047, %v5049
    %v5098 = vmax.f32 %v5048, %v5050
    %v5099 = vmax.f32 %v5051, %v5053
    %v5100 = vmax.f32 %v5052, %v5054
    %v5101 = vmax.f32 %v5055, %v5057
    %v5102 = vmax.f32 %v5056, %v5058
    %v5103 = vmax.f32 %v5059, %v5061
    %v5104 = vmax.f32 %v5060, %v5062
    %v5105 = vmax.f32 %v5063, %v5065
    %v5106 = vmax.f32 %v5064, %v5066
    %v5107 = vmax.f32 %v5067, %v5069
    %v5108 = vmax.f32 %v5068, %v5070
    %v5109 = vmax.f32 %v5071, %v5073
    %v5110 = vmax.f32 %v5072, %v5074
    %v5111 = vmax.f32 %v5075, %v5077
    %v5112 = vmax.f32 %v5076, %v5078
    %v5113 = vmax.f32 %v5079, %v5081
    %v5114 = vmax.f32 %v5080, %v5082
    %vm5115 = vcmask 64512
    %5116 = vst.msk [vmem:[#allocation4] sm:$0xff] %vm5115, %v5083
    %5117 = vst.msk [vmem:[#allocation4 + $0x8] sm:$0xff] %vm5115, %v5084
    %5118 = vst.msk [vmem:[#allocation4 + $0x10] sm:$0xff] %vm5115, %v5085
    %5119 = vst.msk [vmem:[#allocation4 + $0x18] sm:$0xff] %vm5115, %v5086
    %5120 = vst.msk [vmem:[#allocation4 + $0x20] sm:$0xff] %vm5115, %v5087
    %5121 = vst.msk [vmem:[#allocation4 + $0x28] sm:$0xff] %vm5115, %v5088
    %5122 = vst.msk [vmem:[#allocation4 + $0x30] sm:$0xff] %vm5115, %v5089
    %5123 = vst.msk [vmem:[#allocation4 + $0x38] sm:$0xff] %vm5115, %v5090
    %5124 = vst.msk [vmem:[#allocation4 + $0x40] sm:$0xff] %vm5115, %v5091
    %5125 = vst.msk [vmem:[#allocation4 + $0x48] sm:$0xff] %vm5115, %v5092
    %5126 = vst.msk [vmem:[#allocation4 + $0x50] sm:$0xff] %vm5115, %v5093
    %5127 = vst.msk [vmem:[#allocation4 + $0x58] sm:$0xff] %vm5115, %v5094
    %5128 = vst.msk [vmem:[#allocation4 + $0x60] sm:$0xff] %vm5115, %v5095
    %5129 = vst.msk [vmem:[#allocation4 + $0x68] sm:$0xff] %vm5115, %v5096
    %5130 = vst.msk [vmem:[#allocation4 + $0x70] sm:$0xff] %vm5115, %v5097
    %5131 = vst.msk [vmem:[#allocation4 + $0x78] sm:$0xff] %vm5115, %v5098
    %5132 = vst.msk [vmem:[#allocation4 + $0x80] sm:$0xff] %vm5115, %v5099
    %5133 = vst.msk [vmem:[#allocation4 + $0x88] sm:$0xff] %vm5115, %v5100
    %5134 = vst.msk [vmem:[#allocation4 + $0x90] sm:$0xff] %vm5115, %v5101
    %5135 = vst.msk [vmem:[#allocation4 + $0x98] sm:$0xff] %vm5115, %v5102
    %5136 = vst.msk [vmem:[#allocation4 + $0xa0] sm:$0xff] %vm5115, %v5103
    %5137 = vst.msk [vmem:[#allocation4 + $0xa8] sm:$0xff] %vm5115, %v5104
    %5138 = vst.msk [vmem:[#allocation4 + $0xb0] sm:$0xff] %vm5115, %v5105
    %5139 = vst.msk [vmem:[#allocation4 + $0xb8] sm:$0xff] %vm5115, %v5106
    %5140 = vst.msk [vmem:[#allocation4 + $0xc0] sm:$0xff] %vm5115, %v5107
    %5141 = vst.msk [vmem:[#allocation4 + $0xc8] sm:$0xff] %vm5115, %v5108
    %5142 = vst.msk [vmem:[#allocation4 + $0xd0] sm:$0xff] %vm5115, %v5109
    %5143 = vst.msk [vmem:[#allocation4 + $0xd8] sm:$0xff] %vm5115, %v5110
    %5144 = vst.msk [vmem:[#allocation4 + $0xe0] sm:$0xff] %vm5115, %v5111
    %5145 = vst.msk [vmem:[#allocation4 + $0xe8] sm:$0xff] %vm5115, %v5112
    %5146 = vst.msk [vmem:[#allocation4 + $0xf0] sm:$0xff] %vm5115, %v5113
    %5147 = vst.msk [vmem:[#allocation4 + $0xf8] sm:$0xff] %vm5115, %v5114
    %v5148 = vld [vmem:[#allocation4] ss:$2 sm:$0xff]
    %s5149 = scalar_lea.vmem [#allocation4], 16
    %v5150 = vld [vmem:[%s5149] ss:$2 sm:$0xff]
    %s5151 = scalar_lea.vmem [#allocation4], 32
    %v5152 = vld [vmem:[%s5151] ss:$2 sm:$0xff]
    %s5153 = scalar_lea.vmem [#allocation4], 48
    %v5154 = vld [vmem:[%s5153] ss:$2 sm:$0xff]
    %s5155 = scalar_lea.vmem [#allocation4], 64
    %v5156 = vld [vmem:[%s5155] ss:$2 sm:$0xff]
    %s5157 = scalar_lea.vmem [#allocation4], 80
    %v5158 = vld [vmem:[%s5157] ss:$2 sm:$0xff]
    %s5159 = scalar_lea.vmem [#allocation4], 96
    %v5160 = vld [vmem:[%s5159] ss:$2 sm:$0xff]
    %s5161 = scalar_lea.vmem [#allocation4], 112
    %v5162 = vld [vmem:[%s5161] ss:$2 sm:$0xff]
    %s5163 = scalar_lea.vmem [#allocation4], 128
    %v5164 = vld [vmem:[%s5163] ss:$2 sm:$0xff]
    %s5165 = scalar_lea.vmem [#allocation4], 144
    %v5166 = vld [vmem:[%s5165] ss:$2 sm:$0xff]
    %s5167 = scalar_lea.vmem [#allocation4], 160
    %v5168 = vld [vmem:[%s5167] ss:$2 sm:$0xff]
    %s5169 = scalar_lea.vmem [#allocation4], 176
    %v5170 = vld [vmem:[%s5169] ss:$2 sm:$0xff]
    %s5171 = scalar_lea.vmem [#allocation4], 192
    %v5172 = vld [vmem:[%s5171] ss:$2 sm:$0xff]
    %s5173 = scalar_lea.vmem [#allocation4], 208
    %v5174 = vld [vmem:[%s5173] ss:$2 sm:$0xff]
    %s5175 = scalar_lea.vmem [#allocation4], 224
    %v5176 = vld [vmem:[%s5175] ss:$2 sm:$0xff]
    %s5177 = scalar_lea.vmem [#allocation4], 240
    %v5178 = vld [vmem:[%s5177] ss:$2 sm:$0xff]
    %s5179 = scalar_lea.vmem [#allocation4], 1
    %v5180 = vld [vmem:[%s5179] ss:$2 sm:$0xff]
    %s5181 = scalar_lea.vmem [#allocation4], 17
    %v5182 = vld [vmem:[%s5181] ss:$2 sm:$0xff]
    %s5183 = scalar_lea.vmem [#allocation4], 33
    %v5184 = vld [vmem:[%s5183] ss:$2 sm:$0xff]
    %s5185 = scalar_lea.vmem [#allocation4], 49
    %v5186 = vld [vmem:[%s5185] ss:$2 sm:$0xff]
    %s5187 = scalar_lea.vmem [#allocation4], 65
    %v5188 = vld [vmem:[%s5187] ss:$2 sm:$0xff]
    %s5189 = scalar_lea.vmem [#allocation4], 81
    %v5190 = vld [vmem:[%s5189] ss:$2 sm:$0xff]
    %s5191 = scalar_lea.vmem [#allocation4], 97
    %v5192 = vld [vmem:[%s5191] ss:$2 sm:$0xff]
    %s5193 = scalar_lea.vmem [#allocation4], 113
    %v5194 = vld [vmem:[%s5193] ss:$2 sm:$0xff]
    %s5195 = scalar_lea.vmem [#allocation4], 129
    %v5196 = vld [vmem:[%s5195] ss:$2 sm:$0xff]
    %s5197 = scalar_lea.vmem [#allocation4], 145
    %v5198 = vld [vmem:[%s5197] ss:$2 sm:$0xff]
    %s5199 = scalar_lea.vmem [#allocation4], 161
    %v5200 = vld [vmem:[%s5199] ss:$2 sm:$0xff]
    %s5201 = scalar_lea.vmem [#allocation4], 177
    %v5202 = vld [vmem:[%s5201] ss:$2 sm:$0xff]
    %s5203 = scalar_lea.vmem [#allocation4], 193
    %v5204 = vld [vmem:[%s5203] ss:$2 sm:$0xff]
    %s5205 = scalar_lea.vmem [#allocation4], 209
    %v5206 = vld [vmem:[%s5205] ss:$2 sm:$0xff]
    %s5207 = scalar_lea.vmem [#allocation4], 225
    %v5208 = vld [vmem:[%s5207] ss:$2 sm:$0xff]
    %s5209 = scalar_lea.vmem [#allocation4], 241
    %v5210 = vld [vmem:[%s5209] ss:$2 sm:$0xff]
    %v5211 = vmax.f32 %v5148, %v5180
    %v5212 = vmax.f32 %v5150, %v5182
    %v5213 = vmax.f32 %v5152, %v5184
    %v5214 = vmax.f32 %v5154, %v5186
    %v5215 = vmax.f32 %v5156, %v5188
    %v5216 = vmax.f32 %v5158, %v5190
    %v5217 = vmax.f32 %v5160, %v5192
    %v5218 = vmax.f32 %v5162, %v5194
    %v5219 = vmax.f32 %v5164, %v5196
    %v5220 = vmax.f32 %v5166, %v5198
    %v5221 = vmax.f32 %v5168, %v5200
    %v5222 = vmax.f32 %v5170, %v5202
    %v5223 = vmax.f32 %v5172, %v5204
    %v5224 = vmax.f32 %v5174, %v5206
    %v5225 = vmax.f32 %v5176, %v5208
    %v5226 = vmax.f32 %v5178, %v5210
    %5227 = vst.msk [vmem:[#allocation3] sm:$0xff] %vm5115, 0.0
    %vm5228 = vcmask 58368
    %5229 = vst.msk [vmem:[#allocation3 + $0x8] sm:$0x3] %vm5228, 0.0
    %5230 = vst.msk [vmem:[#allocation3 + $0x10] sm:$0xff] %vm5115, 0.0
    %5231 = vst.msk [vmem:[#allocation3 + $0x18] sm:$0x3] %vm5228, 0.0
    %5232 = vst.msk [vmem:[#allocation3 + $0x20] sm:$0xff] %vm5115, 0.0
    %5233 = vst.msk [vmem:[#allocation3 + $0x28] sm:$0x3] %vm5228, 0.0
    %5234 = vst.msk [vmem:[#allocation3 + $0x30] sm:$0xff] %vm5115, 0.0
    %5235 = vst.msk [vmem:[#allocation3 + $0x38] sm:$0x3] %vm5228, 0.0
    %5236 = vst.msk [vmem:[#allocation3 + $0x40] sm:$0xff] %vm5115, 0.0
    %5237 = vst.msk [vmem:[#allocation3 + $0x48] sm:$0x3] %vm5228, 0.0
    %5238 = vst.msk [vmem:[#allocation3 + $0x50] sm:$0xff] %vm5115, 0.0
    %5239 = vst.msk [vmem:[#allocation3 + $0x58] sm:$0x3] %vm5228, 0.0
    %5240 = vst.msk [vmem:[#allocation3 + $0x60] sm:$0xff] %vm5115, 0.0
    %5241 = vst.msk [vmem:[#allocation3 + $0x68] sm:$0x3] %vm5228, 0.0
    %5242 = vst.msk [vmem:[#allocation3 + $0x70] sm:$0xff] %vm5115, 0.0
    %5243 = vst.msk [vmem:[#allocation3 + $0x78] sm:$0x3] %vm5228, 0.0
    %5244 = vst.msk [vmem:[#allocation3 + $0x80] sm:$0xff] %vm5115, 0.0
    %5245 = vst.msk [vmem:[#allocation3 + $0x88] sm:$0x3] %vm5228, 0.0
    %5246 = vst.msk [vmem:[#allocation3 + $0x90] sm:$0xff] %vm5115, 0.0
    %5247 = vst.msk [vmem:[#allocation3 + $0x98] sm:$0x3] %vm5228, 0.0
    %5248 = vst.msk [vmem:[#allocation3 + $0xa0] sm:$0xff] %vm5115, 0.0
    %5249 = vst.msk [vmem:[#allocation3 + $0xa8] sm:$0x3] %vm5228, 0.0
    %5250 = vst.msk [vmem:[#allocation3 + $0xb0] sm:$0xff] %vm5115, 0.0
    %5251 = vst.msk [vmem:[#allocation3 + $0xb8] sm:$0x3] %vm5228, 0.0
    %5252 = vst.msk [vmem:[#allocation3 + $0xc0] sm:$0xff] %vm5115, 0.0
    %5253 = vst.msk [vmem:[#allocation3 + $0xc8] sm:$0x3] %vm5228, 0.0
    %5254 = vst.msk [vmem:[#allocation3 + $0xd0] sm:$0xff] %vm5115, 0.0
    %5255 = vst.msk [vmem:[#allocation3 + $0xd8] sm:$0x3] %vm5228, 0.0
    %5256 = vst.msk [vmem:[#allocation3 + $0xe0] sm:$0xff] %vm5115, 0.0
    %5257 = vst.msk [vmem:[#allocation3 + $0xe8] sm:$0x3] %vm5228, 0.0
    %5258 = vst.msk [vmem:[#allocation3 + $0xf0] sm:$0xff] %vm5115, 0.0
    %5259 = vst.msk [vmem:[#allocation3 + $0xf8] sm:$0x3] %vm5228, 0.0
    %5260 = vst.msk [vmem:[#allocation3 + $0x100] sm:$0xff] %vm5115, 0.0
    %5261 = vst.msk [vmem:[#allocation3 + $0x108] sm:$0x3] %vm5228, 0.0
    %5262 = vst.msk [vmem:[#allocation3 + $0x110] sm:$0xff] %vm5115, 0.0
    %5263 = vst.msk [vmem:[#allocation3 + $0x118] sm:$0x3] %vm5228, 0.0
    %5264 = vst.msk [vmem:[#allocation3 + $0x120] sm:$0xff] %vm5115, 0.0
    %5265 = vst.msk [vmem:[#allocation3 + $0x128] sm:$0x3] %vm5228, 0.0
    %5266 = vst.msk [vmem:[#allocation3 + $0x130] sm:$0xff] %vm5115, 0.0
    %5267 = vst.msk [vmem:[#allocation3 + $0x138] sm:$0x3] %vm5228, 0.0
    %s5268 = scalar_lea.vmem [#allocation3], 16
    %5269 = vst.msk [vmem:[%s5268 + $0x1] sm:$0xff] %vm5115, %v5211
    %5270 = vst.msk [vmem:[%s5268 + $0x11] sm:$0xff] %vm5115, %v5212
    %5271 = vst.msk [vmem:[%s5268 + $0x21] sm:$0xff] %vm5115, %v5213
    %5272 = vst.msk [vmem:[%s5268 + $0x31] sm:$0xff] %vm5115, %v5214
    %5273 = vst.msk [vmem:[%s5268 + $0x41] sm:$0xff] %vm5115, %v5215
    %5274 = vst.msk [vmem:[%s5268 + $0x51] sm:$0xff] %vm5115, %v5216
    %5275 = vst.msk [vmem:[%s5268 + $0x61] sm:$0xff] %vm5115, %v5217
    %5276 = vst.msk [vmem:[%s5268 + $0x71] sm:$0xff] %vm5115, %v5218
    %5277 = vst.msk [vmem:[%s5268 + $0xa1] sm:$0xff] %vm5115, %v5219
    %5278 = vst.msk [vmem:[%s5268 + $0xb1] sm:$0xff] %vm5115, %v5220
    %5279 = vst.msk [vmem:[%s5268 + $0xc1] sm:$0xff] %vm5115, %v5221
    %5280 = vst.msk [vmem:[%s5268 + $0xd1] sm:$0xff] %vm5115, %v5222
    %5281 = vst.msk [vmem:[%s5268 + $0xe1] sm:$0xff] %vm5115, %v5223
    %5282 = vst.msk [vmem:[%s5268 + $0xf1] sm:$0xff] %vm5115, %v5224
    %5283 = vst.msk [vmem:[%s5268 + $0x101] sm:$0xff] %vm5115, %v5225
    %5284 = vst.msk [vmem:[%s5268 + $0x111] sm:$0xff] %vm5115, %v5226
    %v5285 = vld [vmem:[#allocation3] sm:$0xff]
    %v5286 = vld [vmem:[#allocation3 + $0x10] sm:$0xff]
    %v5287 = vld [vmem:[#allocation3 + $0x20] sm:$0xff]
    %v5288 = vld [vmem:[#allocation3 + $0x30] sm:$0xff]
    %v5289 = vld [vmem:[#allocation3 + $0x40] sm:$0xff]
    %v5290 = vld [vmem:[#allocation3 + $0x50] sm:$0xff]
    %v5291 = vld [vmem:[#allocation3 + $0x60] sm:$0xff]
    %v5292 = vld [vmem:[#allocation3 + $0x70] sm:$0xff]
    %v5293 = vld [vmem:[#allocation3 + $0xa0] sm:$0xff]
    %v5294 = vld [vmem:[#allocation3 + $0xb0] sm:$0xff]
    %v5295 = vld [vmem:[#allocation3 + $0xc0] sm:$0xff]
    %v5296 = vld [vmem:[#allocation3 + $0xd0] sm:$0xff]
    %v5297 = vld [vmem:[#allocation3 + $0xe0] sm:$0xff]
    %v5298 = vld [vmem:[#allocation3 + $0xf0] sm:$0xff]
    %v5299 = vld [vmem:[#allocation3 + $0x100] sm:$0xff]
    %v5300 = vld [vmem:[#allocation3 + $0x110] sm:$0xff]
    %v5301 = vld [vmem:[%s3] sm:$0xff]
    %v5302 = vld [vmem:[#allocation3 + $0x1] sm:$0xff]
    %v5303 = vld [vmem:[#allocation3 + $0x11] sm:$0xff]
    %v5304 = vld [vmem:[#allocation3 + $0x21] sm:$0xff]
    %v5305 = vld [vmem:[#allocation3 + $0x31] sm:$0xff]
    %v5306 = vld [vmem:[#allocation3 + $0x41] sm:$0xff]
    %v5307 = vld [vmem:[#allocation3 + $0x51] sm:$0xff]
    %v5308 = vld [vmem:[#allocation3 + $0x61] sm:$0xff]
    %v5309 = vld [vmem:[#allocation3 + $0x71] sm:$0xff]
    %v5310 = vld [vmem:[#allocation3 + $0xa1] sm:$0xff]
    %v5311 = vld [vmem:[#allocation3 + $0xb1] sm:$0xff]
    %v5312 = vld [vmem:[#allocation3 + $0xc1] sm:$0xff]
    %v5313 = vld [vmem:[#allocation3 + $0xd1] sm:$0xff]
    %v5314 = vld [vmem:[#allocation3 + $0xe1] sm:$0xff]
    %v5315 = vld [vmem:[#allocation3 + $0xf1] sm:$0xff]
    %v5316 = vld [vmem:[#allocation3 + $0x101] sm:$0xff]
    %v5317 = vld [vmem:[#allocation3 + $0x111] sm:$0xff]
    %s5318 = scalar_lea.vmem %s3, 8
    %v5319 = vld [vmem:[%s5318] sm:$0xff]
    %v5321 = vsel %vm5115, %v5302, 0
    %v5324 = vsel %vm5115, %v5303, 0
    %v5327 = vsel %vm5115, %v5304, 0
    %v5330 = vsel %vm5115, %v5305, 0
    %v5333 = vsel %vm5115, %v5306, 0
    %v5336 = vsel %vm5115, %v5307, 0
    %v5339 = vsel %vm5115, %v5308, 0
    %v5342 = vsel %vm5115, %v5309, 0
    %v5345 = vsel %vm5115, %v5310, 0
    %v5348 = vsel %vm5115, %v5311, 0
    %v5351 = vsel %vm5115, %v5312, 0
    %v5354 = vsel %vm5115, %v5313, 0
    %v5357 = vsel %vm5115, %v5314, 0
    %v5360 = vsel %vm5115, %v5315, 0
    %v5363 = vsel %vm5115, %v5316, 0
    %v5366 = vsel %vm5115, %v5317, 0
    %5368 = vmatpush.msra.mxu0 0.0
    %5369 = vmatpush.msra.mxu0 0.0
    %5370 = vmatpush.msra.mxu0 0.0
    %5371 = vmatpush.msra.mxu0 0.0
    %5372 = vmatpush.msra.mxu0 0.0
    %5373 = vmatpush.msra.mxu0 0.0
    %5374 = vmatpush.msra.mxu0 0.0
    %5375 = vmatpush.msra.mxu0 0.0
    %5376 = vmatpush.msra.mxu0 0.0
    %5377 = vmatpush.msra.mxu0 0.0
    %5378 = vmatpush.msra.mxu0 0.0
    %5379 = vmatpush.msra.mxu0 0.0
    %5380 = vmatpush.msra.mxu0 0.0
    %5381 = vmatpush.msra.mxu0 0.0
    %5382 = vmatpush.msra.mxu0 0.0
    %5383 = vmatpush.msra.mxu0 %v5319
    %5384 = vmatmul.f32.gmra.mxu0 %v5321
    %v5385 = vpop.f32.mrf.mxu0
    %v5386 = vadd.f32 0.0, %v5385
    %5387 = vmatmul.f32.gmra.mxu0 %v5324
    %v5388 = vpop.f32.mrf.mxu0
    %v5389 = vadd.f32 0.0, %v5388
    %5390 = vmatmul.f32.gmra.mxu0 %v5327
    %v5391 = vpop.f32.mrf.mxu0
    %v5392 = vadd.f32 0.0, %v5391
    %5393 = vmatmul.f32.gmra.mxu0 %v5330
    %v5394 = vpop.f32.mrf.mxu0
    %v5395 = vadd.f32 0.0, %v5394
    %5396 = vmatmul.f32.gmra.mxu0 %v5333
    %v5397 = vpop.f32.mrf.mxu0
    %v5398 = vadd.f32 0.0, %v5397
    %5399 = vmatmul.f32.gmra.mxu0 %v5336
    %v5400 = vpop.f32.mrf.mxu0
    %v5401 = vadd.f32 0.0, %v5400
    %5402 = vmatmul.f32.gmra.mxu0 %v5339
    %v5403 = vpop.f32.mrf.mxu0
    %v5404 = vadd.f32 0.0, %v5403
    %5405 = vmatmul.f32.gmra.mxu0 %v5342
    %v5406 = vpop.f32.mrf.mxu0
    %v5407 = vadd.f32 0.0, %v5406
    %5408 = vmatmul.f32.gmra.mxu0 %v5345
    %v5409 = vpop.f32.mrf.mxu0
    %v5410 = vadd.f32 0.0, %v5409
    %5411 = vmatmul.f32.gmra.mxu0 %v5348
    %v5412 = vpop.f32.mrf.mxu0
    %v5413 = vadd.f32 0.0, %v5412
    %5414 = vmatmul.f32.gmra.mxu0 %v5351
    %v5415 = vpop.f32.mrf.mxu0
    %v5416 = vadd.f32 0.0, %v5415
    %5417 = vmatmul.f32.gmra.mxu0 %v5354
    %v5418 = vpop.f32.mrf.mxu0
    %v5419 = vadd.f32 0.0, %v5418
    %5420 = vmatmul.f32.gmra.mxu0 %v5357
    %v5421 = vpop.f32.mrf.mxu0
    %v5422 = vadd.f32 0.0, %v5421
    %5423 = vmatmul.f32.gmra.mxu0 %v5360
    %v5424 = vpop.f32.mrf.mxu0
    %v5425 = vadd.f32 0.0, %v5424
    %5426 = vmatmul.f32.gmra.mxu0 %v5363
    %v5427 = vpop.f32.mrf.mxu0
    %v5428 = vadd.f32 0.0, %v5427
    %5429 = vmatmul.f32.gmra.mxu0 %v5366
    %v5430 = vpop.f32.mrf.mxu0
    %v5431 = vadd.f32 0.0, %v5430
    %5432 = vdwg.mxu0
    %v5434 = vsel %vm5115, %v5285, 0
    %v5437 = vsel %vm5115, %v5286, 0
    %v5440 = vsel %vm5115, %v5287, 0
    %v5443 = vsel %vm5115, %v5288, 0
    %v5446 = vsel %vm5115, %v5289, 0
    %v5449 = vsel %vm5115, %v5290, 0
    %v5452 = vsel %vm5115, %v5291, 0
    %v5455 = vsel %vm5115, %v5292, 0
    %v5458 = vsel %vm5115, %v5293, 0
    %v5461 = vsel %vm5115, %v5294, 0
    %v5464 = vsel %vm5115, %v5295, 0
    %v5467 = vsel %vm5115, %v5296, 0
    %v5470 = vsel %vm5115, %v5297, 0
    %v5473 = vsel %vm5115, %v5298, 0
    %v5476 = vsel %vm5115, %v5299, 0
    %v5479 = vsel %vm5115, %v5300, 0
    %5481 = vmatpush.msra.mxu0 0.0
    %5482 = vmatpush.msra.mxu0 0.0
    %5483 = vmatpush.msra.mxu0 0.0
    %5484 = vmatpush.msra.mxu0 0.0
    %5485 = vmatpush.msra.mxu0 0.0
    %5486 = vmatpush.msra.mxu0 0.0
    %5487 = vmatpush.msra.mxu0 0.0
    %5488 = vmatpush.msra.mxu0 0.0
    %5489 = vmatpush.msra.mxu0 0.0
    %5490 = vmatpush.msra.mxu0 0.0
    %5491 = vmatpush.msra.mxu0 0.0
    %5492 = vmatpush.msra.mxu0 0.0
    %5493 = vmatpush.msra.mxu0 0.0
    %5494 = vmatpush.msra.mxu0 0.0
    %5495 = vmatpush.msra.mxu0 0.0
    %5496 = vmatpush.msra.mxu0 %v5301
    %5497 = vmatmul.f32.gmra.mxu0 %v5434
    %v5498 = vpop.f32.mrf.mxu0
    %v5499 = vadd.f32 %v5386, %v5498
    %5500 = vmatmul.f32.gmra.mxu0 %v5437
    %v5501 = vpop.f32.mrf.mxu0
    %v5502 = vadd.f32 %v5389, %v5501
    %5503 = vmatmul.f32.gmra.mxu0 %v5440
    %v5504 = vpop.f32.mrf.mxu0
    %v5505 = vadd.f32 %v5392, %v5504
    %5506 = vmatmul.f32.gmra.mxu0 %v5443
    %v5507 = vpop.f32.mrf.mxu0
    %v5508 = vadd.f32 %v5395, %v5507
    %5509 = vmatmul.f32.gmra.mxu0 %v5446
    %v5510 = vpop.f32.mrf.mxu0
    %v5511 = vadd.f32 %v5398, %v5510
    %5512 = vmatmul.f32.gmra.mxu0 %v5449
    %v5513 = vpop.f32.mrf.mxu0
    %v5514 = vadd.f32 %v5401, %v5513
    %5515 = vmatmul.f32.gmra.mxu0 %v5452
    %v5516 = vpop.f32.mrf.mxu0
    %v5517 = vadd.f32 %v5404, %v5516
    %5518 = vmatmul.f32.gmra.mxu0 %v5455
    %v5519 = vpop.f32.mrf.mxu0
    %v5520 = vadd.f32 %v5407, %v5519
    %5521 = vmatmul.f32.gmra.mxu0 %v5458
    %v5522 = vpop.f32.mrf.mxu0
    %v5523 = vadd.f32 %v5410, %v5522
    %5524 = vmatmul.f32.gmra.mxu0 %v5461
    %v5525 = vpop.f32.mrf.mxu0
    %v5526 = vadd.f32 %v5413, %v5525
    %5527 = vmatmul.f32.gmra.mxu0 %v5464
    %v5528 = vpop.f32.mrf.mxu0
    %v5529 = vadd.f32 %v5416, %v5528
    %5530 = vmatmul.f32.gmra.mxu0 %v5467
    %v5531 = vpop.f32.mrf.mxu0
    %v5532 = vadd.f32 %v5419, %v5531
    %5533 = vmatmul.f32.gmra.mxu0 %v5470
    %v5534 = vpop.f32.mrf.mxu0
    %v5535 = vadd.f32 %v5422, %v5534
    %5536 = vmatmul.f32.gmra.mxu0 %v5473
    %v5537 = vpop.f32.mrf.mxu0
    %v5538 = vadd.f32 %v5425, %v5537
    %5539 = vmatmul.f32.gmra.mxu0 %v5476
    %v5540 = vpop.f32.mrf.mxu0
    %v5541 = vadd.f32 %v5428, %v5540
    %5542 = vmatmul.f32.gmra.mxu0 %v5479
    %v5543 = vpop.f32.mrf.mxu0
    %v5544 = vadd.f32 %v5431, %v5543
    %5545 = vdwg.mxu0
    %v5546 = vld [vmem:[#allocation3 + $0x2] sm:$0xff]
    %v5547 = vld [vmem:[#allocation3 + $0x12] sm:$0xff]
    %v5548 = vld [vmem:[#allocation3 + $0x22] sm:$0xff]
    %v5549 = vld [vmem:[#allocation3 + $0x32] sm:$0xff]
    %v5550 = vld [vmem:[#allocation3 + $0x42] sm:$0xff]
    %v5551 = vld [vmem:[#allocation3 + $0x52] sm:$0xff]
    %v5552 = vld [vmem:[#allocation3 + $0x62] sm:$0xff]
    %v5553 = vld [vmem:[#allocation3 + $0x72] sm:$0xff]
    %v5554 = vld [vmem:[#allocation3 + $0xa2] sm:$0xff]
    %v5555 = vld [vmem:[#allocation3 + $0xb2] sm:$0xff]
    %v5556 = vld [vmem:[#allocation3 + $0xc2] sm:$0xff]
    %v5557 = vld [vmem:[#allocation3 + $0xd2] sm:$0xff]
    %v5558 = vld [vmem:[#allocation3 + $0xe2] sm:$0xff]
    %v5559 = vld [vmem:[#allocation3 + $0xf2] sm:$0xff]
    %v5560 = vld [vmem:[#allocation3 + $0x102] sm:$0xff]
    %v5561 = vld [vmem:[#allocation3 + $0x112] sm:$0xff]
    %s5562 = scalar_lea.vmem %s3, 16
    %v5563 = vld [vmem:[%s5562] sm:$0xff]
    %v5565 = vsel %vm5115, %v5546, 0
    %v5568 = vsel %vm5115, %v5547, 0
    %v5571 = vsel %vm5115, %v5548, 0
    %v5574 = vsel %vm5115, %v5549, 0
    %v5577 = vsel %vm5115, %v5550, 0
    %v5580 = vsel %vm5115, %v5551, 0
    %v5583 = vsel %vm5115, %v5552, 0
    %v5586 = vsel %vm5115, %v5553, 0
    %v5589 = vsel %vm5115, %v5554, 0
    %v5592 = vsel %vm5115, %v5555, 0
    %v5595 = vsel %vm5115, %v5556, 0
    %v5598 = vsel %vm5115, %v5557, 0
    %v5601 = vsel %vm5115, %v5558, 0
    %v5604 = vsel %vm5115, %v5559, 0
    %v5607 = vsel %vm5115, %v5560, 0
    %v5610 = vsel %vm5115, %v5561, 0
    %5612 = vmatpush.msra.mxu0 0.0
    %5613 = vmatpush.msra.mxu0 0.0
    %5614 = vmatpush.msra.mxu0 0.0
    %5615 = vmatpush.msra.mxu0 0.0
    %5616 = vmatpush.msra.mxu0 0.0
    %5617 = vmatpush.msra.mxu0 0.0
    %5618 = vmatpush.msra.mxu0 0.0
    %5619 = vmatpush.msra.mxu0 0.0
    %5620 = vmatpush.msra.mxu0 0.0
    %5621 = vmatpush.msra.mxu0 0.0
    %5622 = vmatpush.msra.mxu0 0.0
    %5623 = vmatpush.msra.mxu0 0.0
    %5624 = vmatpush.msra.mxu0 0.0
    %5625 = vmatpush.msra.mxu0 0.0
    %5626 = vmatpush.msra.mxu0 0.0
    %5627 = vmatpush.msra.mxu0 %v5563
    %5628 = vmatmul.f32.gmra.mxu0 %v5565
    %v5629 = vpop.f32.mrf.mxu0
    %v5630 = vadd.f32 0.0, %v5629
    %5631 = vmatmul.f32.gmra.mxu0 %v5568
    %v5632 = vpop.f32.mrf.mxu0
    %v5633 = vadd.f32 0.0, %v5632
    %5634 = vmatmul.f32.gmra.mxu0 %v5571
    %v5635 = vpop.f32.mrf.mxu0
    %v5636 = vadd.f32 0.0, %v5635
    %5637 = vmatmul.f32.gmra.mxu0 %v5574
    %v5638 = vpop.f32.mrf.mxu0
    %v5639 = vadd.f32 0.0, %v5638
    %5640 = vmatmul.f32.gmra.mxu0 %v5577
    %v5641 = vpop.f32.mrf.mxu0
    %v5642 = vadd.f32 0.0, %v5641
    %5643 = vmatmul.f32.gmra.mxu0 %v5580
    %v5644 = vpop.f32.mrf.mxu0
    %v5645 = vadd.f32 0.0, %v5644
    %5646 = vmatmul.f32.gmra.mxu0 %v5583
    %v5647 = vpop.f32.mrf.mxu0
    %v5648 = vadd.f32 0.0, %v5647
    %5649 = vmatmul.f32.gmra.mxu0 %v5586
    %v5650 = vpop.f32.mrf.mxu0
    %v5651 = vadd.f32 0.0, %v5650
    %5652 = vmatmul.f32.gmra.mxu0 %v5589
    %v5653 = vpop.f32.mrf.mxu0
    %v5654 = vadd.f32 0.0, %v5653
    %5655 = vmatmul.f32.gmra.mxu0 %v5592
    %v5656 = vpop.f32.mrf.mxu0
    %v5657 = vadd.f32 0.0, %v5656
    %5658 = vmatmul.f32.gmra.mxu0 %v5595
    %v5659 = vpop.f32.mrf.mxu0
    %v5660 = vadd.f32 0.0, %v5659
    %5661 = vmatmul.f32.gmra.mxu0 %v5598
    %v5662 = vpop.f32.mrf.mxu0
    %v5663 = vadd.f32 0.0, %v5662
    %5664 = vmatmul.f32.gmra.mxu0 %v5601
    %v5665 = vpop.f32.mrf.mxu0
    %v5666 = vadd.f32 0.0, %v5665
    %5667 = vmatmul.f32.gmra.mxu0 %v5604
    %v5668 = vpop.f32.mrf.mxu0
    %v5669 = vadd.f32 0.0, %v5668
    %5670 = vmatmul.f32.gmra.mxu0 %v5607
    %v5671 = vpop.f32.mrf.mxu0
    %v5672 = vadd.f32 0.0, %v5671
    %5673 = vmatmul.f32.gmra.mxu0 %v5610
    %v5674 = vpop.f32.mrf.mxu0
    %v5675 = vadd.f32 0.0, %v5674
    %5676 = vdwg.mxu0
    %v5677 = vadd.f32 %v5499, %v5630
    %v5678 = vadd.f32 %v5502, %v5633
    %v5679 = vadd.f32 %v5505, %v5636
    %v5680 = vadd.f32 %v5508, %v5639
    %v5681 = vadd.f32 %v5511, %v5642
    %v5682 = vadd.f32 %v5514, %v5645
    %v5683 = vadd.f32 %v5517, %v5648
    %v5684 = vadd.f32 %v5520, %v5651
    %v5685 = vadd.f32 %v5523, %v5654
    %v5686 = vadd.f32 %v5526, %v5657
    %v5687 = vadd.f32 %v5529, %v5660
    %v5688 = vadd.f32 %v5532, %v5663
    %v5689 = vadd.f32 %v5535, %v5666
    %v5690 = vadd.f32 %v5538, %v5669
    %v5691 = vadd.f32 %v5541, %v5672
    %v5692 = vadd.f32 %v5544, %v5675
    %v5693 = vld [vmem:[%s5268] sm:$0xff]
    %v5694 = vld [vmem:[%s5268 + $0x10] sm:$0xff]
    %v5695 = vld [vmem:[%s5268 + $0x20] sm:$0xff]
    %v5696 = vld [vmem:[%s5268 + $0x30] sm:$0xff]
    %v5697 = vld [vmem:[%s5268 + $0x40] sm:$0xff]
    %v5698 = vld [vmem:[%s5268 + $0x50] sm:$0xff]
    %v5699 = vld [vmem:[%s5268 + $0x60] sm:$0xff]
    %v5700 = vld [vmem:[%s5268 + $0x70] sm:$0xff]
    %v5701 = vld [vmem:[%s5268 + $0xa0] sm:$0xff]
    %v5702 = vld [vmem:[%s5268 + $0xb0] sm:$0xff]
    %v5703 = vld [vmem:[%s5268 + $0xc0] sm:$0xff]
    %v5704 = vld [vmem:[%s5268 + $0xd0] sm:$0xff]
    %v5705 = vld [vmem:[%s5268 + $0xe0] sm:$0xff]
    %v5706 = vld [vmem:[%s5268 + $0xf0] sm:$0xff]
    %v5707 = vld [vmem:[%s5268 + $0x100] sm:$0xff]
    %v5708 = vld [vmem:[%s5268 + $0x110] sm:$0xff]
    %s5709 = scalar_lea.vmem %s3, 24
    %v5710 = vld [vmem:[%s5709] sm:$0xff]
    %v5712 = vsel %vm5115, %v5693, 0
    %v5715 = vsel %vm5115, %v5694, 0
    %v5718 = vsel %vm5115, %v5695, 0
    %v5721 = vsel %vm5115, %v5696, 0
    %v5724 = vsel %vm5115, %v5697, 0
    %v5727 = vsel %vm5115, %v5698, 0
    %v5730 = vsel %vm5115, %v5699, 0
    %v5733 = vsel %vm5115, %v5700, 0
    %v5736 = vsel %vm5115, %v5701, 0
    %v5739 = vsel %vm5115, %v5702, 0
    %v5742 = vsel %vm5115, %v5703, 0
    %v5745 = vsel %vm5115, %v5704, 0
    %v5748 = vsel %vm5115, %v5705, 0
    %v5751 = vsel %vm5115, %v5706, 0
    %v5754 = vsel %vm5115, %v5707, 0
    %v5757 = vsel %vm5115, %v5708, 0
    %5759 = vmatpush.msra.mxu0 0.0
    %5760 = vmatpush.msra.mxu0 0.0
    %5761 = vmatpush.msra.mxu0 0.0
    %5762 = vmatpush.msra.mxu0 0.0
    %5763 = vmatpush.msra.mxu0 0.0
    %5764 = vmatpush.msra.mxu0 0.0
    %5765 = vmatpush.msra.mxu0 0.0
    %5766 = vmatpush.msra.mxu0 0.0
    %5767 = vmatpush.msra.mxu0 0.0
    %5768 = vmatpush.msra.mxu0 0.0
    %5769 = vmatpush.msra.mxu0 0.0
    %5770 = vmatpush.msra.mxu0 0.0
    %5771 = vmatpush.msra.mxu0 0.0
    %5772 = vmatpush.msra.mxu0 0.0
    %5773 = vmatpush.msra.mxu0 0.0
    %5774 = vmatpush.msra.mxu0 %v5710
    %5775 = vmatmul.f32.gmra.mxu0 %v5712
    %v5776 = vpop.f32.mrf.mxu0
    %v5777 = vadd.f32 0.0, %v5776
    %5778 = vmatmul.f32.gmra.mxu0 %v5715
    %v5779 = vpop.f32.mrf.mxu0
    %v5780 = vadd.f32 0.0, %v5779
    %5781 = vmatmul.f32.gmra.mxu0 %v5718
    %v5782 = vpop.f32.mrf.mxu0
    %v5783 = vadd.f32 0.0, %v5782
    %5784 = vmatmul.f32.gmra.mxu0 %v5721
    %v5785 = vpop.f32.mrf.mxu0
    %v5786 = vadd.f32 0.0, %v5785
    %5787 = vmatmul.f32.gmra.mxu0 %v5724
    %v5788 = vpop.f32.mrf.mxu0
    %v5789 = vadd.f32 0.0, %v5788
    %5790 = vmatmul.f32.gmra.mxu0 %v5727
    %v5791 = vpop.f32.mrf.mxu0
    %v5792 = vadd.f32 0.0, %v5791
    %5793 = vmatmul.f32.gmra.mxu0 %v5730
    %v5794 = vpop.f32.mrf.mxu0
    %v5795 = vadd.f32 0.0, %v5794
    %5796 = vmatmul.f32.gmra.mxu0 %v5733
    %v5797 = vpop.f32.mrf.mxu0
    %v5798 = vadd.f32 0.0, %v5797
    %5799 = vmatmul.f32.gmra.mxu0 %v5736
    %v5800 = vpop.f32.mrf.mxu0
    %v5801 = vadd.f32 0.0, %v5800
    %5802 = vmatmul.f32.gmra.mxu0 %v5739
    %v5803 = vpop.f32.mrf.mxu0
    %v5804 = vadd.f32 0.0, %v5803
    %5805 = vmatmul.f32.gmra.mxu0 %v5742
    %v5806 = vpop.f32.mrf.mxu0
    %v5807 = vadd.f32 0.0, %v5806
    %5808 = vmatmul.f32.gmra.mxu0 %v5745
    %v5809 = vpop.f32.mrf.mxu0
    %v5810 = vadd.f32 0.0, %v5809
    %5811 = vmatmul.f32.gmra.mxu0 %v5748
    %v5812 = vpop.f32.mrf.mxu0
    %v5813 = vadd.f32 0.0, %v5812
    %5814 = vmatmul.f32.gmra.mxu0 %v5751
    %v5815 = vpop.f32.mrf.mxu0
    %v5816 = vadd.f32 0.0, %v5815
    %5817 = vmatmul.f32.gmra.mxu0 %v5754
    %v5818 = vpop.f32.mrf.mxu0
    %v5819 = vadd.f32 0.0, %v5818
    %5820 = vmatmul.f32.gmra.mxu0 %v5757
    %v5821 = vpop.f32.mrf.mxu0
    %v5822 = vadd.f32 0.0, %v5821
    %5823 = vdwg.mxu0
    %v5824 = vadd.f32 %v5677, %v5777
    %v5825 = vadd.f32 %v5678, %v5780
    %v5826 = vadd.f32 %v5679, %v5783
    %v5827 = vadd.f32 %v5680, %v5786
    %v5828 = vadd.f32 %v5681, %v5789
    %v5829 = vadd.f32 %v5682, %v5792
    %v5830 = vadd.f32 %v5683, %v5795
    %v5831 = vadd.f32 %v5684, %v5798
    %v5832 = vadd.f32 %v5685, %v5801
    %v5833 = vadd.f32 %v5686, %v5804
    %v5834 = vadd.f32 %v5687, %v5807
    %v5835 = vadd.f32 %v5688, %v5810
    %v5836 = vadd.f32 %v5689, %v5813
    %v5837 = vadd.f32 %v5690, %v5816
    %v5838 = vadd.f32 %v5691, %v5819
    %v5839 = vadd.f32 %v5692, %v5822
    %v5840 = vld [vmem:[%s5268 + $0x1] sm:$0xff]
    %v5841 = vld [vmem:[%s5268 + $0x11] sm:$0xff]
    %v5842 = vld [vmem:[%s5268 + $0x21] sm:$0xff]
    %v5843 = vld [vmem:[%s5268 + $0x31] sm:$0xff]
    %v5844 = vld [vmem:[%s5268 + $0x41] sm:$0xff]
    %v5845 = vld [vmem:[%s5268 + $0x51] sm:$0xff]
    %v5846 = vld [vmem:[%s5268 + $0x61] sm:$0xff]
    %v5847 = vld [vmem:[%s5268 + $0x71] sm:$0xff]
    %v5848 = vld [vmem:[%s5268 + $0xa1] sm:$0xff]
    %v5849 = vld [vmem:[%s5268 + $0xb1] sm:$0xff]
    %v5850 = vld [vmem:[%s5268 + $0xc1] sm:$0xff]
    %v5851 = vld [vmem:[%s5268 + $0xd1] sm:$0xff]
    %v5852 = vld [vmem:[%s5268 + $0xe1] sm:$0xff]
    %v5853 = vld [vmem:[%s5268 + $0xf1] sm:$0xff]
    %v5854 = vld [vmem:[%s5268 + $0x101] sm:$0xff]
    %v5855 = vld [vmem:[%s5268 + $0x111] sm:$0xff]
    %s5856 = scalar_lea.vmem %s3, 32
    %v5857 = vld [vmem:[%s5856] sm:$0xff]
    %v5859 = vsel %vm5115, %v5840, 0
    %v5862 = vsel %vm5115, %v5841, 0
    %v5865 = vsel %vm5115, %v5842, 0
    %v5868 = vsel %vm5115, %v5843, 0
    %v5871 = vsel %vm5115, %v5844, 0
    %v5874 = vsel %vm5115, %v5845, 0
    %v5877 = vsel %vm5115, %v5846, 0
    %v5880 = vsel %vm5115, %v5847, 0
    %v5883 = vsel %vm5115, %v5848, 0
    %v5886 = vsel %vm5115, %v5849, 0
    %v5889 = vsel %vm5115, %v5850, 0
    %v5892 = vsel %vm5115, %v5851, 0
    %v5895 = vsel %vm5115, %v5852, 0
    %v5898 = vsel %vm5115, %v5853, 0
    %v5901 = vsel %vm5115, %v5854, 0
    %v5904 = vsel %vm5115, %v5855, 0
    %5906 = vmatpush.msra.mxu0 0.0
    %5907 = vmatpush.msra.mxu0 0.0
    %5908 = vmatpush.msra.mxu0 0.0
    %5909 = vmatpush.msra.mxu0 0.0
    %5910 = vmatpush.msra.mxu0 0.0
    %5911 = vmatpush.msra.mxu0 0.0
    %5912 = vmatpush.msra.mxu0 0.0
    %5913 = vmatpush.msra.mxu0 0.0
    %5914 = vmatpush.msra.mxu0 0.0
    %5915 = vmatpush.msra.mxu0 0.0
    %5916 = vmatpush.msra.mxu0 0.0
    %5917 = vmatpush.msra.mxu0 0.0
    %5918 = vmatpush.msra.mxu0 0.0
    %5919 = vmatpush.msra.mxu0 0.0
    %5920 = vmatpush.msra.mxu0 0.0
    %5921 = vmatpush.msra.mxu0 %v5857
    %5922 = vmatmul.f32.gmra.mxu0 %v5859
    %v5923 = vpop.f32.mrf.mxu0
    %v5924 = vadd.f32 0.0, %v5923
    %5925 = vmatmul.f32.gmra.mxu0 %v5862
    %v5926 = vpop.f32.mrf.mxu0
    %v5927 = vadd.f32 0.0, %v5926
    %5928 = vmatmul.f32.gmra.mxu0 %v5865
    %v5929 = vpop.f32.mrf.mxu0
    %v5930 = vadd.f32 0.0, %v5929
    %5931 = vmatmul.f32.gmra.mxu0 %v5868
    %v5932 = vpop.f32.mrf.mxu0
    %v5933 = vadd.f32 0.0, %v5932
    %5934 = vmatmul.f32.gmra.mxu0 %v5871
    %v5935 = vpop.f32.mrf.mxu0
    %v5936 = vadd.f32 0.0, %v5935
    %5937 = vmatmul.f32.gmra.mxu0 %v5874
    %v5938 = vpop.f32.mrf.mxu0
    %v5939 = vadd.f32 0.0, %v5938
    %5940 = vmatmul.f32.gmra.mxu0 %v5877
    %v5941 = vpop.f32.mrf.mxu0
    %v5942 = vadd.f32 0.0, %v5941
    %5943 = vmatmul.f32.gmra.mxu0 %v5880
    %v5944 = vpop.f32.mrf.mxu0
    %v5945 = vadd.f32 0.0, %v5944
    %5946 = vmatmul.f32.gmra.mxu0 %v5883
    %v5947 = vpop.f32.mrf.mxu0
    %v5948 = vadd.f32 0.0, %v5947
    %5949 = vmatmul.f32.gmra.mxu0 %v5886
    %v5950 = vpop.f32.mrf.mxu0
    %v5951 = vadd.f32 0.0, %v5950
    %5952 = vmatmul.f32.gmra.mxu0 %v5889
    %v5953 = vpop.f32.mrf.mxu0
    %v5954 = vadd.f32 0.0, %v5953
    %5955 = vmatmul.f32.gmra.mxu0 %v5892
    %v5956 = vpop.f32.mrf.mxu0
    %v5957 = vadd.f32 0.0, %v5956
    %5958 = vmatmul.f32.gmra.mxu0 %v5895
    %v5959 = vpop.f32.mrf.mxu0
    %v5960 = vadd.f32 0.0, %v5959
    %5961 = vmatmul.f32.gmra.mxu0 %v5898
    %v5962 = vpop.f32.mrf.mxu0
    %v5963 = vadd.f32 0.0, %v5962
    %5964 = vmatmul.f32.gmra.mxu0 %v5901
    %v5965 = vpop.f32.mrf.mxu0
    %v5966 = vadd.f32 0.0, %v5965
    %5967 = vmatmul.f32.gmra.mxu0 %v5904
    %v5968 = vpop.f32.mrf.mxu0
    %v5969 = vadd.f32 0.0, %v5968
    %5970 = vdwg.mxu0
    %v5971 = vadd.f32 %v5824, %v5924
    %v5972 = vadd.f32 %v5825, %v5927
    %v5973 = vadd.f32 %v5826, %v5930
    %v5974 = vadd.f32 %v5827, %v5933
    %v5975 = vadd.f32 %v5828, %v5936
    %v5976 = vadd.f32 %v5829, %v5939
    %v5977 = vadd.f32 %v5830, %v5942
    %v5978 = vadd.f32 %v5831, %v5945
    %v5979 = vadd.f32 %v5832, %v5948
    %v5980 = vadd.f32 %v5833, %v5951
    %v5981 = vadd.f32 %v5834, %v5954
    %v5982 = vadd.f32 %v5835, %v5957
    %v5983 = vadd.f32 %v5836, %v5960
    %v5984 = vadd.f32 %v5837, %v5963
    %v5985 = vadd.f32 %v5838, %v5966
    %v5986 = vadd.f32 %v5839, %v5969
    %v5987 = vld [vmem:[%s5268 + $0x2] sm:$0xff]
    %v5988 = vld [vmem:[%s5268 + $0x12] sm:$0xff]
    %v5989 = vld [vmem:[%s5268 + $0x22] sm:$0xff]
    %v5990 = vld [vmem:[%s5268 + $0x32] sm:$0xff]
    %v5991 = vld [vmem:[%s5268 + $0x42] sm:$0xff]
    %v5992 = vld [vmem:[%s5268 + $0x52] sm:$0xff]
    %v5993 = vld [vmem:[%s5268 + $0x62] sm:$0xff]
    %v5994 = vld [vmem:[%s5268 + $0x72] sm:$0xff]
    %v5995 = vld [vmem:[%s5268 + $0xa2] sm:$0xff]
    %v5996 = vld [vmem:[%s5268 + $0xb2] sm:$0xff]
    %v5997 = vld [vmem:[%s5268 + $0xc2] sm:$0xff]
    %v5998 = vld [vmem:[%s5268 + $0xd2] sm:$0xff]
    %v5999 = vld [vmem:[%s5268 + $0xe2] sm:$0xff]
    %v6000 = vld [vmem:[%s5268 + $0xf2] sm:$0xff]
    %v6001 = vld [vmem:[%s5268 + $0x102] sm:$0xff]
    %v6002 = vld [vmem:[%s5268 + $0x112] sm:$0xff]
    %s6003 = scalar_lea.vmem %s3, 40
    %v6004 = vld [vmem:[%s6003] sm:$0xff]
    %v6006 = vsel %vm5115, %v5987, 0
    %v6009 = vsel %vm5115, %v5988, 0
    %v6012 = vsel %vm5115, %v5989, 0
    %v6015 = vsel %vm5115, %v5990, 0
    %v6018 = vsel %vm5115, %v5991, 0
    %v6021 = vsel %vm5115, %v5992, 0
    %v6024 = vsel %vm5115, %v5993, 0
    %v6027 = vsel %vm5115, %v5994, 0
    %v6030 = vsel %vm5115, %v5995, 0
    %v6033 = vsel %vm5115, %v5996, 0
    %v6036 = vsel %vm5115, %v5997, 0
    %v6039 = vsel %vm5115, %v5998, 0
    %v6042 = vsel %vm5115, %v5999, 0
    %v6045 = vsel %vm5115, %v6000, 0
    %v6048 = vsel %vm5115, %v6001, 0
    %v6051 = vsel %vm5115, %v6002, 0
    %6053 = vmatpush.msra.mxu0 0.0
    %6054 = vmatpush.msra.mxu0 0.0
    %6055 = vmatpush.msra.mxu0 0.0
    %6056 = vmatpush.msra.mxu0 0.0
    %6057 = vmatpush.msra.mxu0 0.0
    %6058 = vmatpush.msra.mxu0 0.0
    %6059 = vmatpush.msra.mxu0 0.0
    %6060 = vmatpush.msra.mxu0 0.0
    %6061 = vmatpush.msra.mxu0 0.0
    %6062 = vmatpush.msra.mxu0 0.0
    %6063 = vmatpush.msra.mxu0 0.0
    %6064 = vmatpush.msra.mxu0 0.0
    %6065 = vmatpush.msra.mxu0 0.0
    %6066 = vmatpush.msra.mxu0 0.0
    %6067 = vmatpush.msra.mxu0 0.0
    %6068 = vmatpush.msra.mxu0 %v6004
    %6069 = vmatmul.f32.gmra.mxu0 %v6006
    %v6070 = vpop.f32.mrf.mxu0
    %v6071 = vadd.f32 0.0, %v6070
    %6072 = vmatmul.f32.gmra.mxu0 %v6009
    %v6073 = vpop.f32.mrf.mxu0
    %v6074 = vadd.f32 0.0, %v6073
    %6075 = vmatmul.f32.gmra.mxu0 %v6012
    %v6076 = vpop.f32.mrf.mxu0
    %v6077 = vadd.f32 0.0, %v6076
    %6078 = vmatmul.f32.gmra.mxu0 %v6015
    %v6079 = vpop.f32.mrf.mxu0
    %v6080 = vadd.f32 0.0, %v6079
    %6081 = vmatmul.f32.gmra.mxu0 %v6018
    %v6082 = vpop.f32.mrf.mxu0
    %v6083 = vadd.f32 0.0, %v6082
    %6084 = vmatmul.f32.gmra.mxu0 %v6021
    %v6085 = vpop.f32.mrf.mxu0
    %v6086 = vadd.f32 0.0, %v6085
    %6087 = vmatmul.f32.gmra.mxu0 %v6024
    %v6088 = vpop.f32.mrf.mxu0
    %v6089 = vadd.f32 0.0, %v6088
    %6090 = vmatmul.f32.gmra.mxu0 %v6027
    %v6091 = vpop.f32.mrf.mxu0
    %v6092 = vadd.f32 0.0, %v6091
    %6093 = vmatmul.f32.gmra.mxu0 %v6030
    %v6094 = vpop.f32.mrf.mxu0
    %v6095 = vadd.f32 0.0, %v6094
    %6096 = vmatmul.f32.gmra.mxu0 %v6033
    %v6097 = vpop.f32.mrf.mxu0
    %v6098 = vadd.f32 0.0, %v6097
    %6099 = vmatmul.f32.gmra.mxu0 %v6036
    %v6100 = vpop.f32.mrf.mxu0
    %v6101 = vadd.f32 0.0, %v6100
    %6102 = vmatmul.f32.gmra.mxu0 %v6039
    %v6103 = vpop.f32.mrf.mxu0
    %v6104 = vadd.f32 0.0, %v6103
    %6105 = vmatmul.f32.gmra.mxu0 %v6042
    %v6106 = vpop.f32.mrf.mxu0
    %v6107 = vadd.f32 0.0, %v6106
    %6108 = vmatmul.f32.gmra.mxu0 %v6045
    %v6109 = vpop.f32.mrf.mxu0
    %v6110 = vadd.f32 0.0, %v6109
    %6111 = vmatmul.f32.gmra.mxu0 %v6048
    %v6112 = vpop.f32.mrf.mxu0
    %v6113 = vadd.f32 0.0, %v6112
    %6114 = vmatmul.f32.gmra.mxu0 %v6051
    %v6115 = vpop.f32.mrf.mxu0
    %v6116 = vadd.f32 0.0, %v6115
    %6117 = vdwg.mxu0
    %v6118 = vadd.f32 %v5971, %v6071
    %v6119 = vadd.f32 %v5972, %v6074
    %v6120 = vadd.f32 %v5973, %v6077
    %v6121 = vadd.f32 %v5974, %v6080
    %v6122 = vadd.f32 %v5975, %v6083
    %v6123 = vadd.f32 %v5976, %v6086
    %v6124 = vadd.f32 %v5977, %v6089
    %v6125 = vadd.f32 %v5978, %v6092
    %v6126 = vadd.f32 %v5979, %v6095
    %v6127 = vadd.f32 %v5980, %v6098
    %v6128 = vadd.f32 %v5981, %v6101
    %v6129 = vadd.f32 %v5982, %v6104
    %v6130 = vadd.f32 %v5983, %v6107
    %v6131 = vadd.f32 %v5984, %v6110
    %v6132 = vadd.f32 %v5985, %v6113
    %v6133 = vadd.f32 %v5986, %v6116
    %s6134 = scalar_lea.vmem [#allocation3], 32
    %v6135 = vld [vmem:[%s6134] sm:$0xff]
    %v6136 = vld [vmem:[%s6134 + $0x10] sm:$0xff]
    %v6137 = vld [vmem:[%s6134 + $0x20] sm:$0xff]
    %v6138 = vld [vmem:[%s6134 + $0x30] sm:$0xff]
    %v6139 = vld [vmem:[%s6134 + $0x40] sm:$0xff]
    %v6140 = vld [vmem:[%s6134 + $0x50] sm:$0xff]
    %v6141 = vld [vmem:[%s6134 + $0x60] sm:$0xff]
    %v6142 = vld [vmem:[%s6134 + $0x70] sm:$0xff]
    %v6143 = vld [vmem:[%s6134 + $0xa0] sm:$0xff]
    %v6144 = vld [vmem:[%s6134 + $0xb0] sm:$0xff]
    %v6145 = vld [vmem:[%s6134 + $0xc0] sm:$0xff]
    %v6146 = vld [vmem:[%s6134 + $0xd0] sm:$0xff]
    %v6147 = vld [vmem:[%s6134 + $0xe0] sm:$0xff]
    %v6148 = vld [vmem:[%s6134 + $0xf0] sm:$0xff]
    %v6149 = vld [vmem:[%s6134 + $0x100] sm:$0xff]
    %v6150 = vld [vmem:[%s6134 + $0x110] sm:$0xff]
    %s6151 = scalar_lea.vmem %s3, 48
    %v6152 = vld [vmem:[%s6151] sm:$0xff]
    %v6154 = vsel %vm5115, %v6135, 0
    %v6157 = vsel %vm5115, %v6136, 0
    %v6160 = vsel %vm5115, %v6137, 0
    %v6163 = vsel %vm5115, %v6138, 0
    %v6166 = vsel %vm5115, %v6139, 0
    %v6169 = vsel %vm5115, %v6140, 0
    %v6172 = vsel %vm5115, %v6141, 0
    %v6175 = vsel %vm5115, %v6142, 0
    %v6178 = vsel %vm5115, %v6143, 0
    %v6181 = vsel %vm5115, %v6144, 0
    %v6184 = vsel %vm5115, %v6145, 0
    %v6187 = vsel %vm5115, %v6146, 0
    %v6190 = vsel %vm5115, %v6147, 0
    %v6193 = vsel %vm5115, %v6148, 0
    %v6196 = vsel %vm5115, %v6149, 0
    %v6199 = vsel %vm5115, %v6150, 0
    %6201 = vmatpush.msra.mxu0 0.0
    %6202 = vmatpush.msra.mxu0 0.0
    %6203 = vmatpush.msra.mxu0 0.0
    %6204 = vmatpush.msra.mxu0 0.0
    %6205 = vmatpush.msra.mxu0 0.0
    %6206 = vmatpush.msra.mxu0 0.0
    %6207 = vmatpush.msra.mxu0 0.0
    %6208 = vmatpush.msra.mxu0 0.0
    %6209 = vmatpush.msra.mxu0 0.0
    %6210 = vmatpush.msra.mxu0 0.0
    %6211 = vmatpush.msra.mxu0 0.0
    %6212 = vmatpush.msra.mxu0 0.0
    %6213 = vmatpush.msra.mxu0 0.0
    %6214 = vmatpush.msra.mxu0 0.0
    %6215 = vmatpush.msra.mxu0 0.0
    %6216 = vmatpush.msra.mxu0 %v6152
    %6217 = vmatmul.f32.gmra.mxu0 %v6154
    %v6218 = vpop.f32.mrf.mxu0
    %v6219 = vadd.f32 0.0, %v6218
    %6220 = vmatmul.f32.gmra.mxu0 %v6157
    %v6221 = vpop.f32.mrf.mxu0
    %v6222 = vadd.f32 0.0, %v6221
    %6223 = vmatmul.f32.gmra.mxu0 %v6160
    %v6224 = vpop.f32.mrf.mxu0
    %v6225 = vadd.f32 0.0, %v6224
    %6226 = vmatmul.f32.gmra.mxu0 %v6163
    %v6227 = vpop.f32.mrf.mxu0
    %v6228 = vadd.f32 0.0, %v6227
    %6229 = vmatmul.f32.gmra.mxu0 %v6166
    %v6230 = vpop.f32.mrf.mxu0
    %v6231 = vadd.f32 0.0, %v6230
    %6232 = vmatmul.f32.gmra.mxu0 %v6169
    %v6233 = vpop.f32.mrf.mxu0
    %v6234 = vadd.f32 0.0, %v6233
    %6235 = vmatmul.f32.gmra.mxu0 %v6172
    %v6236 = vpop.f32.mrf.mxu0
    %v6237 = vadd.f32 0.0, %v6236
    %6238 = vmatmul.f32.gmra.mxu0 %v6175
    %v6239 = vpop.f32.mrf.mxu0
    %v6240 = vadd.f32 0.0, %v6239
    %6241 = vmatmul.f32.gmra.mxu0 %v6178
    %v6242 = vpop.f32.mrf.mxu0
    %v6243 = vadd.f32 0.0, %v6242
    %6244 = vmatmul.f32.gmra.mxu0 %v6181
    %v6245 = vpop.f32.mrf.mxu0
    %v6246 = vadd.f32 0.0, %v6245
    %6247 = vmatmul.f32.gmra.mxu0 %v6184
    %v6248 = vpop.f32.mrf.mxu0
    %v6249 = vadd.f32 0.0, %v6248
    %6250 = vmatmul.f32.gmra.mxu0 %v6187
    %v6251 = vpop.f32.mrf.mxu0
    %v6252 = vadd.f32 0.0, %v6251
    %6253 = vmatmul.f32.gmra.mxu0 %v6190
    %v6254 = vpop.f32.mrf.mxu0
    %v6255 = vadd.f32 0.0, %v6254
    %6256 = vmatmul.f32.gmra.mxu0 %v6193
    %v6257 = vpop.f32.mrf.mxu0
    %v6258 = vadd.f32 0.0, %v6257
    %6259 = vmatmul.f32.gmra.mxu0 %v6196
    %v6260 = vpop.f32.mrf.mxu0
    %v6261 = vadd.f32 0.0, %v6260
    %6262 = vmatmul.f32.gmra.mxu0 %v6199
    %v6263 = vpop.f32.mrf.mxu0
    %v6264 = vadd.f32 0.0, %v6263
    %6265 = vdwg.mxu0
    %v6266 = vadd.f32 %v6118, %v6219
    %v6267 = vadd.f32 %v6119, %v6222
    %v6268 = vadd.f32 %v6120, %v6225
    %v6269 = vadd.f32 %v6121, %v6228
    %v6270 = vadd.f32 %v6122, %v6231
    %v6271 = vadd.f32 %v6123, %v6234
    %v6272 = vadd.f32 %v6124, %v6237
    %v6273 = vadd.f32 %v6125, %v6240
    %v6274 = vadd.f32 %v6126, %v6243
    %v6275 = vadd.f32 %v6127, %v6246
    %v6276 = vadd.f32 %v6128, %v6249
    %v6277 = vadd.f32 %v6129, %v6252
    %v6278 = vadd.f32 %v6130, %v6255
    %v6279 = vadd.f32 %v6131, %v6258
    %v6280 = vadd.f32 %v6132, %v6261
    %v6281 = vadd.f32 %v6133, %v6264
    %v6282 = vld [vmem:[%s6134 + $0x1] sm:$0xff]
    %v6283 = vld [vmem:[%s6134 + $0x11] sm:$0xff]
    %v6284 = vld [vmem:[%s6134 + $0x21] sm:$0xff]
    %v6285 = vld [vmem:[%s6134 + $0x31] sm:$0xff]
    %v6286 = vld [vmem:[%s6134 + $0x41] sm:$0xff]
    %v6287 = vld [vmem:[%s6134 + $0x51] sm:$0xff]
    %v6288 = vld [vmem:[%s6134 + $0x61] sm:$0xff]
    %v6289 = vld [vmem:[%s6134 + $0x71] sm:$0xff]
    %v6290 = vld [vmem:[%s6134 + $0xa1] sm:$0xff]
    %v6291 = vld [vmem:[%s6134 + $0xb1] sm:$0xff]
    %v6292 = vld [vmem:[%s6134 + $0xc1] sm:$0xff]
    %v6293 = vld [vmem:[%s6134 + $0xd1] sm:$0xff]
    %v6294 = vld [vmem:[%s6134 + $0xe1] sm:$0xff]
    %v6295 = vld [vmem:[%s6134 + $0xf1] sm:$0xff]
    %v6296 = vld [vmem:[%s6134 + $0x101] sm:$0xff]
    %v6297 = vld [vmem:[%s6134 + $0x111] sm:$0xff]
    %s6298 = scalar_lea.vmem %s3, 56
    %v6299 = vld [vmem:[%s6298] sm:$0xff]
    %v6301 = vsel %vm5115, %v6282, 0
    %v6304 = vsel %vm5115, %v6283, 0
    %v6307 = vsel %vm5115, %v6284, 0
    %v6310 = vsel %vm5115, %v6285, 0
    %v6313 = vsel %vm5115, %v6286, 0
    %v6316 = vsel %vm5115, %v6287, 0
    %v6319 = vsel %vm5115, %v6288, 0
    %v6322 = vsel %vm5115, %v6289, 0
    %v6325 = vsel %vm5115, %v6290, 0
    %v6328 = vsel %vm5115, %v6291, 0
    %v6331 = vsel %vm5115, %v6292, 0
    %v6334 = vsel %vm5115, %v6293, 0
    %v6337 = vsel %vm5115, %v6294, 0
    %v6340 = vsel %vm5115, %v6295, 0
    %v6343 = vsel %vm5115, %v6296, 0
    %v6346 = vsel %vm5115, %v6297, 0
    %6348 = vmatpush.msra.mxu0 0.0
    %6349 = vmatpush.msra.mxu0 0.0
    %6350 = vmatpush.msra.mxu0 0.0
    %6351 = vmatpush.msra.mxu0 0.0
    %6352 = vmatpush.msra.mxu0 0.0
    %6353 = vmatpush.msra.mxu0 0.0
    %6354 = vmatpush.msra.mxu0 0.0
    %6355 = vmatpush.msra.mxu0 0.0
    %6356 = vmatpush.msra.mxu0 0.0
    %6357 = vmatpush.msra.mxu0 0.0
    %6358 = vmatpush.msra.mxu0 0.0
    %6359 = vmatpush.msra.mxu0 0.0
    %6360 = vmatpush.msra.mxu0 0.0
    %6361 = vmatpush.msra.mxu0 0.0
    %6362 = vmatpush.msra.mxu0 0.0
    %6363 = vmatpush.msra.mxu0 %v6299
    %6364 = vmatmul.f32.gmra.mxu0 %v6301
    %v6365 = vpop.f32.mrf.mxu0
    %v6366 = vadd.f32 0.0, %v6365
    %6367 = vmatmul.f32.gmra.mxu0 %v6304
    %v6368 = vpop.f32.mrf.mxu0
    %v6369 = vadd.f32 0.0, %v6368
    %6370 = vmatmul.f32.gmra.mxu0 %v6307
    %v6371 = vpop.f32.mrf.mxu0
    %v6372 = vadd.f32 0.0, %v6371
    %6373 = vmatmul.f32.gmra.mxu0 %v6310
    %v6374 = vpop.f32.mrf.mxu0
    %v6375 = vadd.f32 0.0, %v6374
    %6376 = vmatmul.f32.gmra.mxu0 %v6313
    %v6377 = vpop.f32.mrf.mxu0
    %v6378 = vadd.f32 0.0, %v6377
    %6379 = vmatmul.f32.gmra.mxu0 %v6316
    %v6380 = vpop.f32.mrf.mxu0
    %v6381 = vadd.f32 0.0, %v6380
    %6382 = vmatmul.f32.gmra.mxu0 %v6319
    %v6383 = vpop.f32.mrf.mxu0
    %v6384 = vadd.f32 0.0, %v6383
    %6385 = vmatmul.f32.gmra.mxu0 %v6322
    %v6386 = vpop.f32.mrf.mxu0
    %v6387 = vadd.f32 0.0, %v6386
    %6388 = vmatmul.f32.gmra.mxu0 %v6325
    %v6389 = vpop.f32.mrf.mxu0
    %v6390 = vadd.f32 0.0, %v6389
    %6391 = vmatmul.f32.gmra.mxu0 %v6328
    %v6392 = vpop.f32.mrf.mxu0
    %v6393 = vadd.f32 0.0, %v6392
    %6394 = vmatmul.f32.gmra.mxu0 %v6331
    %v6395 = vpop.f32.mrf.mxu0
    %v6396 = vadd.f32 0.0, %v6395
    %6397 = vmatmul.f32.gmra.mxu0 %v6334
    %v6398 = vpop.f32.mrf.mxu0
    %v6399 = vadd.f32 0.0, %v6398
    %6400 = vmatmul.f32.gmra.mxu0 %v6337
    %v6401 = vpop.f32.mrf.mxu0
    %v6402 = vadd.f32 0.0, %v6401
    %6403 = vmatmul.f32.gmra.mxu0 %v6340
    %v6404 = vpop.f32.mrf.mxu0
    %v6405 = vadd.f32 0.0, %v6404
    %6406 = vmatmul.f32.gmra.mxu0 %v6343
    %v6407 = vpop.f32.mrf.mxu0
    %v6408 = vadd.f32 0.0, %v6407
    %6409 = vmatmul.f32.gmra.mxu0 %v6346
    %v6410 = vpop.f32.mrf.mxu0
    %v6411 = vadd.f32 0.0, %v6410
    %6412 = vdwg.mxu0
    %v6413 = vadd.f32 %v6266, %v6366
    %v6414 = vadd.f32 %v6267, %v6369
    %v6415 = vadd.f32 %v6268, %v6372
    %v6416 = vadd.f32 %v6269, %v6375
    %v6417 = vadd.f32 %v6270, %v6378
    %v6418 = vadd.f32 %v6271, %v6381
    %v6419 = vadd.f32 %v6272, %v6384
    %v6420 = vadd.f32 %v6273, %v6387
    %v6421 = vadd.f32 %v6274, %v6390
    %v6422 = vadd.f32 %v6275, %v6393
    %v6423 = vadd.f32 %v6276, %v6396
    %v6424 = vadd.f32 %v6277, %v6399
    %v6425 = vadd.f32 %v6278, %v6402
    %v6426 = vadd.f32 %v6279, %v6405
    %v6427 = vadd.f32 %v6280, %v6408
    %v6428 = vadd.f32 %v6281, %v6411
    %v6429 = vld [vmem:[%s6134 + $0x2] sm:$0xff]
    %v6430 = vld [vmem:[%s6134 + $0x12] sm:$0xff]
    %v6431 = vld [vmem:[%s6134 + $0x22] sm:$0xff]
    %v6432 = vld [vmem:[%s6134 + $0x32] sm:$0xff]
    %v6433 = vld [vmem:[%s6134 + $0x42] sm:$0xff]
    %v6434 = vld [vmem:[%s6134 + $0x52] sm:$0xff]
    %v6435 = vld [vmem:[%s6134 + $0x62] sm:$0xff]
    %v6436 = vld [vmem:[%s6134 + $0x72] sm:$0xff]
    %v6437 = vld [vmem:[%s6134 + $0xa2] sm:$0xff]
    %v6438 = vld [vmem:[%s6134 + $0xb2] sm:$0xff]
    %v6439 = vld [vmem:[%s6134 + $0xc2] sm:$0xff]
    %v6440 = vld [vmem:[%s6134 + $0xd2] sm:$0xff]
    %v6441 = vld [vmem:[%s6134 + $0xe2] sm:$0xff]
    %v6442 = vld [vmem:[%s6134 + $0xf2] sm:$0xff]
    %v6443 = vld [vmem:[%s6134 + $0x102] sm:$0xff]
    %v6444 = vld [vmem:[%s6134 + $0x112] sm:$0xff]
    %s6445 = scalar_lea.vmem %s3, 64
    %v6446 = vld [vmem:[%s6445] sm:$0xff]
    %v6448 = vsel %vm5115, %v6429, 0
    %v6451 = vsel %vm5115, %v6430, 0
    %v6454 = vsel %vm5115, %v6431, 0
    %v6457 = vsel %vm5115, %v6432, 0
    %v6460 = vsel %vm5115, %v6433, 0
    %v6463 = vsel %vm5115, %v6434, 0
    %v6466 = vsel %vm5115, %v6435, 0
    %v6469 = vsel %vm5115, %v6436, 0
    %v6472 = vsel %vm5115, %v6437, 0
    %v6475 = vsel %vm5115, %v6438, 0
    %v6478 = vsel %vm5115, %v6439, 0
    %v6481 = vsel %vm5115, %v6440, 0
    %v6484 = vsel %vm5115, %v6441, 0
    %v6487 = vsel %vm5115, %v6442, 0
    %v6490 = vsel %vm5115, %v6443, 0
    %v6493 = vsel %vm5115, %v6444, 0
    %6495 = vmatpush.msra.mxu0 0.0
    %6496 = vmatpush.msra.mxu0 0.0
    %6497 = vmatpush.msra.mxu0 0.0
    %6498 = vmatpush.msra.mxu0 0.0
    %6499 = vmatpush.msra.mxu0 0.0
    %6500 = vmatpush.msra.mxu0 0.0
    %6501 = vmatpush.msra.mxu0 0.0
    %6502 = vmatpush.msra.mxu0 0.0
    %6503 = vmatpush.msra.mxu0 0.0
    %6504 = vmatpush.msra.mxu0 0.0
    %6505 = vmatpush.msra.mxu0 0.0
    %6506 = vmatpush.msra.mxu0 0.0
    %6507 = vmatpush.msra.mxu0 0.0
    %6508 = vmatpush.msra.mxu0 0.0
    %6509 = vmatpush.msra.mxu0 0.0
    %6510 = vmatpush.msra.mxu0 %v6446
    %6511 = vmatmul.f32.gmra.mxu0 %v6448
    %v6512 = vpop.f32.mrf.mxu0
    %v6513 = vadd.f32 0.0, %v6512
    %6514 = vmatmul.f32.gmra.mxu0 %v6451
    %v6515 = vpop.f32.mrf.mxu0
    %v6516 = vadd.f32 0.0, %v6515
    %6517 = vmatmul.f32.gmra.mxu0 %v6454
    %v6518 = vpop.f32.mrf.mxu0
    %v6519 = vadd.f32 0.0, %v6518
    %6520 = vmatmul.f32.gmra.mxu0 %v6457
    %v6521 = vpop.f32.mrf.mxu0
    %v6522 = vadd.f32 0.0, %v6521
    %6523 = vmatmul.f32.gmra.mxu0 %v6460
    %v6524 = vpop.f32.mrf.mxu0
    %v6525 = vadd.f32 0.0, %v6524
    %6526 = vmatmul.f32.gmra.mxu0 %v6463
    %v6527 = vpop.f32.mrf.mxu0
    %v6528 = vadd.f32 0.0, %v6527
    %6529 = vmatmul.f32.gmra.mxu0 %v6466
    %v6530 = vpop.f32.mrf.mxu0
    %v6531 = vadd.f32 0.0, %v6530
    %6532 = vmatmul.f32.gmra.mxu0 %v6469
    %v6533 = vpop.f32.mrf.mxu0
    %v6534 = vadd.f32 0.0, %v6533
    %6535 = vmatmul.f32.gmra.mxu0 %v6472
    %v6536 = vpop.f32.mrf.mxu0
    %v6537 = vadd.f32 0.0, %v6536
    %6538 = vmatmul.f32.gmra.mxu0 %v6475
    %v6539 = vpop.f32.mrf.mxu0
    %v6540 = vadd.f32 0.0, %v6539
    %6541 = vmatmul.f32.gmra.mxu0 %v6478
    %v6542 = vpop.f32.mrf.mxu0
    %v6543 = vadd.f32 0.0, %v6542
    %6544 = vmatmul.f32.gmra.mxu0 %v6481
    %v6545 = vpop.f32.mrf.mxu0
    %v6546 = vadd.f32 0.0, %v6545
    %6547 = vmatmul.f32.gmra.mxu0 %v6484
    %v6548 = vpop.f32.mrf.mxu0
    %v6549 = vadd.f32 0.0, %v6548
    %6550 = vmatmul.f32.gmra.mxu0 %v6487
    %v6551 = vpop.f32.mrf.mxu0
    %v6552 = vadd.f32 0.0, %v6551
    %6553 = vmatmul.f32.gmra.mxu0 %v6490
    %v6554 = vpop.f32.mrf.mxu0
    %v6555 = vadd.f32 0.0, %v6554
    %6556 = vmatmul.f32.gmra.mxu0 %v6493
    %v6557 = vpop.f32.mrf.mxu0
    %v6558 = vadd.f32 0.0, %v6557
    %6559 = vdwg.mxu0
    %v6560 = vadd.f32 %v6413, %v6513
    %v6561 = vadd.f32 %v6414, %v6516
    %v6562 = vadd.f32 %v6415, %v6519
    %v6563 = vadd.f32 %v6416, %v6522
    %v6564 = vadd.f32 %v6417, %v6525
    %v6565 = vadd.f32 %v6418, %v6528
    %v6566 = vadd.f32 %v6419, %v6531
    %v6567 = vadd.f32 %v6420, %v6534
    %v6568 = vadd.f32 %v6421, %v6537
    %v6569 = vadd.f32 %v6422, %v6540
    %v6570 = vadd.f32 %v6423, %v6543
    %v6571 = vadd.f32 %v6424, %v6546
    %v6572 = vadd.f32 %v6425, %v6549
    %v6573 = vadd.f32 %v6426, %v6552
    %v6574 = vadd.f32 %v6427, %v6555
    %v6575 = vadd.f32 %v6428, %v6558
    %v6576 = vld [vmem:[%s4] sm:$0x1]
    %v6578 = vperm.slane %v6576, 0
    %v6580 = vadd.f32 %v6560, %v6578
    %v6581 = vadd.f32 %v6561, %v6578
    %v6582 = vadd.f32 %v6562, %v6578
    %v6583 = vadd.f32 %v6563, %v6578
    %v6584 = vadd.f32 %v6564, %v6578
    %v6585 = vadd.f32 %v6565, %v6578
    %v6586 = vadd.f32 %v6566, %v6578
    %v6587 = vadd.f32 %v6567, %v6578
    %v6588 = vadd.f32 %v6568, %v6578
    %v6589 = vadd.f32 %v6569, %v6578
    %v6590 = vadd.f32 %v6570, %v6578
    %v6591 = vadd.f32 %v6571, %v6578
    %v6592 = vadd.f32 %v6572, %v6578
    %v6593 = vadd.f32 %v6573, %v6578
    %v6594 = vadd.f32 %v6574, %v6578
    %v6595 = vadd.f32 %v6575, %v6578
    %v6596 = vmax.f32 %v6580, 0.0
    %v6597 = vmax.f32 %v6581, 0.0
    %v6598 = vmax.f32 %v6582, 0.0
    %v6599 = vmax.f32 %v6583, 0.0
    %v6600 = vmax.f32 %v6584, 0.0
    %v6601 = vmax.f32 %v6585, 0.0
    %v6602 = vmax.f32 %v6586, 0.0
    %v6603 = vmax.f32 %v6587, 0.0
    %v6604 = vmax.f32 %v6588, 0.0
    %v6605 = vmax.f32 %v6589, 0.0
    %v6606 = vmax.f32 %v6590, 0.0
    %v6607 = vmax.f32 %v6591, 0.0
    %v6608 = vmax.f32 %v6592, 0.0
    %v6609 = vmax.f32 %v6593, 0.0
    %v6610 = vmax.f32 %v6594, 0.0
    %v6611 = vmax.f32 %v6595, 0.0
    %v6612 = vmax.f32 %v6596, %v6597
    %v6613 = vmax.f32 %v6598, %v6599
    %v6614 = vmax.f32 %v6600, %v6601
    %v6615 = vmax.f32 %v6602, %v6603
    %v6616 = vmax.f32 %v6604, %v6605
    %v6617 = vmax.f32 %v6606, %v6607
    %v6618 = vmax.f32 %v6608, %v6609
    %v6619 = vmax.f32 %v6610, %v6611
    %vm6620 = vcmask 130048
    %6621 = vst.msk [vmem:[#allocation5] sm:$0xff] %vm6620, %v6612
    %6622 = vst.msk [vmem:[#allocation5 + $0x8] sm:$0xff] %vm6620, %v6613
    %6623 = vst.msk [vmem:[#allocation5 + $0x10] sm:$0xff] %vm6620, %v6614
    %6624 = vst.msk [vmem:[#allocation5 + $0x18] sm:$0xff] %vm6620, %v6615
    %6625 = vst.msk [vmem:[#allocation5 + $0x20] sm:$0xff] %vm6620, %v6616
    %6626 = vst.msk [vmem:[#allocation5 + $0x28] sm:$0xff] %vm6620, %v6617
    %6627 = vst.msk [vmem:[#allocation5 + $0x30] sm:$0xff] %vm6620, %v6618
    %6628 = vst.msk [vmem:[#allocation5 + $0x38] sm:$0xff] %vm6620, %v6619
    %v6629 = vld [vmem:[#allocation5] ss:$2 sm:$0xff]
    %s6630 = scalar_lea.vmem [#allocation5], 16
    %v6631 = vld [vmem:[%s6630] ss:$2 sm:$0xff]
    %s6632 = scalar_lea.vmem [#allocation5], 32
    %v6633 = vld [vmem:[%s6632] ss:$2 sm:$0xff]
    %s6634 = scalar_lea.vmem [#allocation5], 48
    %v6635 = vld [vmem:[%s6634] ss:$2 sm:$0xff]
    %s6636 = scalar_lea.vmem [#allocation5], 1
    %v6637 = vld [vmem:[%s6636] ss:$2 sm:$0xff]
    %s6638 = scalar_lea.vmem [#allocation5], 17
    %v6639 = vld [vmem:[%s6638] ss:$2 sm:$0xff]
    %s6640 = scalar_lea.vmem [#allocation5], 33
    %v6641 = vld [vmem:[%s6640] ss:$2 sm:$0xff]
    %s6642 = scalar_lea.vmem [#allocation5], 49
    %v6643 = vld [vmem:[%s6642] ss:$2 sm:$0xff]
    %v6644 = vmax.f32 %v6629, %v6637
    %v6645 = vmax.f32 %v6631, %v6639
    %v6646 = vmax.f32 %v6633, %v6641
    %v6647 = vmax.f32 %v6635, %v6643
    %6648 = vst.msk [vmem:[#allocation6] sm:$0xff] %vm6620, %v6644
    %6649 = vst.msk [vmem:[#allocation6 + $0x8] sm:$0xff] %vm6620, %v6645
    %6650 = vst.msk [vmem:[#allocation6 + $0x10] sm:$0xff] %vm6620, %v6646
    %6651 = vst.msk [vmem:[#allocation6 + $0x18] sm:$0xff] %vm6620, %v6647
    %v6652 = vld [vmem:[#allocation6] ss:$16 sm:$0x3]
    %v6653 = vld [vmem:[%s5] sm:$0xff]
    %v6654 = vld [vmem:[%s5 + $0x8] sm:$0xff]
    %s6655 = scalar_lea.vmem [#allocation6], 1
    %v6656 = vld [vmem:[%s6655] ss:$16 sm:$0x3]
    %s6657 = scalar_lea.vmem %s5, 16
    %v6658 = vld [vmem:[%s6657] sm:$0xff]
    %v6659 = vld [vmem:[%s6657 + $0x8] sm:$0xff]
    %v6661 = vsel %vm6620, %v6656, 0
    %6663 = vmatpush.msra.mxu0 0.0
    %6664 = vmatpush.msra.mxu0 0.0
    %6665 = vmatpush.msra.mxu0 0.0
    %6666 = vmatpush.msra.mxu0 0.0
    %6667 = vmatpush.msra.mxu0 0.0
    %6668 = vmatpush.msra.mxu0 0.0
    %6669 = vmatpush.msra.mxu0 0.0
    %6670 = vmatpush.msra.mxu0 0.0
    %6671 = vmatpush.msra.mxu0 0.0
    %6672 = vmatpush.msra.mxu0 0.0
    %6673 = vmatpush.msra.mxu0 0.0
    %6674 = vmatpush.msra.mxu0 0.0
    %6675 = vmatpush.msra.mxu0 0.0
    %6676 = vmatpush.msra.mxu0 0.0
    %6677 = vmatpush.msra.mxu0 %v6659
    %6678 = vmatpush.msra.mxu0 %v6658
    %6679 = vmatmul.f32.gmra.mxu0 %v6661
    %v6680 = vpop.f32.mrf.mxu0
    %v6681 = vadd.f32 0.0, %v6680
    %6682 = vdwg.mxu0
    %v6684 = vsel %vm6620, %v6652, 0
    %6686 = vmatpush.msra.mxu0 0.0
    %6687 = vmatpush.msra.mxu0 0.0
    %6688 = vmatpush.msra.mxu0 0.0
    %6689 = vmatpush.msra.mxu0 0.0
    %6690 = vmatpush.msra.mxu0 0.0
    %6691 = vmatpush.msra.mxu0 0.0
    %6692 = vmatpush.msra.mxu0 0.0
    %6693 = vmatpush.msra.mxu0 0.0
    %6694 = vmatpush.msra.mxu0 0.0
    %6695 = vmatpush.msra.mxu0 0.0
    %6696 = vmatpush.msra.mxu0 0.0
    %6697 = vmatpush.msra.mxu0 0.0
    %6698 = vmatpush.msra.mxu0 0.0
    %6699 = vmatpush.msra.mxu0 0.0
    %6700 = vmatpush.msra.mxu0 %v6654
    %6701 = vmatpush.msra.mxu0 %v6653
    %6702 = vmatmul.f32.gmra.mxu0 %v6684
    %v6703 = vpop.f32.mrf.mxu0
    %v6704 = vadd.f32 %v6681, %v6703
    %6705 = vdwg.mxu0
    %s6706 = scalar_lea.vmem [#allocation6], 2
    %v6707 = vld [vmem:[%s6706] ss:$16 sm:$0x3]
    %s6708 = scalar_lea.vmem %s5, 32
    %v6709 = vld [vmem:[%s6708] sm:$0xff]
    %v6710 = vld [vmem:[%s6708 + $0x8] sm:$0xff]
    %v6712 = vsel %vm6620, %v6707, 0
    %6714 = vmatpush.msra.mxu0 0.0
    %6715 = vmatpush.msra.mxu0 0.0
    %6716 = vmatpush.msra.mxu0 0.0
    %6717 = vmatpush.msra.mxu0 0.0
    %6718 = vmatpush.msra.mxu0 0.0
    %6719 = vmatpush.msra.mxu0 0.0
    %6720 = vmatpush.msra.mxu0 0.0
    %6721 = vmatpush.msra.mxu0 0.0
    %6722 = vmatpush.msra.mxu0 0.0
    %6723 = vmatpush.msra.mxu0 0.0
    %6724 = vmatpush.msra.mxu0 0.0
    %6725 = vmatpush.msra.mxu0 0.0
    %6726 = vmatpush.msra.mxu0 0.0
    %6727 = vmatpush.msra.mxu0 0.0
    %6728 = vmatpush.msra.mxu0 %v6710
    %6729 = vmatpush.msra.mxu0 %v6709
    %6730 = vmatmul.f32.gmra.mxu0 %v6712
    %v6731 = vpop.f32.mrf.mxu0
    %v6732 = vadd.f32 0.0, %v6731
    %6733 = vdwg.mxu0
    %v6734 = vadd.f32 %v6704, %v6732
    %s6735 = scalar_lea.vmem [#allocation6], 3
    %v6736 = vld [vmem:[%s6735] ss:$16 sm:$0x3]
    %s6737 = scalar_lea.vmem %s5, 48
    %v6738 = vld [vmem:[%s6737] sm:$0xff]
    %v6739 = vld [vmem:[%s6737 + $0x8] sm:$0xff]
    %v6741 = vsel %vm6620, %v6736, 0
    %6743 = vmatpush.msra.mxu0 0.0
    %6744 = vmatpush.msra.mxu0 0.0
    %6745 = vmatpush.msra.mxu0 0.0
    %6746 = vmatpush.msra.mxu0 0.0
    %6747 = vmatpush.msra.mxu0 0.0
    %6748 = vmatpush.msra.mxu0 0.0
    %6749 = vmatpush.msra.mxu0 0.0
    %6750 = vmatpush.msra.mxu0 0.0
    %6751 = vmatpush.msra.mxu0 0.0
    %6752 = vmatpush.msra.mxu0 0.0
    %6753 = vmatpush.msra.mxu0 0.0
    %6754 = vmatpush.msra.mxu0 0.0
    %6755 = vmatpush.msra.mxu0 0.0
    %6756 = vmatpush.msra.mxu0 0.0
    %6757 = vmatpush.msra.mxu0 %v6739
    %6758 = vmatpush.msra.mxu0 %v6738
    %6759 = vmatmul.f32.gmra.mxu0 %v6741
    %v6760 = vpop.f32.mrf.mxu0
    %v6761 = vadd.f32 0.0, %v6760
    %6762 = vdwg.mxu0
    %v6763 = vadd.f32 %v6734, %v6761
    %s6764 = scalar_lea.vmem [#allocation6], 4
    %v6765 = vld [vmem:[%s6764] ss:$16 sm:$0x3]
    %s6766 = scalar_lea.vmem %s5, 64
    %v6767 = vld [vmem:[%s6766] sm:$0xff]
    %v6768 = vld [vmem:[%s6766 + $0x8] sm:$0xff]
    %v6770 = vsel %vm6620, %v6765, 0
    %6772 = vmatpush.msra.mxu0 0.0
    %6773 = vmatpush.msra.mxu0 0.0
    %6774 = vmatpush.msra.mxu0 0.0
    %6775 = vmatpush.msra.mxu0 0.0
    %6776 = vmatpush.msra.mxu0 0.0
    %6777 = vmatpush.msra.mxu0 0.0
    %6778 = vmatpush.msra.mxu0 0.0
    %6779 = vmatpush.msra.mxu0 0.0
    %6780 = vmatpush.msra.mxu0 0.0
    %6781 = vmatpush.msra.mxu0 0.0
    %6782 = vmatpush.msra.mxu0 0.0
    %6783 = vmatpush.msra.mxu0 0.0
    %6784 = vmatpush.msra.mxu0 0.0
    %6785 = vmatpush.msra.mxu0 0.0
    %6786 = vmatpush.msra.mxu0 %v6768
    %6787 = vmatpush.msra.mxu0 %v6767
    %6788 = vmatmul.f32.gmra.mxu0 %v6770
    %v6789 = vpop.f32.mrf.mxu0
    %v6790 = vadd.f32 0.0, %v6789
    %6791 = vdwg.mxu0
    %v6792 = vadd.f32 %v6763, %v6790
    %s6793 = scalar_lea.vmem [#allocation6], 5
    %v6794 = vld [vmem:[%s6793] ss:$16 sm:$0x3]
    %s6795 = scalar_lea.vmem %s5, 80
    %v6796 = vld [vmem:[%s6795] sm:$0xff]
    %v6797 = vld [vmem:[%s6795 + $0x8] sm:$0xff]
    %v6799 = vsel %vm6620, %v6794, 0
    %6801 = vmatpush.msra.mxu0 0.0
    %6802 = vmatpush.msra.mxu0 0.0
    %6803 = vmatpush.msra.mxu0 0.0
    %6804 = vmatpush.msra.mxu0 0.0
    %6805 = vmatpush.msra.mxu0 0.0
    %6806 = vmatpush.msra.mxu0 0.0
    %6807 = vmatpush.msra.mxu0 0.0
    %6808 = vmatpush.msra.mxu0 0.0
    %6809 = vmatpush.msra.mxu0 0.0
    %6810 = vmatpush.msra.mxu0 0.0
    %6811 = vmatpush.msra.mxu0 0.0
    %6812 = vmatpush.msra.mxu0 0.0
    %6813 = vmatpush.msra.mxu0 0.0
    %6814 = vmatpush.msra.mxu0 0.0
    %6815 = vmatpush.msra.mxu0 %v6797
    %6816 = vmatpush.msra.mxu0 %v6796
    %6817 = vmatmul.f32.gmra.mxu0 %v6799
    %v6818 = vpop.f32.mrf.mxu0
    %v6819 = vadd.f32 0.0, %v6818
    %6820 = vdwg.mxu0
    %v6821 = vadd.f32 %v6792, %v6819
    %s6822 = scalar_lea.vmem [#allocation6], 6
    %v6823 = vld [vmem:[%s6822] ss:$16 sm:$0x3]
    %s6824 = scalar_lea.vmem %s5, 96
    %v6825 = vld [vmem:[%s6824] sm:$0xff]
    %v6826 = vld [vmem:[%s6824 + $0x8] sm:$0xff]
    %v6828 = vsel %vm6620, %v6823, 0
    %6830 = vmatpush.msra.mxu0 0.0
    %6831 = vmatpush.msra.mxu0 0.0
    %6832 = vmatpush.msra.mxu0 0.0
    %6833 = vmatpush.msra.mxu0 0.0
    %6834 = vmatpush.msra.mxu0 0.0
    %6835 = vmatpush.msra.mxu0 0.0
    %6836 = vmatpush.msra.mxu0 0.0
    %6837 = vmatpush.msra.mxu0 0.0
    %6838 = vmatpush.msra.mxu0 0.0
    %6839 = vmatpush.msra.mxu0 0.0
    %6840 = vmatpush.msra.mxu0 0.0
    %6841 = vmatpush.msra.mxu0 0.0
    %6842 = vmatpush.msra.mxu0 0.0
    %6843 = vmatpush.msra.mxu0 0.0
    %6844 = vmatpush.msra.mxu0 %v6826
    %6845 = vmatpush.msra.mxu0 %v6825
    %6846 = vmatmul.f32.gmra.mxu0 %v6828
    %v6847 = vpop.f32.mrf.mxu0
    %v6848 = vadd.f32 0.0, %v6847
    %6849 = vdwg.mxu0
    %v6850 = vadd.f32 %v6821, %v6848
    %s6851 = scalar_lea.vmem [#allocation6], 7
    %v6852 = vld [vmem:[%s6851] ss:$16 sm:$0x3]
    %s6853 = scalar_lea.vmem %s5, 112
    %v6854 = vld [vmem:[%s6853] sm:$0xff]
    %v6855 = vld [vmem:[%s6853 + $0x8] sm:$0xff]
    %v6857 = vsel %vm6620, %v6852, 0
    %6859 = vmatpush.msra.mxu0 0.0
    %6860 = vmatpush.msra.mxu0 0.0
    %6861 = vmatpush.msra.mxu0 0.0
    %6862 = vmatpush.msra.mxu0 0.0
    %6863 = vmatpush.msra.mxu0 0.0
    %6864 = vmatpush.msra.mxu0 0.0
    %6865 = vmatpush.msra.mxu0 0.0
    %6866 = vmatpush.msra.mxu0 0.0
    %6867 = vmatpush.msra.mxu0 0.0
    %6868 = vmatpush.msra.mxu0 0.0
    %6869 = vmatpush.msra.mxu0 0.0
    %6870 = vmatpush.msra.mxu0 0.0
    %6871 = vmatpush.msra.mxu0 0.0
    %6872 = vmatpush.msra.mxu0 0.0
    %6873 = vmatpush.msra.mxu0 %v6855
    %6874 = vmatpush.msra.mxu0 %v6854
    %6875 = vmatmul.f32.gmra.mxu0 %v6857
    %v6876 = vpop.f32.mrf.mxu0
    %v6877 = vadd.f32 0.0, %v6876
    %6878 = vdwg.mxu0
    %v6879 = vadd.f32 %v6850, %v6877
    %s6880 = scalar_lea.vmem [#allocation6], 8
    %v6881 = vld [vmem:[%s6880] ss:$16 sm:$0x3]
    %s6882 = scalar_lea.vmem %s5, 128
    %v6883 = vld [vmem:[%s6882] sm:$0xff]
    %v6884 = vld [vmem:[%s6882 + $0x8] sm:$0xff]
    %v6886 = vsel %vm6620, %v6881, 0
    %6888 = vmatpush.msra.mxu0 0.0
    %6889 = vmatpush.msra.mxu0 0.0
    %6890 = vmatpush.msra.mxu0 0.0
    %6891 = vmatpush.msra.mxu0 0.0
    %6892 = vmatpush.msra.mxu0 0.0
    %6893 = vmatpush.msra.mxu0 0.0
    %6894 = vmatpush.msra.mxu0 0.0
    %6895 = vmatpush.msra.mxu0 0.0
    %6896 = vmatpush.msra.mxu0 0.0
    %6897 = vmatpush.msra.mxu0 0.0
    %6898 = vmatpush.msra.mxu0 0.0
    %6899 = vmatpush.msra.mxu0 0.0
    %6900 = vmatpush.msra.mxu0 0.0
    %6901 = vmatpush.msra.mxu0 0.0
    %6902 = vmatpush.msra.mxu0 %v6884
    %6903 = vmatpush.msra.mxu0 %v6883
    %6904 = vmatmul.f32.gmra.mxu0 %v6886
    %v6905 = vpop.f32.mrf.mxu0
    %v6906 = vadd.f32 0.0, %v6905
    %6907 = vdwg.mxu0
    %v6908 = vadd.f32 %v6879, %v6906
    %s6909 = scalar_lea.vmem [#allocation6], 9
    %v6910 = vld [vmem:[%s6909] ss:$16 sm:$0x3]
    %s6911 = scalar_lea.vmem %s5, 144
    %v6912 = vld [vmem:[%s6911] sm:$0xff]
    %v6913 = vld [vmem:[%s6911 + $0x8] sm:$0xff]
    %v6915 = vsel %vm6620, %v6910, 0
    %6917 = vmatpush.msra.mxu0 0.0
    %6918 = vmatpush.msra.mxu0 0.0
    %6919 = vmatpush.msra.mxu0 0.0
    %6920 = vmatpush.msra.mxu0 0.0
    %6921 = vmatpush.msra.mxu0 0.0
    %6922 = vmatpush.msra.mxu0 0.0
    %6923 = vmatpush.msra.mxu0 0.0
    %6924 = vmatpush.msra.mxu0 0.0
    %6925 = vmatpush.msra.mxu0 0.0
    %6926 = vmatpush.msra.mxu0 0.0
    %6927 = vmatpush.msra.mxu0 0.0
    %6928 = vmatpush.msra.mxu0 0.0
    %6929 = vmatpush.msra.mxu0 0.0
    %6930 = vmatpush.msra.mxu0 0.0
    %6931 = vmatpush.msra.mxu0 %v6913
    %6932 = vmatpush.msra.mxu0 %v6912
    %6933 = vmatmul.f32.gmra.mxu0 %v6915
    %v6934 = vpop.f32.mrf.mxu0
    %v6935 = vadd.f32 0.0, %v6934
    %6936 = vdwg.mxu0
    %v6937 = vadd.f32 %v6908, %v6935
    %s6938 = scalar_lea.vmem [#allocation6], 10
    %v6939 = vld [vmem:[%s6938] ss:$16 sm:$0x3]
    %s6940 = scalar_lea.vmem %s5, 160
    %v6941 = vld [vmem:[%s6940] sm:$0xff]
    %v6942 = vld [vmem:[%s6940 + $0x8] sm:$0xff]
    %v6944 = vsel %vm6620, %v6939, 0
    %6946 = vmatpush.msra.mxu0 0.0
    %6947 = vmatpush.msra.mxu0 0.0
    %6948 = vmatpush.msra.mxu0 0.0
    %6949 = vmatpush.msra.mxu0 0.0
    %6950 = vmatpush.msra.mxu0 0.0
    %6951 = vmatpush.msra.mxu0 0.0
    %6952 = vmatpush.msra.mxu0 0.0
    %6953 = vmatpush.msra.mxu0 0.0
    %6954 = vmatpush.msra.mxu0 0.0
    %6955 = vmatpush.msra.mxu0 0.0
    %6956 = vmatpush.msra.mxu0 0.0
    %6957 = vmatpush.msra.mxu0 0.0
    %6958 = vmatpush.msra.mxu0 0.0
    %6959 = vmatpush.msra.mxu0 0.0
    %6960 = vmatpush.msra.mxu0 %v6942
    %6961 = vmatpush.msra.mxu0 %v6941
    %6962 = vmatmul.f32.gmra.mxu0 %v6944
    %v6963 = vpop.f32.mrf.mxu0
    %v6964 = vadd.f32 0.0, %v6963
    %6965 = vdwg.mxu0
    %v6966 = vadd.f32 %v6937, %v6964
    %s6967 = scalar_lea.vmem [#allocation6], 11
    %v6968 = vld [vmem:[%s6967] ss:$16 sm:$0x3]
    %s6969 = scalar_lea.vmem %s5, 176
    %v6970 = vld [vmem:[%s6969] sm:$0xff]
    %v6971 = vld [vmem:[%s6969 + $0x8] sm:$0xff]
    %v6973 = vsel %vm6620, %v6968, 0
    %6975 = vmatpush.msra.mxu0 0.0
    %6976 = vmatpush.msra.mxu0 0.0
    %6977 = vmatpush.msra.mxu0 0.0
    %6978 = vmatpush.msra.mxu0 0.0
    %6979 = vmatpush.msra.mxu0 0.0
    %6980 = vmatpush.msra.mxu0 0.0
    %6981 = vmatpush.msra.mxu0 0.0
    %6982 = vmatpush.msra.mxu0 0.0
    %6983 = vmatpush.msra.mxu0 0.0
    %6984 = vmatpush.msra.mxu0 0.0
    %6985 = vmatpush.msra.mxu0 0.0
    %6986 = vmatpush.msra.mxu0 0.0
    %6987 = vmatpush.msra.mxu0 0.0
    %6988 = vmatpush.msra.mxu0 0.0
    %6989 = vmatpush.msra.mxu0 %v6971
    %6990 = vmatpush.msra.mxu0 %v6970
    %6991 = vmatmul.f32.gmra.mxu0 %v6973
    %v6992 = vpop.f32.mrf.mxu0
    %v6993 = vadd.f32 0.0, %v6992
    %6994 = vdwg.mxu0
    %v6995 = vadd.f32 %v6966, %v6993
    %s6996 = scalar_lea.vmem [#allocation6], 12
    %v6997 = vld [vmem:[%s6996] ss:$16 sm:$0x3]
    %s6998 = scalar_lea.vmem %s5, 192
    %v6999 = vld [vmem:[%s6998] sm:$0xff]
    %v7000 = vld [vmem:[%s6998 + $0x8] sm:$0xff]
    %v7002 = vsel %vm6620, %v6997, 0
    %7004 = vmatpush.msra.mxu0 0.0
    %7005 = vmatpush.msra.mxu0 0.0
    %7006 = vmatpush.msra.mxu0 0.0
    %7007 = vmatpush.msra.mxu0 0.0
    %7008 = vmatpush.msra.mxu0 0.0
    %7009 = vmatpush.msra.mxu0 0.0
    %7010 = vmatpush.msra.mxu0 0.0
    %7011 = vmatpush.msra.mxu0 0.0
    %7012 = vmatpush.msra.mxu0 0.0
    %7013 = vmatpush.msra.mxu0 0.0
    %7014 = vmatpush.msra.mxu0 0.0
    %7015 = vmatpush.msra.mxu0 0.0
    %7016 = vmatpush.msra.mxu0 0.0
    %7017 = vmatpush.msra.mxu0 0.0
    %7018 = vmatpush.msra.mxu0 %v7000
    %7019 = vmatpush.msra.mxu0 %v6999
    %7020 = vmatmul.f32.gmra.mxu0 %v7002
    %v7021 = vpop.f32.mrf.mxu0
    %v7022 = vadd.f32 0.0, %v7021
    %7023 = vdwg.mxu0
    %v7024 = vadd.f32 %v6995, %v7022
    %s7025 = scalar_lea.vmem [#allocation6], 13
    %v7026 = vld [vmem:[%s7025] ss:$16 sm:$0x3]
    %s7027 = scalar_lea.vmem %s5, 208
    %v7028 = vld [vmem:[%s7027] sm:$0xff]
    %v7029 = vld [vmem:[%s7027 + $0x8] sm:$0xff]
    %v7031 = vsel %vm6620, %v7026, 0
    %7033 = vmatpush.msra.mxu0 0.0
    %7034 = vmatpush.msra.mxu0 0.0
    %7035 = vmatpush.msra.mxu0 0.0
    %7036 = vmatpush.msra.mxu0 0.0
    %7037 = vmatpush.msra.mxu0 0.0
    %7038 = vmatpush.msra.mxu0 0.0
    %7039 = vmatpush.msra.mxu0 0.0
    %7040 = vmatpush.msra.mxu0 0.0
    %7041 = vmatpush.msra.mxu0 0.0
    %7042 = vmatpush.msra.mxu0 0.0
    %7043 = vmatpush.msra.mxu0 0.0
    %7044 = vmatpush.msra.mxu0 0.0
    %7045 = vmatpush.msra.mxu0 0.0
    %7046 = vmatpush.msra.mxu0 0.0
    %7047 = vmatpush.msra.mxu0 %v7029
    %7048 = vmatpush.msra.mxu0 %v7028
    %7049 = vmatmul.f32.gmra.mxu0 %v7031
    %v7050 = vpop.f32.mrf.mxu0
    %v7051 = vadd.f32 0.0, %v7050
    %7052 = vdwg.mxu0
    %v7053 = vadd.f32 %v7024, %v7051
    %s7054 = scalar_lea.vmem [#allocation6], 14
    %v7055 = vld [vmem:[%s7054] ss:$16 sm:$0x3]
    %s7056 = scalar_lea.vmem %s5, 224
    %v7057 = vld [vmem:[%s7056] sm:$0xff]
    %v7058 = vld [vmem:[%s7056 + $0x8] sm:$0xff]
    %v7060 = vsel %vm6620, %v7055, 0
    %7062 = vmatpush.msra.mxu0 0.0
    %7063 = vmatpush.msra.mxu0 0.0
    %7064 = vmatpush.msra.mxu0 0.0
    %7065 = vmatpush.msra.mxu0 0.0
    %7066 = vmatpush.msra.mxu0 0.0
    %7067 = vmatpush.msra.mxu0 0.0
    %7068 = vmatpush.msra.mxu0 0.0
    %7069 = vmatpush.msra.mxu0 0.0
    %7070 = vmatpush.msra.mxu0 0.0
    %7071 = vmatpush.msra.mxu0 0.0
    %7072 = vmatpush.msra.mxu0 0.0
    %7073 = vmatpush.msra.mxu0 0.0
    %7074 = vmatpush.msra.mxu0 0.0
    %7075 = vmatpush.msra.mxu0 0.0
    %7076 = vmatpush.msra.mxu0 %v7058
    %7077 = vmatpush.msra.mxu0 %v7057
    %7078 = vmatmul.f32.gmra.mxu0 %v7060
    %v7079 = vpop.f32.mrf.mxu0
    %v7080 = vadd.f32 0.0, %v7079
    %7081 = vdwg.mxu0
    %v7082 = vadd.f32 %v7053, %v7080
    %s7083 = scalar_lea.vmem [#allocation6], 15
    %v7084 = vld [vmem:[%s7083] ss:$16 sm:$0x3]
    %s7085 = scalar_lea.vmem %s5, 240
    %v7086 = vld [vmem:[%s7085] sm:$0xff]
    %v7087 = vld [vmem:[%s7085 + $0x8] sm:$0xff]
    %v7089 = vsel %vm6620, %v7084, 0
    %7091 = vmatpush.msra.mxu0 0.0
    %7092 = vmatpush.msra.mxu0 0.0
    %7093 = vmatpush.msra.mxu0 0.0
    %7094 = vmatpush.msra.mxu0 0.0
    %7095 = vmatpush.msra.mxu0 0.0
    %7096 = vmatpush.msra.mxu0 0.0
    %7097 = vmatpush.msra.mxu0 0.0
    %7098 = vmatpush.msra.mxu0 0.0
    %7099 = vmatpush.msra.mxu0 0.0
    %7100 = vmatpush.msra.mxu0 0.0
    %7101 = vmatpush.msra.mxu0 0.0
    %7102 = vmatpush.msra.mxu0 0.0
    %7103 = vmatpush.msra.mxu0 0.0
    %7104 = vmatpush.msra.mxu0 0.0
    %7105 = vmatpush.msra.mxu0 %v7087
    %7106 = vmatpush.msra.mxu0 %v7086
    %7107 = vmatmul.f32.gmra.mxu0 %v7089
    %v7108 = vpop.f32.mrf.mxu0
    %v7109 = vadd.f32 0.0, %v7108
    %7110 = vdwg.mxu0
    %v7111 = vadd.f32 %v7082, %v7109
    %v7112 = vld [vmem:[%s6] sm:$0x1]
    %v7114 = vperm.slane %v7112, 0
    %v7116 = vadd.f32 %v7111, %v7114
    %v7117 = vmax.f32 %v7116, 0.0
    %v7118 = vld [vmem:[%s7] sm:$0xff]
    %v7119 = vld [vmem:[%s7 + $0x8] sm:$0xff]
    %v7120 = vld [vmem:[%s7 + $0x10] sm:$0xff]
    %v7121 = vld [vmem:[%s7 + $0x18] sm:$0xff]
    %v7122 = vld [vmem:[%s8] sm:$0x1]
    %v7124 = vperm.slane %v7122, 0
    %vm7126 = vcmask 261120
    %v7128 = vsel %vm7126, %v7117, 0
    %7130 = vmatpush.msra.mxu0 0.0
    %7131 = vmatpush.msra.mxu0 0.0
    %7132 = vmatpush.msra.mxu0 0.0
    %7133 = vmatpush.msra.mxu0 0.0
    %7134 = vmatpush.msra.mxu0 0.0
    %7135 = vmatpush.msra.mxu0 0.0
    %7136 = vmatpush.msra.mxu0 0.0
    %7137 = vmatpush.msra.mxu0 0.0
    %7138 = vmatpush.msra.mxu0 0.0
    %7139 = vmatpush.msra.mxu0 0.0
    %7140 = vmatpush.msra.mxu0 0.0
    %7141 = vmatpush.msra.mxu0 0.0
    %7142 = vmatpush.msra.mxu0 %v7121
    %7143 = vmatpush.msra.mxu0 %v7120
    %7144 = vmatpush.msra.mxu0 %v7119
    %7145 = vmatpush.msra.mxu0 %v7118
    %7146 = vmatmul.f32.gmra.mxu0 %v7128
    %v7147 = vpop.f32.mrf.mxu0
    %v7148 = vadd.f32 %v7124, %v7147
    %7149 = vdwg.mxu0
    %vm7150 = vcmask 254976
    %7151 = vst.msk [vmem:[#allocation7] sm:$0x3] %vm7150, %v7148
    // Predicated region
    $region38: #{feature_extractor_forward.1} parent=1 // pred_check
      _
    $region39: #{feature_extractor_forward.1} parent=1 // pred_check_branch
      %7153 = sbr.rel (0) target = $region41
    $region40: #{feature_extractor_forward.1} parent=1 // pred_region
      %7155 = vsyncadd [#allocation8], 0
      %s7157 = sshll.u32 [#allocation7], 4
      %s7158 = int_to_ptr.vmem [resolvable:$true] %s7157
      %s7159 = sshll.u32 %s9, 4
      %s7160 = int_to_ptr.hbm [resolvable:$true] %s7159
      %7162 = dma.vmem_to_hbm [thread:$0]  %s7158, 32, %s7160, [#allocation8]
    $region41: #{feature_extractor_forward.1} parent=1 // pred_fallthru
      _
    // Predicated region
    $region42: #{feature_extractor_forward.1} parent=1 // pred_check
      _
    $region43: #{feature_extractor_forward.1} parent=1 // pred_check_branch
      %7164 = sbr.rel (0) target = $region45
    $region44: #{feature_extractor_forward.1} parent=1 // pred_region
      %7166 = dma.done [#allocation8], 32
    $region45: #{feature_extractor_forward.1} parent=1 // pred_fallthru
      _
    %7167 = vsyncpa [#allocation8], 1

</llo_original>
